<compile_context>
chip_gen: v6e
topology: v6e:2x2x1
jax: 0.10.0
libtpu: 0.0.40
codegen_flags: <defaults>
</compile_context>

<pallas_src>
import jax
import jax.numpy as jnp
from jax import lax
from jax.experimental import pallas as pl
from jax.experimental.pallas import tpu as pltpu


# ------------------------------ fused kernel -------------------------------

def _resnet_fused_kernel(x_ref,                       # [1, 3, HW]    bf16
                         t1_ref,                      # [9, HW, HW]   bf16
                         t2_ref,                      # [9, HW, HW4]  bf16
                         t3_ref,                      # [9, HW4, HW4] bf16
                         w1_ref, s1_ref, b1_ref,      # stem
                         w11_ref, s11_ref, b11_ref,   # layer1 conv1
                         w12_ref, s12_ref, b12_ref,   # layer1 conv2
                         w21_ref, s21_ref, b21_ref,   # layer2 conv1
                         wds_ref, sds_ref, bds_ref,   # layer2 downsample (1x1)
                         w22_ref, s22_ref, b22_ref,   # layer2 conv2
                         o_ref):                      # [1, Cout, 1]  f32
    f32 = jnp.float32
    bf16 = jnp.bfloat16

    def conv3x3(x, w_ref, t_ref):
        # x: [Cin, Mi] activation.  w_ref: [9, Cout, Cin] conv taps.
        # t_ref: [9, Mi, Mo] 0/1 shift operators (zero-pad + stride baked in).
        # Returns the pre-BN accumulator [Cout, Mo] in f32.
        cout = w_ref.shape[1]
        mo = t_ref.shape[2]
        xb = x.astype(bf16)
        acc = jnp.zeros((cout, mo), f32)
        for t in range(9):                                          # static unroll
            xs = jnp.dot(xb, t_ref[t],
                         preferred_element_type=f32)                # [Cin, Mo]
            acc = acc + jnp.dot(w_ref[t], xs.astype(bf16),
                                preferred_element_type=f32)         # [Cout, Mo]
        return acc

    def bn(y, s_ref, b_ref):
        return y * s_ref[...] + b_ref[...]

    def relu(v):
        return jnp.maximum(v, 0.0)

    x0 = x_ref[0]                                                   # [3, HW] bf16

    # stem: conv3x3 + BN + ReLU
    a1 = relu(bn(conv3x3(x0, w1_ref, t1_ref), s1_ref, b1_ref))          # [8, HW]

    # layer1: BasicBlock with identity shortcut
    a2 = relu(bn(conv3x3(a1, w11_ref, t1_ref), s11_ref, b11_ref))       # [8, HW]
    a3 = relu(bn(conv3x3(a2, w12_ref, t1_ref), s12_ref, b12_ref) + a1)  # [8, HW]

    # layer2: BasicBlock, stride 2, 1x1-conv + BN shortcut
    a4 = relu(bn(conv3x3(a3, w21_ref, t2_ref), s21_ref, b21_ref))       # [16, HW4]
    # 1x1 stride-2 shortcut == center-tap subsample then 1x1 matmul + BN
    xds = jnp.dot(a3.astype(bf16), t2_ref[4],
                  preferred_element_type=f32)                            # [8, HW4]
    sc = bn(jnp.dot(wds_ref[...], xds.astype(bf16),
                    preferred_element_type=f32), sds_ref, bds_ref)       # [16, HW4]
    a5 = relu(bn(conv3x3(a4, w22_ref, t3_ref), s22_ref, b22_ref) + sc)   # [16, HW4]

    # fused global average pool epilogue
    pooled = jnp.mean(a5, axis=1, keepdims=True)                         # [16, 1]
    o_ref[0] = pooled.astype(o_ref.dtype)


# ----------------------------- wrapper (glue) -------------------------------

def _fold_bn(gamma, beta, mean, var, eps=1e-5):
    scale = gamma / jnp.sqrt(var + eps)
    bias = beta - mean * scale
    return (scale.reshape(-1, 1).astype(jnp.float32),
            bias.reshape(-1, 1).astype(jnp.float32))


def _conv_taps(w):
    # PyTorch conv weight [Cout, Cin, 3, 3] -> [9, Cout, Cin] tap matrices
    # (tap index t = di*3 + dj), bf16 MXU operands.
    cout, cin, kh, kw = w.shape
    return (jnp.transpose(w, (2, 3, 0, 1))
            .reshape(kh * kw, cout, cin).astype(jnp.bfloat16))


def _shift_operators(hi, wi, ho, wo, stride):
    # T[t][q, p] = 1 iff input flat index q == (stride*yo + di - 1)*wi +
    # (stride*xo + dj - 1) for output flat index p = yo*wo + xo, t = di*3 + dj;
    # zero when the tap lands in the zero-padding halo.  Applying X @ T[t]
    # shifts a lane-major activation [C, hi*wi] into tap-t alignment at the
    # output resolution, so a 3x3 conv becomes 9 dense MXU matmuls in-kernel.
    p = jnp.arange(ho * wo)
    yo, xo = p // wo, p % wo
    q_ids = jnp.arange(hi * wi)
    mats = []
    for di in range(3):
        for dj in range(3):
            yi = stride * yo + di - 1
            xi = stride * xo + dj - 1
            valid = (yi >= 0) & (yi < hi) & (xi >= 0) & (xi < wi)
            q = yi * wi + xi
            mats.append((q_ids[:, None] == q[None, :]) & valid[None, :])
    return jnp.stack(mats, axis=0).astype(jnp.bfloat16)   # [9, hi*wi, ho*wo]


@jax.jit
def resnet_features_forward(x_nchw, p):
    """Pallas implementation.  Input NCHW (PyTorch), output (N, C, 1, 1)."""
    n, cin, hh, ww = x_nchw.shape
    assert cin == 3 and hh % 2 == 0 and ww % 2 == 0
    hw = hh * ww
    h2, w2 = hh // 2, ww // 2
    hw2 = h2 * w2
    c_out = p["l2_c2_w"].shape[0]

    # NCHW flattened spatially already IS the lane-dense [C, H*W] layout.
    x = x_nchw.reshape(n, cin, hw).astype(jnp.bfloat16)

    t1 = _shift_operators(hh, ww, hh, ww, 1)    # [9, hw,  hw ]
    t2 = _shift_operators(hh, ww, h2, w2, 2)    # [9, hw,  hw2]
    t3 = _shift_operators(h2, w2, h2, w2, 1)    # [9, hw2, hw2]

    w1, (s1, b1) = _conv_taps(p["conv1_w"]), _fold_bn(*p["bn1"])
    w11, (s11, b11) = _conv_taps(p["l1_c1_w"]), _fold_bn(*p["l1_bn1"])
    w12, (s12, b12) = _conv_taps(p["l1_c2_w"]), _fold_bn(*p["l1_bn2"])
    w21, (s21, b21) = _conv_taps(p["l2_c1_w"]), _fold_bn(*p["l2_bn1"])
    w22, (s22, b22) = _conv_taps(p["l2_c2_w"]), _fold_bn(*p["l2_bn2"])
    wds = p["l2_ds_w"][:, :, 0, 0].astype(jnp.bfloat16)    # [16, 8]
    sds, bds = _fold_bn(*p["l2_ds_bn"])

    operands = (x, t1, t2, t3,
                w1, s1, b1, w11, s11, b11, w12, s12, b12,
                w21, s21, b21, wds, sds, bds, w22, s22, b22)

    def rep_spec(a):
        # Whole-array block, same block every grid step -> stays VMEM-resident.
        nd = a.ndim
        return pl.BlockSpec(a.shape, lambda i, _nd=nd: (0,) * _nd)

    in_specs = [pl.BlockSpec((1, cin, hw), lambda i: (i, 0, 0))]
    in_specs += [rep_spec(a) for a in operands[1:]]

    def conv_flops(ci, co, mi, mo):
        return 9 * 2 * (ci * mi * mo + co * ci * mo)
    flops = n * (conv_flops(3, 8, hw, hw) + 2 * conv_flops(8, 8, hw, hw)
                 + conv_flops(8, 16, hw, hw2) + conv_flops(16, 16, hw2, hw2)
                 + 2 * (8 * hw * hw2 + 16 * 8 * hw2))
    bytes_accessed = (sum(int(a.size) * a.dtype.itemsize for a in operands)
                      + n * c_out * 4)

    out = pl.pallas_call(
        _resnet_fused_kernel,
        out_shape=jax.ShapeDtypeStruct((n, c_out, 1), jnp.float32),
        grid=(n,),
        in_specs=in_specs,
        out_specs=pl.BlockSpec((1, c_out, 1), lambda i: (i, 0, 0)),
        compiler_params=pltpu.CompilerParams(
            dimension_semantics=("parallel",),        # megacore sharding on v7x
            vmem_limit_bytes=32 * 1024 * 1024),
        cost_estimate=pl.CostEstimate(flops=int(flops), transcendentals=0,
                                      bytes_accessed=int(bytes_accessed)),
    )(*operands)

    return out.reshape(n, c_out, 1, 1)


# ------------------------------- parameters --------------------------------

def init_params(key):
    ks = list(jax.random.split(key, 16))

    def conv_w(k, cout, cin, ksz):
        fan_in = cin * ksz * ksz
        return (jax.random.normal(k, (cout, cin, ksz, ksz), jnp.float32)
                * (2.0 / fan_in) ** 0.5)

    def bn(k, c):
        k1, k2, k3, k4 = jax.random.split(k, 4)
        gamma = 1.0 + 0.1 * jax.random.normal(k1, (c,), jnp.float32)
        beta = 0.1 * jax.random.normal(k2, (c,), jnp.float32)
        mean = 0.1 * jax.random.normal(k3, (c,), jnp.float32)
        var = jnp.abs(1.0 + 0.1 * jax.random.normal(k4, (c,), jnp.float32))
        return gamma, beta, mean, var

    p = {}
    p["conv1_w"], p["bn1"] = conv_w(ks[0], 8, 3, 3), bn(ks[1], 8)
    p["l1_c1_w"], p["l1_bn1"] = conv_w(ks[2], 8, 8, 3), bn(ks[3], 8)
    p["l1_c2_w"], p["l1_bn2"] = conv_w(ks[4], 8, 8, 3), bn(ks[5], 8)
    p["l2_c1_w"], p["l2_bn1"] = conv_w(ks[6], 16, 8, 3), bn(ks[7], 16)
    p["l2_c2_w"], p["l2_bn2"] = conv_w(ks[8], 16, 16, 3), bn(ks[9], 16)
    p["l2_ds_w"], p["l2_ds_bn"] = conv_w(ks[10], 16, 8, 1), bn(ks[11], 16)
    return p


# ------------------------------ f32 reference -------------------------------

def _ref_conv_bn(x, w, gamma, beta, mean, var, *, stride, pad, relu=True,
                 residual=None, eps=1e-5):
    y = lax.conv_general_dilated(
        x, w, window_strides=(stride, stride), padding=[(pad, pad), (pad, pad)],
        dimension_numbers=("NCHW", "OIHW", "NCHW"),
        precision=lax.Precision.HIGHEST)
    scale = (gamma / jnp.sqrt(var + eps)).reshape(1, -1, 1, 1)
    bias = (beta - mean * gamma / jnp.sqrt(var + eps)).reshape(1, -1, 1, 1)
    y = y * scale + bias
    if residual is not None:
        y = y + residual
    if relu:
        y = jnp.maximum(y, 0.0)
    return y


def resnet_features_ref(x_nchw, p):
    """Pure-JAX f32 reference (lax.conv, HIGHEST precision)."""
    x = x_nchw.astype(jnp.float32)
    x = _ref_conv_bn(x, p["conv1_w"], *p["bn1"], stride=1, pad=1)
    idt = x
    y = _ref_conv_bn(x, p["l1_c1_w"], *p["l1_bn1"], stride=1, pad=1)
    x = _ref_conv_bn(y, p["l1_c2_w"], *p["l1_bn2"], stride=1, pad=1, residual=idt)
    sc = _ref_conv_bn(x, p["l2_ds_w"], *p["l2_ds_bn"], stride=2, pad=0, relu=False)
    y = _ref_conv_bn(x, p["l2_c1_w"], *p["l2_bn1"], stride=2, pad=1)
    x = _ref_conv_bn(y, p["l2_c2_w"], *p["l2_bn2"], stride=1, pad=1, residual=sc)
    return jnp.mean(x, axis=(2, 3), keepdims=True)     # (N, C, 1, 1)


# ----------------------------------- main -----------------------------------

if __name__ == "__main__":
    key = jax.random.PRNGKey(0)
    kx, kp = jax.random.split(key)

    x = jax.random.normal(kx, (2, 3, 16, 16), jnp.float32)   # NCHW like PyTorch
    params = init_params(kp)

    out = jax.block_until_ready(resnet_features_forward(x, params))
    assert out.shape == (2, 16, 1, 1), out.shape
    assert bool(jnp.all(jnp.isfinite(out)))

    ref = jax.block_until_ready(resnet_features_ref(x, params))
    # Tolerance sized for bf16 MXU operands (ref is f32 at HIGHEST precision).
    assert jnp.allclose(out, ref, rtol=3e-2, atol=3e-2), (
        float(jnp.max(jnp.abs(out - ref))))

    print("KERNEL_OK")
</pallas_src>

<mosaic_0001>
module attributes {stable_mosaic.version = 11 : i64} {
  func.func @_resnet_fused_kernel(%arg0: i32, %arg1: memref<1x3x256xbf16, #tpu.memory_space<vmem>>, %arg2: memref<9x256x256xbf16, #tpu.memory_space<vmem>>, %arg3: memref<9x256x64xbf16, #tpu.memory_space<vmem>>, %arg4: memref<9x64x64xbf16, #tpu.memory_space<vmem>>, %arg5: memref<9x8x3xbf16, #tpu.memory_space<vmem>>, %arg6: memref<8x1xf32, #tpu.memory_space<vmem>>, %arg7: memref<8x1xf32, #tpu.memory_space<vmem>>, %arg8: memref<9x8x8xbf16, #tpu.memory_space<vmem>>, %arg9: memref<8x1xf32, #tpu.memory_space<vmem>>, %arg10: memref<8x1xf32, #tpu.memory_space<vmem>>, %arg11: memref<9x8x8xbf16, #tpu.memory_space<vmem>>, %arg12: memref<8x1xf32, #tpu.memory_space<vmem>>, %arg13: memref<8x1xf32, #tpu.memory_space<vmem>>, %arg14: memref<9x16x8xbf16, #tpu.memory_space<vmem>>, %arg15: memref<16x1xf32, #tpu.memory_space<vmem>>, %arg16: memref<16x1xf32, #tpu.memory_space<vmem>>, %arg17: memref<16x8xbf16, #tpu.memory_space<vmem>>, %arg18: memref<16x1xf32, #tpu.memory_space<vmem>>, %arg19: memref<16x1xf32, #tpu.memory_space<vmem>>, %arg20: memref<9x16x16xbf16, #tpu.memory_space<vmem>>, %arg21: memref<16x1xf32, #tpu.memory_space<vmem>>, %arg22: memref<16x1xf32, #tpu.memory_space<vmem>>, %arg23: memref<1x16x1xf32, #tpu.memory_space<vmem>>) attributes {dimension_semantics = [#tpu.dimension_semantics<parallel>], iteration_bounds = array<i64: 2>, scalar_prefetch = 0 : i64, scratch_operands = 0 : i64, tpu.core_type = #tpu.core_type<tc>, window_params = [{transform_indices = @transform_0, window_bounds = array<i64: 1, 3, 256>}, {pipeline_mode = #tpu.pipeline_mode<synchronous>, transform_indices = @transform_1, window_bounds = array<i64: 9, 256, 256>}, {pipeline_mode = #tpu.pipeline_mode<synchronous>, transform_indices = @transform_2, window_bounds = array<i64: 9, 256, 64>}, {pipeline_mode = #tpu.pipeline_mode<synchronous>, transform_indices = @transform_3, window_bounds = array<i64: 9, 64, 64>}, {pipeline_mode = #tpu.pipeline_mode<synchronous>, transform_indices = @transform_4, window_bounds = array<i64: 9, 8, 3>}, {pipeline_mode = #tpu.pipeline_mode<synchronous>, transform_indices = @transform_5, window_bounds = array<i64: 8, 1>}, {pipeline_mode = #tpu.pipeline_mode<synchronous>, transform_indices = @transform_6, window_bounds = array<i64: 8, 1>}, {pipeline_mode = #tpu.pipeline_mode<synchronous>, transform_indices = @transform_7, window_bounds = array<i64: 9, 8, 8>}, {pipeline_mode = #tpu.pipeline_mode<synchronous>, transform_indices = @transform_8, window_bounds = array<i64: 8, 1>}, {pipeline_mode = #tpu.pipeline_mode<synchronous>, transform_indices = @transform_9, window_bounds = array<i64: 8, 1>}, {pipeline_mode = #tpu.pipeline_mode<synchronous>, transform_indices = @transform_10, window_bounds = array<i64: 9, 8, 8>}, {pipeline_mode = #tpu.pipeline_mode<synchronous>, transform_indices = @transform_11, window_bounds = array<i64: 8, 1>}, {pipeline_mode = #tpu.pipeline_mode<synchronous>, transform_indices = @transform_12, window_bounds = array<i64: 8, 1>}, {pipeline_mode = #tpu.pipeline_mode<synchronous>, transform_indices = @transform_13, window_bounds = array<i64: 9, 16, 8>}, {pipeline_mode = #tpu.pipeline_mode<synchronous>, transform_indices = @transform_14, window_bounds = array<i64: 16, 1>}, {pipeline_mode = #tpu.pipeline_mode<synchronous>, transform_indices = @transform_15, window_bounds = array<i64: 16, 1>}, {pipeline_mode = #tpu.pipeline_mode<synchronous>, transform_indices = @transform_16, window_bounds = array<i64: 16, 8>}, {pipeline_mode = #tpu.pipeline_mode<synchronous>, transform_indices = @transform_17, window_bounds = array<i64: 16, 1>}, {pipeline_mode = #tpu.pipeline_mode<synchronous>, transform_indices = @transform_18, window_bounds = array<i64: 16, 1>}, {pipeline_mode = #tpu.pipeline_mode<synchronous>, transform_indices = @transform_19, window_bounds = array<i64: 9, 16, 16>}, {pipeline_mode = #tpu.pipeline_mode<synchronous>, transform_indices = @transform_20, window_bounds = array<i64: 16, 1>}, {pipeline_mode = #tpu.pipeline_mode<synchronous>, transform_indices = @transform_21, window_bounds = array<i64: 16, 1>}, {transform_indices = @transform_22, window_bounds = array<i64: 1, 16, 1>}]} {
    %c0 = arith.constant 0 : index
    %c0_0 = arith.constant 0 : index
    %c0_1 = arith.constant 0 : index
    %0 = vector.load %arg1[%c0, %c0_0, %c0_1] : memref<1x3x256xbf16, #tpu.memory_space<vmem>>, vector<1x3x256xbf16>
    %1 = vector.shape_cast %0 : vector<1x3x256xbf16> to vector<3x256xbf16>
    %cst = arith.constant 0.000000e+00 : f32
    %2 = vector.broadcast %cst : f32 to vector<8x256xf32>
    %c0_2 = arith.constant 0 : index
    %c0_3 = arith.constant 0 : index
    %c0_4 = arith.constant 0 : index
    %3 = vector.load %arg2[%c0_2, %c0_3, %c0_4] : memref<9x256x256xbf16, #tpu.memory_space<vmem>>, vector<1x256x256xbf16>
    %4 = vector.shape_cast %3 : vector<1x256x256xbf16> to vector<256x256xbf16>
    %cst_5 = arith.constant dense<0.000000e+00> : vector<3x256xf32>
    %5 = tpu.matmul %1, %4, %cst_5 {dimension_numbers = #tpu.dot_dimension_numbers<[1], [0], [0], [1], [0, 0, 1, 1], [], []>} : vector<3x256xbf16>, vector<256x256xbf16>, vector<3x256xf32> -> vector<3x256xf32>
    %c0_6 = arith.constant 0 : index
    %c0_7 = arith.constant 0 : index
    %c0_8 = arith.constant 0 : index
    %6 = vector.load %arg5[%c0_6, %c0_7, %c0_8] : memref<9x8x3xbf16, #tpu.memory_space<vmem>>, vector<1x8x3xbf16>
    %7 = vector.shape_cast %6 : vector<1x8x3xbf16> to vector<8x3xbf16>
    %8 = arith.truncf %5 : vector<3x256xf32> to vector<3x256xbf16>
    %cst_9 = arith.constant dense<0.000000e+00> : vector<8x256xf32>
    %9 = tpu.matmul %7, %8, %cst_9 {dimension_numbers = #tpu.dot_dimension_numbers<[1], [0], [0], [1], [0, 0, 1, 1], [], []>} : vector<8x3xbf16>, vector<3x256xbf16>, vector<8x256xf32> -> vector<8x256xf32>
    %10 = arith.addf %2, %9 : vector<8x256xf32>
    %c1 = arith.constant 1 : index
    %c0_10 = arith.constant 0 : index
    %c0_11 = arith.constant 0 : index
    %11 = vector.load %arg2[%c1, %c0_10, %c0_11] : memref<9x256x256xbf16, #tpu.memory_space<vmem>>, vector<1x256x256xbf16>
    %12 = vector.shape_cast %11 : vector<1x256x256xbf16> to vector<256x256xbf16>
    %cst_12 = arith.constant dense<0.000000e+00> : vector<3x256xf32>
    %13 = tpu.matmul %1, %12, %cst_12 {dimension_numbers = #tpu.dot_dimension_numbers<[1], [0], [0], [1], [0, 0, 1, 1], [], []>} : vector<3x256xbf16>, vector<256x256xbf16>, vector<3x256xf32> -> vector<3x256xf32>
    %c1_13 = arith.constant 1 : index
    %c0_14 = arith.constant 0 : index
    %c0_15 = arith.constant 0 : index
    %14 = vector.load %arg5[%c1_13, %c0_14, %c0_15] : memref<9x8x3xbf16, #tpu.memory_space<vmem>>, vector<1x8x3xbf16>
    %15 = vector.shape_cast %14 : vector<1x8x3xbf16> to vector<8x3xbf16>
    %16 = arith.truncf %13 : vector<3x256xf32> to vector<3x256xbf16>
    %cst_16 = arith.constant dense<0.000000e+00> : vector<8x256xf32>
    %17 = tpu.matmul %15, %16, %cst_16 {dimension_numbers = #tpu.dot_dimension_numbers<[1], [0], [0], [1], [0, 0, 1, 1], [], []>} : vector<8x3xbf16>, vector<3x256xbf16>, vector<8x256xf32> -> vector<8x256xf32>
    %18 = arith.addf %10, %17 : vector<8x256xf32>
    %c2 = arith.constant 2 : index
    %c0_17 = arith.constant 0 : index
    %c0_18 = arith.constant 0 : index
    %19 = vector.load %arg2[%c2, %c0_17, %c0_18] : memref<9x256x256xbf16, #tpu.memory_space<vmem>>, vector<1x256x256xbf16>
    %20 = vector.shape_cast %19 : vector<1x256x256xbf16> to vector<256x256xbf16>
    %cst_19 = arith.constant dense<0.000000e+00> : vector<3x256xf32>
    %21 = tpu.matmul %1, %20, %cst_19 {dimension_numbers = #tpu.dot_dimension_numbers<[1], [0], [0], [1], [0, 0, 1, 1], [], []>} : vector<3x256xbf16>, vector<256x256xbf16>, vector<3x256xf32> -> vector<3x256xf32>
    %c2_20 = arith.constant 2 : index
    %c0_21 = arith.constant 0 : index
    %c0_22 = arith.constant 0 : index
    %22 = vector.load %arg5[%c2_20, %c0_21, %c0_22] : memref<9x8x3xbf16, #tpu.memory_space<vmem>>, vector<1x8x3xbf16>
    %23 = vector.shape_cast %22 : vector<1x8x3xbf16> to vector<8x3xbf16>
    %24 = arith.truncf %21 : vector<3x256xf32> to vector<3x256xbf16>
    %cst_23 = arith.constant dense<0.000000e+00> : vector<8x256xf32>
    %25 = tpu.matmul %23, %24, %cst_23 {dimension_numbers = #tpu.dot_dimension_numbers<[1], [0], [0], [1], [0, 0, 1, 1], [], []>} : vector<8x3xbf16>, vector<3x256xbf16>, vector<8x256xf32> -> vector<8x256xf32>
    %26 = arith.addf %18, %25 : vector<8x256xf32>
    %c3 = arith.constant 3 : index
    %c0_24 = arith.constant 0 : index
    %c0_25 = arith.constant 0 : index
    %27 = vector.load %arg2[%c3, %c0_24, %c0_25] : memref<9x256x256xbf16, #tpu.memory_space<vmem>>, vector<1x256x256xbf16>
    %28 = vector.shape_cast %27 : vector<1x256x256xbf16> to vector<256x256xbf16>
    %cst_26 = arith.constant dense<0.000000e+00> : vector<3x256xf32>
    %29 = tpu.matmul %1, %28, %cst_26 {dimension_numbers = #tpu.dot_dimension_numbers<[1], [0], [0], [1], [0, 0, 1, 1], [], []>} : vector<3x256xbf16>, vector<256x256xbf16>, vector<3x256xf32> -> vector<3x256xf32>
    %c3_27 = arith.constant 3 : index
    %c0_28 = arith.constant 0 : index
    %c0_29 = arith.constant 0 : index
    %30 = vector.load %arg5[%c3_27, %c0_28, %c0_29] : memref<9x8x3xbf16, #tpu.memory_space<vmem>>, vector<1x8x3xbf16>
    %31 = vector.shape_cast %30 : vector<1x8x3xbf16> to vector<8x3xbf16>
    %32 = arith.truncf %29 : vector<3x256xf32> to vector<3x256xbf16>
    %cst_30 = arith.constant dense<0.000000e+00> : vector<8x256xf32>
    %33 = tpu.matmul %31, %32, %cst_30 {dimension_numbers = #tpu.dot_dimension_numbers<[1], [0], [0], [1], [0, 0, 1, 1], [], []>} : vector<8x3xbf16>, vector<3x256xbf16>, vector<8x256xf32> -> vector<8x256xf32>
    %34 = arith.addf %26, %33 : vector<8x256xf32>
    %c4 = arith.constant 4 : index
    %c0_31 = arith.constant 0 : index
    %c0_32 = arith.constant 0 : index
    %35 = vector.load %arg2[%c4, %c0_31, %c0_32] : memref<9x256x256xbf16, #tpu.memory_space<vmem>>, vector<1x256x256xbf16>
    %36 = vector.shape_cast %35 : vector<1x256x256xbf16> to vector<256x256xbf16>
    %cst_33 = arith.constant dense<0.000000e+00> : vector<3x256xf32>
    %37 = tpu.matmul %1, %36, %cst_33 {dimension_numbers = #tpu.dot_dimension_numbers<[1], [0], [0], [1], [0, 0, 1, 1], [], []>} : vector<3x256xbf16>, vector<256x256xbf16>, vector<3x256xf32> -> vector<3x256xf32>
    %c4_34 = arith.constant 4 : index
    %c0_35 = arith.constant 0 : index
    %c0_36 = arith.constant 0 : index
    %38 = vector.load %arg5[%c4_34, %c0_35, %c0_36] : memref<9x8x3xbf16, #tpu.memory_space<vmem>>, vector<1x8x3xbf16>
    %39 = vector.shape_cast %38 : vector<1x8x3xbf16> to vector<8x3xbf16>
    %40 = arith.truncf %37 : vector<3x256xf32> to vector<3x256xbf16>
    %cst_37 = arith.constant dense<0.000000e+00> : vector<8x256xf32>
    %41 = tpu.matmul %39, %40, %cst_37 {dimension_numbers = #tpu.dot_dimension_numbers<[1], [0], [0], [1], [0, 0, 1, 1], [], []>} : vector<8x3xbf16>, vector<3x256xbf16>, vector<8x256xf32> -> vector<8x256xf32>
    %42 = arith.addf %34, %41 : vector<8x256xf32>
    %c5 = arith.constant 5 : index
    %c0_38 = arith.constant 0 : index
    %c0_39 = arith.constant 0 : index
    %43 = vector.load %arg2[%c5, %c0_38, %c0_39] : memref<9x256x256xbf16, #tpu.memory_space<vmem>>, vector<1x256x256xbf16>
    %44 = vector.shape_cast %43 : vector<1x256x256xbf16> to vector<256x256xbf16>
    %cst_40 = arith.constant dense<0.000000e+00> : vector<3x256xf32>
    %45 = tpu.matmul %1, %44, %cst_40 {dimension_numbers = #tpu.dot_dimension_numbers<[1], [0], [0], [1], [0, 0, 1, 1], [], []>} : vector<3x256xbf16>, vector<256x256xbf16>, vector<3x256xf32> -> vector<3x256xf32>
    %c5_41 = arith.constant 5 : index
    %c0_42 = arith.constant 0 : index
    %c0_43 = arith.constant 0 : index
    %46 = vector.load %arg5[%c5_41, %c0_42, %c0_43] : memref<9x8x3xbf16, #tpu.memory_space<vmem>>, vector<1x8x3xbf16>
    %47 = vector.shape_cast %46 : vector<1x8x3xbf16> to vector<8x3xbf16>
    %48 = arith.truncf %45 : vector<3x256xf32> to vector<3x256xbf16>
    %cst_44 = arith.constant dense<0.000000e+00> : vector<8x256xf32>
    %49 = tpu.matmul %47, %48, %cst_44 {dimension_numbers = #tpu.dot_dimension_numbers<[1], [0], [0], [1], [0, 0, 1, 1], [], []>} : vector<8x3xbf16>, vector<3x256xbf16>, vector<8x256xf32> -> vector<8x256xf32>
    %50 = arith.addf %42, %49 : vector<8x256xf32>
    %c6 = arith.constant 6 : index
    %c0_45 = arith.constant 0 : index
    %c0_46 = arith.constant 0 : index
    %51 = vector.load %arg2[%c6, %c0_45, %c0_46] : memref<9x256x256xbf16, #tpu.memory_space<vmem>>, vector<1x256x256xbf16>
    %52 = vector.shape_cast %51 : vector<1x256x256xbf16> to vector<256x256xbf16>
    %cst_47 = arith.constant dense<0.000000e+00> : vector<3x256xf32>
    %53 = tpu.matmul %1, %52, %cst_47 {dimension_numbers = #tpu.dot_dimension_numbers<[1], [0], [0], [1], [0, 0, 1, 1], [], []>} : vector<3x256xbf16>, vector<256x256xbf16>, vector<3x256xf32> -> vector<3x256xf32>
    %c6_48 = arith.constant 6 : index
    %c0_49 = arith.constant 0 : index
    %c0_50 = arith.constant 0 : index
    %54 = vector.load %arg5[%c6_48, %c0_49, %c0_50] : memref<9x8x3xbf16, #tpu.memory_space<vmem>>, vector<1x8x3xbf16>
    %55 = vector.shape_cast %54 : vector<1x8x3xbf16> to vector<8x3xbf16>
    %56 = arith.truncf %53 : vector<3x256xf32> to vector<3x256xbf16>
    %cst_51 = arith.constant dense<0.000000e+00> : vector<8x256xf32>
    %57 = tpu.matmul %55, %56, %cst_51 {dimension_numbers = #tpu.dot_dimension_numbers<[1], [0], [0], [1], [0, 0, 1, 1], [], []>} : vector<8x3xbf16>, vector<3x256xbf16>, vector<8x256xf32> -> vector<8x256xf32>
    %58 = arith.addf %50, %57 : vector<8x256xf32>
    %c7 = arith.constant 7 : index
    %c0_52 = arith.constant 0 : index
    %c0_53 = arith.constant 0 : index
    %59 = vector.load %arg2[%c7, %c0_52, %c0_53] : memref<9x256x256xbf16, #tpu.memory_space<vmem>>, vector<1x256x256xbf16>
    %60 = vector.shape_cast %59 : vector<1x256x256xbf16> to vector<256x256xbf16>
    %cst_54 = arith.constant dense<0.000000e+00> : vector<3x256xf32>
    %61 = tpu.matmul %1, %60, %cst_54 {dimension_numbers = #tpu.dot_dimension_numbers<[1], [0], [0], [1], [0, 0, 1, 1], [], []>} : vector<3x256xbf16>, vector<256x256xbf16>, vector<3x256xf32> -> vector<3x256xf32>
    %c7_55 = arith.constant 7 : index
    %c0_56 = arith.constant 0 : index
    %c0_57 = arith.constant 0 : index
    %62 = vector.load %arg5[%c7_55, %c0_56, %c0_57] : memref<9x8x3xbf16, #tpu.memory_space<vmem>>, vector<1x8x3xbf16>
    %63 = vector.shape_cast %62 : vector<1x8x3xbf16> to vector<8x3xbf16>
    %64 = arith.truncf %61 : vector<3x256xf32> to vector<3x256xbf16>
    %cst_58 = arith.constant dense<0.000000e+00> : vector<8x256xf32>
    %65 = tpu.matmul %63, %64, %cst_58 {dimension_numbers = #tpu.dot_dimension_numbers<[1], [0], [0], [1], [0, 0, 1, 1], [], []>} : vector<8x3xbf16>, vector<3x256xbf16>, vector<8x256xf32> -> vector<8x256xf32>
    %66 = arith.addf %58, %65 : vector<8x256xf32>
    %c8 = arith.constant 8 : index
    %c0_59 = arith.constant 0 : index
    %c0_60 = arith.constant 0 : index
    %67 = vector.load %arg2[%c8, %c0_59, %c0_60] : memref<9x256x256xbf16, #tpu.memory_space<vmem>>, vector<1x256x256xbf16>
    %68 = vector.shape_cast %67 : vector<1x256x256xbf16> to vector<256x256xbf16>
    %cst_61 = arith.constant dense<0.000000e+00> : vector<3x256xf32>
    %69 = tpu.matmul %1, %68, %cst_61 {dimension_numbers = #tpu.dot_dimension_numbers<[1], [0], [0], [1], [0, 0, 1, 1], [], []>} : vector<3x256xbf16>, vector<256x256xbf16>, vector<3x256xf32> -> vector<3x256xf32>
    %c8_62 = arith.constant 8 : index
    %c0_63 = arith.constant 0 : index
    %c0_64 = arith.constant 0 : index
    %70 = vector.load %arg5[%c8_62, %c0_63, %c0_64] : memref<9x8x3xbf16, #tpu.memory_space<vmem>>, vector<1x8x3xbf16>
    %71 = vector.shape_cast %70 : vector<1x8x3xbf16> to vector<8x3xbf16>
    %72 = arith.truncf %69 : vector<3x256xf32> to vector<3x256xbf16>
    %cst_65 = arith.constant dense<0.000000e+00> : vector<8x256xf32>
    %73 = tpu.matmul %71, %72, %cst_65 {dimension_numbers = #tpu.dot_dimension_numbers<[1], [0], [0], [1], [0, 0, 1, 1], [], []>} : vector<8x3xbf16>, vector<3x256xbf16>, vector<8x256xf32> -> vector<8x256xf32>
    %74 = arith.addf %66, %73 : vector<8x256xf32>
    %c0_66 = arith.constant 0 : index
    %c0_67 = arith.constant 0 : index
    %75 = vector.load %arg6[%c0_66, %c0_67] : memref<8x1xf32, #tpu.memory_space<vmem>>, vector<8x1xf32>
    %76 = vector.broadcast %75 : vector<8x1xf32> to vector<8x256xf32>
    %77 = arith.mulf %74, %76 : vector<8x256xf32>
    %c0_68 = arith.constant 0 : index
    %c0_69 = arith.constant 0 : index
    %78 = vector.load %arg7[%c0_68, %c0_69] : memref<8x1xf32, #tpu.memory_space<vmem>>, vector<8x1xf32>
    %79 = vector.broadcast %78 : vector<8x1xf32> to vector<8x256xf32>
    %80 = arith.addf %77, %79 : vector<8x256xf32>
    %cst_70 = arith.constant 0.000000e+00 : f32
    %81 = vector.broadcast %cst_70 : f32 to vector<8x256xf32>
    %82 = arith.maximumf %80, %81 : vector<8x256xf32>
    %83 = arith.truncf %82 : vector<8x256xf32> to vector<8x256xbf16>
    %cst_71 = arith.constant 0.000000e+00 : f32
    %84 = vector.broadcast %cst_71 : f32 to vector<8x256xf32>
    %c0_72 = arith.constant 0 : index
    %c0_73 = arith.constant 0 : index
    %c0_74 = arith.constant 0 : index
    %85 = vector.load %arg2[%c0_72, %c0_73, %c0_74] : memref<9x256x256xbf16, #tpu.memory_space<vmem>>, vector<1x256x256xbf16>
    %86 = vector.shape_cast %85 : vector<1x256x256xbf16> to vector<256x256xbf16>
    %cst_75 = arith.constant dense<0.000000e+00> : vector<8x256xf32>
    %87 = tpu.matmul %83, %86, %cst_75 {dimension_numbers = #tpu.dot_dimension_numbers<[1], [0], [0], [1], [0, 0, 1, 1], [], []>} : vector<8x256xbf16>, vector<256x256xbf16>, vector<8x256xf32> -> vector<8x256xf32>
    %c0_76 = arith.constant 0 : index
    %c0_77 = arith.constant 0 : index
    %c0_78 = arith.constant 0 : index
    %88 = vector.load %arg8[%c0_76, %c0_77, %c0_78] : memref<9x8x8xbf16, #tpu.memory_space<vmem>>, vector<1x8x8xbf16>
    %89 = vector.shape_cast %88 : vector<1x8x8xbf16> to vector<8x8xbf16>
    %90 = arith.truncf %87 : vector<8x256xf32> to vector<8x256xbf16>
    %cst_79 = arith.constant dense<0.000000e+00> : vector<8x256xf32>
    %91 = tpu.matmul %89, %90, %cst_79 {dimension_numbers = #tpu.dot_dimension_numbers<[1], [0], [0], [1], [0, 0, 1, 1], [], []>} : vector<8x8xbf16>, vector<8x256xbf16>, vector<8x256xf32> -> vector<8x256xf32>
    %92 = arith.addf %84, %91 : vector<8x256xf32>
    %c1_80 = arith.constant 1 : index
    %c0_81 = arith.constant 0 : index
    %c0_82 = arith.constant 0 : index
    %93 = vector.load %arg2[%c1_80, %c0_81, %c0_82] : memref<9x256x256xbf16, #tpu.memory_space<vmem>>, vector<1x256x256xbf16>
    %94 = vector.shape_cast %93 : vector<1x256x256xbf16> to vector<256x256xbf16>
    %cst_83 = arith.constant dense<0.000000e+00> : vector<8x256xf32>
    %95 = tpu.matmul %83, %94, %cst_83 {dimension_numbers = #tpu.dot_dimension_numbers<[1], [0], [0], [1], [0, 0, 1, 1], [], []>} : vector<8x256xbf16>, vector<256x256xbf16>, vector<8x256xf32> -> vector<8x256xf32>
    %c1_84 = arith.constant 1 : index
    %c0_85 = arith.constant 0 : index
    %c0_86 = arith.constant 0 : index
    %96 = vector.load %arg8[%c1_84, %c0_85, %c0_86] : memref<9x8x8xbf16, #tpu.memory_space<vmem>>, vector<1x8x8xbf16>
    %97 = vector.shape_cast %96 : vector<1x8x8xbf16> to vector<8x8xbf16>
    %98 = arith.truncf %95 : vector<8x256xf32> to vector<8x256xbf16>
    %cst_87 = arith.constant dense<0.000000e+00> : vector<8x256xf32>
    %99 = tpu.matmul %97, %98, %cst_87 {dimension_numbers = #tpu.dot_dimension_numbers<[1], [0], [0], [1], [0, 0, 1, 1], [], []>} : vector<8x8xbf16>, vector<8x256xbf16>, vector<8x256xf32> -> vector<8x256xf32>
    %100 = arith.addf %92, %99 : vector<8x256xf32>
    %c2_88 = arith.constant 2 : index
    %c0_89 = arith.constant 0 : index
    %c0_90 = arith.constant 0 : index
    %101 = vector.load %arg2[%c2_88, %c0_89, %c0_90] : memref<9x256x256xbf16, #tpu.memory_space<vmem>>, vector<1x256x256xbf16>
    %102 = vector.shape_cast %101 : vector<1x256x256xbf16> to vector<256x256xbf16>
    %cst_91 = arith.constant dense<0.000000e+00> : vector<8x256xf32>
    %103 = tpu.matmul %83, %102, %cst_91 {dimension_numbers = #tpu.dot_dimension_numbers<[1], [0], [0], [1], [0, 0, 1, 1], [], []>} : vector<8x256xbf16>, vector<256x256xbf16>, vector<8x256xf32> -> vector<8x256xf32>
    %c2_92 = arith.constant 2 : index
    %c0_93 = arith.constant 0 : index
    %c0_94 = arith.constant 0 : index
    %104 = vector.load %arg8[%c2_92, %c0_93, %c0_94] : memref<9x8x8xbf16, #tpu.memory_space<vmem>>, vector<1x8x8xbf16>
    %105 = vector.shape_cast %104 : vector<1x8x8xbf16> to vector<8x8xbf16>
    %106 = arith.truncf %103 : vector<8x256xf32> to vector<8x256xbf16>
    %cst_95 = arith.constant dense<0.000000e+00> : vector<8x256xf32>
    %107 = tpu.matmul %105, %106, %cst_95 {dimension_numbers = #tpu.dot_dimension_numbers<[1], [0], [0], [1], [0, 0, 1, 1], [], []>} : vector<8x8xbf16>, vector<8x256xbf16>, vector<8x256xf32> -> vector<8x256xf32>
    %108 = arith.addf %100, %107 : vector<8x256xf32>
    %c3_96 = arith.constant 3 : index
    %c0_97 = arith.constant 0 : index
    %c0_98 = arith.constant 0 : index
    %109 = vector.load %arg2[%c3_96, %c0_97, %c0_98] : memref<9x256x256xbf16, #tpu.memory_space<vmem>>, vector<1x256x256xbf16>
    %110 = vector.shape_cast %109 : vector<1x256x256xbf16> to vector<256x256xbf16>
    %cst_99 = arith.constant dense<0.000000e+00> : vector<8x256xf32>
    %111 = tpu.matmul %83, %110, %cst_99 {dimension_numbers = #tpu.dot_dimension_numbers<[1], [0], [0], [1], [0, 0, 1, 1], [], []>} : vector<8x256xbf16>, vector<256x256xbf16>, vector<8x256xf32> -> vector<8x256xf32>
    %c3_100 = arith.constant 3 : index
    %c0_101 = arith.constant 0 : index
    %c0_102 = arith.constant 0 : index
    %112 = vector.load %arg8[%c3_100, %c0_101, %c0_102] : memref<9x8x8xbf16, #tpu.memory_space<vmem>>, vector<1x8x8xbf16>
    %113 = vector.shape_cast %112 : vector<1x8x8xbf16> to vector<8x8xbf16>
    %114 = arith.truncf %111 : vector<8x256xf32> to vector<8x256xbf16>
    %cst_103 = arith.constant dense<0.000000e+00> : vector<8x256xf32>
    %115 = tpu.matmul %113, %114, %cst_103 {dimension_numbers = #tpu.dot_dimension_numbers<[1], [0], [0], [1], [0, 0, 1, 1], [], []>} : vector<8x8xbf16>, vector<8x256xbf16>, vector<8x256xf32> -> vector<8x256xf32>
    %116 = arith.addf %108, %115 : vector<8x256xf32>
    %c4_104 = arith.constant 4 : index
    %c0_105 = arith.constant 0 : index
    %c0_106 = arith.constant 0 : index
    %117 = vector.load %arg2[%c4_104, %c0_105, %c0_106] : memref<9x256x256xbf16, #tpu.memory_space<vmem>>, vector<1x256x256xbf16>
    %118 = vector.shape_cast %117 : vector<1x256x256xbf16> to vector<256x256xbf16>
    %cst_107 = arith.constant dense<0.000000e+00> : vector<8x256xf32>
    %119 = tpu.matmul %83, %118, %cst_107 {dimension_numbers = #tpu.dot_dimension_numbers<[1], [0], [0], [1], [0, 0, 1, 1], [], []>} : vector<8x256xbf16>, vector<256x256xbf16>, vector<8x256xf32> -> vector<8x256xf32>
    %c4_108 = arith.constant 4 : index
    %c0_109 = arith.constant 0 : index
    %c0_110 = arith.constant 0 : index
    %120 = vector.load %arg8[%c4_108, %c0_109, %c0_110] : memref<9x8x8xbf16, #tpu.memory_space<vmem>>, vector<1x8x8xbf16>
    %121 = vector.shape_cast %120 : vector<1x8x8xbf16> to vector<8x8xbf16>
    %122 = arith.truncf %119 : vector<8x256xf32> to vector<8x256xbf16>
    %cst_111 = arith.constant dense<0.000000e+00> : vector<8x256xf32>
    %123 = tpu.matmul %121, %122, %cst_111 {dimension_numbers = #tpu.dot_dimension_numbers<[1], [0], [0], [1], [0, 0, 1, 1], [], []>} : vector<8x8xbf16>, vector<8x256xbf16>, vector<8x256xf32> -> vector<8x256xf32>
    %124 = arith.addf %116, %123 : vector<8x256xf32>
    %c5_112 = arith.constant 5 : index
    %c0_113 = arith.constant 0 : index
    %c0_114 = arith.constant 0 : index
    %125 = vector.load %arg2[%c5_112, %c0_113, %c0_114] : memref<9x256x256xbf16, #tpu.memory_space<vmem>>, vector<1x256x256xbf16>
    %126 = vector.shape_cast %125 : vector<1x256x256xbf16> to vector<256x256xbf16>
    %cst_115 = arith.constant dense<0.000000e+00> : vector<8x256xf32>
    %127 = tpu.matmul %83, %126, %cst_115 {dimension_numbers = #tpu.dot_dimension_numbers<[1], [0], [0], [1], [0, 0, 1, 1], [], []>} : vector<8x256xbf16>, vector<256x256xbf16>, vector<8x256xf32> -> vector<8x256xf32>
    %c5_116 = arith.constant 5 : index
    %c0_117 = arith.constant 0 : index
    %c0_118 = arith.constant 0 : index
    %128 = vector.load %arg8[%c5_116, %c0_117, %c0_118] : memref<9x8x8xbf16, #tpu.memory_space<vmem>>, vector<1x8x8xbf16>
    %129 = vector.shape_cast %128 : vector<1x8x8xbf16> to vector<8x8xbf16>
    %130 = arith.truncf %127 : vector<8x256xf32> to vector<8x256xbf16>
    %cst_119 = arith.constant dense<0.000000e+00> : vector<8x256xf32>
    %131 = tpu.matmul %129, %130, %cst_119 {dimension_numbers = #tpu.dot_dimension_numbers<[1], [0], [0], [1], [0, 0, 1, 1], [], []>} : vector<8x8xbf16>, vector<8x256xbf16>, vector<8x256xf32> -> vector<8x256xf32>
    %132 = arith.addf %124, %131 : vector<8x256xf32>
    %c6_120 = arith.constant 6 : index
    %c0_121 = arith.constant 0 : index
    %c0_122 = arith.constant 0 : index
    %133 = vector.load %arg2[%c6_120, %c0_121, %c0_122] : memref<9x256x256xbf16, #tpu.memory_space<vmem>>, vector<1x256x256xbf16>
    %134 = vector.shape_cast %133 : vector<1x256x256xbf16> to vector<256x256xbf16>
    %cst_123 = arith.constant dense<0.000000e+00> : vector<8x256xf32>
    %135 = tpu.matmul %83, %134, %cst_123 {dimension_numbers = #tpu.dot_dimension_numbers<[1], [0], [0], [1], [0, 0, 1, 1], [], []>} : vector<8x256xbf16>, vector<256x256xbf16>, vector<8x256xf32> -> vector<8x256xf32>
    %c6_124 = arith.constant 6 : index
    %c0_125 = arith.constant 0 : index
    %c0_126 = arith.constant 0 : index
    %136 = vector.load %arg8[%c6_124, %c0_125, %c0_126] : memref<9x8x8xbf16, #tpu.memory_space<vmem>>, vector<1x8x8xbf16>
    %137 = vector.shape_cast %136 : vector<1x8x8xbf16> to vector<8x8xbf16>
    %138 = arith.truncf %135 : vector<8x256xf32> to vector<8x256xbf16>
    %cst_127 = arith.constant dense<0.000000e+00> : vector<8x256xf32>
    %139 = tpu.matmul %137, %138, %cst_127 {dimension_numbers = #tpu.dot_dimension_numbers<[1], [0], [0], [1], [0, 0, 1, 1], [], []>} : vector<8x8xbf16>, vector<8x256xbf16>, vector<8x256xf32> -> vector<8x256xf32>
    %140 = arith.addf %132, %139 : vector<8x256xf32>
    %c7_128 = arith.constant 7 : index
    %c0_129 = arith.constant 0 : index
    %c0_130 = arith.constant 0 : index
    %141 = vector.load %arg2[%c7_128, %c0_129, %c0_130] : memref<9x256x256xbf16, #tpu.memory_space<vmem>>, vector<1x256x256xbf16>
    %142 = vector.shape_cast %141 : vector<1x256x256xbf16> to vector<256x256xbf16>
    %cst_131 = arith.constant dense<0.000000e+00> : vector<8x256xf32>
    %143 = tpu.matmul %83, %142, %cst_131 {dimension_numbers = #tpu.dot_dimension_numbers<[1], [0], [0], [1], [0, 0, 1, 1], [], []>} : vector<8x256xbf16>, vector<256x256xbf16>, vector<8x256xf32> -> vector<8x256xf32>
    %c7_132 = arith.constant 7 : index
    %c0_133 = arith.constant 0 : index
    %c0_134 = arith.constant 0 : index
    %144 = vector.load %arg8[%c7_132, %c0_133, %c0_134] : memref<9x8x8xbf16, #tpu.memory_space<vmem>>, vector<1x8x8xbf16>
    %145 = vector.shape_cast %144 : vector<1x8x8xbf16> to vector<8x8xbf16>
    %146 = arith.truncf %143 : vector<8x256xf32> to vector<8x256xbf16>
    %cst_135 = arith.constant dense<0.000000e+00> : vector<8x256xf32>
    %147 = tpu.matmul %145, %146, %cst_135 {dimension_numbers = #tpu.dot_dimension_numbers<[1], [0], [0], [1], [0, 0, 1, 1], [], []>} : vector<8x8xbf16>, vector<8x256xbf16>, vector<8x256xf32> -> vector<8x256xf32>
    %148 = arith.addf %140, %147 : vector<8x256xf32>
    %c8_136 = arith.constant 8 : index
    %c0_137 = arith.constant 0 : index
    %c0_138 = arith.constant 0 : index
    %149 = vector.load %arg2[%c8_136, %c0_137, %c0_138] : memref<9x256x256xbf16, #tpu.memory_space<vmem>>, vector<1x256x256xbf16>
    %150 = vector.shape_cast %149 : vector<1x256x256xbf16> to vector<256x256xbf16>
    %cst_139 = arith.constant dense<0.000000e+00> : vector<8x256xf32>
    %151 = tpu.matmul %83, %150, %cst_139 {dimension_numbers = #tpu.dot_dimension_numbers<[1], [0], [0], [1], [0, 0, 1, 1], [], []>} : vector<8x256xbf16>, vector<256x256xbf16>, vector<8x256xf32> -> vector<8x256xf32>
    %c8_140 = arith.constant 8 : index
    %c0_141 = arith.constant 0 : index
    %c0_142 = arith.constant 0 : index
    %152 = vector.load %arg8[%c8_140, %c0_141, %c0_142] : memref<9x8x8xbf16, #tpu.memory_space<vmem>>, vector<1x8x8xbf16>
    %153 = vector.shape_cast %152 : vector<1x8x8xbf16> to vector<8x8xbf16>
    %154 = arith.truncf %151 : vector<8x256xf32> to vector<8x256xbf16>
    %cst_143 = arith.constant dense<0.000000e+00> : vector<8x256xf32>
    %155 = tpu.matmul %153, %154, %cst_143 {dimension_numbers = #tpu.dot_dimension_numbers<[1], [0], [0], [1], [0, 0, 1, 1], [], []>} : vector<8x8xbf16>, vector<8x256xbf16>, vector<8x256xf32> -> vector<8x256xf32>
    %156 = arith.addf %148, %155 : vector<8x256xf32>
    %c0_144 = arith.constant 0 : index
    %c0_145 = arith.constant 0 : index
    %157 = vector.load %arg9[%c0_144, %c0_145] : memref<8x1xf32, #tpu.memory_space<vmem>>, vector<8x1xf32>
    %158 = vector.broadcast %157 : vector<8x1xf32> to vector<8x256xf32>
    %159 = arith.mulf %156, %158 : vector<8x256xf32>
    %c0_146 = arith.constant 0 : index
    %c0_147 = arith.constant 0 : index
    %160 = vector.load %arg10[%c0_146, %c0_147] : memref<8x1xf32, #tpu.memory_space<vmem>>, vector<8x1xf32>
    %161 = vector.broadcast %160 : vector<8x1xf32> to vector<8x256xf32>
    %162 = arith.addf %159, %161 : vector<8x256xf32>
    %cst_148 = arith.constant 0.000000e+00 : f32
    %163 = vector.broadcast %cst_148 : f32 to vector<8x256xf32>
    %164 = arith.maximumf %162, %163 : vector<8x256xf32>
    %165 = arith.truncf %164 : vector<8x256xf32> to vector<8x256xbf16>
    %cst_149 = arith.constant 0.000000e+00 : f32
    %166 = vector.broadcast %cst_149 : f32 to vector<8x256xf32>
    %c0_150 = arith.constant 0 : index
    %c0_151 = arith.constant 0 : index
    %c0_152 = arith.constant 0 : index
    %167 = vector.load %arg2[%c0_150, %c0_151, %c0_152] : memref<9x256x256xbf16, #tpu.memory_space<vmem>>, vector<1x256x256xbf16>
    %168 = vector.shape_cast %167 : vector<1x256x256xbf16> to vector<256x256xbf16>
    %cst_153 = arith.constant dense<0.000000e+00> : vector<8x256xf32>
    %169 = tpu.matmul %165, %168, %cst_153 {dimension_numbers = #tpu.dot_dimension_numbers<[1], [0], [0], [1], [0, 0, 1, 1], [], []>} : vector<8x256xbf16>, vector<256x256xbf16>, vector<8x256xf32> -> vector<8x256xf32>
    %c0_154 = arith.constant 0 : index
    %c0_155 = arith.constant 0 : index
    %c0_156 = arith.constant 0 : index
    %170 = vector.load %arg11[%c0_154, %c0_155, %c0_156] : memref<9x8x8xbf16, #tpu.memory_space<vmem>>, vector<1x8x8xbf16>
    %171 = vector.shape_cast %170 : vector<1x8x8xbf16> to vector<8x8xbf16>
    %172 = arith.truncf %169 : vector<8x256xf32> to vector<8x256xbf16>
    %cst_157 = arith.constant dense<0.000000e+00> : vector<8x256xf32>
    %173 = tpu.matmul %171, %172, %cst_157 {dimension_numbers = #tpu.dot_dimension_numbers<[1], [0], [0], [1], [0, 0, 1, 1], [], []>} : vector<8x8xbf16>, vector<8x256xbf16>, vector<8x256xf32> -> vector<8x256xf32>
    %174 = arith.addf %166, %173 : vector<8x256xf32>
    %c1_158 = arith.constant 1 : index
    %c0_159 = arith.constant 0 : index
    %c0_160 = arith.constant 0 : index
    %175 = vector.load %arg2[%c1_158, %c0_159, %c0_160] : memref<9x256x256xbf16, #tpu.memory_space<vmem>>, vector<1x256x256xbf16>
    %176 = vector.shape_cast %175 : vector<1x256x256xbf16> to vector<256x256xbf16>
    %cst_161 = arith.constant dense<0.000000e+00> : vector<8x256xf32>
    %177 = tpu.matmul %165, %176, %cst_161 {dimension_numbers = #tpu.dot_dimension_numbers<[1], [0], [0], [1], [0, 0, 1, 1], [], []>} : vector<8x256xbf16>, vector<256x256xbf16>, vector<8x256xf32> -> vector<8x256xf32>
    %c1_162 = arith.constant 1 : index
    %c0_163 = arith.constant 0 : index
    %c0_164 = arith.constant 0 : index
    %178 = vector.load %arg11[%c1_162, %c0_163, %c0_164] : memref<9x8x8xbf16, #tpu.memory_space<vmem>>, vector<1x8x8xbf16>
    %179 = vector.shape_cast %178 : vector<1x8x8xbf16> to vector<8x8xbf16>
    %180 = arith.truncf %177 : vector<8x256xf32> to vector<8x256xbf16>
    %cst_165 = arith.constant dense<0.000000e+00> : vector<8x256xf32>
    %181 = tpu.matmul %179, %180, %cst_165 {dimension_numbers = #tpu.dot_dimension_numbers<[1], [0], [0], [1], [0, 0, 1, 1], [], []>} : vector<8x8xbf16>, vector<8x256xbf16>, vector<8x256xf32> -> vector<8x256xf32>
    %182 = arith.addf %174, %181 : vector<8x256xf32>
    %c2_166 = arith.constant 2 : index
    %c0_167 = arith.constant 0 : index
    %c0_168 = arith.constant 0 : index
    %183 = vector.load %arg2[%c2_166, %c0_167, %c0_168] : memref<9x256x256xbf16, #tpu.memory_space<vmem>>, vector<1x256x256xbf16>
    %184 = vector.shape_cast %183 : vector<1x256x256xbf16> to vector<256x256xbf16>
    %cst_169 = arith.constant dense<0.000000e+00> : vector<8x256xf32>
    %185 = tpu.matmul %165, %184, %cst_169 {dimension_numbers = #tpu.dot_dimension_numbers<[1], [0], [0], [1], [0, 0, 1, 1], [], []>} : vector<8x256xbf16>, vector<256x256xbf16>, vector<8x256xf32> -> vector<8x256xf32>
    %c2_170 = arith.constant 2 : index
    %c0_171 = arith.constant 0 : index
    %c0_172 = arith.constant 0 : index
    %186 = vector.load %arg11[%c2_170, %c0_171, %c0_172] : memref<9x8x8xbf16, #tpu.memory_space<vmem>>, vector<1x8x8xbf16>
    %187 = vector.shape_cast %186 : vector<1x8x8xbf16> to vector<8x8xbf16>
    %188 = arith.truncf %185 : vector<8x256xf32> to vector<8x256xbf16>
    %cst_173 = arith.constant dense<0.000000e+00> : vector<8x256xf32>
    %189 = tpu.matmul %187, %188, %cst_173 {dimension_numbers = #tpu.dot_dimension_numbers<[1], [0], [0], [1], [0, 0, 1, 1], [], []>} : vector<8x8xbf16>, vector<8x256xbf16>, vector<8x256xf32> -> vector<8x256xf32>
    %190 = arith.addf %182, %189 : vector<8x256xf32>
    %c3_174 = arith.constant 3 : index
    %c0_175 = arith.constant 0 : index
    %c0_176 = arith.constant 0 : index
    %191 = vector.load %arg2[%c3_174, %c0_175, %c0_176] : memref<9x256x256xbf16, #tpu.memory_space<vmem>>, vector<1x256x256xbf16>
    %192 = vector.shape_cast %191 : vector<1x256x256xbf16> to vector<256x256xbf16>
    %cst_177 = arith.constant dense<0.000000e+00> : vector<8x256xf32>
    %193 = tpu.matmul %165, %192, %cst_177 {dimension_numbers = #tpu.dot_dimension_numbers<[1], [0], [0], [1], [0, 0, 1, 1], [], []>} : vector<8x256xbf16>, vector<256x256xbf16>, vector<8x256xf32> -> vector<8x256xf32>
    %c3_178 = arith.constant 3 : index
    %c0_179 = arith.constant 0 : index
    %c0_180 = arith.constant 0 : index
    %194 = vector.load %arg11[%c3_178, %c0_179, %c0_180] : memref<9x8x8xbf16, #tpu.memory_space<vmem>>, vector<1x8x8xbf16>
    %195 = vector.shape_cast %194 : vector<1x8x8xbf16> to vector<8x8xbf16>
    %196 = arith.truncf %193 : vector<8x256xf32> to vector<8x256xbf16>
    %cst_181 = arith.constant dense<0.000000e+00> : vector<8x256xf32>
    %197 = tpu.matmul %195, %196, %cst_181 {dimension_numbers = #tpu.dot_dimension_numbers<[1], [0], [0], [1], [0, 0, 1, 1], [], []>} : vector<8x8xbf16>, vector<8x256xbf16>, vector<8x256xf32> -> vector<8x256xf32>
    %198 = arith.addf %190, %197 : vector<8x256xf32>
    %c4_182 = arith.constant 4 : index
    %c0_183 = arith.constant 0 : index
    %c0_184 = arith.constant 0 : index
    %199 = vector.load %arg2[%c4_182, %c0_183, %c0_184] : memref<9x256x256xbf16, #tpu.memory_space<vmem>>, vector<1x256x256xbf16>
    %200 = vector.shape_cast %199 : vector<1x256x256xbf16> to vector<256x256xbf16>
    %cst_185 = arith.constant dense<0.000000e+00> : vector<8x256xf32>
    %201 = tpu.matmul %165, %200, %cst_185 {dimension_numbers = #tpu.dot_dimension_numbers<[1], [0], [0], [1], [0, 0, 1, 1], [], []>} : vector<8x256xbf16>, vector<256x256xbf16>, vector<8x256xf32> -> vector<8x256xf32>
    %c4_186 = arith.constant 4 : index
    %c0_187 = arith.constant 0 : index
    %c0_188 = arith.constant 0 : index
    %202 = vector.load %arg11[%c4_186, %c0_187, %c0_188] : memref<9x8x8xbf16, #tpu.memory_space<vmem>>, vector<1x8x8xbf16>
    %203 = vector.shape_cast %202 : vector<1x8x8xbf16> to vector<8x8xbf16>
    %204 = arith.truncf %201 : vector<8x256xf32> to vector<8x256xbf16>
    %cst_189 = arith.constant dense<0.000000e+00> : vector<8x256xf32>
    %205 = tpu.matmul %203, %204, %cst_189 {dimension_numbers = #tpu.dot_dimension_numbers<[1], [0], [0], [1], [0, 0, 1, 1], [], []>} : vector<8x8xbf16>, vector<8x256xbf16>, vector<8x256xf32> -> vector<8x256xf32>
    %206 = arith.addf %198, %205 : vector<8x256xf32>
    %c5_190 = arith.constant 5 : index
    %c0_191 = arith.constant 0 : index
    %c0_192 = arith.constant 0 : index
    %207 = vector.load %arg2[%c5_190, %c0_191, %c0_192] : memref<9x256x256xbf16, #tpu.memory_space<vmem>>, vector<1x256x256xbf16>
    %208 = vector.shape_cast %207 : vector<1x256x256xbf16> to vector<256x256xbf16>
    %cst_193 = arith.constant dense<0.000000e+00> : vector<8x256xf32>
    %209 = tpu.matmul %165, %208, %cst_193 {dimension_numbers = #tpu.dot_dimension_numbers<[1], [0], [0], [1], [0, 0, 1, 1], [], []>} : vector<8x256xbf16>, vector<256x256xbf16>, vector<8x256xf32> -> vector<8x256xf32>
    %c5_194 = arith.constant 5 : index
    %c0_195 = arith.constant 0 : index
    %c0_196 = arith.constant 0 : index
    %210 = vector.load %arg11[%c5_194, %c0_195, %c0_196] : memref<9x8x8xbf16, #tpu.memory_space<vmem>>, vector<1x8x8xbf16>
    %211 = vector.shape_cast %210 : vector<1x8x8xbf16> to vector<8x8xbf16>
    %212 = arith.truncf %209 : vector<8x256xf32> to vector<8x256xbf16>
    %cst_197 = arith.constant dense<0.000000e+00> : vector<8x256xf32>
    %213 = tpu.matmul %211, %212, %cst_197 {dimension_numbers = #tpu.dot_dimension_numbers<[1], [0], [0], [1], [0, 0, 1, 1], [], []>} : vector<8x8xbf16>, vector<8x256xbf16>, vector<8x256xf32> -> vector<8x256xf32>
    %214 = arith.addf %206, %213 : vector<8x256xf32>
    %c6_198 = arith.constant 6 : index
    %c0_199 = arith.constant 0 : index
    %c0_200 = arith.constant 0 : index
    %215 = vector.load %arg2[%c6_198, %c0_199, %c0_200] : memref<9x256x256xbf16, #tpu.memory_space<vmem>>, vector<1x256x256xbf16>
    %216 = vector.shape_cast %215 : vector<1x256x256xbf16> to vector<256x256xbf16>
    %cst_201 = arith.constant dense<0.000000e+00> : vector<8x256xf32>
    %217 = tpu.matmul %165, %216, %cst_201 {dimension_numbers = #tpu.dot_dimension_numbers<[1], [0], [0], [1], [0, 0, 1, 1], [], []>} : vector<8x256xbf16>, vector<256x256xbf16>, vector<8x256xf32> -> vector<8x256xf32>
    %c6_202 = arith.constant 6 : index
    %c0_203 = arith.constant 0 : index
    %c0_204 = arith.constant 0 : index
    %218 = vector.load %arg11[%c6_202, %c0_203, %c0_204] : memref<9x8x8xbf16, #tpu.memory_space<vmem>>, vector<1x8x8xbf16>
    %219 = vector.shape_cast %218 : vector<1x8x8xbf16> to vector<8x8xbf16>
    %220 = arith.truncf %217 : vector<8x256xf32> to vector<8x256xbf16>
    %cst_205 = arith.constant dense<0.000000e+00> : vector<8x256xf32>
    %221 = tpu.matmul %219, %220, %cst_205 {dimension_numbers = #tpu.dot_dimension_numbers<[1], [0], [0], [1], [0, 0, 1, 1], [], []>} : vector<8x8xbf16>, vector<8x256xbf16>, vector<8x256xf32> -> vector<8x256xf32>
    %222 = arith.addf %214, %221 : vector<8x256xf32>
    %c7_206 = arith.constant 7 : index
    %c0_207 = arith.constant 0 : index
    %c0_208 = arith.constant 0 : index
    %223 = vector.load %arg2[%c7_206, %c0_207, %c0_208] : memref<9x256x256xbf16, #tpu.memory_space<vmem>>, vector<1x256x256xbf16>
    %224 = vector.shape_cast %223 : vector<1x256x256xbf16> to vector<256x256xbf16>
    %cst_209 = arith.constant dense<0.000000e+00> : vector<8x256xf32>
    %225 = tpu.matmul %165, %224, %cst_209 {dimension_numbers = #tpu.dot_dimension_numbers<[1], [0], [0], [1], [0, 0, 1, 1], [], []>} : vector<8x256xbf16>, vector<256x256xbf16>, vector<8x256xf32> -> vector<8x256xf32>
    %c7_210 = arith.constant 7 : index
    %c0_211 = arith.constant 0 : index
    %c0_212 = arith.constant 0 : index
    %226 = vector.load %arg11[%c7_210, %c0_211, %c0_212] : memref<9x8x8xbf16, #tpu.memory_space<vmem>>, vector<1x8x8xbf16>
    %227 = vector.shape_cast %226 : vector<1x8x8xbf16> to vector<8x8xbf16>
    %228 = arith.truncf %225 : vector<8x256xf32> to vector<8x256xbf16>
    %cst_213 = arith.constant dense<0.000000e+00> : vector<8x256xf32>
    %229 = tpu.matmul %227, %228, %cst_213 {dimension_numbers = #tpu.dot_dimension_numbers<[1], [0], [0], [1], [0, 0, 1, 1], [], []>} : vector<8x8xbf16>, vector<8x256xbf16>, vector<8x256xf32> -> vector<8x256xf32>
    %230 = arith.addf %222, %229 : vector<8x256xf32>
    %c8_214 = arith.constant 8 : index
    %c0_215 = arith.constant 0 : index
    %c0_216 = arith.constant 0 : index
    %231 = vector.load %arg2[%c8_214, %c0_215, %c0_216] : memref<9x256x256xbf16, #tpu.memory_space<vmem>>, vector<1x256x256xbf16>
    %232 = vector.shape_cast %231 : vector<1x256x256xbf16> to vector<256x256xbf16>
    %cst_217 = arith.constant dense<0.000000e+00> : vector<8x256xf32>
    %233 = tpu.matmul %165, %232, %cst_217 {dimension_numbers = #tpu.dot_dimension_numbers<[1], [0], [0], [1], [0, 0, 1, 1], [], []>} : vector<8x256xbf16>, vector<256x256xbf16>, vector<8x256xf32> -> vector<8x256xf32>
    %c8_218 = arith.constant 8 : index
    %c0_219 = arith.constant 0 : index
    %c0_220 = arith.constant 0 : index
    %234 = vector.load %arg11[%c8_218, %c0_219, %c0_220] : memref<9x8x8xbf16, #tpu.memory_space<vmem>>, vector<1x8x8xbf16>
    %235 = vector.shape_cast %234 : vector<1x8x8xbf16> to vector<8x8xbf16>
    %236 = arith.truncf %233 : vector<8x256xf32> to vector<8x256xbf16>
    %cst_221 = arith.constant dense<0.000000e+00> : vector<8x256xf32>
    %237 = tpu.matmul %235, %236, %cst_221 {dimension_numbers = #tpu.dot_dimension_numbers<[1], [0], [0], [1], [0, 0, 1, 1], [], []>} : vector<8x8xbf16>, vector<8x256xbf16>, vector<8x256xf32> -> vector<8x256xf32>
    %238 = arith.addf %230, %237 : vector<8x256xf32>
    %c0_222 = arith.constant 0 : index
    %c0_223 = arith.constant 0 : index
    %239 = vector.load %arg12[%c0_222, %c0_223] : memref<8x1xf32, #tpu.memory_space<vmem>>, vector<8x1xf32>
    %240 = vector.broadcast %239 : vector<8x1xf32> to vector<8x256xf32>
    %241 = arith.mulf %238, %240 : vector<8x256xf32>
    %c0_224 = arith.constant 0 : index
    %c0_225 = arith.constant 0 : index
    %242 = vector.load %arg13[%c0_224, %c0_225] : memref<8x1xf32, #tpu.memory_space<vmem>>, vector<8x1xf32>
    %243 = vector.broadcast %242 : vector<8x1xf32> to vector<8x256xf32>
    %244 = arith.addf %241, %243 : vector<8x256xf32>
    %245 = arith.addf %244, %82 : vector<8x256xf32>
    %cst_226 = arith.constant 0.000000e+00 : f32
    %246 = vector.broadcast %cst_226 : f32 to vector<8x256xf32>
    %247 = arith.maximumf %245, %246 : vector<8x256xf32>
    %248 = arith.truncf %247 : vector<8x256xf32> to vector<8x256xbf16>
    %cst_227 = arith.constant 0.000000e+00 : f32
    %249 = vector.broadcast %cst_227 : f32 to vector<16x64xf32>
    %c0_228 = arith.constant 0 : index
    %c0_229 = arith.constant 0 : index
    %c0_230 = arith.constant 0 : index
    %250 = vector.load %arg3[%c0_228, %c0_229, %c0_230] : memref<9x256x64xbf16, #tpu.memory_space<vmem>>, vector<1x256x64xbf16>
    %251 = vector.shape_cast %250 : vector<1x256x64xbf16> to vector<256x64xbf16>
    %cst_231 = arith.constant dense<0.000000e+00> : vector<8x64xf32>
    %252 = tpu.matmul %248, %251, %cst_231 {dimension_numbers = #tpu.dot_dimension_numbers<[1], [0], [0], [1], [0, 0, 1, 1], [], []>} : vector<8x256xbf16>, vector<256x64xbf16>, vector<8x64xf32> -> vector<8x64xf32>
    %c0_232 = arith.constant 0 : index
    %c0_233 = arith.constant 0 : index
    %c0_234 = arith.constant 0 : index
    %253 = vector.load %arg14[%c0_232, %c0_233, %c0_234] : memref<9x16x8xbf16, #tpu.memory_space<vmem>>, vector<1x16x8xbf16>
    %254 = vector.shape_cast %253 : vector<1x16x8xbf16> to vector<16x8xbf16>
    %255 = arith.truncf %252 : vector<8x64xf32> to vector<8x64xbf16>
    %cst_235 = arith.constant dense<0.000000e+00> : vector<16x64xf32>
    %256 = tpu.matmul %254, %255, %cst_235 {dimension_numbers = #tpu.dot_dimension_numbers<[1], [0], [0], [1], [0, 0, 1, 1], [], []>} : vector<16x8xbf16>, vector<8x64xbf16>, vector<16x64xf32> -> vector<16x64xf32>
    %257 = arith.addf %249, %256 : vector<16x64xf32>
    %c1_236 = arith.constant 1 : index
    %c0_237 = arith.constant 0 : index
    %c0_238 = arith.constant 0 : index
    %258 = vector.load %arg3[%c1_236, %c0_237, %c0_238] : memref<9x256x64xbf16, #tpu.memory_space<vmem>>, vector<1x256x64xbf16>
    %259 = vector.shape_cast %258 : vector<1x256x64xbf16> to vector<256x64xbf16>
    %cst_239 = arith.constant dense<0.000000e+00> : vector<8x64xf32>
    %260 = tpu.matmul %248, %259, %cst_239 {dimension_numbers = #tpu.dot_dimension_numbers<[1], [0], [0], [1], [0, 0, 1, 1], [], []>} : vector<8x256xbf16>, vector<256x64xbf16>, vector<8x64xf32> -> vector<8x64xf32>
    %c1_240 = arith.constant 1 : index
    %c0_241 = arith.constant 0 : index
    %c0_242 = arith.constant 0 : index
    %261 = vector.load %arg14[%c1_240, %c0_241, %c0_242] : memref<9x16x8xbf16, #tpu.memory_space<vmem>>, vector<1x16x8xbf16>
    %262 = vector.shape_cast %261 : vector<1x16x8xbf16> to vector<16x8xbf16>
    %263 = arith.truncf %260 : vector<8x64xf32> to vector<8x64xbf16>
    %cst_243 = arith.constant dense<0.000000e+00> : vector<16x64xf32>
    %264 = tpu.matmul %262, %263, %cst_243 {dimension_numbers = #tpu.dot_dimension_numbers<[1], [0], [0], [1], [0, 0, 1, 1], [], []>} : vector<16x8xbf16>, vector<8x64xbf16>, vector<16x64xf32> -> vector<16x64xf32>
    %265 = arith.addf %257, %264 : vector<16x64xf32>
    %c2_244 = arith.constant 2 : index
    %c0_245 = arith.constant 0 : index
    %c0_246 = arith.constant 0 : index
    %266 = vector.load %arg3[%c2_244, %c0_245, %c0_246] : memref<9x256x64xbf16, #tpu.memory_space<vmem>>, vector<1x256x64xbf16>
    %267 = vector.shape_cast %266 : vector<1x256x64xbf16> to vector<256x64xbf16>
    %cst_247 = arith.constant dense<0.000000e+00> : vector<8x64xf32>
    %268 = tpu.matmul %248, %267, %cst_247 {dimension_numbers = #tpu.dot_dimension_numbers<[1], [0], [0], [1], [0, 0, 1, 1], [], []>} : vector<8x256xbf16>, vector<256x64xbf16>, vector<8x64xf32> -> vector<8x64xf32>
    %c2_248 = arith.constant 2 : index
    %c0_249 = arith.constant 0 : index
    %c0_250 = arith.constant 0 : index
    %269 = vector.load %arg14[%c2_248, %c0_249, %c0_250] : memref<9x16x8xbf16, #tpu.memory_space<vmem>>, vector<1x16x8xbf16>
    %270 = vector.shape_cast %269 : vector<1x16x8xbf16> to vector<16x8xbf16>
    %271 = arith.truncf %268 : vector<8x64xf32> to vector<8x64xbf16>
    %cst_251 = arith.constant dense<0.000000e+00> : vector<16x64xf32>
    %272 = tpu.matmul %270, %271, %cst_251 {dimension_numbers = #tpu.dot_dimension_numbers<[1], [0], [0], [1], [0, 0, 1, 1], [], []>} : vector<16x8xbf16>, vector<8x64xbf16>, vector<16x64xf32> -> vector<16x64xf32>
    %273 = arith.addf %265, %272 : vector<16x64xf32>
    %c3_252 = arith.constant 3 : index
    %c0_253 = arith.constant 0 : index
    %c0_254 = arith.constant 0 : index
    %274 = vector.load %arg3[%c3_252, %c0_253, %c0_254] : memref<9x256x64xbf16, #tpu.memory_space<vmem>>, vector<1x256x64xbf16>
    %275 = vector.shape_cast %274 : vector<1x256x64xbf16> to vector<256x64xbf16>
    %cst_255 = arith.constant dense<0.000000e+00> : vector<8x64xf32>
    %276 = tpu.matmul %248, %275, %cst_255 {dimension_numbers = #tpu.dot_dimension_numbers<[1], [0], [0], [1], [0, 0, 1, 1], [], []>} : vector<8x256xbf16>, vector<256x64xbf16>, vector<8x64xf32> -> vector<8x64xf32>
    %c3_256 = arith.constant 3 : index
    %c0_257 = arith.constant 0 : index
    %c0_258 = arith.constant 0 : index
    %277 = vector.load %arg14[%c3_256, %c0_257, %c0_258] : memref<9x16x8xbf16, #tpu.memory_space<vmem>>, vector<1x16x8xbf16>
    %278 = vector.shape_cast %277 : vector<1x16x8xbf16> to vector<16x8xbf16>
    %279 = arith.truncf %276 : vector<8x64xf32> to vector<8x64xbf16>
    %cst_259 = arith.constant dense<0.000000e+00> : vector<16x64xf32>
    %280 = tpu.matmul %278, %279, %cst_259 {dimension_numbers = #tpu.dot_dimension_numbers<[1], [0], [0], [1], [0, 0, 1, 1], [], []>} : vector<16x8xbf16>, vector<8x64xbf16>, vector<16x64xf32> -> vector<16x64xf32>
    %281 = arith.addf %273, %280 : vector<16x64xf32>
    %c4_260 = arith.constant 4 : index
    %c0_261 = arith.constant 0 : index
    %c0_262 = arith.constant 0 : index
    %282 = vector.load %arg3[%c4_260, %c0_261, %c0_262] : memref<9x256x64xbf16, #tpu.memory_space<vmem>>, vector<1x256x64xbf16>
    %283 = vector.shape_cast %282 : vector<1x256x64xbf16> to vector<256x64xbf16>
    %cst_263 = arith.constant dense<0.000000e+00> : vector<8x64xf32>
    %284 = tpu.matmul %248, %283, %cst_263 {dimension_numbers = #tpu.dot_dimension_numbers<[1], [0], [0], [1], [0, 0, 1, 1], [], []>} : vector<8x256xbf16>, vector<256x64xbf16>, vector<8x64xf32> -> vector<8x64xf32>
    %c4_264 = arith.constant 4 : index
    %c0_265 = arith.constant 0 : index
    %c0_266 = arith.constant 0 : index
    %285 = vector.load %arg14[%c4_264, %c0_265, %c0_266] : memref<9x16x8xbf16, #tpu.memory_space<vmem>>, vector<1x16x8xbf16>
    %286 = vector.shape_cast %285 : vector<1x16x8xbf16> to vector<16x8xbf16>
    %287 = arith.truncf %284 : vector<8x64xf32> to vector<8x64xbf16>
    %cst_267 = arith.constant dense<0.000000e+00> : vector<16x64xf32>
    %288 = tpu.matmul %286, %287, %cst_267 {dimension_numbers = #tpu.dot_dimension_numbers<[1], [0], [0], [1], [0, 0, 1, 1], [], []>} : vector<16x8xbf16>, vector<8x64xbf16>, vector<16x64xf32> -> vector<16x64xf32>
    %289 = arith.addf %281, %288 : vector<16x64xf32>
    %c5_268 = arith.constant 5 : index
    %c0_269 = arith.constant 0 : index
    %c0_270 = arith.constant 0 : index
    %290 = vector.load %arg3[%c5_268, %c0_269, %c0_270] : memref<9x256x64xbf16, #tpu.memory_space<vmem>>, vector<1x256x64xbf16>
    %291 = vector.shape_cast %290 : vector<1x256x64xbf16> to vector<256x64xbf16>
    %cst_271 = arith.constant dense<0.000000e+00> : vector<8x64xf32>
    %292 = tpu.matmul %248, %291, %cst_271 {dimension_numbers = #tpu.dot_dimension_numbers<[1], [0], [0], [1], [0, 0, 1, 1], [], []>} : vector<8x256xbf16>, vector<256x64xbf16>, vector<8x64xf32> -> vector<8x64xf32>
    %c5_272 = arith.constant 5 : index
    %c0_273 = arith.constant 0 : index
    %c0_274 = arith.constant 0 : index
    %293 = vector.load %arg14[%c5_272, %c0_273, %c0_274] : memref<9x16x8xbf16, #tpu.memory_space<vmem>>, vector<1x16x8xbf16>
    %294 = vector.shape_cast %293 : vector<1x16x8xbf16> to vector<16x8xbf16>
    %295 = arith.truncf %292 : vector<8x64xf32> to vector<8x64xbf16>
    %cst_275 = arith.constant dense<0.000000e+00> : vector<16x64xf32>
    %296 = tpu.matmul %294, %295, %cst_275 {dimension_numbers = #tpu.dot_dimension_numbers<[1], [0], [0], [1], [0, 0, 1, 1], [], []>} : vector<16x8xbf16>, vector<8x64xbf16>, vector<16x64xf32> -> vector<16x64xf32>
    %297 = arith.addf %289, %296 : vector<16x64xf32>
    %c6_276 = arith.constant 6 : index
    %c0_277 = arith.constant 0 : index
    %c0_278 = arith.constant 0 : index
    %298 = vector.load %arg3[%c6_276, %c0_277, %c0_278] : memref<9x256x64xbf16, #tpu.memory_space<vmem>>, vector<1x256x64xbf16>
    %299 = vector.shape_cast %298 : vector<1x256x64xbf16> to vector<256x64xbf16>
    %cst_279 = arith.constant dense<0.000000e+00> : vector<8x64xf32>
    %300 = tpu.matmul %248, %299, %cst_279 {dimension_numbers = #tpu.dot_dimension_numbers<[1], [0], [0], [1], [0, 0, 1, 1], [], []>} : vector<8x256xbf16>, vector<256x64xbf16>, vector<8x64xf32> -> vector<8x64xf32>
    %c6_280 = arith.constant 6 : index
    %c0_281 = arith.constant 0 : index
    %c0_282 = arith.constant 0 : index
    %301 = vector.load %arg14[%c6_280, %c0_281, %c0_282] : memref<9x16x8xbf16, #tpu.memory_space<vmem>>, vector<1x16x8xbf16>
    %302 = vector.shape_cast %301 : vector<1x16x8xbf16> to vector<16x8xbf16>
    %303 = arith.truncf %300 : vector<8x64xf32> to vector<8x64xbf16>
    %cst_283 = arith.constant dense<0.000000e+00> : vector<16x64xf32>
    %304 = tpu.matmul %302, %303, %cst_283 {dimension_numbers = #tpu.dot_dimension_numbers<[1], [0], [0], [1], [0, 0, 1, 1], [], []>} : vector<16x8xbf16>, vector<8x64xbf16>, vector<16x64xf32> -> vector<16x64xf32>
    %305 = arith.addf %297, %304 : vector<16x64xf32>
    %c7_284 = arith.constant 7 : index
    %c0_285 = arith.constant 0 : index
    %c0_286 = arith.constant 0 : index
    %306 = vector.load %arg3[%c7_284, %c0_285, %c0_286] : memref<9x256x64xbf16, #tpu.memory_space<vmem>>, vector<1x256x64xbf16>
    %307 = vector.shape_cast %306 : vector<1x256x64xbf16> to vector<256x64xbf16>
    %cst_287 = arith.constant dense<0.000000e+00> : vector<8x64xf32>
    %308 = tpu.matmul %248, %307, %cst_287 {dimension_numbers = #tpu.dot_dimension_numbers<[1], [0], [0], [1], [0, 0, 1, 1], [], []>} : vector<8x256xbf16>, vector<256x64xbf16>, vector<8x64xf32> -> vector<8x64xf32>
    %c7_288 = arith.constant 7 : index
    %c0_289 = arith.constant 0 : index
    %c0_290 = arith.constant 0 : index
    %309 = vector.load %arg14[%c7_288, %c0_289, %c0_290] : memref<9x16x8xbf16, #tpu.memory_space<vmem>>, vector<1x16x8xbf16>
    %310 = vector.shape_cast %309 : vector<1x16x8xbf16> to vector<16x8xbf16>
    %311 = arith.truncf %308 : vector<8x64xf32> to vector<8x64xbf16>
    %cst_291 = arith.constant dense<0.000000e+00> : vector<16x64xf32>
    %312 = tpu.matmul %310, %311, %cst_291 {dimension_numbers = #tpu.dot_dimension_numbers<[1], [0], [0], [1], [0, 0, 1, 1], [], []>} : vector<16x8xbf16>, vector<8x64xbf16>, vector<16x64xf32> -> vector<16x64xf32>
    %313 = arith.addf %305, %312 : vector<16x64xf32>
    %c8_292 = arith.constant 8 : index
    %c0_293 = arith.constant 0 : index
    %c0_294 = arith.constant 0 : index
    %314 = vector.load %arg3[%c8_292, %c0_293, %c0_294] : memref<9x256x64xbf16, #tpu.memory_space<vmem>>, vector<1x256x64xbf16>
    %315 = vector.shape_cast %314 : vector<1x256x64xbf16> to vector<256x64xbf16>
    %cst_295 = arith.constant dense<0.000000e+00> : vector<8x64xf32>
    %316 = tpu.matmul %248, %315, %cst_295 {dimension_numbers = #tpu.dot_dimension_numbers<[1], [0], [0], [1], [0, 0, 1, 1], [], []>} : vector<8x256xbf16>, vector<256x64xbf16>, vector<8x64xf32> -> vector<8x64xf32>
    %c8_296 = arith.constant 8 : index
    %c0_297 = arith.constant 0 : index
    %c0_298 = arith.constant 0 : index
    %317 = vector.load %arg14[%c8_296, %c0_297, %c0_298] : memref<9x16x8xbf16, #tpu.memory_space<vmem>>, vector<1x16x8xbf16>
    %318 = vector.shape_cast %317 : vector<1x16x8xbf16> to vector<16x8xbf16>
    %319 = arith.truncf %316 : vector<8x64xf32> to vector<8x64xbf16>
    %cst_299 = arith.constant dense<0.000000e+00> : vector<16x64xf32>
    %320 = tpu.matmul %318, %319, %cst_299 {dimension_numbers = #tpu.dot_dimension_numbers<[1], [0], [0], [1], [0, 0, 1, 1], [], []>} : vector<16x8xbf16>, vector<8x64xbf16>, vector<16x64xf32> -> vector<16x64xf32>
    %321 = arith.addf %313, %320 : vector<16x64xf32>
    %c0_300 = arith.constant 0 : index
    %c0_301 = arith.constant 0 : index
    %322 = vector.load %arg15[%c0_300, %c0_301] : memref<16x1xf32, #tpu.memory_space<vmem>>, vector<16x1xf32>
    %323 = vector.broadcast %322 : vector<16x1xf32> to vector<16x64xf32>
    %324 = arith.mulf %321, %323 : vector<16x64xf32>
    %c0_302 = arith.constant 0 : index
    %c0_303 = arith.constant 0 : index
    %325 = vector.load %arg16[%c0_302, %c0_303] : memref<16x1xf32, #tpu.memory_space<vmem>>, vector<16x1xf32>
    %326 = vector.broadcast %325 : vector<16x1xf32> to vector<16x64xf32>
    %327 = arith.addf %324, %326 : vector<16x64xf32>
    %cst_304 = arith.constant 0.000000e+00 : f32
    %328 = vector.broadcast %cst_304 : f32 to vector<16x64xf32>
    %329 = arith.maximumf %327, %328 : vector<16x64xf32>
    %330 = arith.truncf %247 : vector<8x256xf32> to vector<8x256xbf16>
    %c4_305 = arith.constant 4 : index
    %c0_306 = arith.constant 0 : index
    %c0_307 = arith.constant 0 : index
    %331 = vector.load %arg3[%c4_305, %c0_306, %c0_307] : memref<9x256x64xbf16, #tpu.memory_space<vmem>>, vector<1x256x64xbf16>
    %332 = vector.shape_cast %331 : vector<1x256x64xbf16> to vector<256x64xbf16>
    %cst_308 = arith.constant dense<0.000000e+00> : vector<8x64xf32>
    %333 = tpu.matmul %330, %332, %cst_308 {dimension_numbers = #tpu.dot_dimension_numbers<[1], [0], [0], [1], [0, 0, 1, 1], [], []>} : vector<8x256xbf16>, vector<256x64xbf16>, vector<8x64xf32> -> vector<8x64xf32>
    %c0_309 = arith.constant 0 : index
    %c0_310 = arith.constant 0 : index
    %334 = vector.load %arg17[%c0_309, %c0_310] : memref<16x8xbf16, #tpu.memory_space<vmem>>, vector<16x8xbf16>
    %335 = arith.truncf %333 : vector<8x64xf32> to vector<8x64xbf16>
    %cst_311 = arith.constant dense<0.000000e+00> : vector<16x64xf32>
    %336 = tpu.matmul %334, %335, %cst_311 {dimension_numbers = #tpu.dot_dimension_numbers<[1], [0], [0], [1], [0, 0, 1, 1], [], []>} : vector<16x8xbf16>, vector<8x64xbf16>, vector<16x64xf32> -> vector<16x64xf32>
    %c0_312 = arith.constant 0 : index
    %c0_313 = arith.constant 0 : index
    %337 = vector.load %arg18[%c0_312, %c0_313] : memref<16x1xf32, #tpu.memory_space<vmem>>, vector<16x1xf32>
    %338 = vector.broadcast %337 : vector<16x1xf32> to vector<16x64xf32>
    %339 = arith.mulf %336, %338 : vector<16x64xf32>
    %c0_314 = arith.constant 0 : index
    %c0_315 = arith.constant 0 : index
    %340 = vector.load %arg19[%c0_314, %c0_315] : memref<16x1xf32, #tpu.memory_space<vmem>>, vector<16x1xf32>
    %341 = vector.broadcast %340 : vector<16x1xf32> to vector<16x64xf32>
    %342 = arith.addf %339, %341 : vector<16x64xf32>
    %343 = arith.truncf %329 : vector<16x64xf32> to vector<16x64xbf16>
    %cst_316 = arith.constant 0.000000e+00 : f32
    %344 = vector.broadcast %cst_316 : f32 to vector<16x64xf32>
    %c0_317 = arith.constant 0 : index
    %c0_318 = arith.constant 0 : index
    %c0_319 = arith.constant 0 : index
    %345 = vector.load %arg4[%c0_317, %c0_318, %c0_319] : memref<9x64x64xbf16, #tpu.memory_space<vmem>>, vector<1x64x64xbf16>
    %346 = vector.shape_cast %345 : vector<1x64x64xbf16> to vector<64x64xbf16>
    %cst_320 = arith.constant dense<0.000000e+00> : vector<16x64xf32>
    %347 = tpu.matmul %343, %346, %cst_320 {dimension_numbers = #tpu.dot_dimension_numbers<[1], [0], [0], [1], [0, 0, 1, 1], [], []>} : vector<16x64xbf16>, vector<64x64xbf16>, vector<16x64xf32> -> vector<16x64xf32>
    %c0_321 = arith.constant 0 : index
    %c0_322 = arith.constant 0 : index
    %c0_323 = arith.constant 0 : index
    %348 = vector.load %arg20[%c0_321, %c0_322, %c0_323] : memref<9x16x16xbf16, #tpu.memory_space<vmem>>, vector<1x16x16xbf16>
    %349 = vector.shape_cast %348 : vector<1x16x16xbf16> to vector<16x16xbf16>
    %350 = arith.truncf %347 : vector<16x64xf32> to vector<16x64xbf16>
    %cst_324 = arith.constant dense<0.000000e+00> : vector<16x64xf32>
    %351 = tpu.matmul %349, %350, %cst_324 {dimension_numbers = #tpu.dot_dimension_numbers<[1], [0], [0], [1], [0, 0, 1, 1], [], []>} : vector<16x16xbf16>, vector<16x64xbf16>, vector<16x64xf32> -> vector<16x64xf32>
    %352 = arith.addf %344, %351 : vector<16x64xf32>
    %c1_325 = arith.constant 1 : index
    %c0_326 = arith.constant 0 : index
    %c0_327 = arith.constant 0 : index
    %353 = vector.load %arg4[%c1_325, %c0_326, %c0_327] : memref<9x64x64xbf16, #tpu.memory_space<vmem>>, vector<1x64x64xbf16>
    %354 = vector.shape_cast %353 : vector<1x64x64xbf16> to vector<64x64xbf16>
    %cst_328 = arith.constant dense<0.000000e+00> : vector<16x64xf32>
    %355 = tpu.matmul %343, %354, %cst_328 {dimension_numbers = #tpu.dot_dimension_numbers<[1], [0], [0], [1], [0, 0, 1, 1], [], []>} : vector<16x64xbf16>, vector<64x64xbf16>, vector<16x64xf32> -> vector<16x64xf32>
    %c1_329 = arith.constant 1 : index
    %c0_330 = arith.constant 0 : index
    %c0_331 = arith.constant 0 : index
    %356 = vector.load %arg20[%c1_329, %c0_330, %c0_331] : memref<9x16x16xbf16, #tpu.memory_space<vmem>>, vector<1x16x16xbf16>
    %357 = vector.shape_cast %356 : vector<1x16x16xbf16> to vector<16x16xbf16>
    %358 = arith.truncf %355 : vector<16x64xf32> to vector<16x64xbf16>
    %cst_332 = arith.constant dense<0.000000e+00> : vector<16x64xf32>
    %359 = tpu.matmul %357, %358, %cst_332 {dimension_numbers = #tpu.dot_dimension_numbers<[1], [0], [0], [1], [0, 0, 1, 1], [], []>} : vector<16x16xbf16>, vector<16x64xbf16>, vector<16x64xf32> -> vector<16x64xf32>
    %360 = arith.addf %352, %359 : vector<16x64xf32>
    %c2_333 = arith.constant 2 : index
    %c0_334 = arith.constant 0 : index
    %c0_335 = arith.constant 0 : index
    %361 = vector.load %arg4[%c2_333, %c0_334, %c0_335] : memref<9x64x64xbf16, #tpu.memory_space<vmem>>, vector<1x64x64xbf16>
    %362 = vector.shape_cast %361 : vector<1x64x64xbf16> to vector<64x64xbf16>
    %cst_336 = arith.constant dense<0.000000e+00> : vector<16x64xf32>
    %363 = tpu.matmul %343, %362, %cst_336 {dimension_numbers = #tpu.dot_dimension_numbers<[1], [0], [0], [1], [0, 0, 1, 1], [], []>} : vector<16x64xbf16>, vector<64x64xbf16>, vector<16x64xf32> -> vector<16x64xf32>
    %c2_337 = arith.constant 2 : index
    %c0_338 = arith.constant 0 : index
    %c0_339 = arith.constant 0 : index
    %364 = vector.load %arg20[%c2_337, %c0_338, %c0_339] : memref<9x16x16xbf16, #tpu.memory_space<vmem>>, vector<1x16x16xbf16>
    %365 = vector.shape_cast %364 : vector<1x16x16xbf16> to vector<16x16xbf16>
    %366 = arith.truncf %363 : vector<16x64xf32> to vector<16x64xbf16>
    %cst_340 = arith.constant dense<0.000000e+00> : vector<16x64xf32>
    %367 = tpu.matmul %365, %366, %cst_340 {dimension_numbers = #tpu.dot_dimension_numbers<[1], [0], [0], [1], [0, 0, 1, 1], [], []>} : vector<16x16xbf16>, vector<16x64xbf16>, vector<16x64xf32> -> vector<16x64xf32>
    %368 = arith.addf %360, %367 : vector<16x64xf32>
    %c3_341 = arith.constant 3 : index
    %c0_342 = arith.constant 0 : index
    %c0_343 = arith.constant 0 : index
    %369 = vector.load %arg4[%c3_341, %c0_342, %c0_343] : memref<9x64x64xbf16, #tpu.memory_space<vmem>>, vector<1x64x64xbf16>
    %370 = vector.shape_cast %369 : vector<1x64x64xbf16> to vector<64x64xbf16>
    %cst_344 = arith.constant dense<0.000000e+00> : vector<16x64xf32>
    %371 = tpu.matmul %343, %370, %cst_344 {dimension_numbers = #tpu.dot_dimension_numbers<[1], [0], [0], [1], [0, 0, 1, 1], [], []>} : vector<16x64xbf16>, vector<64x64xbf16>, vector<16x64xf32> -> vector<16x64xf32>
    %c3_345 = arith.constant 3 : index
    %c0_346 = arith.constant 0 : index
    %c0_347 = arith.constant 0 : index
    %372 = vector.load %arg20[%c3_345, %c0_346, %c0_347] : memref<9x16x16xbf16, #tpu.memory_space<vmem>>, vector<1x16x16xbf16>
    %373 = vector.shape_cast %372 : vector<1x16x16xbf16> to vector<16x16xbf16>
    %374 = arith.truncf %371 : vector<16x64xf32> to vector<16x64xbf16>
    %cst_348 = arith.constant dense<0.000000e+00> : vector<16x64xf32>
    %375 = tpu.matmul %373, %374, %cst_348 {dimension_numbers = #tpu.dot_dimension_numbers<[1], [0], [0], [1], [0, 0, 1, 1], [], []>} : vector<16x16xbf16>, vector<16x64xbf16>, vector<16x64xf32> -> vector<16x64xf32>
    %376 = arith.addf %368, %375 : vector<16x64xf32>
    %c4_349 = arith.constant 4 : index
    %c0_350 = arith.constant 0 : index
    %c0_351 = arith.constant 0 : index
    %377 = vector.load %arg4[%c4_349, %c0_350, %c0_351] : memref<9x64x64xbf16, #tpu.memory_space<vmem>>, vector<1x64x64xbf16>
    %378 = vector.shape_cast %377 : vector<1x64x64xbf16> to vector<64x64xbf16>
    %cst_352 = arith.constant dense<0.000000e+00> : vector<16x64xf32>
    %379 = tpu.matmul %343, %378, %cst_352 {dimension_numbers = #tpu.dot_dimension_numbers<[1], [0], [0], [1], [0, 0, 1, 1], [], []>} : vector<16x64xbf16>, vector<64x64xbf16>, vector<16x64xf32> -> vector<16x64xf32>
    %c4_353 = arith.constant 4 : index
    %c0_354 = arith.constant 0 : index
    %c0_355 = arith.constant 0 : index
    %380 = vector.load %arg20[%c4_353, %c0_354, %c0_355] : memref<9x16x16xbf16, #tpu.memory_space<vmem>>, vector<1x16x16xbf16>
    %381 = vector.shape_cast %380 : vector<1x16x16xbf16> to vector<16x16xbf16>
    %382 = arith.truncf %379 : vector<16x64xf32> to vector<16x64xbf16>
    %cst_356 = arith.constant dense<0.000000e+00> : vector<16x64xf32>
    %383 = tpu.matmul %381, %382, %cst_356 {dimension_numbers = #tpu.dot_dimension_numbers<[1], [0], [0], [1], [0, 0, 1, 1], [], []>} : vector<16x16xbf16>, vector<16x64xbf16>, vector<16x64xf32> -> vector<16x64xf32>
    %384 = arith.addf %376, %383 : vector<16x64xf32>
    %c5_357 = arith.constant 5 : index
    %c0_358 = arith.constant 0 : index
    %c0_359 = arith.constant 0 : index
    %385 = vector.load %arg4[%c5_357, %c0_358, %c0_359] : memref<9x64x64xbf16, #tpu.memory_space<vmem>>, vector<1x64x64xbf16>
    %386 = vector.shape_cast %385 : vector<1x64x64xbf16> to vector<64x64xbf16>
    %cst_360 = arith.constant dense<0.000000e+00> : vector<16x64xf32>
    %387 = tpu.matmul %343, %386, %cst_360 {dimension_numbers = #tpu.dot_dimension_numbers<[1], [0], [0], [1], [0, 0, 1, 1], [], []>} : vector<16x64xbf16>, vector<64x64xbf16>, vector<16x64xf32> -> vector<16x64xf32>
    %c5_361 = arith.constant 5 : index
    %c0_362 = arith.constant 0 : index
    %c0_363 = arith.constant 0 : index
    %388 = vector.load %arg20[%c5_361, %c0_362, %c0_363] : memref<9x16x16xbf16, #tpu.memory_space<vmem>>, vector<1x16x16xbf16>
    %389 = vector.shape_cast %388 : vector<1x16x16xbf16> to vector<16x16xbf16>
    %390 = arith.truncf %387 : vector<16x64xf32> to vector<16x64xbf16>
    %cst_364 = arith.constant dense<0.000000e+00> : vector<16x64xf32>
    %391 = tpu.matmul %389, %390, %cst_364 {dimension_numbers = #tpu.dot_dimension_numbers<[1], [0], [0], [1], [0, 0, 1, 1], [], []>} : vector<16x16xbf16>, vector<16x64xbf16>, vector<16x64xf32> -> vector<16x64xf32>
    %392 = arith.addf %384, %391 : vector<16x64xf32>
    %c6_365 = arith.constant 6 : index
    %c0_366 = arith.constant 0 : index
    %c0_367 = arith.constant 0 : index
    %393 = vector.load %arg4[%c6_365, %c0_366, %c0_367] : memref<9x64x64xbf16, #tpu.memory_space<vmem>>, vector<1x64x64xbf16>
    %394 = vector.shape_cast %393 : vector<1x64x64xbf16> to vector<64x64xbf16>
    %cst_368 = arith.constant dense<0.000000e+00> : vector<16x64xf32>
    %395 = tpu.matmul %343, %394, %cst_368 {dimension_numbers = #tpu.dot_dimension_numbers<[1], [0], [0], [1], [0, 0, 1, 1], [], []>} : vector<16x64xbf16>, vector<64x64xbf16>, vector<16x64xf32> -> vector<16x64xf32>
    %c6_369 = arith.constant 6 : index
    %c0_370 = arith.constant 0 : index
    %c0_371 = arith.constant 0 : index
    %396 = vector.load %arg20[%c6_369, %c0_370, %c0_371] : memref<9x16x16xbf16, #tpu.memory_space<vmem>>, vector<1x16x16xbf16>
    %397 = vector.shape_cast %396 : vector<1x16x16xbf16> to vector<16x16xbf16>
    %398 = arith.truncf %395 : vector<16x64xf32> to vector<16x64xbf16>
    %cst_372 = arith.constant dense<0.000000e+00> : vector<16x64xf32>
    %399 = tpu.matmul %397, %398, %cst_372 {dimension_numbers = #tpu.dot_dimension_numbers<[1], [0], [0], [1], [0, 0, 1, 1], [], []>} : vector<16x16xbf16>, vector<16x64xbf16>, vector<16x64xf32> -> vector<16x64xf32>
    %400 = arith.addf %392, %399 : vector<16x64xf32>
    %c7_373 = arith.constant 7 : index
    %c0_374 = arith.constant 0 : index
    %c0_375 = arith.constant 0 : index
    %401 = vector.load %arg4[%c7_373, %c0_374, %c0_375] : memref<9x64x64xbf16, #tpu.memory_space<vmem>>, vector<1x64x64xbf16>
    %402 = vector.shape_cast %401 : vector<1x64x64xbf16> to vector<64x64xbf16>
    %cst_376 = arith.constant dense<0.000000e+00> : vector<16x64xf32>
    %403 = tpu.matmul %343, %402, %cst_376 {dimension_numbers = #tpu.dot_dimension_numbers<[1], [0], [0], [1], [0, 0, 1, 1], [], []>} : vector<16x64xbf16>, vector<64x64xbf16>, vector<16x64xf32> -> vector<16x64xf32>
    %c7_377 = arith.constant 7 : index
    %c0_378 = arith.constant 0 : index
    %c0_379 = arith.constant 0 : index
    %404 = vector.load %arg20[%c7_377, %c0_378, %c0_379] : memref<9x16x16xbf16, #tpu.memory_space<vmem>>, vector<1x16x16xbf16>
    %405 = vector.shape_cast %404 : vector<1x16x16xbf16> to vector<16x16xbf16>
    %406 = arith.truncf %403 : vector<16x64xf32> to vector<16x64xbf16>
    %cst_380 = arith.constant dense<0.000000e+00> : vector<16x64xf32>
    %407 = tpu.matmul %405, %406, %cst_380 {dimension_numbers = #tpu.dot_dimension_numbers<[1], [0], [0], [1], [0, 0, 1, 1], [], []>} : vector<16x16xbf16>, vector<16x64xbf16>, vector<16x64xf32> -> vector<16x64xf32>
    %408 = arith.addf %400, %407 : vector<16x64xf32>
    %c8_381 = arith.constant 8 : index
    %c0_382 = arith.constant 0 : index
    %c0_383 = arith.constant 0 : index
    %409 = vector.load %arg4[%c8_381, %c0_382, %c0_383] : memref<9x64x64xbf16, #tpu.memory_space<vmem>>, vector<1x64x64xbf16>
    %410 = vector.shape_cast %409 : vector<1x64x64xbf16> to vector<64x64xbf16>
    %cst_384 = arith.constant dense<0.000000e+00> : vector<16x64xf32>
    %411 = tpu.matmul %343, %410, %cst_384 {dimension_numbers = #tpu.dot_dimension_numbers<[1], [0], [0], [1], [0, 0, 1, 1], [], []>} : vector<16x64xbf16>, vector<64x64xbf16>, vector<16x64xf32> -> vector<16x64xf32>
    %c8_385 = arith.constant 8 : index
    %c0_386 = arith.constant 0 : index
    %c0_387 = arith.constant 0 : index
    %412 = vector.load %arg20[%c8_385, %c0_386, %c0_387] : memref<9x16x16xbf16, #tpu.memory_space<vmem>>, vector<1x16x16xbf16>
    %413 = vector.shape_cast %412 : vector<1x16x16xbf16> to vector<16x16xbf16>
    %414 = arith.truncf %411 : vector<16x64xf32> to vector<16x64xbf16>
    %cst_388 = arith.constant dense<0.000000e+00> : vector<16x64xf32>
    %415 = tpu.matmul %413, %414, %cst_388 {dimension_numbers = #tpu.dot_dimension_numbers<[1], [0], [0], [1], [0, 0, 1, 1], [], []>} : vector<16x16xbf16>, vector<16x64xbf16>, vector<16x64xf32> -> vector<16x64xf32>
    %416 = arith.addf %408, %415 : vector<16x64xf32>
    %c0_389 = arith.constant 0 : index
    %c0_390 = arith.constant 0 : index
    %417 = vector.load %arg21[%c0_389, %c0_390] : memref<16x1xf32, #tpu.memory_space<vmem>>, vector<16x1xf32>
    %418 = vector.broadcast %417 : vector<16x1xf32> to vector<16x64xf32>
    %419 = arith.mulf %416, %418 : vector<16x64xf32>
    %c0_391 = arith.constant 0 : index
    %c0_392 = arith.constant 0 : index
    %420 = vector.load %arg22[%c0_391, %c0_392] : memref<16x1xf32, #tpu.memory_space<vmem>>, vector<16x1xf32>
    %421 = vector.broadcast %420 : vector<16x1xf32> to vector<16x64xf32>
    %422 = arith.addf %419, %421 : vector<16x64xf32>
    %423 = arith.addf %422, %342 : vector<16x64xf32>
    %cst_393 = arith.constant 0.000000e+00 : f32
    %424 = vector.broadcast %cst_393 : f32 to vector<16x64xf32>
    %425 = arith.maximumf %423, %424 : vector<16x64xf32>
    %cst_394 = arith.constant dense<0.000000e+00> : vector<16xf32>
    %426 = vector.multi_reduction <add>, %425, %cst_394 [1] : vector<16x64xf32> to vector<16xf32>
    %427 = vector.shape_cast %426 : vector<16xf32> to vector<16x1xf32>
    %cst_395 = arith.constant 6.400000e+01 : f32
    %428 = vector.broadcast %cst_395 : f32 to vector<16x1xf32>
    %429 = arith.divf %427, %428 : vector<16x1xf32>
    %c0_396 = arith.constant 0 : index
    %c0_397 = arith.constant 0 : index
    %c0_398 = arith.constant 0 : index
    %430 = vector.load %arg23[%c0_396, %c0_397, %c0_398] : memref<1x16x1xf32, #tpu.memory_space<vmem>>, vector<1x16x1xf32>
    %431 = vector.shape_cast %430 : vector<1x16x1xf32> to vector<16x1xf32>
    %432 = vector.shape_cast %429 : vector<16x1xf32> to vector<1x16x1xf32>
    tpu.vector_store %arg23[%c0_396, %c0_397, %c0_398], %432 {strides = array<i32>} : memref<1x16x1xf32, #tpu.memory_space<vmem>>, vector<1x16x1xf32>,
    return
  }
  func.func @transform_0(%arg0: i32) -> (i32, i32, i32) {
    %c0_i32 = arith.constant 0 : i32
    %c0_i32_0 = arith.constant 0 : i32
    %c0_i32_1 = arith.constant 0 : i32
    return %arg0, %c0_i32, %c0_i32_0 : i32, i32, i32
  }
  func.func @transform_1(%arg0: i32) -> (i32, i32, i32) {
    %c0_i32 = arith.constant 0 : i32
    %c0_i32_0 = arith.constant 0 : i32
    %c0_i32_1 = arith.constant 0 : i32
    %c0_i32_2 = arith.constant 0 : i32
    return %c0_i32, %c0_i32_0, %c0_i32_1 : i32, i32, i32
  }
  func.func @transform_2(%arg0: i32) -> (i32, i32, i32) {
    %c0_i32 = arith.constant 0 : i32
    %c0_i32_0 = arith.constant 0 : i32
    %c0_i32_1 = arith.constant 0 : i32
    %c0_i32_2 = arith.constant 0 : i32
    return %c0_i32, %c0_i32_0, %c0_i32_1 : i32, i32, i32
  }
  func.func @transform_3(%arg0: i32) -> (i32, i32, i32) {
    %c0_i32 = arith.constant 0 : i32
    %c0_i32_0 = arith.constant 0 : i32
    %c0_i32_1 = arith.constant 0 : i32
    %c0_i32_2 = arith.constant 0 : i32
    return %c0_i32, %c0_i32_0, %c0_i32_1 : i32, i32, i32
  }
  func.func @transform_4(%arg0: i32) -> (i32, i32, i32) {
    %c0_i32 = arith.constant 0 : i32
    %c0_i32_0 = arith.constant 0 : i32
    %c0_i32_1 = arith.constant 0 : i32
    %c0_i32_2 = arith.constant 0 : i32
    return %c0_i32, %c0_i32_0, %c0_i32_1 : i32, i32, i32
  }
  func.func @transform_5(%arg0: i32) -> (i32, i32) {
    %c0_i32 = arith.constant 0 : i32
    %c0_i32_0 = arith.constant 0 : i32
    %c0_i32_1 = arith.constant 0 : i32
    return %c0_i32, %c0_i32_0 : i32, i32
  }
  func.func @transform_6(%arg0: i32) -> (i32, i32) {
    %c0_i32 = arith.constant 0 : i32
    %c0_i32_0 = arith.constant 0 : i32
    %c0_i32_1 = arith.constant 0 : i32
    return %c0_i32, %c0_i32_0 : i32, i32
  }
  func.func @transform_7(%arg0: i32) -> (i32, i32, i32) {
    %c0_i32 = arith.constant 0 : i32
    %c0_i32_0 = arith.constant 0 : i32
    %c0_i32_1 = arith.constant 0 : i32
    %c0_i32_2 = arith.constant 0 : i32
    return %c0_i32, %c0_i32_0, %c0_i32_1 : i32, i32, i32
  }
  func.func @transform_8(%arg0: i32) -> (i32, i32) {
    %c0_i32 = arith.constant 0 : i32
    %c0_i32_0 = arith.constant 0 : i32
    %c0_i32_1 = arith.constant 0 : i32
    return %c0_i32, %c0_i32_0 : i32, i32
  }
  func.func @transform_9(%arg0: i32) -> (i32, i32) {
    %c0_i32 = arith.constant 0 : i32
    %c0_i32_0 = arith.constant 0 : i32
    %c0_i32_1 = arith.constant 0 : i32
    return %c0_i32, %c0_i32_0 : i32, i32
  }
  func.func @transform_10(%arg0: i32) -> (i32, i32, i32) {
    %c0_i32 = arith.constant 0 : i32
    %c0_i32_0 = arith.constant 0 : i32
    %c0_i32_1 = arith.constant 0 : i32
    %c0_i32_2 = arith.constant 0 : i32
    return %c0_i32, %c0_i32_0, %c0_i32_1 : i32, i32, i32
  }
  func.func @transform_11(%arg0: i32) -> (i32, i32) {
    %c0_i32 = arith.constant 0 : i32
    %c0_i32_0 = arith.constant 0 : i32
    %c0_i32_1 = arith.constant 0 : i32
    return %c0_i32, %c0_i32_0 : i32, i32
  }
  func.func @transform_12(%arg0: i32) -> (i32, i32) {
    %c0_i32 = arith.constant 0 : i32
    %c0_i32_0 = arith.constant 0 : i32
    %c0_i32_1 = arith.constant 0 : i32
    return %c0_i32, %c0_i32_0 : i32, i32
  }
  func.func @transform_13(%arg0: i32) -> (i32, i32, i32) {
    %c0_i32 = arith.constant 0 : i32
    %c0_i32_0 = arith.constant 0 : i32
    %c0_i32_1 = arith.constant 0 : i32
    %c0_i32_2 = arith.constant 0 : i32
    return %c0_i32, %c0_i32_0, %c0_i32_1 : i32, i32, i32
  }
  func.func @transform_14(%arg0: i32) -> (i32, i32) {
    %c0_i32 = arith.constant 0 : i32
    %c0_i32_0 = arith.constant 0 : i32
    %c0_i32_1 = arith.constant 0 : i32
    return %c0_i32, %c0_i32_0 : i32, i32
  }
  func.func @transform_15(%arg0: i32) -> (i32, i32) {
    %c0_i32 = arith.constant 0 : i32
    %c0_i32_0 = arith.constant 0 : i32
    %c0_i32_1 = arith.constant 0 : i32
    return %c0_i32, %c0_i32_0 : i32, i32
  }
  func.func @transform_16(%arg0: i32) -> (i32, i32) {
    %c0_i32 = arith.constant 0 : i32
    %c0_i32_0 = arith.constant 0 : i32
    %c0_i32_1 = arith.constant 0 : i32
    return %c0_i32, %c0_i32_0 : i32, i32
  }
  func.func @transform_17(%arg0: i32) -> (i32, i32) {
    %c0_i32 = arith.constant 0 : i32
    %c0_i32_0 = arith.constant 0 : i32
    %c0_i32_1 = arith.constant 0 : i32
    return %c0_i32, %c0_i32_0 : i32, i32
  }
  func.func @transform_18(%arg0: i32) -> (i32, i32) {
    %c0_i32 = arith.constant 0 : i32
    %c0_i32_0 = arith.constant 0 : i32
    %c0_i32_1 = arith.constant 0 : i32
    return %c0_i32, %c0_i32_0 : i32, i32
  }
  func.func @transform_19(%arg0: i32) -> (i32, i32, i32) {
    %c0_i32 = arith.constant 0 : i32
    %c0_i32_0 = arith.constant 0 : i32
    %c0_i32_1 = arith.constant 0 : i32
    %c0_i32_2 = arith.constant 0 : i32
    return %c0_i32, %c0_i32_0, %c0_i32_1 : i32, i32, i32
  }
  func.func @transform_20(%arg0: i32) -> (i32, i32) {
    %c0_i32 = arith.constant 0 : i32
    %c0_i32_0 = arith.constant 0 : i32
    %c0_i32_1 = arith.constant 0 : i32
    return %c0_i32, %c0_i32_0 : i32, i32
  }
  func.func @transform_21(%arg0: i32) -> (i32, i32) {
    %c0_i32 = arith.constant 0 : i32
    %c0_i32_0 = arith.constant 0 : i32
    %c0_i32_1 = arith.constant 0 : i32
    return %c0_i32, %c0_i32_0 : i32, i32
  }
  func.func @transform_22(%arg0: i32) -> (i32, i32, i32) {
    %c0_i32 = arith.constant 0 : i32
    %c0_i32_0 = arith.constant 0 : i32
    %c0_i32_1 = arith.constant 0 : i32
    return %arg0, %c0_i32, %c0_i32_0 : i32, i32, i32
  }
}

</mosaic_0001>

<llo_original>
// kernel: resnet_features_forward.1
$region0: #{resnet_features_forward.1}
  #allocation0 [shape = 'u32[]', space=smem, size = 0x4, offset = 0x4, fixed_abs, tag = 'smem constant byte address 0x4 - core index']
  #allocation1 [shape = 'u32[144,128]{1,0:T(1,128)}', space=vmem, size = 0x12000, scoped, tag = 'internal scratch']
  %s0 = inlined_call_operand.vmem [shape: bf16[2,3,256], index: 0, kind: input, shape index: {}]
  %s1 = inlined_call_operand.vmem [shape: bf16[9,256,256], index: 1, kind: input, shape index: {}]
  %s2 = inlined_call_operand.vmem [shape: bf16[9,256,64], index: 2, kind: input, shape index: {}]
  %s3 = inlined_call_operand.vmem [shape: bf16[9,64,64], index: 3, kind: input, shape index: {}]
  %s4 = inlined_call_operand.vmem [shape: bf16[9,8,3], index: 4, kind: input, shape index: {}]
  %s5 = inlined_call_operand.vmem [shape: f32[8,1], index: 5, kind: input, shape index: {}]
  %s6 = inlined_call_operand.vmem [shape: f32[8,1], index: 6, kind: input, shape index: {}]
  %s7 = inlined_call_operand.vmem [shape: bf16[9,8,8], index: 7, kind: input, shape index: {}]
  %s8 = inlined_call_operand.vmem [shape: f32[8,1], index: 8, kind: input, shape index: {}]
  %s9 = inlined_call_operand.vmem [shape: f32[8,1], index: 9, kind: input, shape index: {}]
  %s10 = inlined_call_operand.vmem [shape: bf16[9,8,8], index: 10, kind: input, shape index: {}]
  %s11 = inlined_call_operand.vmem [shape: f32[8,1], index: 11, kind: input, shape index: {}]
  %s12 = inlined_call_operand.vmem [shape: f32[8,1], index: 12, kind: input, shape index: {}]
  %s13 = inlined_call_operand.vmem [shape: bf16[9,16,8], index: 13, kind: input, shape index: {}]
  %s14 = inlined_call_operand.vmem [shape: f32[16,1], index: 14, kind: input, shape index: {}]
  %s15 = inlined_call_operand.vmem [shape: f32[16,1], index: 15, kind: input, shape index: {}]
  %s16 = inlined_call_operand.vmem [shape: bf16[16,8], index: 16, kind: input, shape index: {}]
  %s17 = inlined_call_operand.vmem [shape: f32[16,1], index: 17, kind: input, shape index: {}]
  %s18 = inlined_call_operand.vmem [shape: f32[16,1], index: 18, kind: input, shape index: {}]
  %s19 = inlined_call_operand.vmem [shape: bf16[9,16,16], index: 19, kind: input, shape index: {}]
  %s20 = inlined_call_operand.vmem [shape: f32[16,1], index: 20, kind: input, shape index: {}]
  %s21 = inlined_call_operand.vmem [shape: f32[16,1], index: 21, kind: input, shape index: {}]
  %s22 = inlined_call_operand.vmem [shape: f32[2,16,1], index: 22, kind: output, shape index: {}]
  %s23 = sld [smem:[#allocation0]]
  $region121: #{resnet_features_forward.1} parent=0
    _
  %s25 = ssub.s32 1, %s23
  %s26 = scalar_select 0, %s25, %s23
  loop: start=0, step=1, limit=4
  $region2: #{resnet_features_forward.1} parent=0 // loop_pre_header
    _
  $region3: #{resnet_features_forward.1} parent=0 // loop_header
    %s28 = sphi 0, %s32
    %p29 = scmp.ge.s32.totalorder %s28, 4
    %s38 = sphi 0, %s40
    %s41 = sphi 0, %s38
    %s42 = sphi 0, %s41
    %s58 = sphi 0, %s42
    %s62 = sphi 0, %s62
    %s64 = sphi 0, %s62
    %s65 = sphi 0, %s64
    %s79 = sphi 0, %s65
    %s83 = sphi 0, %s83
    %s85 = sphi 0, %s83
    %s86 = sphi 0, %s85
    %s100 = sphi 0, %s86
    %s104 = sphi 0, %s104
    %s106 = sphi 0, %s104
    %s107 = sphi 0, %s106
    %s121 = sphi 0, %s107
    %s125 = sphi 0, %s125
    %s127 = sphi 0, %s125
    %s128 = sphi 0, %s127
    %s142 = sphi 0, %s128
    %s146 = sphi 0, %s146
    %s148 = sphi 0, %s146
    %s149 = sphi 0, %s148
    %s163 = sphi 0, %s149
    %s167 = sphi 0, %s167
    %s169 = sphi 0, %s167
    %s170 = sphi 0, %s169
    %s184 = sphi 0, %s170
    %s188 = sphi 0, %s188
    %s190 = sphi 0, %s188
    %s191 = sphi 0, %s190
    %s205 = sphi 0, %s191
    %s209 = sphi 0, %s209
    %s211 = sphi 0, %s209
    %s212 = sphi 0, %s211
    %s226 = sphi 0, %s212
    %s230 = sphi 0, %s230
    %s232 = sphi 0, %s230
    %s233 = sphi 0, %s232
    %s247 = sphi 0, %s233
    %s251 = sphi 0, %s251
    %s253 = sphi 0, %s251
    %s254 = sphi 0, %s253
    %s268 = sphi 0, %s254
    %s272 = sphi 0, %s272
    %s274 = sphi 0, %s272
    %s275 = sphi 0, %s274
    %s289 = sphi 0, %s275
    %s293 = sphi 0, %s293
    %s295 = sphi 0, %s293
    %s296 = sphi 0, %s295
    %s310 = sphi 0, %s296
    %s314 = sphi 0, %s314
    %s316 = sphi 0, %s314
    %s317 = sphi 0, %s316
    %s331 = sphi 0, %s317
    %s335 = sphi 0, %s335
    %s337 = sphi 0, %s335
    %s338 = sphi 0, %s337
    %s352 = sphi 0, %s338
    %s356 = sphi 0, %s356
    %s358 = sphi 0, %s356
    %s359 = sphi 0, %s358
    %s373 = sphi 0, %s359
    %s377 = sphi 0, %s377
    %s379 = sphi 0, %s377
    %s380 = sphi 0, %s379
    %s394 = sphi 0, %s380
    %s398 = sphi 0, %s398
    %s400 = sphi 0, %s398
    %s401 = sphi 0, %s400
    %s415 = sphi 0, %s401
    %s419 = sphi 0, %s419
    %s421 = sphi 0, %s419
    %s422 = sphi 0, %s421
    %s436 = sphi 0, %s422
    %s440 = sphi 0, %s440
    %s442 = sphi 0, %s440
    %s443 = sphi 0, %s442
    %s457 = sphi 0, %s443
    %s461 = sphi 0, %s461
    %s463 = sphi 0, %s461
    %s464 = sphi 0, %s463
    %s478 = sphi 0, %s464
    %s482 = sphi 0, %s482
    %s484 = sphi 0, %s482
    %s485 = sphi 0, %s484
    %s499 = sphi 0, %s485
    %s505 = sphi 0, %s507
    %s508 = sphi 0, %s505
    %s509 = sphi 0, %s508
    %s525 = sphi 0, %s509
  $region4: #{resnet_features_forward.1} parent=0 // loop_header_branch
    %31 = sbr.rel (%p29) target = $region8
  $region5: #{resnet_features_forward.1} parent=0 // loop_body
    %s33 = ssub.s32 %s28, 1
    %s34 = ssub.s32 %s28, 2
    %s35 = sadd.s32 %s28, 1
    %s36 = ssub.s32 %s28, %s35
    %p37 = scmp.eq.s32.totalorder %s36, 0
    %s39 = sadd.s32 %s38, 1
    %s40 = scalar_select %p37, %s38, %s39
    %p43 = pneg %p37
    %p44 = scmp.eq.s32.totalorder %s28, 1
    %p45 = por %p43, %p44
    %p46 = scmp.ne.s32.totalorder %s38, %s41
    %p47 = scmp.eq.s32.totalorder %s28, 0
    %p48 = por %p46, %p47
    %p49 = scmp.ne.s32.totalorder %s38, %s41
    %p50 = scmp.eq.s32.totalorder %s33, 1
    %p51 = por %p49, %p50
    %p52 = scmp.ne.s32.totalorder %s41, %s42
    %p53 = scmp.eq.s32.totalorder %s33, 0
    %p54 = por %p52, %p53
    %p55 = scmp.ne.s32.totalorder %s41, %s42
    %p56 = scmp.eq.s32.totalorder %s34, 1
    %p57 = por %p55, %p56
    %p59 = scmp.ne.s32.totalorder %s42, %s58
    %p60 = scmp.eq.s32.totalorder %s34, 0
    %p61 = por %p59, %p60
    %s63 = sadd.s32 %s62, 1
    %p66 = scmp.eq.s32.totalorder %s28, 1
    %p67 = scmp.ne.s32.totalorder %s62, %s64
    %p68 = scmp.eq.s32.totalorder %s28, 0
    %p69 = por %p67, %p68
    %p70 = scmp.ne.s32.totalorder %s62, %s64
    %p71 = scmp.eq.s32.totalorder %s33, 1
    %p72 = por %p70, %p71
    %p73 = scmp.ne.s32.totalorder %s64, %s65
    %p74 = scmp.eq.s32.totalorder %s33, 0
    %p75 = por %p73, %p74
    %p76 = scmp.ne.s32.totalorder %s64, %s65
    %p77 = scmp.eq.s32.totalorder %s34, 1
    %p78 = por %p76, %p77
    %p80 = scmp.ne.s32.totalorder %s65, %s79
    %p81 = scmp.eq.s32.totalorder %s34, 0
    %p82 = por %p80, %p81
    %s84 = sadd.s32 %s83, 1
    %p87 = scmp.eq.s32.totalorder %s28, 1
    %p88 = scmp.ne.s32.totalorder %s83, %s85
    %p89 = scmp.eq.s32.totalorder %s28, 0
    %p90 = por %p88, %p89
    %p91 = scmp.ne.s32.totalorder %s83, %s85
    %p92 = scmp.eq.s32.totalorder %s33, 1
    %p93 = por %p91, %p92
    %p94 = scmp.ne.s32.totalorder %s85, %s86
    %p95 = scmp.eq.s32.totalorder %s33, 0
    %p96 = por %p94, %p95
    %p97 = scmp.ne.s32.totalorder %s85, %s86
    %p98 = scmp.eq.s32.totalorder %s34, 1
    %p99 = por %p97, %p98
    %p101 = scmp.ne.s32.totalorder %s86, %s100
    %p102 = scmp.eq.s32.totalorder %s34, 0
    %p103 = por %p101, %p102
    %s105 = sadd.s32 %s104, 1
    %p108 = scmp.eq.s32.totalorder %s28, 1
    %p109 = scmp.ne.s32.totalorder %s104, %s106
    %p110 = scmp.eq.s32.totalorder %s28, 0
    %p111 = por %p109, %p110
    %p112 = scmp.ne.s32.totalorder %s104, %s106
    %p113 = scmp.eq.s32.totalorder %s33, 1
    %p114 = por %p112, %p113
    %p115 = scmp.ne.s32.totalorder %s106, %s107
    %p116 = scmp.eq.s32.totalorder %s33, 0
    %p117 = por %p115, %p116
    %p118 = scmp.ne.s32.totalorder %s106, %s107
    %p119 = scmp.eq.s32.totalorder %s34, 1
    %p120 = por %p118, %p119
    %p122 = scmp.ne.s32.totalorder %s107, %s121
    %p123 = scmp.eq.s32.totalorder %s34, 0
    %p124 = por %p122, %p123
    %s126 = sadd.s32 %s125, 1
    %p129 = scmp.eq.s32.totalorder %s28, 1
    %p130 = scmp.ne.s32.totalorder %s125, %s127
    %p131 = scmp.eq.s32.totalorder %s28, 0
    %p132 = por %p130, %p131
    %p133 = scmp.ne.s32.totalorder %s125, %s127
    %p134 = scmp.eq.s32.totalorder %s33, 1
    %p135 = por %p133, %p134
    %p136 = scmp.ne.s32.totalorder %s127, %s128
    %p137 = scmp.eq.s32.totalorder %s33, 0
    %p138 = por %p136, %p137
    %p139 = scmp.ne.s32.totalorder %s127, %s128
    %p140 = scmp.eq.s32.totalorder %s34, 1
    %p141 = por %p139, %p140
    %p143 = scmp.ne.s32.totalorder %s128, %s142
    %p144 = scmp.eq.s32.totalorder %s34, 0
    %p145 = por %p143, %p144
    %s147 = sadd.s32 %s146, 1
    %p150 = scmp.eq.s32.totalorder %s28, 1
    %p151 = scmp.ne.s32.totalorder %s146, %s148
    %p152 = scmp.eq.s32.totalorder %s28, 0
    %p153 = por %p151, %p152
    %p154 = scmp.ne.s32.totalorder %s146, %s148
    %p155 = scmp.eq.s32.totalorder %s33, 1
    %p156 = por %p154, %p155
    %p157 = scmp.ne.s32.totalorder %s148, %s149
    %p158 = scmp.eq.s32.totalorder %s33, 0
    %p159 = por %p157, %p158
    %p160 = scmp.ne.s32.totalorder %s148, %s149
    %p161 = scmp.eq.s32.totalorder %s34, 1
    %p162 = por %p160, %p161
    %p164 = scmp.ne.s32.totalorder %s149, %s163
    %p165 = scmp.eq.s32.totalorder %s34, 0
    %p166 = por %p164, %p165
    %s168 = sadd.s32 %s167, 1
    %p171 = scmp.eq.s32.totalorder %s28, 1
    %p172 = scmp.ne.s32.totalorder %s167, %s169
    %p173 = scmp.eq.s32.totalorder %s28, 0
    %p174 = por %p172, %p173
    %p175 = scmp.ne.s32.totalorder %s167, %s169
    %p176 = scmp.eq.s32.totalorder %s33, 1
    %p177 = por %p175, %p176
    %p178 = scmp.ne.s32.totalorder %s169, %s170
    %p179 = scmp.eq.s32.totalorder %s33, 0
    %p180 = por %p178, %p179
    %p181 = scmp.ne.s32.totalorder %s169, %s170
    %p182 = scmp.eq.s32.totalorder %s34, 1
    %p183 = por %p181, %p182
    %p185 = scmp.ne.s32.totalorder %s170, %s184
    %p186 = scmp.eq.s32.totalorder %s34, 0
    %p187 = por %p185, %p186
    %s189 = sadd.s32 %s188, 1
    %p192 = scmp.eq.s32.totalorder %s28, 1
    %p193 = scmp.ne.s32.totalorder %s188, %s190
    %p194 = scmp.eq.s32.totalorder %s28, 0
    %p195 = por %p193, %p194
    %p196 = scmp.ne.s32.totalorder %s188, %s190
    %p197 = scmp.eq.s32.totalorder %s33, 1
    %p198 = por %p196, %p197
    %p199 = scmp.ne.s32.totalorder %s190, %s191
    %p200 = scmp.eq.s32.totalorder %s33, 0
    %p201 = por %p199, %p200
    %p202 = scmp.ne.s32.totalorder %s190, %s191
    %p203 = scmp.eq.s32.totalorder %s34, 1
    %p204 = por %p202, %p203
    %p206 = scmp.ne.s32.totalorder %s191, %s205
    %p207 = scmp.eq.s32.totalorder %s34, 0
    %p208 = por %p206, %p207
    %s210 = sadd.s32 %s209, 1
    %p213 = scmp.eq.s32.totalorder %s28, 1
    %p214 = scmp.ne.s32.totalorder %s209, %s211
    %p215 = scmp.eq.s32.totalorder %s28, 0
    %p216 = por %p214, %p215
    %p217 = scmp.ne.s32.totalorder %s209, %s211
    %p218 = scmp.eq.s32.totalorder %s33, 1
    %p219 = por %p217, %p218
    %p220 = scmp.ne.s32.totalorder %s211, %s212
    %p221 = scmp.eq.s32.totalorder %s33, 0
    %p222 = por %p220, %p221
    %p223 = scmp.ne.s32.totalorder %s211, %s212
    %p224 = scmp.eq.s32.totalorder %s34, 1
    %p225 = por %p223, %p224
    %p227 = scmp.ne.s32.totalorder %s212, %s226
    %p228 = scmp.eq.s32.totalorder %s34, 0
    %p229 = por %p227, %p228
    %s231 = sadd.s32 %s230, 1
    %p234 = scmp.eq.s32.totalorder %s28, 1
    %p235 = scmp.ne.s32.totalorder %s230, %s232
    %p236 = scmp.eq.s32.totalorder %s28, 0
    %p237 = por %p235, %p236
    %p238 = scmp.ne.s32.totalorder %s230, %s232
    %p239 = scmp.eq.s32.totalorder %s33, 1
    %p240 = por %p238, %p239
    %p241 = scmp.ne.s32.totalorder %s232, %s233
    %p242 = scmp.eq.s32.totalorder %s33, 0
    %p243 = por %p241, %p242
    %p244 = scmp.ne.s32.totalorder %s232, %s233
    %p245 = scmp.eq.s32.totalorder %s34, 1
    %p246 = por %p244, %p245
    %p248 = scmp.ne.s32.totalorder %s233, %s247
    %p249 = scmp.eq.s32.totalorder %s34, 0
    %p250 = por %p248, %p249
    %s252 = sadd.s32 %s251, 1
    %p255 = scmp.eq.s32.totalorder %s28, 1
    %p256 = scmp.ne.s32.totalorder %s251, %s253
    %p257 = scmp.eq.s32.totalorder %s28, 0
    %p258 = por %p256, %p257
    %p259 = scmp.ne.s32.totalorder %s251, %s253
    %p260 = scmp.eq.s32.totalorder %s33, 1
    %p261 = por %p259, %p260
    %p262 = scmp.ne.s32.totalorder %s253, %s254
    %p263 = scmp.eq.s32.totalorder %s33, 0
    %p264 = por %p262, %p263
    %p265 = scmp.ne.s32.totalorder %s253, %s254
    %p266 = scmp.eq.s32.totalorder %s34, 1
    %p267 = por %p265, %p266
    %p269 = scmp.ne.s32.totalorder %s254, %s268
    %p270 = scmp.eq.s32.totalorder %s34, 0
    %p271 = por %p269, %p270
    %s273 = sadd.s32 %s272, 1
    %p276 = scmp.eq.s32.totalorder %s28, 1
    %p277 = scmp.ne.s32.totalorder %s272, %s274
    %p278 = scmp.eq.s32.totalorder %s28, 0
    %p279 = por %p277, %p278
    %p280 = scmp.ne.s32.totalorder %s272, %s274
    %p281 = scmp.eq.s32.totalorder %s33, 1
    %p282 = por %p280, %p281
    %p283 = scmp.ne.s32.totalorder %s274, %s275
    %p284 = scmp.eq.s32.totalorder %s33, 0
    %p285 = por %p283, %p284
    %p286 = scmp.ne.s32.totalorder %s274, %s275
    %p287 = scmp.eq.s32.totalorder %s34, 1
    %p288 = por %p286, %p287
    %p290 = scmp.ne.s32.totalorder %s275, %s289
    %p291 = scmp.eq.s32.totalorder %s34, 0
    %p292 = por %p290, %p291
    %s294 = sadd.s32 %s293, 1
    %p297 = scmp.eq.s32.totalorder %s28, 1
    %p298 = scmp.ne.s32.totalorder %s293, %s295
    %p299 = scmp.eq.s32.totalorder %s28, 0
    %p300 = por %p298, %p299
    %p301 = scmp.ne.s32.totalorder %s293, %s295
    %p302 = scmp.eq.s32.totalorder %s33, 1
    %p303 = por %p301, %p302
    %p304 = scmp.ne.s32.totalorder %s295, %s296
    %p305 = scmp.eq.s32.totalorder %s33, 0
    %p306 = por %p304, %p305
    %p307 = scmp.ne.s32.totalorder %s295, %s296
    %p308 = scmp.eq.s32.totalorder %s34, 1
    %p309 = por %p307, %p308
    %p311 = scmp.ne.s32.totalorder %s296, %s310
    %p312 = scmp.eq.s32.totalorder %s34, 0
    %p313 = por %p311, %p312
    %s315 = sadd.s32 %s314, 1
    %p318 = scmp.eq.s32.totalorder %s28, 1
    %p319 = scmp.ne.s32.totalorder %s314, %s316
    %p320 = scmp.eq.s32.totalorder %s28, 0
    %p321 = por %p319, %p320
    %p322 = scmp.ne.s32.totalorder %s314, %s316
    %p323 = scmp.eq.s32.totalorder %s33, 1
    %p324 = por %p322, %p323
    %p325 = scmp.ne.s32.totalorder %s316, %s317
    %p326 = scmp.eq.s32.totalorder %s33, 0
    %p327 = por %p325, %p326
    %p328 = scmp.ne.s32.totalorder %s316, %s317
    %p329 = scmp.eq.s32.totalorder %s34, 1
    %p330 = por %p328, %p329
    %p332 = scmp.ne.s32.totalorder %s317, %s331
    %p333 = scmp.eq.s32.totalorder %s34, 0
    %p334 = por %p332, %p333
    %s336 = sadd.s32 %s335, 1
    %p339 = scmp.eq.s32.totalorder %s28, 1
    %p340 = scmp.ne.s32.totalorder %s335, %s337
    %p341 = scmp.eq.s32.totalorder %s28, 0
    %p342 = por %p340, %p341
    %p343 = scmp.ne.s32.totalorder %s335, %s337
    %p344 = scmp.eq.s32.totalorder %s33, 1
    %p345 = por %p343, %p344
    %p346 = scmp.ne.s32.totalorder %s337, %s338
    %p347 = scmp.eq.s32.totalorder %s33, 0
    %p348 = por %p346, %p347
    %p349 = scmp.ne.s32.totalorder %s337, %s338
    %p350 = scmp.eq.s32.totalorder %s34, 1
    %p351 = por %p349, %p350
    %p353 = scmp.ne.s32.totalorder %s338, %s352
    %p354 = scmp.eq.s32.totalorder %s34, 0
    %p355 = por %p353, %p354
    %s357 = sadd.s32 %s356, 1
    %p360 = scmp.eq.s32.totalorder %s28, 1
    %p361 = scmp.ne.s32.totalorder %s356, %s358
    %p362 = scmp.eq.s32.totalorder %s28, 0
    %p363 = por %p361, %p362
    %p364 = scmp.ne.s32.totalorder %s356, %s358
    %p365 = scmp.eq.s32.totalorder %s33, 1
    %p366 = por %p364, %p365
    %p367 = scmp.ne.s32.totalorder %s358, %s359
    %p368 = scmp.eq.s32.totalorder %s33, 0
    %p369 = por %p367, %p368
    %p370 = scmp.ne.s32.totalorder %s358, %s359
    %p371 = scmp.eq.s32.totalorder %s34, 1
    %p372 = por %p370, %p371
    %p374 = scmp.ne.s32.totalorder %s359, %s373
    %p375 = scmp.eq.s32.totalorder %s34, 0
    %p376 = por %p374, %p375
    %s378 = sadd.s32 %s377, 1
    %p381 = scmp.eq.s32.totalorder %s28, 1
    %p382 = scmp.ne.s32.totalorder %s377, %s379
    %p383 = scmp.eq.s32.totalorder %s28, 0
    %p384 = por %p382, %p383
    %p385 = scmp.ne.s32.totalorder %s377, %s379
    %p386 = scmp.eq.s32.totalorder %s33, 1
    %p387 = por %p385, %p386
    %p388 = scmp.ne.s32.totalorder %s379, %s380
    %p389 = scmp.eq.s32.totalorder %s33, 0
    %p390 = por %p388, %p389
    %p391 = scmp.ne.s32.totalorder %s379, %s380
    %p392 = scmp.eq.s32.totalorder %s34, 1
    %p393 = por %p391, %p392
    %p395 = scmp.ne.s32.totalorder %s380, %s394
    %p396 = scmp.eq.s32.totalorder %s34, 0
    %p397 = por %p395, %p396
    %s399 = sadd.s32 %s398, 1
    %p402 = scmp.eq.s32.totalorder %s28, 1
    %p403 = scmp.ne.s32.totalorder %s398, %s400
    %p404 = scmp.eq.s32.totalorder %s28, 0
    %p405 = por %p403, %p404
    %p406 = scmp.ne.s32.totalorder %s398, %s400
    %p407 = scmp.eq.s32.totalorder %s33, 1
    %p408 = por %p406, %p407
    %p409 = scmp.ne.s32.totalorder %s400, %s401
    %p410 = scmp.eq.s32.totalorder %s33, 0
    %p411 = por %p409, %p410
    %p412 = scmp.ne.s32.totalorder %s400, %s401
    %p413 = scmp.eq.s32.totalorder %s34, 1
    %p414 = por %p412, %p413
    %p416 = scmp.ne.s32.totalorder %s401, %s415
    %p417 = scmp.eq.s32.totalorder %s34, 0
    %p418 = por %p416, %p417
    %s420 = sadd.s32 %s419, 1
    %p423 = scmp.eq.s32.totalorder %s28, 1
    %p424 = scmp.ne.s32.totalorder %s419, %s421
    %p425 = scmp.eq.s32.totalorder %s28, 0
    %p426 = por %p424, %p425
    %p427 = scmp.ne.s32.totalorder %s419, %s421
    %p428 = scmp.eq.s32.totalorder %s33, 1
    %p429 = por %p427, %p428
    %p430 = scmp.ne.s32.totalorder %s421, %s422
    %p431 = scmp.eq.s32.totalorder %s33, 0
    %p432 = por %p430, %p431
    %p433 = scmp.ne.s32.totalorder %s421, %s422
    %p434 = scmp.eq.s32.totalorder %s34, 1
    %p435 = por %p433, %p434
    %p437 = scmp.ne.s32.totalorder %s422, %s436
    %p438 = scmp.eq.s32.totalorder %s34, 0
    %p439 = por %p437, %p438
    %s441 = sadd.s32 %s440, 1
    %p444 = scmp.eq.s32.totalorder %s28, 1
    %p445 = scmp.ne.s32.totalorder %s440, %s442
    %p446 = scmp.eq.s32.totalorder %s28, 0
    %p447 = por %p445, %p446
    %p448 = scmp.ne.s32.totalorder %s440, %s442
    %p449 = scmp.eq.s32.totalorder %s33, 1
    %p450 = por %p448, %p449
    %p451 = scmp.ne.s32.totalorder %s442, %s443
    %p452 = scmp.eq.s32.totalorder %s33, 0
    %p453 = por %p451, %p452
    %p454 = scmp.ne.s32.totalorder %s442, %s443
    %p455 = scmp.eq.s32.totalorder %s34, 1
    %p456 = por %p454, %p455
    %p458 = scmp.ne.s32.totalorder %s443, %s457
    %p459 = scmp.eq.s32.totalorder %s34, 0
    %p460 = por %p458, %p459
    %s462 = sadd.s32 %s461, 1
    %p465 = scmp.eq.s32.totalorder %s28, 1
    %p466 = scmp.ne.s32.totalorder %s461, %s463
    %p467 = scmp.eq.s32.totalorder %s28, 0
    %p468 = por %p466, %p467
    %p469 = scmp.ne.s32.totalorder %s461, %s463
    %p470 = scmp.eq.s32.totalorder %s33, 1
    %p471 = por %p469, %p470
    %p472 = scmp.ne.s32.totalorder %s463, %s464
    %p473 = scmp.eq.s32.totalorder %s33, 0
    %p474 = por %p472, %p473
    %p475 = scmp.ne.s32.totalorder %s463, %s464
    %p476 = scmp.eq.s32.totalorder %s34, 1
    %p477 = por %p475, %p476
    %p479 = scmp.ne.s32.totalorder %s464, %s478
    %p480 = scmp.eq.s32.totalorder %s34, 0
    %p481 = por %p479, %p480
    %s483 = sadd.s32 %s482, 1
    %p486 = scmp.eq.s32.totalorder %s28, 1
    %p487 = scmp.ne.s32.totalorder %s482, %s484
    %p488 = scmp.eq.s32.totalorder %s28, 0
    %p489 = por %p487, %p488
    %p490 = scmp.ne.s32.totalorder %s482, %s484
    %p491 = scmp.eq.s32.totalorder %s33, 1
    %p492 = por %p490, %p491
    %p493 = scmp.ne.s32.totalorder %s484, %s485
    %p494 = scmp.eq.s32.totalorder %s33, 0
    %p495 = por %p493, %p494
    %p496 = scmp.ne.s32.totalorder %s484, %s485
    %p497 = scmp.eq.s32.totalorder %s34, 1
    %p498 = por %p496, %p497
    %p500 = scmp.ne.s32.totalorder %s485, %s499
    %p501 = scmp.eq.s32.totalorder %s34, 0
    %p502 = por %p500, %p501
    %s503 = ssub.s32 %s28, %s35
    %p504 = scmp.eq.s32.totalorder %s503, 0
    %s506 = sadd.s32 %s505, 1
    %s507 = scalar_select %p504, %s505, %s506
    %p510 = pneg %p504
    %p511 = scmp.eq.s32.totalorder %s28, 1
    %p512 = por %p510, %p511
    %p513 = scmp.ne.s32.totalorder %s505, %s508
    %p514 = scmp.eq.s32.totalorder %s28, 0
    %p515 = por %p513, %p514
    %p516 = scmp.ne.s32.totalorder %s505, %s508
    %p517 = scmp.eq.s32.totalorder %s33, 1
    %p518 = por %p516, %p517
    %p519 = scmp.ne.s32.totalorder %s508, %s509
    %p520 = scmp.eq.s32.totalorder %s33, 0
    %p521 = por %p519, %p520
    %p522 = scmp.ne.s32.totalorder %s508, %s509
    %p523 = scmp.eq.s32.totalorder %s34, 1
    %p524 = por %p522, %p523
    %p526 = scmp.ne.s32.totalorder %s509, %s525
    %p527 = scmp.eq.s32.totalorder %s34, 0
    %p528 = por %p526, %p527
    %p529 = scmp.le.s32.totalorder 1, %s28
    %p530 = scmp.lt.s32.totalorder %s28, 3
    %p531 = pnand %p529, %p530
    %p532 = pneg %p531
    // Predicated region
    $region9: #{resnet_features_forward.1} parent=5 // pred_check
      _
    $region10: #{resnet_features_forward.1} parent=5 // pred_check_branch
      %534 = sbr.rel (%p531) target = $region12
    $region11: #{resnet_features_forward.1} parent=5 // pred_region
      %s535 = ssub.s32 %s28, 1
      // Predicated region
      $region13: #{resnet_features_forward.1} parent=11 // pred_check
        %p536 = pneg %p75
      $region14: #{resnet_features_forward.1} parent=11 // pred_check_branch
        %538 = sbr.rel (%p536) target = $region16
      $region15: #{resnet_features_forward.1} parent=11 // pred_region
        _
      $region16: #{resnet_features_forward.1} parent=11 // pred_fallthru
        _
      // Predicated region
      $region17: #{resnet_features_forward.1} parent=11 // pred_check
        %p539 = pneg %p96
      $region18: #{resnet_features_forward.1} parent=11 // pred_check_branch
        %541 = sbr.rel (%p539) target = $region20
      $region19: #{resnet_features_forward.1} parent=11 // pred_region
        _
      $region20: #{resnet_features_forward.1} parent=11 // pred_fallthru
        _
      // Predicated region
      $region21: #{resnet_features_forward.1} parent=11 // pred_check
        %p542 = pneg %p117
      $region22: #{resnet_features_forward.1} parent=11 // pred_check_branch
        %544 = sbr.rel (%p542) target = $region24
      $region23: #{resnet_features_forward.1} parent=11 // pred_region
        _
      $region24: #{resnet_features_forward.1} parent=11 // pred_fallthru
        _
      // Predicated region
      $region25: #{resnet_features_forward.1} parent=11 // pred_check
        %p545 = pneg %p138
      $region26: #{resnet_features_forward.1} parent=11 // pred_check_branch
        %547 = sbr.rel (%p545) target = $region28
      $region27: #{resnet_features_forward.1} parent=11 // pred_region
        _
      $region28: #{resnet_features_forward.1} parent=11 // pred_fallthru
        _
      // Predicated region
      $region29: #{resnet_features_forward.1} parent=11 // pred_check
        %p548 = pneg %p159
      $region30: #{resnet_features_forward.1} parent=11 // pred_check_branch
        %550 = sbr.rel (%p548) target = $region32
      $region31: #{resnet_features_forward.1} parent=11 // pred_region
        _
      $region32: #{resnet_features_forward.1} parent=11 // pred_fallthru
        _
      // Predicated region
      $region33: #{resnet_features_forward.1} parent=11 // pred_check
        %p551 = pneg %p180
      $region34: #{resnet_features_forward.1} parent=11 // pred_check_branch
        %553 = sbr.rel (%p551) target = $region36
      $region35: #{resnet_features_forward.1} parent=11 // pred_region
        _
      $region36: #{resnet_features_forward.1} parent=11 // pred_fallthru
        _
      // Predicated region
      $region37: #{resnet_features_forward.1} parent=11 // pred_check
        %p554 = pneg %p201
      $region38: #{resnet_features_forward.1} parent=11 // pred_check_branch
        %556 = sbr.rel (%p554) target = $region40
      $region39: #{resnet_features_forward.1} parent=11 // pred_region
        _
      $region40: #{resnet_features_forward.1} parent=11 // pred_fallthru
        _
      // Predicated region
      $region41: #{resnet_features_forward.1} parent=11 // pred_check
        %p557 = pneg %p222
      $region42: #{resnet_features_forward.1} parent=11 // pred_check_branch
        %559 = sbr.rel (%p557) target = $region44
      $region43: #{resnet_features_forward.1} parent=11 // pred_region
        _
      $region44: #{resnet_features_forward.1} parent=11 // pred_fallthru
        _
      // Predicated region
      $region45: #{resnet_features_forward.1} parent=11 // pred_check
        %p560 = pneg %p243
      $region46: #{resnet_features_forward.1} parent=11 // pred_check_branch
        %562 = sbr.rel (%p560) target = $region48
      $region47: #{resnet_features_forward.1} parent=11 // pred_region
        _
      $region48: #{resnet_features_forward.1} parent=11 // pred_fallthru
        _
      // Predicated region
      $region49: #{resnet_features_forward.1} parent=11 // pred_check
        %p563 = pneg %p264
      $region50: #{resnet_features_forward.1} parent=11 // pred_check_branch
        %565 = sbr.rel (%p563) target = $region52
      $region51: #{resnet_features_forward.1} parent=11 // pred_region
        _
      $region52: #{resnet_features_forward.1} parent=11 // pred_fallthru
        _
      // Predicated region
      $region53: #{resnet_features_forward.1} parent=11 // pred_check
        %p566 = pneg %p285
      $region54: #{resnet_features_forward.1} parent=11 // pred_check_branch
        %568 = sbr.rel (%p566) target = $region56
      $region55: #{resnet_features_forward.1} parent=11 // pred_region
        _
      $region56: #{resnet_features_forward.1} parent=11 // pred_fallthru
        _
      // Predicated region
      $region57: #{resnet_features_forward.1} parent=11 // pred_check
        %p569 = pneg %p306
      $region58: #{resnet_features_forward.1} parent=11 // pred_check_branch
        %571 = sbr.rel (%p569) target = $region60
      $region59: #{resnet_features_forward.1} parent=11 // pred_region
        _
      $region60: #{resnet_features_forward.1} parent=11 // pred_fallthru
        _
      // Predicated region
      $region61: #{resnet_features_forward.1} parent=11 // pred_check
        %p572 = pneg %p327
      $region62: #{resnet_features_forward.1} parent=11 // pred_check_branch
        %574 = sbr.rel (%p572) target = $region64
      $region63: #{resnet_features_forward.1} parent=11 // pred_region
        _
      $region64: #{resnet_features_forward.1} parent=11 // pred_fallthru
        _
      // Predicated region
      $region65: #{resnet_features_forward.1} parent=11 // pred_check
        %p575 = pneg %p348
      $region66: #{resnet_features_forward.1} parent=11 // pred_check_branch
        %577 = sbr.rel (%p575) target = $region68
      $region67: #{resnet_features_forward.1} parent=11 // pred_region
        _
      $region68: #{resnet_features_forward.1} parent=11 // pred_fallthru
        _
      // Predicated region
      $region69: #{resnet_features_forward.1} parent=11 // pred_check
        %p578 = pneg %p369
      $region70: #{resnet_features_forward.1} parent=11 // pred_check_branch
        %580 = sbr.rel (%p578) target = $region72
      $region71: #{resnet_features_forward.1} parent=11 // pred_region
        _
      $region72: #{resnet_features_forward.1} parent=11 // pred_fallthru
        _
      // Predicated region
      $region73: #{resnet_features_forward.1} parent=11 // pred_check
        %p581 = pneg %p390
      $region74: #{resnet_features_forward.1} parent=11 // pred_check_branch
        %583 = sbr.rel (%p581) target = $region76
      $region75: #{resnet_features_forward.1} parent=11 // pred_region
        _
      $region76: #{resnet_features_forward.1} parent=11 // pred_fallthru
        _
      // Predicated region
      $region77: #{resnet_features_forward.1} parent=11 // pred_check
        %p584 = pneg %p411
      $region78: #{resnet_features_forward.1} parent=11 // pred_check_branch
        %586 = sbr.rel (%p584) target = $region80
      $region79: #{resnet_features_forward.1} parent=11 // pred_region
        _
      $region80: #{resnet_features_forward.1} parent=11 // pred_fallthru
        _
      // Predicated region
      $region81: #{resnet_features_forward.1} parent=11 // pred_check
        %p587 = pneg %p432
      $region82: #{resnet_features_forward.1} parent=11 // pred_check_branch
        %589 = sbr.rel (%p587) target = $region84
      $region83: #{resnet_features_forward.1} parent=11 // pred_region
        _
      $region84: #{resnet_features_forward.1} parent=11 // pred_fallthru
        _
      // Predicated region
      $region85: #{resnet_features_forward.1} parent=11 // pred_check
        %p590 = pneg %p453
      $region86: #{resnet_features_forward.1} parent=11 // pred_check_branch
        %592 = sbr.rel (%p590) target = $region88
      $region87: #{resnet_features_forward.1} parent=11 // pred_region
        _
      $region88: #{resnet_features_forward.1} parent=11 // pred_fallthru
        _
      // Predicated region
      $region89: #{resnet_features_forward.1} parent=11 // pred_check
        %p593 = pneg %p474
      $region90: #{resnet_features_forward.1} parent=11 // pred_check_branch
        %595 = sbr.rel (%p593) target = $region92
      $region91: #{resnet_features_forward.1} parent=11 // pred_region
        _
      $region92: #{resnet_features_forward.1} parent=11 // pred_fallthru
        _
      // Predicated region
      $region93: #{resnet_features_forward.1} parent=11 // pred_check
        %p596 = pneg %p495
      $region94: #{resnet_features_forward.1} parent=11 // pred_check_branch
        %598 = sbr.rel (%p596) target = $region96
      $region95: #{resnet_features_forward.1} parent=11 // pred_region
        _
      $region96: #{resnet_features_forward.1} parent=11 // pred_fallthru
        _
    $region12: #{resnet_features_forward.1} parent=5 // pred_fallthru
      _
    %p599 = scmp.lt.s32.totalorder %s28, 2
    // Predicated region
    $region97: #{resnet_features_forward.1} parent=5 // pred_check
      %p600 = pneg %p599
    $region98: #{resnet_features_forward.1} parent=5 // pred_check_branch
      %602 = sbr.rel (%p600) target = $region100
    $region99: #{resnet_features_forward.1} parent=5 // pred_region
      // Predicated region
      $region101: #{resnet_features_forward.1} parent=99 // pred_check
        %p603 = pneg %p48
      $region102: #{resnet_features_forward.1} parent=99 // pred_check_branch
        %605 = sbr.rel (%p603) target = $region104
      $region103: #{resnet_features_forward.1} parent=99 // pred_region
        %p606 = scmp.lt.s32.totalorder %s28, 1
        %s607 = scalar_select %p606, %s28, 1
        %s608 = smul.addr %s607, 2
        %s609 = smul.addr %s608, 2
        %s610 = scalar_lea.vmem %s0, %s609
      $region104: #{resnet_features_forward.1} parent=99 // pred_fallthru
        _
    $region100: #{resnet_features_forward.1} parent=5 // pred_fallthru
      _
    %p611 = scmp.le.s32.totalorder 1, %s28
    %p612 = scmp.lt.s32.totalorder %s28, 3
    %p613 = pnand %p611, %p612
    %p614 = pneg %p613
    // Predicated region
    $region105: #{resnet_features_forward.1} parent=5 // pred_check
      _
    $region106: #{resnet_features_forward.1} parent=5 // pred_check_branch
      %616 = sbr.rel (%p613) target = $region108
    $region107: #{resnet_features_forward.1} parent=5 // pred_region
      %s617 = ssub.s32 %s28, 1
      %p618 = scmp.lt.s32.totalorder %s33, 1
      %s619 = scalar_select %p618, %s33, 1
      %s620 = smul.addr %s619, 2
      %s621 = smul.addr %s620, 2
      %s622 = scalar_lea.vmem %s0, %s621
      %p623 = pneg %p54
      %p624 = pneg %p51
      %p625 = pneg %p75
      %p626 = pneg %p72
      %p627 = pneg %p96
      %p628 = pneg %p93
      %p629 = pneg %p117
      %p630 = pneg %p114
      %p631 = pneg %p138
      %p632 = pneg %p135
      %p633 = pneg %p159
      %p634 = pneg %p156
      %p635 = pneg %p180
      %p636 = pneg %p177
      %p637 = pneg %p201
      %p638 = pneg %p198
      %p639 = pneg %p222
      %p640 = pneg %p219
      %p641 = pneg %p243
      %p642 = pneg %p240
      %p643 = pneg %p264
      %p644 = pneg %p261
      %p645 = pneg %p285
      %p646 = pneg %p282
      %p647 = pneg %p306
      %p648 = pneg %p303
      %p649 = pneg %p327
      %p650 = pneg %p324
      %p651 = pneg %p348
      %p652 = pneg %p345
      %p653 = pneg %p369
      %p654 = pneg %p366
      %p655 = pneg %p390
      %p656 = pneg %p387
      %p657 = pneg %p411
      %p658 = pneg %p408
      %p659 = pneg %p432
      %p660 = pneg %p429
      %p661 = pneg %p453
      %p662 = pneg %p450
      %p663 = pneg %p474
      %p664 = pneg %p471
      %p665 = pneg %p495
      %p666 = pneg %p492
      %p667 = pneg %p521
      %p668 = pneg %p518
      %p669 = scmp.lt.s32.totalorder %s33, 1
      %s670 = scalar_select %p669, %s33, 1
      %s671 = smul.addr %s670, 2
      %s672 = smul.addr %s671, 8
      %s673 = scalar_lea.vmem %s22, %s672
      %p674 = scmp.lt.s32.totalorder %s33, 1
      %s675 = scalar_select %p674, %s33, 1
      %s676 = smul.addr %s675, 2
      %s677 = smul.addr %s676, 2
      %s678 = scalar_lea.vmem %s0, %s677
      %p679 = scmp.lt.s32.totalorder %s33, 1
      %s680 = scalar_select %p679, %s33, 1
      %s681 = smul.addr %s680, 2
      %s682 = smul.addr %s681, 8
      %s683 = scalar_lea.vmem %s22, %s682
      %v685 = vld [vmem:[%s678] sm:$0xf]
      %v686 = vld [vmem:[%s1] sm:$0xff]
      %v687 = vld [vmem:[%s1 + $0x8] sm:$0xff]
      %v688 = vld [vmem:[%s1 + $0x10] sm:$0xff]
      %v689 = vld [vmem:[%s1 + $0x18] sm:$0xff]
      %v690 = vld [vmem:[%s1 + $0x20] sm:$0xff]
      %v691 = vld [vmem:[%s1 + $0x28] sm:$0xff]
      %v692 = vld [vmem:[%s1 + $0x30] sm:$0xff]
      %v693 = vld [vmem:[%s1 + $0x38] sm:$0xff]
      %v694 = vld [vmem:[%s1 + $0x40] sm:$0xff]
      %v695 = vld [vmem:[%s1 + $0x48] sm:$0xff]
      %v696 = vld [vmem:[%s1 + $0x50] sm:$0xff]
      %v697 = vld [vmem:[%s1 + $0x58] sm:$0xff]
      %v698 = vld [vmem:[%s1 + $0x60] sm:$0xff]
      %v699 = vld [vmem:[%s1 + $0x68] sm:$0xff]
      %v700 = vld [vmem:[%s1 + $0x70] sm:$0xff]
      %v701 = vld [vmem:[%s1 + $0x78] sm:$0xff]
      %v702 = vld [vmem:[%s1 + $0x80] sm:$0xff]
      %v703 = vld [vmem:[%s1 + $0x88] sm:$0xff]
      %v704 = vld [vmem:[%s1 + $0x90] sm:$0xff]
      %v705 = vld [vmem:[%s1 + $0x98] sm:$0xff]
      %v706 = vld [vmem:[%s1 + $0xa0] sm:$0xff]
      %v707 = vld [vmem:[%s1 + $0xa8] sm:$0xff]
      %v708 = vld [vmem:[%s1 + $0xb0] sm:$0xff]
      %v709 = vld [vmem:[%s1 + $0xb8] sm:$0xff]
      %v710 = vld [vmem:[%s1 + $0xc0] sm:$0xff]
      %v711 = vld [vmem:[%s1 + $0xc8] sm:$0xff]
      %v712 = vld [vmem:[%s1 + $0xd0] sm:$0xff]
      %v713 = vld [vmem:[%s1 + $0xd8] sm:$0xff]
      %v714 = vld [vmem:[%s1 + $0xe0] sm:$0xff]
      %v715 = vld [vmem:[%s1 + $0xe8] sm:$0xff]
      %v716 = vld [vmem:[%s1 + $0xf0] sm:$0xff]
      %v717 = vld [vmem:[%s1 + $0xf8] sm:$0xff]
      %v720 = vunpack.c.l.s4 1983009808
      %v721 = vunpack.c.0.s8 %v720
      %v722 = vlaneseq
      %v723 = vshrl.u32 %v722, 7
      %v724 = vsub.s32 %v721, %v723
      %v725 = vrot.slane %v685, %v724
      %v726 = vcombine.high %v725, %v725
      %v761 = vunpack.c.l.b16 %v686
      %v762 = vunpack.c.h.b16 %v686
      %v763 = vunpack.c.l.b16 %v687
      %v764 = vunpack.c.h.b16 %v687
      %v765 = vunpack.c.l.b16 %v688
      %v766 = vunpack.c.h.b16 %v688
      %v767 = vunpack.c.l.b16 %v689
      %v768 = vunpack.c.h.b16 %v689
      %v769 = vunpack.c.l.b16 %v690
      %v770 = vunpack.c.h.b16 %v690
      %v771 = vunpack.c.l.b16 %v691
      %v772 = vunpack.c.h.b16 %v691
      %v773 = vunpack.c.l.b16 %v692
      %v774 = vunpack.c.h.b16 %v692
      %v775 = vunpack.c.l.b16 %v693
      %v776 = vunpack.c.h.b16 %v693
      %v777 = vunpack.c.l.b16 %v694
      %v778 = vunpack.c.h.b16 %v694
      %v779 = vunpack.c.l.b16 %v695
      %v780 = vunpack.c.h.b16 %v695
      %v781 = vunpack.c.l.b16 %v696
      %v782 = vunpack.c.h.b16 %v696
      %v783 = vunpack.c.l.b16 %v697
      %v784 = vunpack.c.h.b16 %v697
      %v785 = vunpack.c.l.b16 %v698
      %v786 = vunpack.c.h.b16 %v698
      %v787 = vunpack.c.l.b16 %v699
      %v788 = vunpack.c.h.b16 %v699
      %v789 = vunpack.c.l.b16 %v700
      %v790 = vunpack.c.h.b16 %v700
      %v791 = vunpack.c.l.b16 %v701
      %v792 = vunpack.c.h.b16 %v701
      %v793 = vunpack.c.l.b16 %v702
      %v794 = vunpack.c.h.b16 %v702
      %v795 = vunpack.c.l.b16 %v703
      %v796 = vunpack.c.h.b16 %v703
      %v797 = vunpack.c.l.b16 %v704
      %v798 = vunpack.c.h.b16 %v704
      %v799 = vunpack.c.l.b16 %v705
      %v800 = vunpack.c.h.b16 %v705
      %v801 = vunpack.c.l.b16 %v706
      %v802 = vunpack.c.h.b16 %v706
      %v803 = vunpack.c.l.b16 %v707
      %v804 = vunpack.c.h.b16 %v707
      %v805 = vunpack.c.l.b16 %v708
      %v806 = vunpack.c.h.b16 %v708
      %v807 = vunpack.c.l.b16 %v709
      %v808 = vunpack.c.h.b16 %v709
      %v809 = vunpack.c.l.b16 %v710
      %v810 = vunpack.c.h.b16 %v710
      %v811 = vunpack.c.l.b16 %v711
      %v812 = vunpack.c.h.b16 %v711
      %v813 = vunpack.c.l.b16 %v712
      %v814 = vunpack.c.h.b16 %v712
      %v815 = vunpack.c.l.b16 %v713
      %v816 = vunpack.c.h.b16 %v713
      %v817 = vunpack.c.l.b16 %v714
      %v818 = vunpack.c.h.b16 %v714
      %v819 = vunpack.c.l.b16 %v715
      %v820 = vunpack.c.h.b16 %v715
      %v821 = vunpack.c.l.b16 %v716
      %v822 = vunpack.c.h.b16 %v716
      %v823 = vunpack.c.l.b16 %v717
      %v824 = vunpack.c.h.b16 %v717
      %v825 = vpack.c.b16 %v763, %v761
      %v826 = vpack.c.b16 %v764, %v762
      %v827 = vpack.c.b16 %v767, %v765
      %v828 = vpack.c.b16 %v768, %v766
      %v829 = vpack.c.b16 %v771, %v769
      %v830 = vpack.c.b16 %v772, %v770
      %v831 = vpack.c.b16 %v775, %v773
      %v832 = vpack.c.b16 %v776, %v774
      %v833 = vpack.c.b16 %v779, %v777
      %v834 = vpack.c.b16 %v780, %v778
      %v835 = vpack.c.b16 %v783, %v781
      %v836 = vpack.c.b16 %v784, %v782
      %v837 = vpack.c.b16 %v787, %v785
      %v838 = vpack.c.b16 %v788, %v786
      %v839 = vpack.c.b16 %v791, %v789
      %v840 = vpack.c.b16 %v792, %v790
      %v841 = vpack.c.b16 %v795, %v793
      %v842 = vpack.c.b16 %v796, %v794
      %v843 = vpack.c.b16 %v799, %v797
      %v844 = vpack.c.b16 %v800, %v798
      %v845 = vpack.c.b16 %v803, %v801
      %v846 = vpack.c.b16 %v804, %v802
      %v847 = vpack.c.b16 %v807, %v805
      %v848 = vpack.c.b16 %v808, %v806
      %v849 = vpack.c.b16 %v811, %v809
      %v850 = vpack.c.b16 %v812, %v810
      %v851 = vpack.c.b16 %v815, %v813
      %v852 = vpack.c.b16 %v816, %v814
      %v853 = vpack.c.b16 %v819, %v817
      %v854 = vpack.c.b16 %v820, %v818
      %v855 = vpack.c.b16 %v823, %v821
      %v856 = vpack.c.b16 %v824, %v822
      %889 = vmatprep.subr.bf16.mxu0 %v840
      %890 = vmatpush1.bf16.msra.mxu0 %v839
      %891 = vmatprep.subr.bf16.mxu0 %v838
      %892 = vmatpush1.bf16.msra.mxu0 %v837
      %893 = vmatprep.subr.bf16.mxu0 %v836
      %894 = vmatpush1.bf16.msra.mxu0 %v835
      %895 = vmatprep.subr.bf16.mxu0 %v834
      %896 = vmatpush1.bf16.msra.mxu0 %v833
      %897 = vmatprep.subr.bf16.mxu0 %v832
      %898 = vmatpush1.bf16.msra.mxu0 %v831
      %899 = vmatprep.subr.bf16.mxu0 %v830
      %900 = vmatpush1.bf16.msra.mxu0 %v829
      %901 = vmatprep.subr.bf16.mxu0 %v828
      %902 = vmatpush1.bf16.msra.mxu0 %v827
      %903 = vmatprep.subr.bf16.mxu0 %v826
      %904 = vmatpush1.bf16.msra.mxu0 %v825
      %905 = vmatprep.subr.bf16.mxu0 %v856
      %906 = vmatpush2.bf16.msra.mxu0 %v855
      %907 = vmatprep.subr.bf16.mxu0 %v854
      %908 = vmatpush2.bf16.msra.mxu0 %v853
      %909 = vmatprep.subr.bf16.mxu0 %v852
      %910 = vmatpush2.bf16.msra.mxu0 %v851
      %911 = vmatprep.subr.bf16.mxu0 %v850
      %912 = vmatpush2.bf16.msra.mxu0 %v849
      %913 = vmatprep.subr.bf16.mxu0 %v848
      %914 = vmatpush2.bf16.msra.mxu0 %v847
      %915 = vmatprep.subr.bf16.mxu0 %v846
      %916 = vmatpush2.bf16.msra.mxu0 %v845
      %917 = vmatprep.subr.bf16.mxu0 %v844
      %918 = vmatpush2.bf16.msra.mxu0 %v843
      %919 = vmatprep.subr.bf16.mxu0 %v842
      %920 = vmatpush2.bf16.msra.mxu0 %v841
      %921 = vmatprep.mubr.bf16.mxu0 %v726
      %922 = vmatmul.mubr.bf16.gmra.mxu0 %v725
      %v923 = vpop.f32.mrf.mxu0
      %v924 = vadd.f32 0.0, %v923
      %v925 = vpop.f32.mrf.mxu0
      %v926 = vadd.f32 0.0, %v925
      %v927 = vpop.f32.mrf.mxu0
      %v928 = vpop.f32.mrf.mxu0
      %929 = vdwg.mxu0
      %v930 = vld [vmem:[%s4] sm:$0xf]
      %v931 = vpack.c.bf16 %v924, %v924
      %v932 = vpack.c.bf16 %v926, %v926
      %s933 = scalar_lea.vmem %s1, 256
      %v934 = vld [vmem:[%s933] sm:$0xff]
      %v935 = vld [vmem:[%s933 + $0x8] sm:$0xff]
      %v936 = vld [vmem:[%s933 + $0x10] sm:$0xff]
      %v937 = vld [vmem:[%s933 + $0x18] sm:$0xff]
      %v938 = vld [vmem:[%s933 + $0x20] sm:$0xff]
      %v939 = vld [vmem:[%s933 + $0x28] sm:$0xff]
      %v940 = vld [vmem:[%s933 + $0x30] sm:$0xff]
      %v941 = vld [vmem:[%s933 + $0x38] sm:$0xff]
      %v942 = vld [vmem:[%s933 + $0x40] sm:$0xff]
      %v943 = vld [vmem:[%s933 + $0x48] sm:$0xff]
      %v944 = vld [vmem:[%s933 + $0x50] sm:$0xff]
      %v945 = vld [vmem:[%s933 + $0x58] sm:$0xff]
      %v946 = vld [vmem:[%s933 + $0x60] sm:$0xff]
      %v947 = vld [vmem:[%s933 + $0x68] sm:$0xff]
      %v948 = vld [vmem:[%s933 + $0x70] sm:$0xff]
      %v949 = vld [vmem:[%s933 + $0x78] sm:$0xff]
      %v950 = vld [vmem:[%s933 + $0x80] sm:$0xff]
      %v951 = vld [vmem:[%s933 + $0x88] sm:$0xff]
      %v952 = vld [vmem:[%s933 + $0x90] sm:$0xff]
      %v953 = vld [vmem:[%s933 + $0x98] sm:$0xff]
      %v954 = vld [vmem:[%s933 + $0xa0] sm:$0xff]
      %v955 = vld [vmem:[%s933 + $0xa8] sm:$0xff]
      %v956 = vld [vmem:[%s933 + $0xb0] sm:$0xff]
      %v957 = vld [vmem:[%s933 + $0xb8] sm:$0xff]
      %v958 = vld [vmem:[%s933 + $0xc0] sm:$0xff]
      %v959 = vld [vmem:[%s933 + $0xc8] sm:$0xff]
      %v960 = vld [vmem:[%s933 + $0xd0] sm:$0xff]
      %v961 = vld [vmem:[%s933 + $0xd8] sm:$0xff]
      %v962 = vld [vmem:[%s933 + $0xe0] sm:$0xff]
      %v963 = vld [vmem:[%s933 + $0xe8] sm:$0xff]
      %v964 = vld [vmem:[%s933 + $0xf0] sm:$0xff]
      %v965 = vld [vmem:[%s933 + $0xf8] sm:$0xff]
      %v998 = vunpack.c.l.b16 %v934
      %v999 = vunpack.c.h.b16 %v934
      %v1000 = vunpack.c.l.b16 %v935
      %v1001 = vunpack.c.h.b16 %v935
      %v1002 = vunpack.c.l.b16 %v936
      %v1003 = vunpack.c.h.b16 %v936
      %v1004 = vunpack.c.l.b16 %v937
      %v1005 = vunpack.c.h.b16 %v937
      %v1006 = vunpack.c.l.b16 %v938
      %v1007 = vunpack.c.h.b16 %v938
      %v1008 = vunpack.c.l.b16 %v939
      %v1009 = vunpack.c.h.b16 %v939
      %v1010 = vunpack.c.l.b16 %v940
      %v1011 = vunpack.c.h.b16 %v940
      %v1012 = vunpack.c.l.b16 %v941
      %v1013 = vunpack.c.h.b16 %v941
      %v1014 = vunpack.c.l.b16 %v942
      %v1015 = vunpack.c.h.b16 %v942
      %v1016 = vunpack.c.l.b16 %v943
      %v1017 = vunpack.c.h.b16 %v943
      %v1018 = vunpack.c.l.b16 %v944
      %v1019 = vunpack.c.h.b16 %v944
      %v1020 = vunpack.c.l.b16 %v945
      %v1021 = vunpack.c.h.b16 %v945
      %v1022 = vunpack.c.l.b16 %v946
      %v1023 = vunpack.c.h.b16 %v946
      %v1024 = vunpack.c.l.b16 %v947
      %v1025 = vunpack.c.h.b16 %v947
      %v1026 = vunpack.c.l.b16 %v948
      %v1027 = vunpack.c.h.b16 %v948
      %v1028 = vunpack.c.l.b16 %v949
      %v1029 = vunpack.c.h.b16 %v949
      %v1030 = vunpack.c.l.b16 %v950
      %v1031 = vunpack.c.h.b16 %v950
      %v1032 = vunpack.c.l.b16 %v951
      %v1033 = vunpack.c.h.b16 %v951
      %v1034 = vunpack.c.l.b16 %v952
      %v1035 = vunpack.c.h.b16 %v952
      %v1036 = vunpack.c.l.b16 %v953
      %v1037 = vunpack.c.h.b16 %v953
      %v1038 = vunpack.c.l.b16 %v954
      %v1039 = vunpack.c.h.b16 %v954
      %v1040 = vunpack.c.l.b16 %v955
      %v1041 = vunpack.c.h.b16 %v955
      %v1042 = vunpack.c.l.b16 %v956
      %v1043 = vunpack.c.h.b16 %v956
      %v1044 = vunpack.c.l.b16 %v957
      %v1045 = vunpack.c.h.b16 %v957
      %v1046 = vunpack.c.l.b16 %v958
      %v1047 = vunpack.c.h.b16 %v958
      %v1048 = vunpack.c.l.b16 %v959
      %v1049 = vunpack.c.h.b16 %v959
      %v1050 = vunpack.c.l.b16 %v960
      %v1051 = vunpack.c.h.b16 %v960
      %v1052 = vunpack.c.l.b16 %v961
      %v1053 = vunpack.c.h.b16 %v961
      %v1054 = vunpack.c.l.b16 %v962
      %v1055 = vunpack.c.h.b16 %v962
      %v1056 = vunpack.c.l.b16 %v963
      %v1057 = vunpack.c.h.b16 %v963
      %v1058 = vunpack.c.l.b16 %v964
      %v1059 = vunpack.c.h.b16 %v964
      %v1060 = vunpack.c.l.b16 %v965
      %v1061 = vunpack.c.h.b16 %v965
      %v1062 = vpack.c.b16 %v1000, %v998
      %v1063 = vpack.c.b16 %v1001, %v999
      %v1064 = vpack.c.b16 %v1004, %v1002
      %v1065 = vpack.c.b16 %v1005, %v1003
      %v1066 = vpack.c.b16 %v1008, %v1006
      %v1067 = vpack.c.b16 %v1009, %v1007
      %v1068 = vpack.c.b16 %v1012, %v1010
      %v1069 = vpack.c.b16 %v1013, %v1011
      %v1070 = vpack.c.b16 %v1016, %v1014
      %v1071 = vpack.c.b16 %v1017, %v1015
      %v1072 = vpack.c.b16 %v1020, %v1018
      %v1073 = vpack.c.b16 %v1021, %v1019
      %v1074 = vpack.c.b16 %v1024, %v1022
      %v1075 = vpack.c.b16 %v1025, %v1023
      %v1076 = vpack.c.b16 %v1028, %v1026
      %v1077 = vpack.c.b16 %v1029, %v1027
      %v1078 = vpack.c.b16 %v1032, %v1030
      %v1079 = vpack.c.b16 %v1033, %v1031
      %v1080 = vpack.c.b16 %v1036, %v1034
      %v1081 = vpack.c.b16 %v1037, %v1035
      %v1082 = vpack.c.b16 %v1040, %v1038
      %v1083 = vpack.c.b16 %v1041, %v1039
      %v1084 = vpack.c.b16 %v1044, %v1042
      %v1085 = vpack.c.b16 %v1045, %v1043
      %v1086 = vpack.c.b16 %v1048, %v1046
      %v1087 = vpack.c.b16 %v1049, %v1047
      %v1088 = vpack.c.b16 %v1052, %v1050
      %v1089 = vpack.c.b16 %v1053, %v1051
      %v1090 = vpack.c.b16 %v1056, %v1054
      %v1091 = vpack.c.b16 %v1057, %v1055
      %v1092 = vpack.c.b16 %v1060, %v1058
      %v1093 = vpack.c.b16 %v1061, %v1059
      %1126 = vmatprep.subr.bf16.mxu0 %v1077
      %1127 = vmatpush1.bf16.msra.mxu0 %v1076
      %1128 = vmatprep.subr.bf16.mxu0 %v1075
      %1129 = vmatpush1.bf16.msra.mxu0 %v1074
      %1130 = vmatprep.subr.bf16.mxu0 %v1073
      %1131 = vmatpush1.bf16.msra.mxu0 %v1072
      %1132 = vmatprep.subr.bf16.mxu0 %v1071
      %1133 = vmatpush1.bf16.msra.mxu0 %v1070
      %1134 = vmatprep.subr.bf16.mxu0 %v1069
      %1135 = vmatpush1.bf16.msra.mxu0 %v1068
      %1136 = vmatprep.subr.bf16.mxu0 %v1067
      %1137 = vmatpush1.bf16.msra.mxu0 %v1066
      %1138 = vmatprep.subr.bf16.mxu0 %v1065
      %1139 = vmatpush1.bf16.msra.mxu0 %v1064
      %1140 = vmatprep.subr.bf16.mxu0 %v1063
      %1141 = vmatpush1.bf16.msra.mxu0 %v1062
      %1142 = vmatprep.subr.bf16.mxu0 %v1093
      %1143 = vmatpush2.bf16.msra.mxu0 %v1092
      %1144 = vmatprep.subr.bf16.mxu0 %v1091
      %1145 = vmatpush2.bf16.msra.mxu0 %v1090
      %1146 = vmatprep.subr.bf16.mxu0 %v1089
      %1147 = vmatpush2.bf16.msra.mxu0 %v1088
      %1148 = vmatprep.subr.bf16.mxu0 %v1087
      %1149 = vmatpush2.bf16.msra.mxu0 %v1086
      %1150 = vmatprep.subr.bf16.mxu0 %v1085
      %1151 = vmatpush2.bf16.msra.mxu0 %v1084
      %1152 = vmatprep.subr.bf16.mxu0 %v1083
      %1153 = vmatpush2.bf16.msra.mxu0 %v1082
      %1154 = vmatprep.subr.bf16.mxu0 %v1081
      %1155 = vmatpush2.bf16.msra.mxu0 %v1080
      %1156 = vmatprep.subr.bf16.mxu0 %v1079
      %1157 = vmatpush2.bf16.msra.mxu0 %v1078
      %1158 = vmatprep.mubr.bf16.mxu0 %v726
      %1159 = vmatmul.mubr.bf16.gmra.mxu0 %v725
      %v1160 = vpop.f32.mrf.mxu0
      %v1161 = vadd.f32 0.0, %v1160
      %v1162 = vpop.f32.mrf.mxu0
      %v1163 = vadd.f32 0.0, %v1162
      %v1164 = vpop.f32.mrf.mxu0
      %v1165 = vpop.f32.mrf.mxu0
      %1166 = vdwg.mxu0
      %s1167 = scalar_lea.vmem %s4, 4
      %v1168 = vld [vmem:[%s1167] sm:$0xf]
      %v1169 = vpack.c.bf16 %v1161, %v1161
      %v1170 = vpack.c.bf16 %v1163, %v1163
      %vm1171 = vcmask 23552
      %v1173 = vsel %vm1171, %v1168, 0
      %vm1175 = vcmask 1040384
      %vm1176 = vcmask 1041408
      %v1177 = vsel %vm1175, 4294967295, 65535
      %v1178 = vsel %vm1176, %v1177, 0
      %v1180 = vand.u32 %v1169, %v1178
      %v1183 = vand.u32 %v1170, %v1178
      %1185 = vmatprep.subr.bf16.mxu0 0
      %1186 = vmatpush1.bf16.msra.mxu0 0
      %1187 = vmatprep.subr.bf16.mxu0 0
      %1188 = vmatpush1.bf16.msra.mxu0 0
      %1189 = vmatprep.subr.bf16.mxu0 0
      %1190 = vmatpush1.bf16.msra.mxu0 0
      %1191 = vmatprep.subr.bf16.mxu0 0
      %1192 = vmatpush1.bf16.msra.mxu0 0
      %1193 = vmatprep.subr.bf16.mxu0 0
      %1194 = vmatpush1.bf16.msra.mxu0 0
      %1195 = vmatprep.subr.bf16.mxu0 0
      %1196 = vmatpush1.bf16.msra.mxu0 0
      %1197 = vmatprep.subr.bf16.mxu0 0
      %1198 = vmatpush1.bf16.msra.mxu0 0
      %1199 = vmatprep.subr.bf16.mxu0 %v1183
      %1200 = vmatpush1.bf16.msra.mxu0 %v1180
      %1201 = vmatprep.subr.bf16.mxu0 0
      %1202 = vmatpush2.bf16.msra.mxu0 0
      %1203 = vmatprep.subr.bf16.mxu0 0
      %1204 = vmatpush2.bf16.msra.mxu0 0
      %1205 = vmatprep.subr.bf16.mxu0 0
      %1206 = vmatpush2.bf16.msra.mxu0 0
      %1207 = vmatprep.subr.bf16.mxu0 0
      %1208 = vmatpush2.bf16.msra.mxu0 0
      %1209 = vmatprep.subr.bf16.mxu0 0
      %1210 = vmatpush2.bf16.msra.mxu0 0
      %1211 = vmatprep.subr.bf16.mxu0 0
      %1212 = vmatpush2.bf16.msra.mxu0 0
      %1213 = vmatprep.subr.bf16.mxu0 0
      %1214 = vmatpush2.bf16.msra.mxu0 0
      %1215 = vmatprep.subr.bf16.mxu0 0
      %1216 = vmatpush2.bf16.msra.mxu0 0
      %1217 = vmatprep.mubr.bf16.mxu0 0
      %1218 = vmatmul.mubr.bf16.gmra.mxu0 %v1173
      %v1219 = vpop.f32.mrf.mxu0
      %v1220 = vadd.f32 0.0, %v1219
      %v1221 = vpop.f32.mrf.mxu0
      %v1222 = vadd.f32 0.0, %v1221
      %v1223 = vpop.f32.mrf.mxu0
      %v1224 = vpop.f32.mrf.mxu0
      %1225 = vdwg.mxu0
      %v1227 = vsel %vm1171, %v930, 0
      %v1230 = vand.u32 %v931, %v1178
      %v1233 = vand.u32 %v932, %v1178
      %1235 = vmatprep.subr.bf16.mxu0 0
      %1236 = vmatpush1.bf16.msra.mxu0 0
      %1237 = vmatprep.subr.bf16.mxu0 0
      %1238 = vmatpush1.bf16.msra.mxu0 0
      %1239 = vmatprep.subr.bf16.mxu0 0
      %1240 = vmatpush1.bf16.msra.mxu0 0
      %1241 = vmatprep.subr.bf16.mxu0 0
      %1242 = vmatpush1.bf16.msra.mxu0 0
      %1243 = vmatprep.subr.bf16.mxu0 0
      %1244 = vmatpush1.bf16.msra.mxu0 0
      %1245 = vmatprep.subr.bf16.mxu0 0
      %1246 = vmatpush1.bf16.msra.mxu0 0
      %1247 = vmatprep.subr.bf16.mxu0 0
      %1248 = vmatpush1.bf16.msra.mxu0 0
      %1249 = vmatprep.subr.bf16.mxu0 %v1233
      %1250 = vmatpush1.bf16.msra.mxu0 %v1230
      %1251 = vmatprep.subr.bf16.mxu0 0
      %1252 = vmatpush2.bf16.msra.mxu0 0
      %1253 = vmatprep.subr.bf16.mxu0 0
      %1254 = vmatpush2.bf16.msra.mxu0 0
      %1255 = vmatprep.subr.bf16.mxu0 0
      %1256 = vmatpush2.bf16.msra.mxu0 0
      %1257 = vmatprep.subr.bf16.mxu0 0
      %1258 = vmatpush2.bf16.msra.mxu0 0
      %1259 = vmatprep.subr.bf16.mxu0 0
      %1260 = vmatpush2.bf16.msra.mxu0 0
      %1261 = vmatprep.subr.bf16.mxu0 0
      %1262 = vmatpush2.bf16.msra.mxu0 0
      %1263 = vmatprep.subr.bf16.mxu0 0
      %1264 = vmatpush2.bf16.msra.mxu0 0
      %1265 = vmatprep.subr.bf16.mxu0 0
      %1266 = vmatpush2.bf16.msra.mxu0 0
      %1267 = vmatprep.mubr.bf16.mxu0 0
      %1268 = vmatmul.mubr.bf16.gmra.mxu0 %v1227
      %v1269 = vpop.f32.mrf.mxu0
      %v1270 = vadd.f32 %v1220, %v1269
      %v1271 = vpop.f32.mrf.mxu0
      %v1272 = vadd.f32 %v1222, %v1271
      %v1273 = vpop.f32.mrf.mxu0
      %v1274 = vpop.f32.mrf.mxu0
      %1275 = vdwg.mxu0
      %s1276 = scalar_lea.vmem %s1, 512
      %v1277 = vld [vmem:[%s1276] sm:$0xff]
      %v1278 = vld [vmem:[%s1276 + $0x8] sm:$0xff]
      %v1279 = vld [vmem:[%s1276 + $0x10] sm:$0xff]
      %v1280 = vld [vmem:[%s1276 + $0x18] sm:$0xff]
      %v1281 = vld [vmem:[%s1276 + $0x20] sm:$0xff]
      %v1282 = vld [vmem:[%s1276 + $0x28] sm:$0xff]
      %v1283 = vld [vmem:[%s1276 + $0x30] sm:$0xff]
      %v1284 = vld [vmem:[%s1276 + $0x38] sm:$0xff]
      %v1285 = vld [vmem:[%s1276 + $0x40] sm:$0xff]
      %v1286 = vld [vmem:[%s1276 + $0x48] sm:$0xff]
      %v1287 = vld [vmem:[%s1276 + $0x50] sm:$0xff]
      %v1288 = vld [vmem:[%s1276 + $0x58] sm:$0xff]
      %v1289 = vld [vmem:[%s1276 + $0x60] sm:$0xff]
      %v1290 = vld [vmem:[%s1276 + $0x68] sm:$0xff]
      %v1291 = vld [vmem:[%s1276 + $0x70] sm:$0xff]
      %v1292 = vld [vmem:[%s1276 + $0x78] sm:$0xff]
      %v1293 = vld [vmem:[%s1276 + $0x80] sm:$0xff]
      %v1294 = vld [vmem:[%s1276 + $0x88] sm:$0xff]
      %v1295 = vld [vmem:[%s1276 + $0x90] sm:$0xff]
      %v1296 = vld [vmem:[%s1276 + $0x98] sm:$0xff]
      %v1297 = vld [vmem:[%s1276 + $0xa0] sm:$0xff]
      %v1298 = vld [vmem:[%s1276 + $0xa8] sm:$0xff]
      %v1299 = vld [vmem:[%s1276 + $0xb0] sm:$0xff]
      %v1300 = vld [vmem:[%s1276 + $0xb8] sm:$0xff]
      %v1301 = vld [vmem:[%s1276 + $0xc0] sm:$0xff]
      %v1302 = vld [vmem:[%s1276 + $0xc8] sm:$0xff]
      %v1303 = vld [vmem:[%s1276 + $0xd0] sm:$0xff]
      %v1304 = vld [vmem:[%s1276 + $0xd8] sm:$0xff]
      %v1305 = vld [vmem:[%s1276 + $0xe0] sm:$0xff]
      %v1306 = vld [vmem:[%s1276 + $0xe8] sm:$0xff]
      %v1307 = vld [vmem:[%s1276 + $0xf0] sm:$0xff]
      %v1308 = vld [vmem:[%s1276 + $0xf8] sm:$0xff]
      %v1341 = vunpack.c.l.b16 %v1277
      %v1342 = vunpack.c.h.b16 %v1277
      %v1343 = vunpack.c.l.b16 %v1278
      %v1344 = vunpack.c.h.b16 %v1278
      %v1345 = vunpack.c.l.b16 %v1279
      %v1346 = vunpack.c.h.b16 %v1279
      %v1347 = vunpack.c.l.b16 %v1280
      %v1348 = vunpack.c.h.b16 %v1280
      %v1349 = vunpack.c.l.b16 %v1281
      %v1350 = vunpack.c.h.b16 %v1281
      %v1351 = vunpack.c.l.b16 %v1282
      %v1352 = vunpack.c.h.b16 %v1282
      %v1353 = vunpack.c.l.b16 %v1283
      %v1354 = vunpack.c.h.b16 %v1283
      %v1355 = vunpack.c.l.b16 %v1284
      %v1356 = vunpack.c.h.b16 %v1284
      %v1357 = vunpack.c.l.b16 %v1285
      %v1358 = vunpack.c.h.b16 %v1285
      %v1359 = vunpack.c.l.b16 %v1286
      %v1360 = vunpack.c.h.b16 %v1286
      %v1361 = vunpack.c.l.b16 %v1287
      %v1362 = vunpack.c.h.b16 %v1287
      %v1363 = vunpack.c.l.b16 %v1288
      %v1364 = vunpack.c.h.b16 %v1288
      %v1365 = vunpack.c.l.b16 %v1289
      %v1366 = vunpack.c.h.b16 %v1289
      %v1367 = vunpack.c.l.b16 %v1290
      %v1368 = vunpack.c.h.b16 %v1290
      %v1369 = vunpack.c.l.b16 %v1291
      %v1370 = vunpack.c.h.b16 %v1291
      %v1371 = vunpack.c.l.b16 %v1292
      %v1372 = vunpack.c.h.b16 %v1292
      %v1373 = vunpack.c.l.b16 %v1293
      %v1374 = vunpack.c.h.b16 %v1293
      %v1375 = vunpack.c.l.b16 %v1294
      %v1376 = vunpack.c.h.b16 %v1294
      %v1377 = vunpack.c.l.b16 %v1295
      %v1378 = vunpack.c.h.b16 %v1295
      %v1379 = vunpack.c.l.b16 %v1296
      %v1380 = vunpack.c.h.b16 %v1296
      %v1381 = vunpack.c.l.b16 %v1297
      %v1382 = vunpack.c.h.b16 %v1297
      %v1383 = vunpack.c.l.b16 %v1298
      %v1384 = vunpack.c.h.b16 %v1298
      %v1385 = vunpack.c.l.b16 %v1299
      %v1386 = vunpack.c.h.b16 %v1299
      %v1387 = vunpack.c.l.b16 %v1300
      %v1388 = vunpack.c.h.b16 %v1300
      %v1389 = vunpack.c.l.b16 %v1301
      %v1390 = vunpack.c.h.b16 %v1301
      %v1391 = vunpack.c.l.b16 %v1302
      %v1392 = vunpack.c.h.b16 %v1302
      %v1393 = vunpack.c.l.b16 %v1303
      %v1394 = vunpack.c.h.b16 %v1303
      %v1395 = vunpack.c.l.b16 %v1304
      %v1396 = vunpack.c.h.b16 %v1304
      %v1397 = vunpack.c.l.b16 %v1305
      %v1398 = vunpack.c.h.b16 %v1305
      %v1399 = vunpack.c.l.b16 %v1306
      %v1400 = vunpack.c.h.b16 %v1306
      %v1401 = vunpack.c.l.b16 %v1307
      %v1402 = vunpack.c.h.b16 %v1307
      %v1403 = vunpack.c.l.b16 %v1308
      %v1404 = vunpack.c.h.b16 %v1308
      %v1405 = vpack.c.b16 %v1343, %v1341
      %v1406 = vpack.c.b16 %v1344, %v1342
      %v1407 = vpack.c.b16 %v1347, %v1345
      %v1408 = vpack.c.b16 %v1348, %v1346
      %v1409 = vpack.c.b16 %v1351, %v1349
      %v1410 = vpack.c.b16 %v1352, %v1350
      %v1411 = vpack.c.b16 %v1355, %v1353
      %v1412 = vpack.c.b16 %v1356, %v1354
      %v1413 = vpack.c.b16 %v1359, %v1357
      %v1414 = vpack.c.b16 %v1360, %v1358
      %v1415 = vpack.c.b16 %v1363, %v1361
      %v1416 = vpack.c.b16 %v1364, %v1362
      %v1417 = vpack.c.b16 %v1367, %v1365
      %v1418 = vpack.c.b16 %v1368, %v1366
      %v1419 = vpack.c.b16 %v1371, %v1369
      %v1420 = vpack.c.b16 %v1372, %v1370
      %v1421 = vpack.c.b16 %v1375, %v1373
      %v1422 = vpack.c.b16 %v1376, %v1374
      %v1423 = vpack.c.b16 %v1379, %v1377
      %v1424 = vpack.c.b16 %v1380, %v1378
      %v1425 = vpack.c.b16 %v1383, %v1381
      %v1426 = vpack.c.b16 %v1384, %v1382
      %v1427 = vpack.c.b16 %v1387, %v1385
      %v1428 = vpack.c.b16 %v1388, %v1386
      %v1429 = vpack.c.b16 %v1391, %v1389
      %v1430 = vpack.c.b16 %v1392, %v1390
      %v1431 = vpack.c.b16 %v1395, %v1393
      %v1432 = vpack.c.b16 %v1396, %v1394
      %v1433 = vpack.c.b16 %v1399, %v1397
      %v1434 = vpack.c.b16 %v1400, %v1398
      %v1435 = vpack.c.b16 %v1403, %v1401
      %v1436 = vpack.c.b16 %v1404, %v1402
      %1469 = vmatprep.subr.bf16.mxu0 %v1420
      %1470 = vmatpush1.bf16.msra.mxu0 %v1419
      %1471 = vmatprep.subr.bf16.mxu0 %v1418
      %1472 = vmatpush1.bf16.msra.mxu0 %v1417
      %1473 = vmatprep.subr.bf16.mxu0 %v1416
      %1474 = vmatpush1.bf16.msra.mxu0 %v1415
      %1475 = vmatprep.subr.bf16.mxu0 %v1414
      %1476 = vmatpush1.bf16.msra.mxu0 %v1413
      %1477 = vmatprep.subr.bf16.mxu0 %v1412
      %1478 = vmatpush1.bf16.msra.mxu0 %v1411
      %1479 = vmatprep.subr.bf16.mxu0 %v1410
      %1480 = vmatpush1.bf16.msra.mxu0 %v1409
      %1481 = vmatprep.subr.bf16.mxu0 %v1408
      %1482 = vmatpush1.bf16.msra.mxu0 %v1407
      %1483 = vmatprep.subr.bf16.mxu0 %v1406
      %1484 = vmatpush1.bf16.msra.mxu0 %v1405
      %1485 = vmatprep.subr.bf16.mxu0 %v1436
      %1486 = vmatpush2.bf16.msra.mxu0 %v1435
      %1487 = vmatprep.subr.bf16.mxu0 %v1434
      %1488 = vmatpush2.bf16.msra.mxu0 %v1433
      %1489 = vmatprep.subr.bf16.mxu0 %v1432
      %1490 = vmatpush2.bf16.msra.mxu0 %v1431
      %1491 = vmatprep.subr.bf16.mxu0 %v1430
      %1492 = vmatpush2.bf16.msra.mxu0 %v1429
      %1493 = vmatprep.subr.bf16.mxu0 %v1428
      %1494 = vmatpush2.bf16.msra.mxu0 %v1427
      %1495 = vmatprep.subr.bf16.mxu0 %v1426
      %1496 = vmatpush2.bf16.msra.mxu0 %v1425
      %1497 = vmatprep.subr.bf16.mxu0 %v1424
      %1498 = vmatpush2.bf16.msra.mxu0 %v1423
      %1499 = vmatprep.subr.bf16.mxu0 %v1422
      %1500 = vmatpush2.bf16.msra.mxu0 %v1421
      %1501 = vmatprep.mubr.bf16.mxu0 %v726
      %1502 = vmatmul.mubr.bf16.gmra.mxu0 %v725
      %v1503 = vpop.f32.mrf.mxu0
      %v1504 = vadd.f32 0.0, %v1503
      %v1505 = vpop.f32.mrf.mxu0
      %v1506 = vadd.f32 0.0, %v1505
      %v1507 = vpop.f32.mrf.mxu0
      %v1508 = vpop.f32.mrf.mxu0
      %1509 = vdwg.mxu0
      %s1510 = scalar_lea.vmem %s4, 8
      %v1511 = vld [vmem:[%s1510] sm:$0xf]
      %v1512 = vpack.c.bf16 %v1504, %v1504
      %v1513 = vpack.c.bf16 %v1506, %v1506
      %v1515 = vsel %vm1171, %v1511, 0
      %v1518 = vand.u32 %v1512, %v1178
      %v1521 = vand.u32 %v1513, %v1178
      %1523 = vmatprep.subr.bf16.mxu0 0
      %1524 = vmatpush1.bf16.msra.mxu0 0
      %1525 = vmatprep.subr.bf16.mxu0 0
      %1526 = vmatpush1.bf16.msra.mxu0 0
      %1527 = vmatprep.subr.bf16.mxu0 0
      %1528 = vmatpush1.bf16.msra.mxu0 0
      %1529 = vmatprep.subr.bf16.mxu0 0
      %1530 = vmatpush1.bf16.msra.mxu0 0
      %1531 = vmatprep.subr.bf16.mxu0 0
      %1532 = vmatpush1.bf16.msra.mxu0 0
      %1533 = vmatprep.subr.bf16.mxu0 0
      %1534 = vmatpush1.bf16.msra.mxu0 0
      %1535 = vmatprep.subr.bf16.mxu0 0
      %1536 = vmatpush1.bf16.msra.mxu0 0
      %1537 = vmatprep.subr.bf16.mxu0 %v1521
      %1538 = vmatpush1.bf16.msra.mxu0 %v1518
      %1539 = vmatprep.subr.bf16.mxu0 0
      %1540 = vmatpush2.bf16.msra.mxu0 0
      %1541 = vmatprep.subr.bf16.mxu0 0
      %1542 = vmatpush2.bf16.msra.mxu0 0
      %1543 = vmatprep.subr.bf16.mxu0 0
      %1544 = vmatpush2.bf16.msra.mxu0 0
      %1545 = vmatprep.subr.bf16.mxu0 0
      %1546 = vmatpush2.bf16.msra.mxu0 0
      %1547 = vmatprep.subr.bf16.mxu0 0
      %1548 = vmatpush2.bf16.msra.mxu0 0
      %1549 = vmatprep.subr.bf16.mxu0 0
      %1550 = vmatpush2.bf16.msra.mxu0 0
      %1551 = vmatprep.subr.bf16.mxu0 0
      %1552 = vmatpush2.bf16.msra.mxu0 0
      %1553 = vmatprep.subr.bf16.mxu0 0
      %1554 = vmatpush2.bf16.msra.mxu0 0
      %1555 = vmatprep.mubr.bf16.mxu0 0
      %1556 = vmatmul.mubr.bf16.gmra.mxu0 %v1515
      %v1557 = vpop.f32.mrf.mxu0
      %v1558 = vadd.f32 0.0, %v1557
      %v1559 = vpop.f32.mrf.mxu0
      %v1560 = vadd.f32 0.0, %v1559
      %v1561 = vpop.f32.mrf.mxu0
      %v1562 = vpop.f32.mrf.mxu0
      %1563 = vdwg.mxu0
      %v1564 = vadd.f32 %v1270, %v1558
      %v1565 = vadd.f32 %v1272, %v1560
      %s1566 = scalar_lea.vmem %s1, 768
      %v1567 = vld [vmem:[%s1566] sm:$0xff]
      %v1568 = vld [vmem:[%s1566 + $0x8] sm:$0xff]
      %v1569 = vld [vmem:[%s1566 + $0x10] sm:$0xff]
      %v1570 = vld [vmem:[%s1566 + $0x18] sm:$0xff]
      %v1571 = vld [vmem:[%s1566 + $0x20] sm:$0xff]
      %v1572 = vld [vmem:[%s1566 + $0x28] sm:$0xff]
      %v1573 = vld [vmem:[%s1566 + $0x30] sm:$0xff]
      %v1574 = vld [vmem:[%s1566 + $0x38] sm:$0xff]
      %v1575 = vld [vmem:[%s1566 + $0x40] sm:$0xff]
      %v1576 = vld [vmem:[%s1566 + $0x48] sm:$0xff]
      %v1577 = vld [vmem:[%s1566 + $0x50] sm:$0xff]
      %v1578 = vld [vmem:[%s1566 + $0x58] sm:$0xff]
      %v1579 = vld [vmem:[%s1566 + $0x60] sm:$0xff]
      %v1580 = vld [vmem:[%s1566 + $0x68] sm:$0xff]
      %v1581 = vld [vmem:[%s1566 + $0x70] sm:$0xff]
      %v1582 = vld [vmem:[%s1566 + $0x78] sm:$0xff]
      %v1583 = vld [vmem:[%s1566 + $0x80] sm:$0xff]
      %v1584 = vld [vmem:[%s1566 + $0x88] sm:$0xff]
      %v1585 = vld [vmem:[%s1566 + $0x90] sm:$0xff]
      %v1586 = vld [vmem:[%s1566 + $0x98] sm:$0xff]
      %v1587 = vld [vmem:[%s1566 + $0xa0] sm:$0xff]
      %v1588 = vld [vmem:[%s1566 + $0xa8] sm:$0xff]
      %v1589 = vld [vmem:[%s1566 + $0xb0] sm:$0xff]
      %v1590 = vld [vmem:[%s1566 + $0xb8] sm:$0xff]
      %v1591 = vld [vmem:[%s1566 + $0xc0] sm:$0xff]
      %v1592 = vld [vmem:[%s1566 + $0xc8] sm:$0xff]
      %v1593 = vld [vmem:[%s1566 + $0xd0] sm:$0xff]
      %v1594 = vld [vmem:[%s1566 + $0xd8] sm:$0xff]
      %v1595 = vld [vmem:[%s1566 + $0xe0] sm:$0xff]
      %v1596 = vld [vmem:[%s1566 + $0xe8] sm:$0xff]
      %v1597 = vld [vmem:[%s1566 + $0xf0] sm:$0xff]
      %v1598 = vld [vmem:[%s1566 + $0xf8] sm:$0xff]
      %v1631 = vunpack.c.l.b16 %v1567
      %v1632 = vunpack.c.h.b16 %v1567
      %v1633 = vunpack.c.l.b16 %v1568
      %v1634 = vunpack.c.h.b16 %v1568
      %v1635 = vunpack.c.l.b16 %v1569
      %v1636 = vunpack.c.h.b16 %v1569
      %v1637 = vunpack.c.l.b16 %v1570
      %v1638 = vunpack.c.h.b16 %v1570
      %v1639 = vunpack.c.l.b16 %v1571
      %v1640 = vunpack.c.h.b16 %v1571
      %v1641 = vunpack.c.l.b16 %v1572
      %v1642 = vunpack.c.h.b16 %v1572
      %v1643 = vunpack.c.l.b16 %v1573
      %v1644 = vunpack.c.h.b16 %v1573
      %v1645 = vunpack.c.l.b16 %v1574
      %v1646 = vunpack.c.h.b16 %v1574
      %v1647 = vunpack.c.l.b16 %v1575
      %v1648 = vunpack.c.h.b16 %v1575
      %v1649 = vunpack.c.l.b16 %v1576
      %v1650 = vunpack.c.h.b16 %v1576
      %v1651 = vunpack.c.l.b16 %v1577
      %v1652 = vunpack.c.h.b16 %v1577
      %v1653 = vunpack.c.l.b16 %v1578
      %v1654 = vunpack.c.h.b16 %v1578
      %v1655 = vunpack.c.l.b16 %v1579
      %v1656 = vunpack.c.h.b16 %v1579
      %v1657 = vunpack.c.l.b16 %v1580
      %v1658 = vunpack.c.h.b16 %v1580
      %v1659 = vunpack.c.l.b16 %v1581
      %v1660 = vunpack.c.h.b16 %v1581
      %v1661 = vunpack.c.l.b16 %v1582
      %v1662 = vunpack.c.h.b16 %v1582
      %v1663 = vunpack.c.l.b16 %v1583
      %v1664 = vunpack.c.h.b16 %v1583
      %v1665 = vunpack.c.l.b16 %v1584
      %v1666 = vunpack.c.h.b16 %v1584
      %v1667 = vunpack.c.l.b16 %v1585
      %v1668 = vunpack.c.h.b16 %v1585
      %v1669 = vunpack.c.l.b16 %v1586
      %v1670 = vunpack.c.h.b16 %v1586
      %v1671 = vunpack.c.l.b16 %v1587
      %v1672 = vunpack.c.h.b16 %v1587
      %v1673 = vunpack.c.l.b16 %v1588
      %v1674 = vunpack.c.h.b16 %v1588
      %v1675 = vunpack.c.l.b16 %v1589
      %v1676 = vunpack.c.h.b16 %v1589
      %v1677 = vunpack.c.l.b16 %v1590
      %v1678 = vunpack.c.h.b16 %v1590
      %v1679 = vunpack.c.l.b16 %v1591
      %v1680 = vunpack.c.h.b16 %v1591
      %v1681 = vunpack.c.l.b16 %v1592
      %v1682 = vunpack.c.h.b16 %v1592
      %v1683 = vunpack.c.l.b16 %v1593
      %v1684 = vunpack.c.h.b16 %v1593
      %v1685 = vunpack.c.l.b16 %v1594
      %v1686 = vunpack.c.h.b16 %v1594
      %v1687 = vunpack.c.l.b16 %v1595
      %v1688 = vunpack.c.h.b16 %v1595
      %v1689 = vunpack.c.l.b16 %v1596
      %v1690 = vunpack.c.h.b16 %v1596
      %v1691 = vunpack.c.l.b16 %v1597
      %v1692 = vunpack.c.h.b16 %v1597
      %v1693 = vunpack.c.l.b16 %v1598
      %v1694 = vunpack.c.h.b16 %v1598
      %v1695 = vpack.c.b16 %v1633, %v1631
      %v1696 = vpack.c.b16 %v1634, %v1632
      %v1697 = vpack.c.b16 %v1637, %v1635
      %v1698 = vpack.c.b16 %v1638, %v1636
      %v1699 = vpack.c.b16 %v1641, %v1639
      %v1700 = vpack.c.b16 %v1642, %v1640
      %v1701 = vpack.c.b16 %v1645, %v1643
      %v1702 = vpack.c.b16 %v1646, %v1644
      %v1703 = vpack.c.b16 %v1649, %v1647
      %v1704 = vpack.c.b16 %v1650, %v1648
      %v1705 = vpack.c.b16 %v1653, %v1651
      %v1706 = vpack.c.b16 %v1654, %v1652
      %v1707 = vpack.c.b16 %v1657, %v1655
      %v1708 = vpack.c.b16 %v1658, %v1656
      %v1709 = vpack.c.b16 %v1661, %v1659
      %v1710 = vpack.c.b16 %v1662, %v1660
      %v1711 = vpack.c.b16 %v1665, %v1663
      %v1712 = vpack.c.b16 %v1666, %v1664
      %v1713 = vpack.c.b16 %v1669, %v1667
      %v1714 = vpack.c.b16 %v1670, %v1668
      %v1715 = vpack.c.b16 %v1673, %v1671
      %v1716 = vpack.c.b16 %v1674, %v1672
      %v1717 = vpack.c.b16 %v1677, %v1675
      %v1718 = vpack.c.b16 %v1678, %v1676
      %v1719 = vpack.c.b16 %v1681, %v1679
      %v1720 = vpack.c.b16 %v1682, %v1680
      %v1721 = vpack.c.b16 %v1685, %v1683
      %v1722 = vpack.c.b16 %v1686, %v1684
      %v1723 = vpack.c.b16 %v1689, %v1687
      %v1724 = vpack.c.b16 %v1690, %v1688
      %v1725 = vpack.c.b16 %v1693, %v1691
      %v1726 = vpack.c.b16 %v1694, %v1692
      %1759 = vmatprep.subr.bf16.mxu0 %v1710
      %1760 = vmatpush1.bf16.msra.mxu0 %v1709
      %1761 = vmatprep.subr.bf16.mxu0 %v1708
      %1762 = vmatpush1.bf16.msra.mxu0 %v1707
      %1763 = vmatprep.subr.bf16.mxu0 %v1706
      %1764 = vmatpush1.bf16.msra.mxu0 %v1705
      %1765 = vmatprep.subr.bf16.mxu0 %v1704
      %1766 = vmatpush1.bf16.msra.mxu0 %v1703
      %1767 = vmatprep.subr.bf16.mxu0 %v1702
      %1768 = vmatpush1.bf16.msra.mxu0 %v1701
      %1769 = vmatprep.subr.bf16.mxu0 %v1700
      %1770 = vmatpush1.bf16.msra.mxu0 %v1699
      %1771 = vmatprep.subr.bf16.mxu0 %v1698
      %1772 = vmatpush1.bf16.msra.mxu0 %v1697
      %1773 = vmatprep.subr.bf16.mxu0 %v1696
      %1774 = vmatpush1.bf16.msra.mxu0 %v1695
      %1775 = vmatprep.subr.bf16.mxu0 %v1726
      %1776 = vmatpush2.bf16.msra.mxu0 %v1725
      %1777 = vmatprep.subr.bf16.mxu0 %v1724
      %1778 = vmatpush2.bf16.msra.mxu0 %v1723
      %1779 = vmatprep.subr.bf16.mxu0 %v1722
      %1780 = vmatpush2.bf16.msra.mxu0 %v1721
      %1781 = vmatprep.subr.bf16.mxu0 %v1720
      %1782 = vmatpush2.bf16.msra.mxu0 %v1719
      %1783 = vmatprep.subr.bf16.mxu0 %v1718
      %1784 = vmatpush2.bf16.msra.mxu0 %v1717
      %1785 = vmatprep.subr.bf16.mxu0 %v1716
      %1786 = vmatpush2.bf16.msra.mxu0 %v1715
      %1787 = vmatprep.subr.bf16.mxu0 %v1714
      %1788 = vmatpush2.bf16.msra.mxu0 %v1713
      %1789 = vmatprep.subr.bf16.mxu0 %v1712
      %1790 = vmatpush2.bf16.msra.mxu0 %v1711
      %1791 = vmatprep.mubr.bf16.mxu0 %v726
      %1792 = vmatmul.mubr.bf16.gmra.mxu0 %v725
      %v1793 = vpop.f32.mrf.mxu0
      %v1794 = vadd.f32 0.0, %v1793
      %v1795 = vpop.f32.mrf.mxu0
      %v1796 = vadd.f32 0.0, %v1795
      %v1797 = vpop.f32.mrf.mxu0
      %v1798 = vpop.f32.mrf.mxu0
      %1799 = vdwg.mxu0
      %s1800 = scalar_lea.vmem %s4, 12
      %v1801 = vld [vmem:[%s1800] sm:$0xf]
      %v1802 = vpack.c.bf16 %v1794, %v1794
      %v1803 = vpack.c.bf16 %v1796, %v1796
      %v1805 = vsel %vm1171, %v1801, 0
      %v1808 = vand.u32 %v1802, %v1178
      %v1811 = vand.u32 %v1803, %v1178
      %1813 = vmatprep.subr.bf16.mxu0 0
      %1814 = vmatpush1.bf16.msra.mxu0 0
      %1815 = vmatprep.subr.bf16.mxu0 0
      %1816 = vmatpush1.bf16.msra.mxu0 0
      %1817 = vmatprep.subr.bf16.mxu0 0
      %1818 = vmatpush1.bf16.msra.mxu0 0
      %1819 = vmatprep.subr.bf16.mxu0 0
      %1820 = vmatpush1.bf16.msra.mxu0 0
      %1821 = vmatprep.subr.bf16.mxu0 0
      %1822 = vmatpush1.bf16.msra.mxu0 0
      %1823 = vmatprep.subr.bf16.mxu0 0
      %1824 = vmatpush1.bf16.msra.mxu0 0
      %1825 = vmatprep.subr.bf16.mxu0 0
      %1826 = vmatpush1.bf16.msra.mxu0 0
      %1827 = vmatprep.subr.bf16.mxu0 %v1811
      %1828 = vmatpush1.bf16.msra.mxu0 %v1808
      %1829 = vmatprep.subr.bf16.mxu0 0
      %1830 = vmatpush2.bf16.msra.mxu0 0
      %1831 = vmatprep.subr.bf16.mxu0 0
      %1832 = vmatpush2.bf16.msra.mxu0 0
      %1833 = vmatprep.subr.bf16.mxu0 0
      %1834 = vmatpush2.bf16.msra.mxu0 0
      %1835 = vmatprep.subr.bf16.mxu0 0
      %1836 = vmatpush2.bf16.msra.mxu0 0
      %1837 = vmatprep.subr.bf16.mxu0 0
      %1838 = vmatpush2.bf16.msra.mxu0 0
      %1839 = vmatprep.subr.bf16.mxu0 0
      %1840 = vmatpush2.bf16.msra.mxu0 0
      %1841 = vmatprep.subr.bf16.mxu0 0
      %1842 = vmatpush2.bf16.msra.mxu0 0
      %1843 = vmatprep.subr.bf16.mxu0 0
      %1844 = vmatpush2.bf16.msra.mxu0 0
      %1845 = vmatprep.mubr.bf16.mxu0 0
      %1846 = vmatmul.mubr.bf16.gmra.mxu0 %v1805
      %v1847 = vpop.f32.mrf.mxu0
      %v1848 = vadd.f32 0.0, %v1847
      %v1849 = vpop.f32.mrf.mxu0
      %v1850 = vadd.f32 0.0, %v1849
      %v1851 = vpop.f32.mrf.mxu0
      %v1852 = vpop.f32.mrf.mxu0
      %1853 = vdwg.mxu0
      %v1854 = vadd.f32 %v1564, %v1848
      %v1855 = vadd.f32 %v1565, %v1850
      %s1856 = scalar_lea.vmem %s1, 1024
      %v1857 = vld [vmem:[%s1856] sm:$0xff]
      %v1858 = vld [vmem:[%s1856 + $0x8] sm:$0xff]
      %v1859 = vld [vmem:[%s1856 + $0x10] sm:$0xff]
      %v1860 = vld [vmem:[%s1856 + $0x18] sm:$0xff]
      %v1861 = vld [vmem:[%s1856 + $0x20] sm:$0xff]
      %v1862 = vld [vmem:[%s1856 + $0x28] sm:$0xff]
      %v1863 = vld [vmem:[%s1856 + $0x30] sm:$0xff]
      %v1864 = vld [vmem:[%s1856 + $0x38] sm:$0xff]
      %v1865 = vld [vmem:[%s1856 + $0x40] sm:$0xff]
      %v1866 = vld [vmem:[%s1856 + $0x48] sm:$0xff]
      %v1867 = vld [vmem:[%s1856 + $0x50] sm:$0xff]
      %v1868 = vld [vmem:[%s1856 + $0x58] sm:$0xff]
      %v1869 = vld [vmem:[%s1856 + $0x60] sm:$0xff]
      %v1870 = vld [vmem:[%s1856 + $0x68] sm:$0xff]
      %v1871 = vld [vmem:[%s1856 + $0x70] sm:$0xff]
      %v1872 = vld [vmem:[%s1856 + $0x78] sm:$0xff]
      %v1873 = vld [vmem:[%s1856 + $0x80] sm:$0xff]
      %v1874 = vld [vmem:[%s1856 + $0x88] sm:$0xff]
      %v1875 = vld [vmem:[%s1856 + $0x90] sm:$0xff]
      %v1876 = vld [vmem:[%s1856 + $0x98] sm:$0xff]
      %v1877 = vld [vmem:[%s1856 + $0xa0] sm:$0xff]
      %v1878 = vld [vmem:[%s1856 + $0xa8] sm:$0xff]
      %v1879 = vld [vmem:[%s1856 + $0xb0] sm:$0xff]
      %v1880 = vld [vmem:[%s1856 + $0xb8] sm:$0xff]
      %v1881 = vld [vmem:[%s1856 + $0xc0] sm:$0xff]
      %v1882 = vld [vmem:[%s1856 + $0xc8] sm:$0xff]
      %v1883 = vld [vmem:[%s1856 + $0xd0] sm:$0xff]
      %v1884 = vld [vmem:[%s1856 + $0xd8] sm:$0xff]
      %v1885 = vld [vmem:[%s1856 + $0xe0] sm:$0xff]
      %v1886 = vld [vmem:[%s1856 + $0xe8] sm:$0xff]
      %v1887 = vld [vmem:[%s1856 + $0xf0] sm:$0xff]
      %v1888 = vld [vmem:[%s1856 + $0xf8] sm:$0xff]
      %v1921 = vunpack.c.l.b16 %v1857
      %v1922 = vunpack.c.h.b16 %v1857
      %v1923 = vunpack.c.l.b16 %v1858
      %v1924 = vunpack.c.h.b16 %v1858
      %v1925 = vunpack.c.l.b16 %v1859
      %v1926 = vunpack.c.h.b16 %v1859
      %v1927 = vunpack.c.l.b16 %v1860
      %v1928 = vunpack.c.h.b16 %v1860
      %v1929 = vunpack.c.l.b16 %v1861
      %v1930 = vunpack.c.h.b16 %v1861
      %v1931 = vunpack.c.l.b16 %v1862
      %v1932 = vunpack.c.h.b16 %v1862
      %v1933 = vunpack.c.l.b16 %v1863
      %v1934 = vunpack.c.h.b16 %v1863
      %v1935 = vunpack.c.l.b16 %v1864
      %v1936 = vunpack.c.h.b16 %v1864
      %v1937 = vunpack.c.l.b16 %v1865
      %v1938 = vunpack.c.h.b16 %v1865
      %v1939 = vunpack.c.l.b16 %v1866
      %v1940 = vunpack.c.h.b16 %v1866
      %v1941 = vunpack.c.l.b16 %v1867
      %v1942 = vunpack.c.h.b16 %v1867
      %v1943 = vunpack.c.l.b16 %v1868
      %v1944 = vunpack.c.h.b16 %v1868
      %v1945 = vunpack.c.l.b16 %v1869
      %v1946 = vunpack.c.h.b16 %v1869
      %v1947 = vunpack.c.l.b16 %v1870
      %v1948 = vunpack.c.h.b16 %v1870
      %v1949 = vunpack.c.l.b16 %v1871
      %v1950 = vunpack.c.h.b16 %v1871
      %v1951 = vunpack.c.l.b16 %v1872
      %v1952 = vunpack.c.h.b16 %v1872
      %v1953 = vunpack.c.l.b16 %v1873
      %v1954 = vunpack.c.h.b16 %v1873
      %v1955 = vunpack.c.l.b16 %v1874
      %v1956 = vunpack.c.h.b16 %v1874
      %v1957 = vunpack.c.l.b16 %v1875
      %v1958 = vunpack.c.h.b16 %v1875
      %v1959 = vunpack.c.l.b16 %v1876
      %v1960 = vunpack.c.h.b16 %v1876
      %v1961 = vunpack.c.l.b16 %v1877
      %v1962 = vunpack.c.h.b16 %v1877
      %v1963 = vunpack.c.l.b16 %v1878
      %v1964 = vunpack.c.h.b16 %v1878
      %v1965 = vunpack.c.l.b16 %v1879
      %v1966 = vunpack.c.h.b16 %v1879
      %v1967 = vunpack.c.l.b16 %v1880
      %v1968 = vunpack.c.h.b16 %v1880
      %v1969 = vunpack.c.l.b16 %v1881
      %v1970 = vunpack.c.h.b16 %v1881
      %v1971 = vunpack.c.l.b16 %v1882
      %v1972 = vunpack.c.h.b16 %v1882
      %v1973 = vunpack.c.l.b16 %v1883
      %v1974 = vunpack.c.h.b16 %v1883
      %v1975 = vunpack.c.l.b16 %v1884
      %v1976 = vunpack.c.h.b16 %v1884
      %v1977 = vunpack.c.l.b16 %v1885
      %v1978 = vunpack.c.h.b16 %v1885
      %v1979 = vunpack.c.l.b16 %v1886
      %v1980 = vunpack.c.h.b16 %v1886
      %v1981 = vunpack.c.l.b16 %v1887
      %v1982 = vunpack.c.h.b16 %v1887
      %v1983 = vunpack.c.l.b16 %v1888
      %v1984 = vunpack.c.h.b16 %v1888
      %v1985 = vpack.c.b16 %v1923, %v1921
      %v1986 = vpack.c.b16 %v1924, %v1922
      %v1987 = vpack.c.b16 %v1927, %v1925
      %v1988 = vpack.c.b16 %v1928, %v1926
      %v1989 = vpack.c.b16 %v1931, %v1929
      %v1990 = vpack.c.b16 %v1932, %v1930
      %v1991 = vpack.c.b16 %v1935, %v1933
      %v1992 = vpack.c.b16 %v1936, %v1934
      %v1993 = vpack.c.b16 %v1939, %v1937
      %v1994 = vpack.c.b16 %v1940, %v1938
      %v1995 = vpack.c.b16 %v1943, %v1941
      %v1996 = vpack.c.b16 %v1944, %v1942
      %v1997 = vpack.c.b16 %v1947, %v1945
      %v1998 = vpack.c.b16 %v1948, %v1946
      %v1999 = vpack.c.b16 %v1951, %v1949
      %v2000 = vpack.c.b16 %v1952, %v1950
      %v2001 = vpack.c.b16 %v1955, %v1953
      %v2002 = vpack.c.b16 %v1956, %v1954
      %v2003 = vpack.c.b16 %v1959, %v1957
      %v2004 = vpack.c.b16 %v1960, %v1958
      %v2005 = vpack.c.b16 %v1963, %v1961
      %v2006 = vpack.c.b16 %v1964, %v1962
      %v2007 = vpack.c.b16 %v1967, %v1965
      %v2008 = vpack.c.b16 %v1968, %v1966
      %v2009 = vpack.c.b16 %v1971, %v1969
      %v2010 = vpack.c.b16 %v1972, %v1970
      %v2011 = vpack.c.b16 %v1975, %v1973
      %v2012 = vpack.c.b16 %v1976, %v1974
      %v2013 = vpack.c.b16 %v1979, %v1977
      %v2014 = vpack.c.b16 %v1980, %v1978
      %v2015 = vpack.c.b16 %v1983, %v1981
      %v2016 = vpack.c.b16 %v1984, %v1982
      %2049 = vmatprep.subr.bf16.mxu0 %v2000
      %2050 = vmatpush1.bf16.msra.mxu0 %v1999
      %2051 = vmatprep.subr.bf16.mxu0 %v1998
      %2052 = vmatpush1.bf16.msra.mxu0 %v1997
      %2053 = vmatprep.subr.bf16.mxu0 %v1996
      %2054 = vmatpush1.bf16.msra.mxu0 %v1995
      %2055 = vmatprep.subr.bf16.mxu0 %v1994
      %2056 = vmatpush1.bf16.msra.mxu0 %v1993
      %2057 = vmatprep.subr.bf16.mxu0 %v1992
      %2058 = vmatpush1.bf16.msra.mxu0 %v1991
      %2059 = vmatprep.subr.bf16.mxu0 %v1990
      %2060 = vmatpush1.bf16.msra.mxu0 %v1989
      %2061 = vmatprep.subr.bf16.mxu0 %v1988
      %2062 = vmatpush1.bf16.msra.mxu0 %v1987
      %2063 = vmatprep.subr.bf16.mxu0 %v1986
      %2064 = vmatpush1.bf16.msra.mxu0 %v1985
      %2065 = vmatprep.subr.bf16.mxu0 %v2016
      %2066 = vmatpush2.bf16.msra.mxu0 %v2015
      %2067 = vmatprep.subr.bf16.mxu0 %v2014
      %2068 = vmatpush2.bf16.msra.mxu0 %v2013
      %2069 = vmatprep.subr.bf16.mxu0 %v2012
      %2070 = vmatpush2.bf16.msra.mxu0 %v2011
      %2071 = vmatprep.subr.bf16.mxu0 %v2010
      %2072 = vmatpush2.bf16.msra.mxu0 %v2009
      %2073 = vmatprep.subr.bf16.mxu0 %v2008
      %2074 = vmatpush2.bf16.msra.mxu0 %v2007
      %2075 = vmatprep.subr.bf16.mxu0 %v2006
      %2076 = vmatpush2.bf16.msra.mxu0 %v2005
      %2077 = vmatprep.subr.bf16.mxu0 %v2004
      %2078 = vmatpush2.bf16.msra.mxu0 %v2003
      %2079 = vmatprep.subr.bf16.mxu0 %v2002
      %2080 = vmatpush2.bf16.msra.mxu0 %v2001
      %2081 = vmatprep.mubr.bf16.mxu0 %v726
      %2082 = vmatmul.mubr.bf16.gmra.mxu0 %v725
      %v2083 = vpop.f32.mrf.mxu0
      %v2084 = vadd.f32 0.0, %v2083
      %v2085 = vpop.f32.mrf.mxu0
      %v2086 = vadd.f32 0.0, %v2085
      %v2087 = vpop.f32.mrf.mxu0
      %v2088 = vpop.f32.mrf.mxu0
      %2089 = vdwg.mxu0
      %s2090 = scalar_lea.vmem %s4, 16
      %v2091 = vld [vmem:[%s2090] sm:$0xf]
      %v2092 = vpack.c.bf16 %v2084, %v2084
      %v2093 = vpack.c.bf16 %v2086, %v2086
      %v2095 = vsel %vm1171, %v2091, 0
      %v2098 = vand.u32 %v2092, %v1178
      %v2101 = vand.u32 %v2093, %v1178
      %2103 = vmatprep.subr.bf16.mxu0 0
      %2104 = vmatpush1.bf16.msra.mxu0 0
      %2105 = vmatprep.subr.bf16.mxu0 0
      %2106 = vmatpush1.bf16.msra.mxu0 0
      %2107 = vmatprep.subr.bf16.mxu0 0
      %2108 = vmatpush1.bf16.msra.mxu0 0
      %2109 = vmatprep.subr.bf16.mxu0 0
      %2110 = vmatpush1.bf16.msra.mxu0 0
      %2111 = vmatprep.subr.bf16.mxu0 0
      %2112 = vmatpush1.bf16.msra.mxu0 0
      %2113 = vmatprep.subr.bf16.mxu0 0
      %2114 = vmatpush1.bf16.msra.mxu0 0
      %2115 = vmatprep.subr.bf16.mxu0 0
      %2116 = vmatpush1.bf16.msra.mxu0 0
      %2117 = vmatprep.subr.bf16.mxu0 %v2101
      %2118 = vmatpush1.bf16.msra.mxu0 %v2098
      %2119 = vmatprep.subr.bf16.mxu0 0
      %2120 = vmatpush2.bf16.msra.mxu0 0
      %2121 = vmatprep.subr.bf16.mxu0 0
      %2122 = vmatpush2.bf16.msra.mxu0 0
      %2123 = vmatprep.subr.bf16.mxu0 0
      %2124 = vmatpush2.bf16.msra.mxu0 0
      %2125 = vmatprep.subr.bf16.mxu0 0
      %2126 = vmatpush2.bf16.msra.mxu0 0
      %2127 = vmatprep.subr.bf16.mxu0 0
      %2128 = vmatpush2.bf16.msra.mxu0 0
      %2129 = vmatprep.subr.bf16.mxu0 0
      %2130 = vmatpush2.bf16.msra.mxu0 0
      %2131 = vmatprep.subr.bf16.mxu0 0
      %2132 = vmatpush2.bf16.msra.mxu0 0
      %2133 = vmatprep.subr.bf16.mxu0 0
      %2134 = vmatpush2.bf16.msra.mxu0 0
      %2135 = vmatprep.mubr.bf16.mxu0 0
      %2136 = vmatmul.mubr.bf16.gmra.mxu0 %v2095
      %v2137 = vpop.f32.mrf.mxu0
      %v2138 = vadd.f32 0.0, %v2137
      %v2139 = vpop.f32.mrf.mxu0
      %v2140 = vadd.f32 0.0, %v2139
      %v2141 = vpop.f32.mrf.mxu0
      %v2142 = vpop.f32.mrf.mxu0
      %2143 = vdwg.mxu0
      %v2144 = vadd.f32 %v1854, %v2138
      %v2145 = vadd.f32 %v1855, %v2140
      %s2146 = scalar_lea.vmem %s1, 1280
      %v2147 = vld [vmem:[%s2146] sm:$0xff]
      %v2148 = vld [vmem:[%s2146 + $0x8] sm:$0xff]
      %v2149 = vld [vmem:[%s2146 + $0x10] sm:$0xff]
      %v2150 = vld [vmem:[%s2146 + $0x18] sm:$0xff]
      %v2151 = vld [vmem:[%s2146 + $0x20] sm:$0xff]
      %v2152 = vld [vmem:[%s2146 + $0x28] sm:$0xff]
      %v2153 = vld [vmem:[%s2146 + $0x30] sm:$0xff]
      %v2154 = vld [vmem:[%s2146 + $0x38] sm:$0xff]
      %v2155 = vld [vmem:[%s2146 + $0x40] sm:$0xff]
      %v2156 = vld [vmem:[%s2146 + $0x48] sm:$0xff]
      %v2157 = vld [vmem:[%s2146 + $0x50] sm:$0xff]
      %v2158 = vld [vmem:[%s2146 + $0x58] sm:$0xff]
      %v2159 = vld [vmem:[%s2146 + $0x60] sm:$0xff]
      %v2160 = vld [vmem:[%s2146 + $0x68] sm:$0xff]
      %v2161 = vld [vmem:[%s2146 + $0x70] sm:$0xff]
      %v2162 = vld [vmem:[%s2146 + $0x78] sm:$0xff]
      %v2163 = vld [vmem:[%s2146 + $0x80] sm:$0xff]
      %v2164 = vld [vmem:[%s2146 + $0x88] sm:$0xff]
      %v2165 = vld [vmem:[%s2146 + $0x90] sm:$0xff]
      %v2166 = vld [vmem:[%s2146 + $0x98] sm:$0xff]
      %v2167 = vld [vmem:[%s2146 + $0xa0] sm:$0xff]
      %v2168 = vld [vmem:[%s2146 + $0xa8] sm:$0xff]
      %v2169 = vld [vmem:[%s2146 + $0xb0] sm:$0xff]
      %v2170 = vld [vmem:[%s2146 + $0xb8] sm:$0xff]
      %v2171 = vld [vmem:[%s2146 + $0xc0] sm:$0xff]
      %v2172 = vld [vmem:[%s2146 + $0xc8] sm:$0xff]
      %v2173 = vld [vmem:[%s2146 + $0xd0] sm:$0xff]
      %v2174 = vld [vmem:[%s2146 + $0xd8] sm:$0xff]
      %v2175 = vld [vmem:[%s2146 + $0xe0] sm:$0xff]
      %v2176 = vld [vmem:[%s2146 + $0xe8] sm:$0xff]
      %v2177 = vld [vmem:[%s2146 + $0xf0] sm:$0xff]
      %v2178 = vld [vmem:[%s2146 + $0xf8] sm:$0xff]
      %v2211 = vunpack.c.l.b16 %v2147
      %v2212 = vunpack.c.h.b16 %v2147
      %v2213 = vunpack.c.l.b16 %v2148
      %v2214 = vunpack.c.h.b16 %v2148
      %v2215 = vunpack.c.l.b16 %v2149
      %v2216 = vunpack.c.h.b16 %v2149
      %v2217 = vunpack.c.l.b16 %v2150
      %v2218 = vunpack.c.h.b16 %v2150
      %v2219 = vunpack.c.l.b16 %v2151
      %v2220 = vunpack.c.h.b16 %v2151
      %v2221 = vunpack.c.l.b16 %v2152
      %v2222 = vunpack.c.h.b16 %v2152
      %v2223 = vunpack.c.l.b16 %v2153
      %v2224 = vunpack.c.h.b16 %v2153
      %v2225 = vunpack.c.l.b16 %v2154
      %v2226 = vunpack.c.h.b16 %v2154
      %v2227 = vunpack.c.l.b16 %v2155
      %v2228 = vunpack.c.h.b16 %v2155
      %v2229 = vunpack.c.l.b16 %v2156
      %v2230 = vunpack.c.h.b16 %v2156
      %v2231 = vunpack.c.l.b16 %v2157
      %v2232 = vunpack.c.h.b16 %v2157
      %v2233 = vunpack.c.l.b16 %v2158
      %v2234 = vunpack.c.h.b16 %v2158
      %v2235 = vunpack.c.l.b16 %v2159
      %v2236 = vunpack.c.h.b16 %v2159
      %v2237 = vunpack.c.l.b16 %v2160
      %v2238 = vunpack.c.h.b16 %v2160
      %v2239 = vunpack.c.l.b16 %v2161
      %v2240 = vunpack.c.h.b16 %v2161
      %v2241 = vunpack.c.l.b16 %v2162
      %v2242 = vunpack.c.h.b16 %v2162
      %v2243 = vunpack.c.l.b16 %v2163
      %v2244 = vunpack.c.h.b16 %v2163
      %v2245 = vunpack.c.l.b16 %v2164
      %v2246 = vunpack.c.h.b16 %v2164
      %v2247 = vunpack.c.l.b16 %v2165
      %v2248 = vunpack.c.h.b16 %v2165
      %v2249 = vunpack.c.l.b16 %v2166
      %v2250 = vunpack.c.h.b16 %v2166
      %v2251 = vunpack.c.l.b16 %v2167
      %v2252 = vunpack.c.h.b16 %v2167
      %v2253 = vunpack.c.l.b16 %v2168
      %v2254 = vunpack.c.h.b16 %v2168
      %v2255 = vunpack.c.l.b16 %v2169
      %v2256 = vunpack.c.h.b16 %v2169
      %v2257 = vunpack.c.l.b16 %v2170
      %v2258 = vunpack.c.h.b16 %v2170
      %v2259 = vunpack.c.l.b16 %v2171
      %v2260 = vunpack.c.h.b16 %v2171
      %v2261 = vunpack.c.l.b16 %v2172
      %v2262 = vunpack.c.h.b16 %v2172
      %v2263 = vunpack.c.l.b16 %v2173
      %v2264 = vunpack.c.h.b16 %v2173
      %v2265 = vunpack.c.l.b16 %v2174
      %v2266 = vunpack.c.h.b16 %v2174
      %v2267 = vunpack.c.l.b16 %v2175
      %v2268 = vunpack.c.h.b16 %v2175
      %v2269 = vunpack.c.l.b16 %v2176
      %v2270 = vunpack.c.h.b16 %v2176
      %v2271 = vunpack.c.l.b16 %v2177
      %v2272 = vunpack.c.h.b16 %v2177
      %v2273 = vunpack.c.l.b16 %v2178
      %v2274 = vunpack.c.h.b16 %v2178
      %v2275 = vpack.c.b16 %v2213, %v2211
      %v2276 = vpack.c.b16 %v2214, %v2212
      %v2277 = vpack.c.b16 %v2217, %v2215
      %v2278 = vpack.c.b16 %v2218, %v2216
      %v2279 = vpack.c.b16 %v2221, %v2219
      %v2280 = vpack.c.b16 %v2222, %v2220
      %v2281 = vpack.c.b16 %v2225, %v2223
      %v2282 = vpack.c.b16 %v2226, %v2224
      %v2283 = vpack.c.b16 %v2229, %v2227
      %v2284 = vpack.c.b16 %v2230, %v2228
      %v2285 = vpack.c.b16 %v2233, %v2231
      %v2286 = vpack.c.b16 %v2234, %v2232
      %v2287 = vpack.c.b16 %v2237, %v2235
      %v2288 = vpack.c.b16 %v2238, %v2236
      %v2289 = vpack.c.b16 %v2241, %v2239
      %v2290 = vpack.c.b16 %v2242, %v2240
      %v2291 = vpack.c.b16 %v2245, %v2243
      %v2292 = vpack.c.b16 %v2246, %v2244
      %v2293 = vpack.c.b16 %v2249, %v2247
      %v2294 = vpack.c.b16 %v2250, %v2248
      %v2295 = vpack.c.b16 %v2253, %v2251
      %v2296 = vpack.c.b16 %v2254, %v2252
      %v2297 = vpack.c.b16 %v2257, %v2255
      %v2298 = vpack.c.b16 %v2258, %v2256
      %v2299 = vpack.c.b16 %v2261, %v2259
      %v2300 = vpack.c.b16 %v2262, %v2260
      %v2301 = vpack.c.b16 %v2265, %v2263
      %v2302 = vpack.c.b16 %v2266, %v2264
      %v2303 = vpack.c.b16 %v2269, %v2267
      %v2304 = vpack.c.b16 %v2270, %v2268
      %v2305 = vpack.c.b16 %v2273, %v2271
      %v2306 = vpack.c.b16 %v2274, %v2272
      %2339 = vmatprep.subr.bf16.mxu0 %v2290
      %2340 = vmatpush1.bf16.msra.mxu0 %v2289
      %2341 = vmatprep.subr.bf16.mxu0 %v2288
      %2342 = vmatpush1.bf16.msra.mxu0 %v2287
      %2343 = vmatprep.subr.bf16.mxu0 %v2286
      %2344 = vmatpush1.bf16.msra.mxu0 %v2285
      %2345 = vmatprep.subr.bf16.mxu0 %v2284
      %2346 = vmatpush1.bf16.msra.mxu0 %v2283
      %2347 = vmatprep.subr.bf16.mxu0 %v2282
      %2348 = vmatpush1.bf16.msra.mxu0 %v2281
      %2349 = vmatprep.subr.bf16.mxu0 %v2280
      %2350 = vmatpush1.bf16.msra.mxu0 %v2279
      %2351 = vmatprep.subr.bf16.mxu0 %v2278
      %2352 = vmatpush1.bf16.msra.mxu0 %v2277
      %2353 = vmatprep.subr.bf16.mxu0 %v2276
      %2354 = vmatpush1.bf16.msra.mxu0 %v2275
      %2355 = vmatprep.subr.bf16.mxu0 %v2306
      %2356 = vmatpush2.bf16.msra.mxu0 %v2305
      %2357 = vmatprep.subr.bf16.mxu0 %v2304
      %2358 = vmatpush2.bf16.msra.mxu0 %v2303
      %2359 = vmatprep.subr.bf16.mxu0 %v2302
      %2360 = vmatpush2.bf16.msra.mxu0 %v2301
      %2361 = vmatprep.subr.bf16.mxu0 %v2300
      %2362 = vmatpush2.bf16.msra.mxu0 %v2299
      %2363 = vmatprep.subr.bf16.mxu0 %v2298
      %2364 = vmatpush2.bf16.msra.mxu0 %v2297
      %2365 = vmatprep.subr.bf16.mxu0 %v2296
      %2366 = vmatpush2.bf16.msra.mxu0 %v2295
      %2367 = vmatprep.subr.bf16.mxu0 %v2294
      %2368 = vmatpush2.bf16.msra.mxu0 %v2293
      %2369 = vmatprep.subr.bf16.mxu0 %v2292
      %2370 = vmatpush2.bf16.msra.mxu0 %v2291
      %2371 = vmatprep.mubr.bf16.mxu0 %v726
      %2372 = vmatmul.mubr.bf16.gmra.mxu0 %v725
      %v2373 = vpop.f32.mrf.mxu0
      %v2374 = vadd.f32 0.0, %v2373
      %v2375 = vpop.f32.mrf.mxu0
      %v2376 = vadd.f32 0.0, %v2375
      %v2377 = vpop.f32.mrf.mxu0
      %v2378 = vpop.f32.mrf.mxu0
      %2379 = vdwg.mxu0
      %s2380 = scalar_lea.vmem %s4, 20
      %v2381 = vld [vmem:[%s2380] sm:$0xf]
      %v2382 = vpack.c.bf16 %v2374, %v2374
      %v2383 = vpack.c.bf16 %v2376, %v2376
      %v2385 = vsel %vm1171, %v2381, 0
      %v2388 = vand.u32 %v2382, %v1178
      %v2391 = vand.u32 %v2383, %v1178
      %2393 = vmatprep.subr.bf16.mxu0 0
      %2394 = vmatpush1.bf16.msra.mxu0 0
      %2395 = vmatprep.subr.bf16.mxu0 0
      %2396 = vmatpush1.bf16.msra.mxu0 0
      %2397 = vmatprep.subr.bf16.mxu0 0
      %2398 = vmatpush1.bf16.msra.mxu0 0
      %2399 = vmatprep.subr.bf16.mxu0 0
      %2400 = vmatpush1.bf16.msra.mxu0 0
      %2401 = vmatprep.subr.bf16.mxu0 0
      %2402 = vmatpush1.bf16.msra.mxu0 0
      %2403 = vmatprep.subr.bf16.mxu0 0
      %2404 = vmatpush1.bf16.msra.mxu0 0
      %2405 = vmatprep.subr.bf16.mxu0 0
      %2406 = vmatpush1.bf16.msra.mxu0 0
      %2407 = vmatprep.subr.bf16.mxu0 %v2391
      %2408 = vmatpush1.bf16.msra.mxu0 %v2388
      %2409 = vmatprep.subr.bf16.mxu0 0
      %2410 = vmatpush2.bf16.msra.mxu0 0
      %2411 = vmatprep.subr.bf16.mxu0 0
      %2412 = vmatpush2.bf16.msra.mxu0 0
      %2413 = vmatprep.subr.bf16.mxu0 0
      %2414 = vmatpush2.bf16.msra.mxu0 0
      %2415 = vmatprep.subr.bf16.mxu0 0
      %2416 = vmatpush2.bf16.msra.mxu0 0
      %2417 = vmatprep.subr.bf16.mxu0 0
      %2418 = vmatpush2.bf16.msra.mxu0 0
      %2419 = vmatprep.subr.bf16.mxu0 0
      %2420 = vmatpush2.bf16.msra.mxu0 0
      %2421 = vmatprep.subr.bf16.mxu0 0
      %2422 = vmatpush2.bf16.msra.mxu0 0
      %2423 = vmatprep.subr.bf16.mxu0 0
      %2424 = vmatpush2.bf16.msra.mxu0 0
      %2425 = vmatprep.mubr.bf16.mxu0 0
      %2426 = vmatmul.mubr.bf16.gmra.mxu0 %v2385
      %v2427 = vpop.f32.mrf.mxu0
      %v2428 = vadd.f32 0.0, %v2427
      %v2429 = vpop.f32.mrf.mxu0
      %v2430 = vadd.f32 0.0, %v2429
      %v2431 = vpop.f32.mrf.mxu0
      %v2432 = vpop.f32.mrf.mxu0
      %2433 = vdwg.mxu0
      %v2434 = vadd.f32 %v2144, %v2428
      %v2435 = vadd.f32 %v2145, %v2430
      %s2436 = scalar_lea.vmem %s1, 1536
      %v2437 = vld [vmem:[%s2436] sm:$0xff]
      %v2438 = vld [vmem:[%s2436 + $0x8] sm:$0xff]
      %v2439 = vld [vmem:[%s2436 + $0x10] sm:$0xff]
      %v2440 = vld [vmem:[%s2436 + $0x18] sm:$0xff]
      %v2441 = vld [vmem:[%s2436 + $0x20] sm:$0xff]
      %v2442 = vld [vmem:[%s2436 + $0x28] sm:$0xff]
      %v2443 = vld [vmem:[%s2436 + $0x30] sm:$0xff]
      %v2444 = vld [vmem:[%s2436 + $0x38] sm:$0xff]
      %v2445 = vld [vmem:[%s2436 + $0x40] sm:$0xff]
      %v2446 = vld [vmem:[%s2436 + $0x48] sm:$0xff]
      %v2447 = vld [vmem:[%s2436 + $0x50] sm:$0xff]
      %v2448 = vld [vmem:[%s2436 + $0x58] sm:$0xff]
      %v2449 = vld [vmem:[%s2436 + $0x60] sm:$0xff]
      %v2450 = vld [vmem:[%s2436 + $0x68] sm:$0xff]
      %v2451 = vld [vmem:[%s2436 + $0x70] sm:$0xff]
      %v2452 = vld [vmem:[%s2436 + $0x78] sm:$0xff]
      %v2453 = vld [vmem:[%s2436 + $0x80] sm:$0xff]
      %v2454 = vld [vmem:[%s2436 + $0x88] sm:$0xff]
      %v2455 = vld [vmem:[%s2436 + $0x90] sm:$0xff]
      %v2456 = vld [vmem:[%s2436 + $0x98] sm:$0xff]
      %v2457 = vld [vmem:[%s2436 + $0xa0] sm:$0xff]
      %v2458 = vld [vmem:[%s2436 + $0xa8] sm:$0xff]
      %v2459 = vld [vmem:[%s2436 + $0xb0] sm:$0xff]
      %v2460 = vld [vmem:[%s2436 + $0xb8] sm:$0xff]
      %v2461 = vld [vmem:[%s2436 + $0xc0] sm:$0xff]
      %v2462 = vld [vmem:[%s2436 + $0xc8] sm:$0xff]
      %v2463 = vld [vmem:[%s2436 + $0xd0] sm:$0xff]
      %v2464 = vld [vmem:[%s2436 + $0xd8] sm:$0xff]
      %v2465 = vld [vmem:[%s2436 + $0xe0] sm:$0xff]
      %v2466 = vld [vmem:[%s2436 + $0xe8] sm:$0xff]
      %v2467 = vld [vmem:[%s2436 + $0xf0] sm:$0xff]
      %v2468 = vld [vmem:[%s2436 + $0xf8] sm:$0xff]
      %v2501 = vunpack.c.l.b16 %v2437
      %v2502 = vunpack.c.h.b16 %v2437
      %v2503 = vunpack.c.l.b16 %v2438
      %v2504 = vunpack.c.h.b16 %v2438
      %v2505 = vunpack.c.l.b16 %v2439
      %v2506 = vunpack.c.h.b16 %v2439
      %v2507 = vunpack.c.l.b16 %v2440
      %v2508 = vunpack.c.h.b16 %v2440
      %v2509 = vunpack.c.l.b16 %v2441
      %v2510 = vunpack.c.h.b16 %v2441
      %v2511 = vunpack.c.l.b16 %v2442
      %v2512 = vunpack.c.h.b16 %v2442
      %v2513 = vunpack.c.l.b16 %v2443
      %v2514 = vunpack.c.h.b16 %v2443
      %v2515 = vunpack.c.l.b16 %v2444
      %v2516 = vunpack.c.h.b16 %v2444
      %v2517 = vunpack.c.l.b16 %v2445
      %v2518 = vunpack.c.h.b16 %v2445
      %v2519 = vunpack.c.l.b16 %v2446
      %v2520 = vunpack.c.h.b16 %v2446
      %v2521 = vunpack.c.l.b16 %v2447
      %v2522 = vunpack.c.h.b16 %v2447
      %v2523 = vunpack.c.l.b16 %v2448
      %v2524 = vunpack.c.h.b16 %v2448
      %v2525 = vunpack.c.l.b16 %v2449
      %v2526 = vunpack.c.h.b16 %v2449
      %v2527 = vunpack.c.l.b16 %v2450
      %v2528 = vunpack.c.h.b16 %v2450
      %v2529 = vunpack.c.l.b16 %v2451
      %v2530 = vunpack.c.h.b16 %v2451
      %v2531 = vunpack.c.l.b16 %v2452
      %v2532 = vunpack.c.h.b16 %v2452
      %v2533 = vunpack.c.l.b16 %v2453
      %v2534 = vunpack.c.h.b16 %v2453
      %v2535 = vunpack.c.l.b16 %v2454
      %v2536 = vunpack.c.h.b16 %v2454
      %v2537 = vunpack.c.l.b16 %v2455
      %v2538 = vunpack.c.h.b16 %v2455
      %v2539 = vunpack.c.l.b16 %v2456
      %v2540 = vunpack.c.h.b16 %v2456
      %v2541 = vunpack.c.l.b16 %v2457
      %v2542 = vunpack.c.h.b16 %v2457
      %v2543 = vunpack.c.l.b16 %v2458
      %v2544 = vunpack.c.h.b16 %v2458
      %v2545 = vunpack.c.l.b16 %v2459
      %v2546 = vunpack.c.h.b16 %v2459
      %v2547 = vunpack.c.l.b16 %v2460
      %v2548 = vunpack.c.h.b16 %v2460
      %v2549 = vunpack.c.l.b16 %v2461
      %v2550 = vunpack.c.h.b16 %v2461
      %v2551 = vunpack.c.l.b16 %v2462
      %v2552 = vunpack.c.h.b16 %v2462
      %v2553 = vunpack.c.l.b16 %v2463
      %v2554 = vunpack.c.h.b16 %v2463
      %v2555 = vunpack.c.l.b16 %v2464
      %v2556 = vunpack.c.h.b16 %v2464
      %v2557 = vunpack.c.l.b16 %v2465
      %v2558 = vunpack.c.h.b16 %v2465
      %v2559 = vunpack.c.l.b16 %v2466
      %v2560 = vunpack.c.h.b16 %v2466
      %v2561 = vunpack.c.l.b16 %v2467
      %v2562 = vunpack.c.h.b16 %v2467
      %v2563 = vunpack.c.l.b16 %v2468
      %v2564 = vunpack.c.h.b16 %v2468
      %v2565 = vpack.c.b16 %v2503, %v2501
      %v2566 = vpack.c.b16 %v2504, %v2502
      %v2567 = vpack.c.b16 %v2507, %v2505
      %v2568 = vpack.c.b16 %v2508, %v2506
      %v2569 = vpack.c.b16 %v2511, %v2509
      %v2570 = vpack.c.b16 %v2512, %v2510
      %v2571 = vpack.c.b16 %v2515, %v2513
      %v2572 = vpack.c.b16 %v2516, %v2514
      %v2573 = vpack.c.b16 %v2519, %v2517
      %v2574 = vpack.c.b16 %v2520, %v2518
      %v2575 = vpack.c.b16 %v2523, %v2521
      %v2576 = vpack.c.b16 %v2524, %v2522
      %v2577 = vpack.c.b16 %v2527, %v2525
      %v2578 = vpack.c.b16 %v2528, %v2526
      %v2579 = vpack.c.b16 %v2531, %v2529
      %v2580 = vpack.c.b16 %v2532, %v2530
      %v2581 = vpack.c.b16 %v2535, %v2533
      %v2582 = vpack.c.b16 %v2536, %v2534
      %v2583 = vpack.c.b16 %v2539, %v2537
      %v2584 = vpack.c.b16 %v2540, %v2538
      %v2585 = vpack.c.b16 %v2543, %v2541
      %v2586 = vpack.c.b16 %v2544, %v2542
      %v2587 = vpack.c.b16 %v2547, %v2545
      %v2588 = vpack.c.b16 %v2548, %v2546
      %v2589 = vpack.c.b16 %v2551, %v2549
      %v2590 = vpack.c.b16 %v2552, %v2550
      %v2591 = vpack.c.b16 %v2555, %v2553
      %v2592 = vpack.c.b16 %v2556, %v2554
      %v2593 = vpack.c.b16 %v2559, %v2557
      %v2594 = vpack.c.b16 %v2560, %v2558
      %v2595 = vpack.c.b16 %v2563, %v2561
      %v2596 = vpack.c.b16 %v2564, %v2562
      %2629 = vmatprep.subr.bf16.mxu0 %v2580
      %2630 = vmatpush1.bf16.msra.mxu0 %v2579
      %2631 = vmatprep.subr.bf16.mxu0 %v2578
      %2632 = vmatpush1.bf16.msra.mxu0 %v2577
      %2633 = vmatprep.subr.bf16.mxu0 %v2576
      %2634 = vmatpush1.bf16.msra.mxu0 %v2575
      %2635 = vmatprep.subr.bf16.mxu0 %v2574
      %2636 = vmatpush1.bf16.msra.mxu0 %v2573
      %2637 = vmatprep.subr.bf16.mxu0 %v2572
      %2638 = vmatpush1.bf16.msra.mxu0 %v2571
      %2639 = vmatprep.subr.bf16.mxu0 %v2570
      %2640 = vmatpush1.bf16.msra.mxu0 %v2569
      %2641 = vmatprep.subr.bf16.mxu0 %v2568
      %2642 = vmatpush1.bf16.msra.mxu0 %v2567
      %2643 = vmatprep.subr.bf16.mxu0 %v2566
      %2644 = vmatpush1.bf16.msra.mxu0 %v2565
      %2645 = vmatprep.subr.bf16.mxu0 %v2596
      %2646 = vmatpush2.bf16.msra.mxu0 %v2595
      %2647 = vmatprep.subr.bf16.mxu0 %v2594
      %2648 = vmatpush2.bf16.msra.mxu0 %v2593
      %2649 = vmatprep.subr.bf16.mxu0 %v2592
      %2650 = vmatpush2.bf16.msra.mxu0 %v2591
      %2651 = vmatprep.subr.bf16.mxu0 %v2590
      %2652 = vmatpush2.bf16.msra.mxu0 %v2589
      %2653 = vmatprep.subr.bf16.mxu0 %v2588
      %2654 = vmatpush2.bf16.msra.mxu0 %v2587
      %2655 = vmatprep.subr.bf16.mxu0 %v2586
      %2656 = vmatpush2.bf16.msra.mxu0 %v2585
      %2657 = vmatprep.subr.bf16.mxu0 %v2584
      %2658 = vmatpush2.bf16.msra.mxu0 %v2583
      %2659 = vmatprep.subr.bf16.mxu0 %v2582
      %2660 = vmatpush2.bf16.msra.mxu0 %v2581
      %2661 = vmatprep.mubr.bf16.mxu0 %v726
      %2662 = vmatmul.mubr.bf16.gmra.mxu0 %v725
      %v2663 = vpop.f32.mrf.mxu0
      %v2664 = vadd.f32 0.0, %v2663
      %v2665 = vpop.f32.mrf.mxu0
      %v2666 = vadd.f32 0.0, %v2665
      %v2667 = vpop.f32.mrf.mxu0
      %v2668 = vpop.f32.mrf.mxu0
      %2669 = vdwg.mxu0
      %s2670 = scalar_lea.vmem %s4, 24
      %v2671 = vld [vmem:[%s2670] sm:$0xf]
      %v2672 = vpack.c.bf16 %v2664, %v2664
      %v2673 = vpack.c.bf16 %v2666, %v2666
      %v2675 = vsel %vm1171, %v2671, 0
      %v2678 = vand.u32 %v2672, %v1178
      %v2681 = vand.u32 %v2673, %v1178
      %2683 = vmatprep.subr.bf16.mxu0 0
      %2684 = vmatpush1.bf16.msra.mxu0 0
      %2685 = vmatprep.subr.bf16.mxu0 0
      %2686 = vmatpush1.bf16.msra.mxu0 0
      %2687 = vmatprep.subr.bf16.mxu0 0
      %2688 = vmatpush1.bf16.msra.mxu0 0
      %2689 = vmatprep.subr.bf16.mxu0 0
      %2690 = vmatpush1.bf16.msra.mxu0 0
      %2691 = vmatprep.subr.bf16.mxu0 0
      %2692 = vmatpush1.bf16.msra.mxu0 0
      %2693 = vmatprep.subr.bf16.mxu0 0
      %2694 = vmatpush1.bf16.msra.mxu0 0
      %2695 = vmatprep.subr.bf16.mxu0 0
      %2696 = vmatpush1.bf16.msra.mxu0 0
      %2697 = vmatprep.subr.bf16.mxu0 %v2681
      %2698 = vmatpush1.bf16.msra.mxu0 %v2678
      %2699 = vmatprep.subr.bf16.mxu0 0
      %2700 = vmatpush2.bf16.msra.mxu0 0
      %2701 = vmatprep.subr.bf16.mxu0 0
      %2702 = vmatpush2.bf16.msra.mxu0 0
      %2703 = vmatprep.subr.bf16.mxu0 0
      %2704 = vmatpush2.bf16.msra.mxu0 0
      %2705 = vmatprep.subr.bf16.mxu0 0
      %2706 = vmatpush2.bf16.msra.mxu0 0
      %2707 = vmatprep.subr.bf16.mxu0 0
      %2708 = vmatpush2.bf16.msra.mxu0 0
      %2709 = vmatprep.subr.bf16.mxu0 0
      %2710 = vmatpush2.bf16.msra.mxu0 0
      %2711 = vmatprep.subr.bf16.mxu0 0
      %2712 = vmatpush2.bf16.msra.mxu0 0
      %2713 = vmatprep.subr.bf16.mxu0 0
      %2714 = vmatpush2.bf16.msra.mxu0 0
      %2715 = vmatprep.mubr.bf16.mxu0 0
      %2716 = vmatmul.mubr.bf16.gmra.mxu0 %v2675
      %v2717 = vpop.f32.mrf.mxu0
      %v2718 = vadd.f32 0.0, %v2717
      %v2719 = vpop.f32.mrf.mxu0
      %v2720 = vadd.f32 0.0, %v2719
      %v2721 = vpop.f32.mrf.mxu0
      %v2722 = vpop.f32.mrf.mxu0
      %2723 = vdwg.mxu0
      %v2724 = vadd.f32 %v2434, %v2718
      %v2725 = vadd.f32 %v2435, %v2720
      %s2726 = scalar_lea.vmem %s1, 1792
      %v2727 = vld [vmem:[%s2726] sm:$0xff]
      %v2728 = vld [vmem:[%s2726 + $0x8] sm:$0xff]
      %v2729 = vld [vmem:[%s2726 + $0x10] sm:$0xff]
      %v2730 = vld [vmem:[%s2726 + $0x18] sm:$0xff]
      %v2731 = vld [vmem:[%s2726 + $0x20] sm:$0xff]
      %v2732 = vld [vmem:[%s2726 + $0x28] sm:$0xff]
      %v2733 = vld [vmem:[%s2726 + $0x30] sm:$0xff]
      %v2734 = vld [vmem:[%s2726 + $0x38] sm:$0xff]
      %v2735 = vld [vmem:[%s2726 + $0x40] sm:$0xff]
      %v2736 = vld [vmem:[%s2726 + $0x48] sm:$0xff]
      %v2737 = vld [vmem:[%s2726 + $0x50] sm:$0xff]
      %v2738 = vld [vmem:[%s2726 + $0x58] sm:$0xff]
      %v2739 = vld [vmem:[%s2726 + $0x60] sm:$0xff]
      %v2740 = vld [vmem:[%s2726 + $0x68] sm:$0xff]
      %v2741 = vld [vmem:[%s2726 + $0x70] sm:$0xff]
      %v2742 = vld [vmem:[%s2726 + $0x78] sm:$0xff]
      %v2743 = vld [vmem:[%s2726 + $0x80] sm:$0xff]
      %v2744 = vld [vmem:[%s2726 + $0x88] sm:$0xff]
      %v2745 = vld [vmem:[%s2726 + $0x90] sm:$0xff]
      %v2746 = vld [vmem:[%s2726 + $0x98] sm:$0xff]
      %v2747 = vld [vmem:[%s2726 + $0xa0] sm:$0xff]
      %v2748 = vld [vmem:[%s2726 + $0xa8] sm:$0xff]
      %v2749 = vld [vmem:[%s2726 + $0xb0] sm:$0xff]
      %v2750 = vld [vmem:[%s2726 + $0xb8] sm:$0xff]
      %v2751 = vld [vmem:[%s2726 + $0xc0] sm:$0xff]
      %v2752 = vld [vmem:[%s2726 + $0xc8] sm:$0xff]
      %v2753 = vld [vmem:[%s2726 + $0xd0] sm:$0xff]
      %v2754 = vld [vmem:[%s2726 + $0xd8] sm:$0xff]
      %v2755 = vld [vmem:[%s2726 + $0xe0] sm:$0xff]
      %v2756 = vld [vmem:[%s2726 + $0xe8] sm:$0xff]
      %v2757 = vld [vmem:[%s2726 + $0xf0] sm:$0xff]
      %v2758 = vld [vmem:[%s2726 + $0xf8] sm:$0xff]
      %v2791 = vunpack.c.l.b16 %v2727
      %v2792 = vunpack.c.h.b16 %v2727
      %v2793 = vunpack.c.l.b16 %v2728
      %v2794 = vunpack.c.h.b16 %v2728
      %v2795 = vunpack.c.l.b16 %v2729
      %v2796 = vunpack.c.h.b16 %v2729
      %v2797 = vunpack.c.l.b16 %v2730
      %v2798 = vunpack.c.h.b16 %v2730
      %v2799 = vunpack.c.l.b16 %v2731
      %v2800 = vunpack.c.h.b16 %v2731
      %v2801 = vunpack.c.l.b16 %v2732
      %v2802 = vunpack.c.h.b16 %v2732
      %v2803 = vunpack.c.l.b16 %v2733
      %v2804 = vunpack.c.h.b16 %v2733
      %v2805 = vunpack.c.l.b16 %v2734
      %v2806 = vunpack.c.h.b16 %v2734
      %v2807 = vunpack.c.l.b16 %v2735
      %v2808 = vunpack.c.h.b16 %v2735
      %v2809 = vunpack.c.l.b16 %v2736
      %v2810 = vunpack.c.h.b16 %v2736
      %v2811 = vunpack.c.l.b16 %v2737
      %v2812 = vunpack.c.h.b16 %v2737
      %v2813 = vunpack.c.l.b16 %v2738
      %v2814 = vunpack.c.h.b16 %v2738
      %v2815 = vunpack.c.l.b16 %v2739
      %v2816 = vunpack.c.h.b16 %v2739
      %v2817 = vunpack.c.l.b16 %v2740
      %v2818 = vunpack.c.h.b16 %v2740
      %v2819 = vunpack.c.l.b16 %v2741
      %v2820 = vunpack.c.h.b16 %v2741
      %v2821 = vunpack.c.l.b16 %v2742
      %v2822 = vunpack.c.h.b16 %v2742
      %v2823 = vunpack.c.l.b16 %v2743
      %v2824 = vunpack.c.h.b16 %v2743
      %v2825 = vunpack.c.l.b16 %v2744
      %v2826 = vunpack.c.h.b16 %v2744
      %v2827 = vunpack.c.l.b16 %v2745
      %v2828 = vunpack.c.h.b16 %v2745
      %v2829 = vunpack.c.l.b16 %v2746
      %v2830 = vunpack.c.h.b16 %v2746
      %v2831 = vunpack.c.l.b16 %v2747
      %v2832 = vunpack.c.h.b16 %v2747
      %v2833 = vunpack.c.l.b16 %v2748
      %v2834 = vunpack.c.h.b16 %v2748
      %v2835 = vunpack.c.l.b16 %v2749
      %v2836 = vunpack.c.h.b16 %v2749
      %v2837 = vunpack.c.l.b16 %v2750
      %v2838 = vunpack.c.h.b16 %v2750
      %v2839 = vunpack.c.l.b16 %v2751
      %v2840 = vunpack.c.h.b16 %v2751
      %v2841 = vunpack.c.l.b16 %v2752
      %v2842 = vunpack.c.h.b16 %v2752
      %v2843 = vunpack.c.l.b16 %v2753
      %v2844 = vunpack.c.h.b16 %v2753
      %v2845 = vunpack.c.l.b16 %v2754
      %v2846 = vunpack.c.h.b16 %v2754
      %v2847 = vunpack.c.l.b16 %v2755
      %v2848 = vunpack.c.h.b16 %v2755
      %v2849 = vunpack.c.l.b16 %v2756
      %v2850 = vunpack.c.h.b16 %v2756
      %v2851 = vunpack.c.l.b16 %v2757
      %v2852 = vunpack.c.h.b16 %v2757
      %v2853 = vunpack.c.l.b16 %v2758
      %v2854 = vunpack.c.h.b16 %v2758
      %v2855 = vpack.c.b16 %v2793, %v2791
      %v2856 = vpack.c.b16 %v2794, %v2792
      %v2857 = vpack.c.b16 %v2797, %v2795
      %v2858 = vpack.c.b16 %v2798, %v2796
      %v2859 = vpack.c.b16 %v2801, %v2799
      %v2860 = vpack.c.b16 %v2802, %v2800
      %v2861 = vpack.c.b16 %v2805, %v2803
      %v2862 = vpack.c.b16 %v2806, %v2804
      %v2863 = vpack.c.b16 %v2809, %v2807
      %v2864 = vpack.c.b16 %v2810, %v2808
      %v2865 = vpack.c.b16 %v2813, %v2811
      %v2866 = vpack.c.b16 %v2814, %v2812
      %v2867 = vpack.c.b16 %v2817, %v2815
      %v2868 = vpack.c.b16 %v2818, %v2816
      %v2869 = vpack.c.b16 %v2821, %v2819
      %v2870 = vpack.c.b16 %v2822, %v2820
      %v2871 = vpack.c.b16 %v2825, %v2823
      %v2872 = vpack.c.b16 %v2826, %v2824
      %v2873 = vpack.c.b16 %v2829, %v2827
      %v2874 = vpack.c.b16 %v2830, %v2828
      %v2875 = vpack.c.b16 %v2833, %v2831
      %v2876 = vpack.c.b16 %v2834, %v2832
      %v2877 = vpack.c.b16 %v2837, %v2835
      %v2878 = vpack.c.b16 %v2838, %v2836
      %v2879 = vpack.c.b16 %v2841, %v2839
      %v2880 = vpack.c.b16 %v2842, %v2840
      %v2881 = vpack.c.b16 %v2845, %v2843
      %v2882 = vpack.c.b16 %v2846, %v2844
      %v2883 = vpack.c.b16 %v2849, %v2847
      %v2884 = vpack.c.b16 %v2850, %v2848
      %v2885 = vpack.c.b16 %v2853, %v2851
      %v2886 = vpack.c.b16 %v2854, %v2852
      %2919 = vmatprep.subr.bf16.mxu0 %v2870
      %2920 = vmatpush1.bf16.msra.mxu0 %v2869
      %2921 = vmatprep.subr.bf16.mxu0 %v2868
      %2922 = vmatpush1.bf16.msra.mxu0 %v2867
      %2923 = vmatprep.subr.bf16.mxu0 %v2866
      %2924 = vmatpush1.bf16.msra.mxu0 %v2865
      %2925 = vmatprep.subr.bf16.mxu0 %v2864
      %2926 = vmatpush1.bf16.msra.mxu0 %v2863
      %2927 = vmatprep.subr.bf16.mxu0 %v2862
      %2928 = vmatpush1.bf16.msra.mxu0 %v2861
      %2929 = vmatprep.subr.bf16.mxu0 %v2860
      %2930 = vmatpush1.bf16.msra.mxu0 %v2859
      %2931 = vmatprep.subr.bf16.mxu0 %v2858
      %2932 = vmatpush1.bf16.msra.mxu0 %v2857
      %2933 = vmatprep.subr.bf16.mxu0 %v2856
      %2934 = vmatpush1.bf16.msra.mxu0 %v2855
      %2935 = vmatprep.subr.bf16.mxu0 %v2886
      %2936 = vmatpush2.bf16.msra.mxu0 %v2885
      %2937 = vmatprep.subr.bf16.mxu0 %v2884
      %2938 = vmatpush2.bf16.msra.mxu0 %v2883
      %2939 = vmatprep.subr.bf16.mxu0 %v2882
      %2940 = vmatpush2.bf16.msra.mxu0 %v2881
      %2941 = vmatprep.subr.bf16.mxu0 %v2880
      %2942 = vmatpush2.bf16.msra.mxu0 %v2879
      %2943 = vmatprep.subr.bf16.mxu0 %v2878
      %2944 = vmatpush2.bf16.msra.mxu0 %v2877
      %2945 = vmatprep.subr.bf16.mxu0 %v2876
      %2946 = vmatpush2.bf16.msra.mxu0 %v2875
      %2947 = vmatprep.subr.bf16.mxu0 %v2874
      %2948 = vmatpush2.bf16.msra.mxu0 %v2873
      %2949 = vmatprep.subr.bf16.mxu0 %v2872
      %2950 = vmatpush2.bf16.msra.mxu0 %v2871
      %2951 = vmatprep.mubr.bf16.mxu0 %v726
      %2952 = vmatmul.mubr.bf16.gmra.mxu0 %v725
      %v2953 = vpop.f32.mrf.mxu0
      %v2954 = vadd.f32 0.0, %v2953
      %v2955 = vpop.f32.mrf.mxu0
      %v2956 = vadd.f32 0.0, %v2955
      %v2957 = vpop.f32.mrf.mxu0
      %v2958 = vpop.f32.mrf.mxu0
      %2959 = vdwg.mxu0
      %s2960 = scalar_lea.vmem %s4, 28
      %v2961 = vld [vmem:[%s2960] sm:$0xf]
      %v2962 = vpack.c.bf16 %v2954, %v2954
      %v2963 = vpack.c.bf16 %v2956, %v2956
      %v2965 = vsel %vm1171, %v2961, 0
      %v2968 = vand.u32 %v2962, %v1178
      %v2971 = vand.u32 %v2963, %v1178
      %2973 = vmatprep.subr.bf16.mxu0 0
      %2974 = vmatpush1.bf16.msra.mxu0 0
      %2975 = vmatprep.subr.bf16.mxu0 0
      %2976 = vmatpush1.bf16.msra.mxu0 0
      %2977 = vmatprep.subr.bf16.mxu0 0
      %2978 = vmatpush1.bf16.msra.mxu0 0
      %2979 = vmatprep.subr.bf16.mxu0 0
      %2980 = vmatpush1.bf16.msra.mxu0 0
      %2981 = vmatprep.subr.bf16.mxu0 0
      %2982 = vmatpush1.bf16.msra.mxu0 0
      %2983 = vmatprep.subr.bf16.mxu0 0
      %2984 = vmatpush1.bf16.msra.mxu0 0
      %2985 = vmatprep.subr.bf16.mxu0 0
      %2986 = vmatpush1.bf16.msra.mxu0 0
      %2987 = vmatprep.subr.bf16.mxu0 %v2971
      %2988 = vmatpush1.bf16.msra.mxu0 %v2968
      %2989 = vmatprep.subr.bf16.mxu0 0
      %2990 = vmatpush2.bf16.msra.mxu0 0
      %2991 = vmatprep.subr.bf16.mxu0 0
      %2992 = vmatpush2.bf16.msra.mxu0 0
      %2993 = vmatprep.subr.bf16.mxu0 0
      %2994 = vmatpush2.bf16.msra.mxu0 0
      %2995 = vmatprep.subr.bf16.mxu0 0
      %2996 = vmatpush2.bf16.msra.mxu0 0
      %2997 = vmatprep.subr.bf16.mxu0 0
      %2998 = vmatpush2.bf16.msra.mxu0 0
      %2999 = vmatprep.subr.bf16.mxu0 0
      %3000 = vmatpush2.bf16.msra.mxu0 0
      %3001 = vmatprep.subr.bf16.mxu0 0
      %3002 = vmatpush2.bf16.msra.mxu0 0
      %3003 = vmatprep.subr.bf16.mxu0 0
      %3004 = vmatpush2.bf16.msra.mxu0 0
      %3005 = vmatprep.mubr.bf16.mxu0 0
      %3006 = vmatmul.mubr.bf16.gmra.mxu0 %v2965
      %v3007 = vpop.f32.mrf.mxu0
      %v3008 = vadd.f32 0.0, %v3007
      %v3009 = vpop.f32.mrf.mxu0
      %v3010 = vadd.f32 0.0, %v3009
      %v3011 = vpop.f32.mrf.mxu0
      %v3012 = vpop.f32.mrf.mxu0
      %3013 = vdwg.mxu0
      %v3014 = vadd.f32 %v2724, %v3008
      %v3015 = vadd.f32 %v2725, %v3010
      %s3016 = scalar_lea.vmem %s1, 2048
      %v3017 = vld [vmem:[%s3016] sm:$0xff]
      %v3018 = vld [vmem:[%s3016 + $0x8] sm:$0xff]
      %v3019 = vld [vmem:[%s3016 + $0x10] sm:$0xff]
      %v3020 = vld [vmem:[%s3016 + $0x18] sm:$0xff]
      %v3021 = vld [vmem:[%s3016 + $0x20] sm:$0xff]
      %v3022 = vld [vmem:[%s3016 + $0x28] sm:$0xff]
      %v3023 = vld [vmem:[%s3016 + $0x30] sm:$0xff]
      %v3024 = vld [vmem:[%s3016 + $0x38] sm:$0xff]
      %v3025 = vld [vmem:[%s3016 + $0x40] sm:$0xff]
      %v3026 = vld [vmem:[%s3016 + $0x48] sm:$0xff]
      %v3027 = vld [vmem:[%s3016 + $0x50] sm:$0xff]
      %v3028 = vld [vmem:[%s3016 + $0x58] sm:$0xff]
      %v3029 = vld [vmem:[%s3016 + $0x60] sm:$0xff]
      %v3030 = vld [vmem:[%s3016 + $0x68] sm:$0xff]
      %v3031 = vld [vmem:[%s3016 + $0x70] sm:$0xff]
      %v3032 = vld [vmem:[%s3016 + $0x78] sm:$0xff]
      %v3033 = vld [vmem:[%s3016 + $0x80] sm:$0xff]
      %v3034 = vld [vmem:[%s3016 + $0x88] sm:$0xff]
      %v3035 = vld [vmem:[%s3016 + $0x90] sm:$0xff]
      %v3036 = vld [vmem:[%s3016 + $0x98] sm:$0xff]
      %v3037 = vld [vmem:[%s3016 + $0xa0] sm:$0xff]
      %v3038 = vld [vmem:[%s3016 + $0xa8] sm:$0xff]
      %v3039 = vld [vmem:[%s3016 + $0xb0] sm:$0xff]
      %v3040 = vld [vmem:[%s3016 + $0xb8] sm:$0xff]
      %v3041 = vld [vmem:[%s3016 + $0xc0] sm:$0xff]
      %v3042 = vld [vmem:[%s3016 + $0xc8] sm:$0xff]
      %v3043 = vld [vmem:[%s3016 + $0xd0] sm:$0xff]
      %v3044 = vld [vmem:[%s3016 + $0xd8] sm:$0xff]
      %v3045 = vld [vmem:[%s3016 + $0xe0] sm:$0xff]
      %v3046 = vld [vmem:[%s3016 + $0xe8] sm:$0xff]
      %v3047 = vld [vmem:[%s3016 + $0xf0] sm:$0xff]
      %v3048 = vld [vmem:[%s3016 + $0xf8] sm:$0xff]
      %v3081 = vunpack.c.l.b16 %v3017
      %v3082 = vunpack.c.h.b16 %v3017
      %v3083 = vunpack.c.l.b16 %v3018
      %v3084 = vunpack.c.h.b16 %v3018
      %v3085 = vunpack.c.l.b16 %v3019
      %v3086 = vunpack.c.h.b16 %v3019
      %v3087 = vunpack.c.l.b16 %v3020
      %v3088 = vunpack.c.h.b16 %v3020
      %v3089 = vunpack.c.l.b16 %v3021
      %v3090 = vunpack.c.h.b16 %v3021
      %v3091 = vunpack.c.l.b16 %v3022
      %v3092 = vunpack.c.h.b16 %v3022
      %v3093 = vunpack.c.l.b16 %v3023
      %v3094 = vunpack.c.h.b16 %v3023
      %v3095 = vunpack.c.l.b16 %v3024
      %v3096 = vunpack.c.h.b16 %v3024
      %v3097 = vunpack.c.l.b16 %v3025
      %v3098 = vunpack.c.h.b16 %v3025
      %v3099 = vunpack.c.l.b16 %v3026
      %v3100 = vunpack.c.h.b16 %v3026
      %v3101 = vunpack.c.l.b16 %v3027
      %v3102 = vunpack.c.h.b16 %v3027
      %v3103 = vunpack.c.l.b16 %v3028
      %v3104 = vunpack.c.h.b16 %v3028
      %v3105 = vunpack.c.l.b16 %v3029
      %v3106 = vunpack.c.h.b16 %v3029
      %v3107 = vunpack.c.l.b16 %v3030
      %v3108 = vunpack.c.h.b16 %v3030
      %v3109 = vunpack.c.l.b16 %v3031
      %v3110 = vunpack.c.h.b16 %v3031
      %v3111 = vunpack.c.l.b16 %v3032
      %v3112 = vunpack.c.h.b16 %v3032
      %v3113 = vunpack.c.l.b16 %v3033
      %v3114 = vunpack.c.h.b16 %v3033
      %v3115 = vunpack.c.l.b16 %v3034
      %v3116 = vunpack.c.h.b16 %v3034
      %v3117 = vunpack.c.l.b16 %v3035
      %v3118 = vunpack.c.h.b16 %v3035
      %v3119 = vunpack.c.l.b16 %v3036
      %v3120 = vunpack.c.h.b16 %v3036
      %v3121 = vunpack.c.l.b16 %v3037
      %v3122 = vunpack.c.h.b16 %v3037
      %v3123 = vunpack.c.l.b16 %v3038
      %v3124 = vunpack.c.h.b16 %v3038
      %v3125 = vunpack.c.l.b16 %v3039
      %v3126 = vunpack.c.h.b16 %v3039
      %v3127 = vunpack.c.l.b16 %v3040
      %v3128 = vunpack.c.h.b16 %v3040
      %v3129 = vunpack.c.l.b16 %v3041
      %v3130 = vunpack.c.h.b16 %v3041
      %v3131 = vunpack.c.l.b16 %v3042
      %v3132 = vunpack.c.h.b16 %v3042
      %v3133 = vunpack.c.l.b16 %v3043
      %v3134 = vunpack.c.h.b16 %v3043
      %v3135 = vunpack.c.l.b16 %v3044
      %v3136 = vunpack.c.h.b16 %v3044
      %v3137 = vunpack.c.l.b16 %v3045
      %v3138 = vunpack.c.h.b16 %v3045
      %v3139 = vunpack.c.l.b16 %v3046
      %v3140 = vunpack.c.h.b16 %v3046
      %v3141 = vunpack.c.l.b16 %v3047
      %v3142 = vunpack.c.h.b16 %v3047
      %v3143 = vunpack.c.l.b16 %v3048
      %v3144 = vunpack.c.h.b16 %v3048
      %v3145 = vpack.c.b16 %v3083, %v3081
      %v3146 = vpack.c.b16 %v3084, %v3082
      %v3147 = vpack.c.b16 %v3087, %v3085
      %v3148 = vpack.c.b16 %v3088, %v3086
      %v3149 = vpack.c.b16 %v3091, %v3089
      %v3150 = vpack.c.b16 %v3092, %v3090
      %v3151 = vpack.c.b16 %v3095, %v3093
      %v3152 = vpack.c.b16 %v3096, %v3094
      %v3153 = vpack.c.b16 %v3099, %v3097
      %v3154 = vpack.c.b16 %v3100, %v3098
      %v3155 = vpack.c.b16 %v3103, %v3101
      %v3156 = vpack.c.b16 %v3104, %v3102
      %v3157 = vpack.c.b16 %v3107, %v3105
      %v3158 = vpack.c.b16 %v3108, %v3106
      %v3159 = vpack.c.b16 %v3111, %v3109
      %v3160 = vpack.c.b16 %v3112, %v3110
      %v3161 = vpack.c.b16 %v3115, %v3113
      %v3162 = vpack.c.b16 %v3116, %v3114
      %v3163 = vpack.c.b16 %v3119, %v3117
      %v3164 = vpack.c.b16 %v3120, %v3118
      %v3165 = vpack.c.b16 %v3123, %v3121
      %v3166 = vpack.c.b16 %v3124, %v3122
      %v3167 = vpack.c.b16 %v3127, %v3125
      %v3168 = vpack.c.b16 %v3128, %v3126
      %v3169 = vpack.c.b16 %v3131, %v3129
      %v3170 = vpack.c.b16 %v3132, %v3130
      %v3171 = vpack.c.b16 %v3135, %v3133
      %v3172 = vpack.c.b16 %v3136, %v3134
      %v3173 = vpack.c.b16 %v3139, %v3137
      %v3174 = vpack.c.b16 %v3140, %v3138
      %v3175 = vpack.c.b16 %v3143, %v3141
      %v3176 = vpack.c.b16 %v3144, %v3142
      %3209 = vmatprep.subr.bf16.mxu0 %v3160
      %3210 = vmatpush1.bf16.msra.mxu0 %v3159
      %3211 = vmatprep.subr.bf16.mxu0 %v3158
      %3212 = vmatpush1.bf16.msra.mxu0 %v3157
      %3213 = vmatprep.subr.bf16.mxu0 %v3156
      %3214 = vmatpush1.bf16.msra.mxu0 %v3155
      %3215 = vmatprep.subr.bf16.mxu0 %v3154
      %3216 = vmatpush1.bf16.msra.mxu0 %v3153
      %3217 = vmatprep.subr.bf16.mxu0 %v3152
      %3218 = vmatpush1.bf16.msra.mxu0 %v3151
      %3219 = vmatprep.subr.bf16.mxu0 %v3150
      %3220 = vmatpush1.bf16.msra.mxu0 %v3149
      %3221 = vmatprep.subr.bf16.mxu0 %v3148
      %3222 = vmatpush1.bf16.msra.mxu0 %v3147
      %3223 = vmatprep.subr.bf16.mxu0 %v3146
      %3224 = vmatpush1.bf16.msra.mxu0 %v3145
      %3225 = vmatprep.subr.bf16.mxu0 %v3176
      %3226 = vmatpush2.bf16.msra.mxu0 %v3175
      %3227 = vmatprep.subr.bf16.mxu0 %v3174
      %3228 = vmatpush2.bf16.msra.mxu0 %v3173
      %3229 = vmatprep.subr.bf16.mxu0 %v3172
      %3230 = vmatpush2.bf16.msra.mxu0 %v3171
      %3231 = vmatprep.subr.bf16.mxu0 %v3170
      %3232 = vmatpush2.bf16.msra.mxu0 %v3169
      %3233 = vmatprep.subr.bf16.mxu0 %v3168
      %3234 = vmatpush2.bf16.msra.mxu0 %v3167
      %3235 = vmatprep.subr.bf16.mxu0 %v3166
      %3236 = vmatpush2.bf16.msra.mxu0 %v3165
      %3237 = vmatprep.subr.bf16.mxu0 %v3164
      %3238 = vmatpush2.bf16.msra.mxu0 %v3163
      %3239 = vmatprep.subr.bf16.mxu0 %v3162
      %3240 = vmatpush2.bf16.msra.mxu0 %v3161
      %3241 = vmatprep.mubr.bf16.mxu0 %v726
      %3242 = vmatmul.mubr.bf16.gmra.mxu0 %v725
      %v3243 = vpop.f32.mrf.mxu0
      %v3244 = vadd.f32 0.0, %v3243
      %v3245 = vpop.f32.mrf.mxu0
      %v3246 = vadd.f32 0.0, %v3245
      %v3247 = vpop.f32.mrf.mxu0
      %v3248 = vpop.f32.mrf.mxu0
      %3249 = vdwg.mxu0
      %s3250 = scalar_lea.vmem %s4, 32
      %v3251 = vld [vmem:[%s3250] sm:$0xf]
      %v3252 = vpack.c.bf16 %v3244, %v3244
      %v3253 = vpack.c.bf16 %v3246, %v3246
      %v3255 = vsel %vm1171, %v3251, 0
      %v3258 = vand.u32 %v3252, %v1178
      %v3261 = vand.u32 %v3253, %v1178
      %3263 = vmatprep.subr.bf16.mxu0 0
      %3264 = vmatpush1.bf16.msra.mxu0 0
      %3265 = vmatprep.subr.bf16.mxu0 0
      %3266 = vmatpush1.bf16.msra.mxu0 0
      %3267 = vmatprep.subr.bf16.mxu0 0
      %3268 = vmatpush1.bf16.msra.mxu0 0
      %3269 = vmatprep.subr.bf16.mxu0 0
      %3270 = vmatpush1.bf16.msra.mxu0 0
      %3271 = vmatprep.subr.bf16.mxu0 0
      %3272 = vmatpush1.bf16.msra.mxu0 0
      %3273 = vmatprep.subr.bf16.mxu0 0
      %3274 = vmatpush1.bf16.msra.mxu0 0
      %3275 = vmatprep.subr.bf16.mxu0 0
      %3276 = vmatpush1.bf16.msra.mxu0 0
      %3277 = vmatprep.subr.bf16.mxu0 %v3261
      %3278 = vmatpush1.bf16.msra.mxu0 %v3258
      %3279 = vmatprep.subr.bf16.mxu0 0
      %3280 = vmatpush2.bf16.msra.mxu0 0
      %3281 = vmatprep.subr.bf16.mxu0 0
      %3282 = vmatpush2.bf16.msra.mxu0 0
      %3283 = vmatprep.subr.bf16.mxu0 0
      %3284 = vmatpush2.bf16.msra.mxu0 0
      %3285 = vmatprep.subr.bf16.mxu0 0
      %3286 = vmatpush2.bf16.msra.mxu0 0
      %3287 = vmatprep.subr.bf16.mxu0 0
      %3288 = vmatpush2.bf16.msra.mxu0 0
      %3289 = vmatprep.subr.bf16.mxu0 0
      %3290 = vmatpush2.bf16.msra.mxu0 0
      %3291 = vmatprep.subr.bf16.mxu0 0
      %3292 = vmatpush2.bf16.msra.mxu0 0
      %3293 = vmatprep.subr.bf16.mxu0 0
      %3294 = vmatpush2.bf16.msra.mxu0 0
      %3295 = vmatprep.mubr.bf16.mxu0 0
      %3296 = vmatmul.mubr.bf16.gmra.mxu0 %v3255
      %v3297 = vpop.f32.mrf.mxu0
      %v3298 = vadd.f32 0.0, %v3297
      %v3299 = vpop.f32.mrf.mxu0
      %v3300 = vadd.f32 0.0, %v3299
      %v3301 = vpop.f32.mrf.mxu0
      %v3302 = vpop.f32.mrf.mxu0
      %3303 = vdwg.mxu0
      %v3304 = vadd.f32 %v3014, %v3298
      %v3305 = vadd.f32 %v3015, %v3300
      %v3306 = vld [vmem:[%s5] sm:$0xff]
      %3308 = vset.pattern.permute.xlu0 0
      %3309 = vperm.xlu0 %3308, %v3306
      %v3310 = vpop.permute.xlu0 %3309
      %v3312 = vmul.f32 %v3304, %v3310
      %v3313 = vmul.f32 %v3305, %v3310
      %v3314 = vld [vmem:[%s6] sm:$0xff]
      %3316 = vset.pattern.permute.xlu0 0
      %3317 = vperm.xlu0 %3316, %v3314
      %v3318 = vpop.permute.xlu0 %3317
      %v3320 = vadd.f32 %v3312, %v3318
      %v3321 = vadd.f32 %v3313, %v3318
      %v3322 = vmax.f32 %v3320, 0.0
      %v3323 = vmax.f32 %v3321, 0.0
      %v3324 = vpack.c.bf16 %v3322, %v3322
      %v3325 = vpack.c.bf16 %v3323, %v3323
      %3326 = vmatprep.subr.bf16.mxu0 %v840
      %3327 = vmatpush1.bf16.msra.mxu0 %v839
      %3328 = vmatprep.subr.bf16.mxu0 %v838
      %3329 = vmatpush1.bf16.msra.mxu0 %v837
      %3330 = vmatprep.subr.bf16.mxu0 %v836
      %3331 = vmatpush1.bf16.msra.mxu0 %v835
      %3332 = vmatprep.subr.bf16.mxu0 %v834
      %3333 = vmatpush1.bf16.msra.mxu0 %v833
      %3334 = vmatprep.subr.bf16.mxu0 %v832
      %3335 = vmatpush1.bf16.msra.mxu0 %v831
      %3336 = vmatprep.subr.bf16.mxu0 %v830
      %3337 = vmatpush1.bf16.msra.mxu0 %v829
      %3338 = vmatprep.subr.bf16.mxu0 %v828
      %3339 = vmatpush1.bf16.msra.mxu0 %v827
      %3340 = vmatprep.subr.bf16.mxu0 %v826
      %3341 = vmatpush1.bf16.msra.mxu0 %v825
      %3342 = vmatprep.subr.bf16.mxu0 %v856
      %3343 = vmatpush2.bf16.msra.mxu0 %v855
      %3344 = vmatprep.subr.bf16.mxu0 %v854
      %3345 = vmatpush2.bf16.msra.mxu0 %v853
      %3346 = vmatprep.subr.bf16.mxu0 %v852
      %3347 = vmatpush2.bf16.msra.mxu0 %v851
      %3348 = vmatprep.subr.bf16.mxu0 %v850
      %3349 = vmatpush2.bf16.msra.mxu0 %v849
      %3350 = vmatprep.subr.bf16.mxu0 %v848
      %3351 = vmatpush2.bf16.msra.mxu0 %v847
      %3352 = vmatprep.subr.bf16.mxu0 %v846
      %3353 = vmatpush2.bf16.msra.mxu0 %v845
      %3354 = vmatprep.subr.bf16.mxu0 %v844
      %3355 = vmatpush2.bf16.msra.mxu0 %v843
      %3356 = vmatprep.subr.bf16.mxu0 %v842
      %3357 = vmatpush2.bf16.msra.mxu0 %v841
      %3358 = vmatprep.mubr.bf16.mxu0 %v3325
      %3359 = vmatmul.mubr.bf16.gmra.mxu0 %v3324
      %v3360 = vpop.f32.mrf.mxu0
      %v3361 = vadd.f32 0.0, %v3360
      %v3362 = vpop.f32.mrf.mxu0
      %v3363 = vadd.f32 0.0, %v3362
      %v3364 = vpop.f32.mrf.mxu0
      %v3365 = vpop.f32.mrf.mxu0
      %3366 = vdwg.mxu0
      %v3367 = vld [vmem:[%s7] sm:$0xf]
      %v3368 = vpack.c.bf16 %v3361, %v3361
      %v3369 = vpack.c.bf16 %v3363, %v3363
      %3370 = vmatprep.subr.bf16.mxu0 %v1077
      %3371 = vmatpush1.bf16.msra.mxu0 %v1076
      %3372 = vmatprep.subr.bf16.mxu0 %v1075
      %3373 = vmatpush1.bf16.msra.mxu0 %v1074
      %3374 = vmatprep.subr.bf16.mxu0 %v1073
      %3375 = vmatpush1.bf16.msra.mxu0 %v1072
      %3376 = vmatprep.subr.bf16.mxu0 %v1071
      %3377 = vmatpush1.bf16.msra.mxu0 %v1070
      %3378 = vmatprep.subr.bf16.mxu0 %v1069
      %3379 = vmatpush1.bf16.msra.mxu0 %v1068
      %3380 = vmatprep.subr.bf16.mxu0 %v1067
      %3381 = vmatpush1.bf16.msra.mxu0 %v1066
      %3382 = vmatprep.subr.bf16.mxu0 %v1065
      %3383 = vmatpush1.bf16.msra.mxu0 %v1064
      %3384 = vmatprep.subr.bf16.mxu0 %v1063
      %3385 = vmatpush1.bf16.msra.mxu0 %v1062
      %3386 = vmatprep.subr.bf16.mxu0 %v1093
      %3387 = vmatpush2.bf16.msra.mxu0 %v1092
      %3388 = vmatprep.subr.bf16.mxu0 %v1091
      %3389 = vmatpush2.bf16.msra.mxu0 %v1090
      %3390 = vmatprep.subr.bf16.mxu0 %v1089
      %3391 = vmatpush2.bf16.msra.mxu0 %v1088
      %3392 = vmatprep.subr.bf16.mxu0 %v1087
      %3393 = vmatpush2.bf16.msra.mxu0 %v1086
      %3394 = vmatprep.subr.bf16.mxu0 %v1085
      %3395 = vmatpush2.bf16.msra.mxu0 %v1084
      %3396 = vmatprep.subr.bf16.mxu0 %v1083
      %3397 = vmatpush2.bf16.msra.mxu0 %v1082
      %3398 = vmatprep.subr.bf16.mxu0 %v1081
      %3399 = vmatpush2.bf16.msra.mxu0 %v1080
      %3400 = vmatprep.subr.bf16.mxu0 %v1079
      %3401 = vmatpush2.bf16.msra.mxu0 %v1078
      %3402 = vmatprep.mubr.bf16.mxu0 %v3325
      %3403 = vmatmul.mubr.bf16.gmra.mxu0 %v3324
      %v3404 = vpop.f32.mrf.mxu0
      %v3405 = vadd.f32 0.0, %v3404
      %v3406 = vpop.f32.mrf.mxu0
      %v3407 = vadd.f32 0.0, %v3406
      %v3408 = vpop.f32.mrf.mxu0
      %v3409 = vpop.f32.mrf.mxu0
      %3410 = vdwg.mxu0
      %s3411 = scalar_lea.vmem %s7, 4
      %v3412 = vld [vmem:[%s3411] sm:$0xf]
      %v3413 = vpack.c.bf16 %v3405, %v3405
      %v3414 = vpack.c.bf16 %v3407, %v3407
      %vm3415 = vcmask 64512
      %v3417 = vsel %vm3415, %v3412, 0
      %vm3419 = vcmask 1043456
      %v3421 = vsel %vm3419, %v3413, 0
      %v3424 = vsel %vm3419, %v3414, 0
      %3426 = vmatprep.subr.bf16.mxu0 0
      %3427 = vmatpush1.bf16.msra.mxu0 0
      %3428 = vmatprep.subr.bf16.mxu0 0
      %3429 = vmatpush1.bf16.msra.mxu0 0
      %3430 = vmatprep.subr.bf16.mxu0 0
      %3431 = vmatpush1.bf16.msra.mxu0 0
      %3432 = vmatprep.subr.bf16.mxu0 0
      %3433 = vmatpush1.bf16.msra.mxu0 0
      %3434 = vmatprep.subr.bf16.mxu0 0
      %3435 = vmatpush1.bf16.msra.mxu0 0
      %3436 = vmatprep.subr.bf16.mxu0 0
      %3437 = vmatpush1.bf16.msra.mxu0 0
      %3438 = vmatprep.subr.bf16.mxu0 0
      %3439 = vmatpush1.bf16.msra.mxu0 0
      %3440 = vmatprep.subr.bf16.mxu0 %v3424
      %3441 = vmatpush1.bf16.msra.mxu0 %v3421
      %3442 = vmatprep.subr.bf16.mxu0 0
      %3443 = vmatpush2.bf16.msra.mxu0 0
      %3444 = vmatprep.subr.bf16.mxu0 0
      %3445 = vmatpush2.bf16.msra.mxu0 0
      %3446 = vmatprep.subr.bf16.mxu0 0
      %3447 = vmatpush2.bf16.msra.mxu0 0
      %3448 = vmatprep.subr.bf16.mxu0 0
      %3449 = vmatpush2.bf16.msra.mxu0 0
      %3450 = vmatprep.subr.bf16.mxu0 0
      %3451 = vmatpush2.bf16.msra.mxu0 0
      %3452 = vmatprep.subr.bf16.mxu0 0
      %3453 = vmatpush2.bf16.msra.mxu0 0
      %3454 = vmatprep.subr.bf16.mxu0 0
      %3455 = vmatpush2.bf16.msra.mxu0 0
      %3456 = vmatprep.subr.bf16.mxu0 0
      %3457 = vmatpush2.bf16.msra.mxu0 0
      %3458 = vmatprep.mubr.bf16.mxu0 0
      %3459 = vmatmul.mubr.bf16.gmra.mxu0 %v3417
      %v3460 = vpop.f32.mrf.mxu0
      %v3461 = vadd.f32 0.0, %v3460
      %v3462 = vpop.f32.mrf.mxu0
      %v3463 = vadd.f32 0.0, %v3462
      %v3464 = vpop.f32.mrf.mxu0
      %v3465 = vpop.f32.mrf.mxu0
      %3466 = vdwg.mxu0
      %v3468 = vsel %vm3415, %v3367, 0
      %v3471 = vsel %vm3419, %v3368, 0
      %v3474 = vsel %vm3419, %v3369, 0
      %3476 = vmatprep.subr.bf16.mxu0 0
      %3477 = vmatpush1.bf16.msra.mxu0 0
      %3478 = vmatprep.subr.bf16.mxu0 0
      %3479 = vmatpush1.bf16.msra.mxu0 0
      %3480 = vmatprep.subr.bf16.mxu0 0
      %3481 = vmatpush1.bf16.msra.mxu0 0
      %3482 = vmatprep.subr.bf16.mxu0 0
      %3483 = vmatpush1.bf16.msra.mxu0 0
      %3484 = vmatprep.subr.bf16.mxu0 0
      %3485 = vmatpush1.bf16.msra.mxu0 0
      %3486 = vmatprep.subr.bf16.mxu0 0
      %3487 = vmatpush1.bf16.msra.mxu0 0
      %3488 = vmatprep.subr.bf16.mxu0 0
      %3489 = vmatpush1.bf16.msra.mxu0 0
      %3490 = vmatprep.subr.bf16.mxu0 %v3474
      %3491 = vmatpush1.bf16.msra.mxu0 %v3471
      %3492 = vmatprep.subr.bf16.mxu0 0
      %3493 = vmatpush2.bf16.msra.mxu0 0
      %3494 = vmatprep.subr.bf16.mxu0 0
      %3495 = vmatpush2.bf16.msra.mxu0 0
      %3496 = vmatprep.subr.bf16.mxu0 0
      %3497 = vmatpush2.bf16.msra.mxu0 0
      %3498 = vmatprep.subr.bf16.mxu0 0
      %3499 = vmatpush2.bf16.msra.mxu0 0
      %3500 = vmatprep.subr.bf16.mxu0 0
      %3501 = vmatpush2.bf16.msra.mxu0 0
      %3502 = vmatprep.subr.bf16.mxu0 0
      %3503 = vmatpush2.bf16.msra.mxu0 0
      %3504 = vmatprep.subr.bf16.mxu0 0
      %3505 = vmatpush2.bf16.msra.mxu0 0
      %3506 = vmatprep.subr.bf16.mxu0 0
      %3507 = vmatpush2.bf16.msra.mxu0 0
      %3508 = vmatprep.mubr.bf16.mxu0 0
      %3509 = vmatmul.mubr.bf16.gmra.mxu0 %v3468
      %v3510 = vpop.f32.mrf.mxu0
      %v3511 = vadd.f32 %v3461, %v3510
      %v3512 = vpop.f32.mrf.mxu0
      %v3513 = vadd.f32 %v3463, %v3512
      %v3514 = vpop.f32.mrf.mxu0
      %v3515 = vpop.f32.mrf.mxu0
      %3516 = vdwg.mxu0
      %3517 = vmatprep.subr.bf16.mxu0 %v1420
      %3518 = vmatpush1.bf16.msra.mxu0 %v1419
      %3519 = vmatprep.subr.bf16.mxu0 %v1418
      %3520 = vmatpush1.bf16.msra.mxu0 %v1417
      %3521 = vmatprep.subr.bf16.mxu0 %v1416
      %3522 = vmatpush1.bf16.msra.mxu0 %v1415
      %3523 = vmatprep.subr.bf16.mxu0 %v1414
      %3524 = vmatpush1.bf16.msra.mxu0 %v1413
      %3525 = vmatprep.subr.bf16.mxu0 %v1412
      %3526 = vmatpush1.bf16.msra.mxu0 %v1411
      %3527 = vmatprep.subr.bf16.mxu0 %v1410
      %3528 = vmatpush1.bf16.msra.mxu0 %v1409
      %3529 = vmatprep.subr.bf16.mxu0 %v1408
      %3530 = vmatpush1.bf16.msra.mxu0 %v1407
      %3531 = vmatprep.subr.bf16.mxu0 %v1406
      %3532 = vmatpush1.bf16.msra.mxu0 %v1405
      %3533 = vmatprep.subr.bf16.mxu0 %v1436
      %3534 = vmatpush2.bf16.msra.mxu0 %v1435
      %3535 = vmatprep.subr.bf16.mxu0 %v1434
      %3536 = vmatpush2.bf16.msra.mxu0 %v1433
      %3537 = vmatprep.subr.bf16.mxu0 %v1432
      %3538 = vmatpush2.bf16.msra.mxu0 %v1431
      %3539 = vmatprep.subr.bf16.mxu0 %v1430
      %3540 = vmatpush2.bf16.msra.mxu0 %v1429
      %3541 = vmatprep.subr.bf16.mxu0 %v1428
      %3542 = vmatpush2.bf16.msra.mxu0 %v1427
      %3543 = vmatprep.subr.bf16.mxu0 %v1426
      %3544 = vmatpush2.bf16.msra.mxu0 %v1425
      %3545 = vmatprep.subr.bf16.mxu0 %v1424
      %3546 = vmatpush2.bf16.msra.mxu0 %v1423
      %3547 = vmatprep.subr.bf16.mxu0 %v1422
      %3548 = vmatpush2.bf16.msra.mxu0 %v1421
      %3549 = vmatprep.mubr.bf16.mxu0 %v3325
      %3550 = vmatmul.mubr.bf16.gmra.mxu0 %v3324
      %v3551 = vpop.f32.mrf.mxu0
      %v3552 = vadd.f32 0.0, %v3551
      %v3553 = vpop.f32.mrf.mxu0
      %v3554 = vadd.f32 0.0, %v3553
      %v3555 = vpop.f32.mrf.mxu0
      %v3556 = vpop.f32.mrf.mxu0
      %3557 = vdwg.mxu0
      %s3558 = scalar_lea.vmem %s7, 8
      %v3559 = vld [vmem:[%s3558] sm:$0xf]
      %v3560 = vpack.c.bf16 %v3552, %v3552
      %v3561 = vpack.c.bf16 %v3554, %v3554
      %v3563 = vsel %vm3415, %v3559, 0
      %v3566 = vsel %vm3419, %v3560, 0
      %v3569 = vsel %vm3419, %v3561, 0
      %3571 = vmatprep.subr.bf16.mxu0 0
      %3572 = vmatpush1.bf16.msra.mxu0 0
      %3573 = vmatprep.subr.bf16.mxu0 0
      %3574 = vmatpush1.bf16.msra.mxu0 0
      %3575 = vmatprep.subr.bf16.mxu0 0
      %3576 = vmatpush1.bf16.msra.mxu0 0
      %3577 = vmatprep.subr.bf16.mxu0 0
      %3578 = vmatpush1.bf16.msra.mxu0 0
      %3579 = vmatprep.subr.bf16.mxu0 0
      %3580 = vmatpush1.bf16.msra.mxu0 0
      %3581 = vmatprep.subr.bf16.mxu0 0
      %3582 = vmatpush1.bf16.msra.mxu0 0
      %3583 = vmatprep.subr.bf16.mxu0 0
      %3584 = vmatpush1.bf16.msra.mxu0 0
      %3585 = vmatprep.subr.bf16.mxu0 %v3569
      %3586 = vmatpush1.bf16.msra.mxu0 %v3566
      %3587 = vmatprep.subr.bf16.mxu0 0
      %3588 = vmatpush2.bf16.msra.mxu0 0
      %3589 = vmatprep.subr.bf16.mxu0 0
      %3590 = vmatpush2.bf16.msra.mxu0 0
      %3591 = vmatprep.subr.bf16.mxu0 0
      %3592 = vmatpush2.bf16.msra.mxu0 0
      %3593 = vmatprep.subr.bf16.mxu0 0
      %3594 = vmatpush2.bf16.msra.mxu0 0
      %3595 = vmatprep.subr.bf16.mxu0 0
      %3596 = vmatpush2.bf16.msra.mxu0 0
      %3597 = vmatprep.subr.bf16.mxu0 0
      %3598 = vmatpush2.bf16.msra.mxu0 0
      %3599 = vmatprep.subr.bf16.mxu0 0
      %3600 = vmatpush2.bf16.msra.mxu0 0
      %3601 = vmatprep.subr.bf16.mxu0 0
      %3602 = vmatpush2.bf16.msra.mxu0 0
      %3603 = vmatprep.mubr.bf16.mxu0 0
      %3604 = vmatmul.mubr.bf16.gmra.mxu0 %v3563
      %v3605 = vpop.f32.mrf.mxu0
      %v3606 = vadd.f32 0.0, %v3605
      %v3607 = vpop.f32.mrf.mxu0
      %v3608 = vadd.f32 0.0, %v3607
      %v3609 = vpop.f32.mrf.mxu0
      %v3610 = vpop.f32.mrf.mxu0
      %3611 = vdwg.mxu0
      %v3612 = vadd.f32 %v3511, %v3606
      %v3613 = vadd.f32 %v3513, %v3608
      %3614 = vmatprep.subr.bf16.mxu0 %v1710
      %3615 = vmatpush1.bf16.msra.mxu0 %v1709
      %3616 = vmatprep.subr.bf16.mxu0 %v1708
      %3617 = vmatpush1.bf16.msra.mxu0 %v1707
      %3618 = vmatprep.subr.bf16.mxu0 %v1706
      %3619 = vmatpush1.bf16.msra.mxu0 %v1705
      %3620 = vmatprep.subr.bf16.mxu0 %v1704
      %3621 = vmatpush1.bf16.msra.mxu0 %v1703
      %3622 = vmatprep.subr.bf16.mxu0 %v1702
      %3623 = vmatpush1.bf16.msra.mxu0 %v1701
      %3624 = vmatprep.subr.bf16.mxu0 %v1700
      %3625 = vmatpush1.bf16.msra.mxu0 %v1699
      %3626 = vmatprep.subr.bf16.mxu0 %v1698
      %3627 = vmatpush1.bf16.msra.mxu0 %v1697
      %3628 = vmatprep.subr.bf16.mxu0 %v1696
      %3629 = vmatpush1.bf16.msra.mxu0 %v1695
      %3630 = vmatprep.subr.bf16.mxu0 %v1726
      %3631 = vmatpush2.bf16.msra.mxu0 %v1725
      %3632 = vmatprep.subr.bf16.mxu0 %v1724
      %3633 = vmatpush2.bf16.msra.mxu0 %v1723
      %3634 = vmatprep.subr.bf16.mxu0 %v1722
      %3635 = vmatpush2.bf16.msra.mxu0 %v1721
      %3636 = vmatprep.subr.bf16.mxu0 %v1720
      %3637 = vmatpush2.bf16.msra.mxu0 %v1719
      %3638 = vmatprep.subr.bf16.mxu0 %v1718
      %3639 = vmatpush2.bf16.msra.mxu0 %v1717
      %3640 = vmatprep.subr.bf16.mxu0 %v1716
      %3641 = vmatpush2.bf16.msra.mxu0 %v1715
      %3642 = vmatprep.subr.bf16.mxu0 %v1714
      %3643 = vmatpush2.bf16.msra.mxu0 %v1713
      %3644 = vmatprep.subr.bf16.mxu0 %v1712
      %3645 = vmatpush2.bf16.msra.mxu0 %v1711
      %3646 = vmatprep.mubr.bf16.mxu0 %v3325
      %3647 = vmatmul.mubr.bf16.gmra.mxu0 %v3324
      %v3648 = vpop.f32.mrf.mxu0
      %v3649 = vadd.f32 0.0, %v3648
      %v3650 = vpop.f32.mrf.mxu0
      %v3651 = vadd.f32 0.0, %v3650
      %v3652 = vpop.f32.mrf.mxu0
      %v3653 = vpop.f32.mrf.mxu0
      %3654 = vdwg.mxu0
      %s3655 = scalar_lea.vmem %s7, 12
      %v3656 = vld [vmem:[%s3655] sm:$0xf]
      %v3657 = vpack.c.bf16 %v3649, %v3649
      %v3658 = vpack.c.bf16 %v3651, %v3651
      %v3660 = vsel %vm3415, %v3656, 0
      %v3663 = vsel %vm3419, %v3657, 0
      %v3666 = vsel %vm3419, %v3658, 0
      %3668 = vmatprep.subr.bf16.mxu0 0
      %3669 = vmatpush1.bf16.msra.mxu0 0
      %3670 = vmatprep.subr.bf16.mxu0 0
      %3671 = vmatpush1.bf16.msra.mxu0 0
      %3672 = vmatprep.subr.bf16.mxu0 0
      %3673 = vmatpush1.bf16.msra.mxu0 0
      %3674 = vmatprep.subr.bf16.mxu0 0
      %3675 = vmatpush1.bf16.msra.mxu0 0
      %3676 = vmatprep.subr.bf16.mxu0 0
      %3677 = vmatpush1.bf16.msra.mxu0 0
      %3678 = vmatprep.subr.bf16.mxu0 0
      %3679 = vmatpush1.bf16.msra.mxu0 0
      %3680 = vmatprep.subr.bf16.mxu0 0
      %3681 = vmatpush1.bf16.msra.mxu0 0
      %3682 = vmatprep.subr.bf16.mxu0 %v3666
      %3683 = vmatpush1.bf16.msra.mxu0 %v3663
      %3684 = vmatprep.subr.bf16.mxu0 0
      %3685 = vmatpush2.bf16.msra.mxu0 0
      %3686 = vmatprep.subr.bf16.mxu0 0
      %3687 = vmatpush2.bf16.msra.mxu0 0
      %3688 = vmatprep.subr.bf16.mxu0 0
      %3689 = vmatpush2.bf16.msra.mxu0 0
      %3690 = vmatprep.subr.bf16.mxu0 0
      %3691 = vmatpush2.bf16.msra.mxu0 0
      %3692 = vmatprep.subr.bf16.mxu0 0
      %3693 = vmatpush2.bf16.msra.mxu0 0
      %3694 = vmatprep.subr.bf16.mxu0 0
      %3695 = vmatpush2.bf16.msra.mxu0 0
      %3696 = vmatprep.subr.bf16.mxu0 0
      %3697 = vmatpush2.bf16.msra.mxu0 0
      %3698 = vmatprep.subr.bf16.mxu0 0
      %3699 = vmatpush2.bf16.msra.mxu0 0
      %3700 = vmatprep.mubr.bf16.mxu0 0
      %3701 = vmatmul.mubr.bf16.gmra.mxu0 %v3660
      %v3702 = vpop.f32.mrf.mxu0
      %v3703 = vadd.f32 0.0, %v3702
      %v3704 = vpop.f32.mrf.mxu0
      %v3705 = vadd.f32 0.0, %v3704
      %v3706 = vpop.f32.mrf.mxu0
      %v3707 = vpop.f32.mrf.mxu0
      %3708 = vdwg.mxu0
      %v3709 = vadd.f32 %v3612, %v3703
      %v3710 = vadd.f32 %v3613, %v3705
      %3711 = vmatprep.subr.bf16.mxu0 %v2000
      %3712 = vmatpush1.bf16.msra.mxu0 %v1999
      %3713 = vmatprep.subr.bf16.mxu0 %v1998
      %3714 = vmatpush1.bf16.msra.mxu0 %v1997
      %3715 = vmatprep.subr.bf16.mxu0 %v1996
      %3716 = vmatpush1.bf16.msra.mxu0 %v1995
      %3717 = vmatprep.subr.bf16.mxu0 %v1994
      %3718 = vmatpush1.bf16.msra.mxu0 %v1993
      %3719 = vmatprep.subr.bf16.mxu0 %v1992
      %3720 = vmatpush1.bf16.msra.mxu0 %v1991
      %3721 = vmatprep.subr.bf16.mxu0 %v1990
      %3722 = vmatpush1.bf16.msra.mxu0 %v1989
      %3723 = vmatprep.subr.bf16.mxu0 %v1988
      %3724 = vmatpush1.bf16.msra.mxu0 %v1987
      %3725 = vmatprep.subr.bf16.mxu0 %v1986
      %3726 = vmatpush1.bf16.msra.mxu0 %v1985
      %3727 = vmatprep.subr.bf16.mxu0 %v2016
      %3728 = vmatpush2.bf16.msra.mxu0 %v2015
      %3729 = vmatprep.subr.bf16.mxu0 %v2014
      %3730 = vmatpush2.bf16.msra.mxu0 %v2013
      %3731 = vmatprep.subr.bf16.mxu0 %v2012
      %3732 = vmatpush2.bf16.msra.mxu0 %v2011
      %3733 = vmatprep.subr.bf16.mxu0 %v2010
      %3734 = vmatpush2.bf16.msra.mxu0 %v2009
      %3735 = vmatprep.subr.bf16.mxu0 %v2008
      %3736 = vmatpush2.bf16.msra.mxu0 %v2007
      %3737 = vmatprep.subr.bf16.mxu0 %v2006
      %3738 = vmatpush2.bf16.msra.mxu0 %v2005
      %3739 = vmatprep.subr.bf16.mxu0 %v2004
      %3740 = vmatpush2.bf16.msra.mxu0 %v2003
      %3741 = vmatprep.subr.bf16.mxu0 %v2002
      %3742 = vmatpush2.bf16.msra.mxu0 %v2001
      %3743 = vmatprep.mubr.bf16.mxu0 %v3325
      %3744 = vmatmul.mubr.bf16.gmra.mxu0 %v3324
      %v3745 = vpop.f32.mrf.mxu0
      %v3746 = vadd.f32 0.0, %v3745
      %v3747 = vpop.f32.mrf.mxu0
      %v3748 = vadd.f32 0.0, %v3747
      %v3749 = vpop.f32.mrf.mxu0
      %v3750 = vpop.f32.mrf.mxu0
      %3751 = vdwg.mxu0
      %s3752 = scalar_lea.vmem %s7, 16
      %v3753 = vld [vmem:[%s3752] sm:$0xf]
      %v3754 = vpack.c.bf16 %v3746, %v3746
      %v3755 = vpack.c.bf16 %v3748, %v3748
      %v3757 = vsel %vm3415, %v3753, 0
      %v3760 = vsel %vm3419, %v3754, 0
      %v3763 = vsel %vm3419, %v3755, 0
      %3765 = vmatprep.subr.bf16.mxu0 0
      %3766 = vmatpush1.bf16.msra.mxu0 0
      %3767 = vmatprep.subr.bf16.mxu0 0
      %3768 = vmatpush1.bf16.msra.mxu0 0
      %3769 = vmatprep.subr.bf16.mxu0 0
      %3770 = vmatpush1.bf16.msra.mxu0 0
      %3771 = vmatprep.subr.bf16.mxu0 0
      %3772 = vmatpush1.bf16.msra.mxu0 0
      %3773 = vmatprep.subr.bf16.mxu0 0
      %3774 = vmatpush1.bf16.msra.mxu0 0
      %3775 = vmatprep.subr.bf16.mxu0 0
      %3776 = vmatpush1.bf16.msra.mxu0 0
      %3777 = vmatprep.subr.bf16.mxu0 0
      %3778 = vmatpush1.bf16.msra.mxu0 0
      %3779 = vmatprep.subr.bf16.mxu0 %v3763
      %3780 = vmatpush1.bf16.msra.mxu0 %v3760
      %3781 = vmatprep.subr.bf16.mxu0 0
      %3782 = vmatpush2.bf16.msra.mxu0 0
      %3783 = vmatprep.subr.bf16.mxu0 0
      %3784 = vmatpush2.bf16.msra.mxu0 0
      %3785 = vmatprep.subr.bf16.mxu0 0
      %3786 = vmatpush2.bf16.msra.mxu0 0
      %3787 = vmatprep.subr.bf16.mxu0 0
      %3788 = vmatpush2.bf16.msra.mxu0 0
      %3789 = vmatprep.subr.bf16.mxu0 0
      %3790 = vmatpush2.bf16.msra.mxu0 0
      %3791 = vmatprep.subr.bf16.mxu0 0
      %3792 = vmatpush2.bf16.msra.mxu0 0
      %3793 = vmatprep.subr.bf16.mxu0 0
      %3794 = vmatpush2.bf16.msra.mxu0 0
      %3795 = vmatprep.subr.bf16.mxu0 0
      %3796 = vmatpush2.bf16.msra.mxu0 0
      %3797 = vmatprep.mubr.bf16.mxu0 0
      %3798 = vmatmul.mubr.bf16.gmra.mxu0 %v3757
      %v3799 = vpop.f32.mrf.mxu0
      %v3800 = vadd.f32 0.0, %v3799
      %v3801 = vpop.f32.mrf.mxu0
      %v3802 = vadd.f32 0.0, %v3801
      %v3803 = vpop.f32.mrf.mxu0
      %v3804 = vpop.f32.mrf.mxu0
      %3805 = vdwg.mxu0
      %v3806 = vadd.f32 %v3709, %v3800
      %v3807 = vadd.f32 %v3710, %v3802
      %3808 = vmatprep.subr.bf16.mxu0 %v2290
      %3809 = vmatpush1.bf16.msra.mxu0 %v2289
      %3810 = vmatprep.subr.bf16.mxu0 %v2288
      %3811 = vmatpush1.bf16.msra.mxu0 %v2287
      %3812 = vmatprep.subr.bf16.mxu0 %v2286
      %3813 = vmatpush1.bf16.msra.mxu0 %v2285
      %3814 = vmatprep.subr.bf16.mxu0 %v2284
      %3815 = vmatpush1.bf16.msra.mxu0 %v2283
      %3816 = vmatprep.subr.bf16.mxu0 %v2282
      %3817 = vmatpush1.bf16.msra.mxu0 %v2281
      %3818 = vmatprep.subr.bf16.mxu0 %v2280
      %3819 = vmatpush1.bf16.msra.mxu0 %v2279
      %3820 = vmatprep.subr.bf16.mxu0 %v2278
      %3821 = vmatpush1.bf16.msra.mxu0 %v2277
      %3822 = vmatprep.subr.bf16.mxu0 %v2276
      %3823 = vmatpush1.bf16.msra.mxu0 %v2275
      %3824 = vmatprep.subr.bf16.mxu0 %v2306
      %3825 = vmatpush2.bf16.msra.mxu0 %v2305
      %3826 = vmatprep.subr.bf16.mxu0 %v2304
      %3827 = vmatpush2.bf16.msra.mxu0 %v2303
      %3828 = vmatprep.subr.bf16.mxu0 %v2302
      %3829 = vmatpush2.bf16.msra.mxu0 %v2301
      %3830 = vmatprep.subr.bf16.mxu0 %v2300
      %3831 = vmatpush2.bf16.msra.mxu0 %v2299
      %3832 = vmatprep.subr.bf16.mxu0 %v2298
      %3833 = vmatpush2.bf16.msra.mxu0 %v2297
      %3834 = vmatprep.subr.bf16.mxu0 %v2296
      %3835 = vmatpush2.bf16.msra.mxu0 %v2295
      %3836 = vmatprep.subr.bf16.mxu0 %v2294
      %3837 = vmatpush2.bf16.msra.mxu0 %v2293
      %3838 = vmatprep.subr.bf16.mxu0 %v2292
      %3839 = vmatpush2.bf16.msra.mxu0 %v2291
      %3840 = vmatprep.mubr.bf16.mxu0 %v3325
      %3841 = vmatmul.mubr.bf16.gmra.mxu0 %v3324
      %v3842 = vpop.f32.mrf.mxu0
      %v3843 = vadd.f32 0.0, %v3842
      %v3844 = vpop.f32.mrf.mxu0
      %v3845 = vadd.f32 0.0, %v3844
      %v3846 = vpop.f32.mrf.mxu0
      %v3847 = vpop.f32.mrf.mxu0
      %3848 = vdwg.mxu0
      %s3849 = scalar_lea.vmem %s7, 20
      %v3850 = vld [vmem:[%s3849] sm:$0xf]
      %v3851 = vpack.c.bf16 %v3843, %v3843
      %v3852 = vpack.c.bf16 %v3845, %v3845
      %v3854 = vsel %vm3415, %v3850, 0
      %v3857 = vsel %vm3419, %v3851, 0
      %v3860 = vsel %vm3419, %v3852, 0
      %3862 = vmatprep.subr.bf16.mxu0 0
      %3863 = vmatpush1.bf16.msra.mxu0 0
      %3864 = vmatprep.subr.bf16.mxu0 0
      %3865 = vmatpush1.bf16.msra.mxu0 0
      %3866 = vmatprep.subr.bf16.mxu0 0
      %3867 = vmatpush1.bf16.msra.mxu0 0
      %3868 = vmatprep.subr.bf16.mxu0 0
      %3869 = vmatpush1.bf16.msra.mxu0 0
      %3870 = vmatprep.subr.bf16.mxu0 0
      %3871 = vmatpush1.bf16.msra.mxu0 0
      %3872 = vmatprep.subr.bf16.mxu0 0
      %3873 = vmatpush1.bf16.msra.mxu0 0
      %3874 = vmatprep.subr.bf16.mxu0 0
      %3875 = vmatpush1.bf16.msra.mxu0 0
      %3876 = vmatprep.subr.bf16.mxu0 %v3860
      %3877 = vmatpush1.bf16.msra.mxu0 %v3857
      %3878 = vmatprep.subr.bf16.mxu0 0
      %3879 = vmatpush2.bf16.msra.mxu0 0
      %3880 = vmatprep.subr.bf16.mxu0 0
      %3881 = vmatpush2.bf16.msra.mxu0 0
      %3882 = vmatprep.subr.bf16.mxu0 0
      %3883 = vmatpush2.bf16.msra.mxu0 0
      %3884 = vmatprep.subr.bf16.mxu0 0
      %3885 = vmatpush2.bf16.msra.mxu0 0
      %3886 = vmatprep.subr.bf16.mxu0 0
      %3887 = vmatpush2.bf16.msra.mxu0 0
      %3888 = vmatprep.subr.bf16.mxu0 0
      %3889 = vmatpush2.bf16.msra.mxu0 0
      %3890 = vmatprep.subr.bf16.mxu0 0
      %3891 = vmatpush2.bf16.msra.mxu0 0
      %3892 = vmatprep.subr.bf16.mxu0 0
      %3893 = vmatpush2.bf16.msra.mxu0 0
      %3894 = vmatprep.mubr.bf16.mxu0 0
      %3895 = vmatmul.mubr.bf16.gmra.mxu0 %v3854
      %v3896 = vpop.f32.mrf.mxu0
      %v3897 = vadd.f32 0.0, %v3896
      %v3898 = vpop.f32.mrf.mxu0
      %v3899 = vadd.f32 0.0, %v3898
      %v3900 = vpop.f32.mrf.mxu0
      %v3901 = vpop.f32.mrf.mxu0
      %3902 = vdwg.mxu0
      %v3903 = vadd.f32 %v3806, %v3897
      %v3904 = vadd.f32 %v3807, %v3899
      %3905 = vmatprep.subr.bf16.mxu0 %v2580
      %3906 = vmatpush1.bf16.msra.mxu0 %v2579
      %3907 = vmatprep.subr.bf16.mxu0 %v2578
      %3908 = vmatpush1.bf16.msra.mxu0 %v2577
      %3909 = vmatprep.subr.bf16.mxu0 %v2576
      %3910 = vmatpush1.bf16.msra.mxu0 %v2575
      %3911 = vmatprep.subr.bf16.mxu0 %v2574
      %3912 = vmatpush1.bf16.msra.mxu0 %v2573
      %3913 = vmatprep.subr.bf16.mxu0 %v2572
      %3914 = vmatpush1.bf16.msra.mxu0 %v2571
      %3915 = vmatprep.subr.bf16.mxu0 %v2570
      %3916 = vmatpush1.bf16.msra.mxu0 %v2569
      %3917 = vmatprep.subr.bf16.mxu0 %v2568
      %3918 = vmatpush1.bf16.msra.mxu0 %v2567
      %3919 = vmatprep.subr.bf16.mxu0 %v2566
      %3920 = vmatpush1.bf16.msra.mxu0 %v2565
      %3921 = vmatprep.subr.bf16.mxu0 %v2596
      %3922 = vmatpush2.bf16.msra.mxu0 %v2595
      %3923 = vmatprep.subr.bf16.mxu0 %v2594
      %3924 = vmatpush2.bf16.msra.mxu0 %v2593
      %3925 = vmatprep.subr.bf16.mxu0 %v2592
      %3926 = vmatpush2.bf16.msra.mxu0 %v2591
      %3927 = vmatprep.subr.bf16.mxu0 %v2590
      %3928 = vmatpush2.bf16.msra.mxu0 %v2589
      %3929 = vmatprep.subr.bf16.mxu0 %v2588
      %3930 = vmatpush2.bf16.msra.mxu0 %v2587
      %3931 = vmatprep.subr.bf16.mxu0 %v2586
      %3932 = vmatpush2.bf16.msra.mxu0 %v2585
      %3933 = vmatprep.subr.bf16.mxu0 %v2584
      %3934 = vmatpush2.bf16.msra.mxu0 %v2583
      %3935 = vmatprep.subr.bf16.mxu0 %v2582
      %3936 = vmatpush2.bf16.msra.mxu0 %v2581
      %3937 = vmatprep.mubr.bf16.mxu0 %v3325
      %3938 = vmatmul.mubr.bf16.gmra.mxu0 %v3324
      %v3939 = vpop.f32.mrf.mxu0
      %v3940 = vadd.f32 0.0, %v3939
      %v3941 = vpop.f32.mrf.mxu0
      %v3942 = vadd.f32 0.0, %v3941
      %v3943 = vpop.f32.mrf.mxu0
      %v3944 = vpop.f32.mrf.mxu0
      %3945 = vdwg.mxu0
      %s3946 = scalar_lea.vmem %s7, 24
      %v3947 = vld [vmem:[%s3946] sm:$0xf]
      %v3948 = vpack.c.bf16 %v3940, %v3940
      %v3949 = vpack.c.bf16 %v3942, %v3942
      %v3951 = vsel %vm3415, %v3947, 0
      %v3954 = vsel %vm3419, %v3948, 0
      %v3957 = vsel %vm3419, %v3949, 0
      %3959 = vmatprep.subr.bf16.mxu0 0
      %3960 = vmatpush1.bf16.msra.mxu0 0
      %3961 = vmatprep.subr.bf16.mxu0 0
      %3962 = vmatpush1.bf16.msra.mxu0 0
      %3963 = vmatprep.subr.bf16.mxu0 0
      %3964 = vmatpush1.bf16.msra.mxu0 0
      %3965 = vmatprep.subr.bf16.mxu0 0
      %3966 = vmatpush1.bf16.msra.mxu0 0
      %3967 = vmatprep.subr.bf16.mxu0 0
      %3968 = vmatpush1.bf16.msra.mxu0 0
      %3969 = vmatprep.subr.bf16.mxu0 0
      %3970 = vmatpush1.bf16.msra.mxu0 0
      %3971 = vmatprep.subr.bf16.mxu0 0
      %3972 = vmatpush1.bf16.msra.mxu0 0
      %3973 = vmatprep.subr.bf16.mxu0 %v3957
      %3974 = vmatpush1.bf16.msra.mxu0 %v3954
      %3975 = vmatprep.subr.bf16.mxu0 0
      %3976 = vmatpush2.bf16.msra.mxu0 0
      %3977 = vmatprep.subr.bf16.mxu0 0
      %3978 = vmatpush2.bf16.msra.mxu0 0
      %3979 = vmatprep.subr.bf16.mxu0 0
      %3980 = vmatpush2.bf16.msra.mxu0 0
      %3981 = vmatprep.subr.bf16.mxu0 0
      %3982 = vmatpush2.bf16.msra.mxu0 0
      %3983 = vmatprep.subr.bf16.mxu0 0
      %3984 = vmatpush2.bf16.msra.mxu0 0
      %3985 = vmatprep.subr.bf16.mxu0 0
      %3986 = vmatpush2.bf16.msra.mxu0 0
      %3987 = vmatprep.subr.bf16.mxu0 0
      %3988 = vmatpush2.bf16.msra.mxu0 0
      %3989 = vmatprep.subr.bf16.mxu0 0
      %3990 = vmatpush2.bf16.msra.mxu0 0
      %3991 = vmatprep.mubr.bf16.mxu0 0
      %3992 = vmatmul.mubr.bf16.gmra.mxu0 %v3951
      %v3993 = vpop.f32.mrf.mxu0
      %v3994 = vadd.f32 0.0, %v3993
      %v3995 = vpop.f32.mrf.mxu0
      %v3996 = vadd.f32 0.0, %v3995
      %v3997 = vpop.f32.mrf.mxu0
      %v3998 = vpop.f32.mrf.mxu0
      %3999 = vdwg.mxu0
      %v4000 = vadd.f32 %v3903, %v3994
      %v4001 = vadd.f32 %v3904, %v3996
      %4002 = vmatprep.subr.bf16.mxu0 %v2870
      %4003 = vmatpush1.bf16.msra.mxu0 %v2869
      %4004 = vmatprep.subr.bf16.mxu0 %v2868
      %4005 = vmatpush1.bf16.msra.mxu0 %v2867
      %4006 = vmatprep.subr.bf16.mxu0 %v2866
      %4007 = vmatpush1.bf16.msra.mxu0 %v2865
      %4008 = vmatprep.subr.bf16.mxu0 %v2864
      %4009 = vmatpush1.bf16.msra.mxu0 %v2863
      %4010 = vmatprep.subr.bf16.mxu0 %v2862
      %4011 = vmatpush1.bf16.msra.mxu0 %v2861
      %4012 = vmatprep.subr.bf16.mxu0 %v2860
      %4013 = vmatpush1.bf16.msra.mxu0 %v2859
      %4014 = vmatprep.subr.bf16.mxu0 %v2858
      %4015 = vmatpush1.bf16.msra.mxu0 %v2857
      %4016 = vmatprep.subr.bf16.mxu0 %v2856
      %4017 = vmatpush1.bf16.msra.mxu0 %v2855
      %4018 = vmatprep.subr.bf16.mxu0 %v2886
      %4019 = vmatpush2.bf16.msra.mxu0 %v2885
      %4020 = vmatprep.subr.bf16.mxu0 %v2884
      %4021 = vmatpush2.bf16.msra.mxu0 %v2883
      %4022 = vmatprep.subr.bf16.mxu0 %v2882
      %4023 = vmatpush2.bf16.msra.mxu0 %v2881
      %4024 = vmatprep.subr.bf16.mxu0 %v2880
      %4025 = vmatpush2.bf16.msra.mxu0 %v2879
      %4026 = vmatprep.subr.bf16.mxu0 %v2878
      %4027 = vmatpush2.bf16.msra.mxu0 %v2877
      %4028 = vmatprep.subr.bf16.mxu0 %v2876
      %4029 = vmatpush2.bf16.msra.mxu0 %v2875
      %4030 = vmatprep.subr.bf16.mxu0 %v2874
      %4031 = vmatpush2.bf16.msra.mxu0 %v2873
      %4032 = vmatprep.subr.bf16.mxu0 %v2872
      %4033 = vmatpush2.bf16.msra.mxu0 %v2871
      %4034 = vmatprep.mubr.bf16.mxu0 %v3325
      %4035 = vmatmul.mubr.bf16.gmra.mxu0 %v3324
      %v4036 = vpop.f32.mrf.mxu0
      %v4037 = vadd.f32 0.0, %v4036
      %v4038 = vpop.f32.mrf.mxu0
      %v4039 = vadd.f32 0.0, %v4038
      %v4040 = vpop.f32.mrf.mxu0
      %v4041 = vpop.f32.mrf.mxu0
      %4042 = vdwg.mxu0
      %s4043 = scalar_lea.vmem %s7, 28
      %v4044 = vld [vmem:[%s4043] sm:$0xf]
      %v4045 = vpack.c.bf16 %v4037, %v4037
      %v4046 = vpack.c.bf16 %v4039, %v4039
      %v4048 = vsel %vm3415, %v4044, 0
      %v4051 = vsel %vm3419, %v4045, 0
      %v4054 = vsel %vm3419, %v4046, 0
      %4056 = vmatprep.subr.bf16.mxu0 0
      %4057 = vmatpush1.bf16.msra.mxu0 0
      %4058 = vmatprep.subr.bf16.mxu0 0
      %4059 = vmatpush1.bf16.msra.mxu0 0
      %4060 = vmatprep.subr.bf16.mxu0 0
      %4061 = vmatpush1.bf16.msra.mxu0 0
      %4062 = vmatprep.subr.bf16.mxu0 0
      %4063 = vmatpush1.bf16.msra.mxu0 0
      %4064 = vmatprep.subr.bf16.mxu0 0
      %4065 = vmatpush1.bf16.msra.mxu0 0
      %4066 = vmatprep.subr.bf16.mxu0 0
      %4067 = vmatpush1.bf16.msra.mxu0 0
      %4068 = vmatprep.subr.bf16.mxu0 0
      %4069 = vmatpush1.bf16.msra.mxu0 0
      %4070 = vmatprep.subr.bf16.mxu0 %v4054
      %4071 = vmatpush1.bf16.msra.mxu0 %v4051
      %4072 = vmatprep.subr.bf16.mxu0 0
      %4073 = vmatpush2.bf16.msra.mxu0 0
      %4074 = vmatprep.subr.bf16.mxu0 0
      %4075 = vmatpush2.bf16.msra.mxu0 0
      %4076 = vmatprep.subr.bf16.mxu0 0
      %4077 = vmatpush2.bf16.msra.mxu0 0
      %4078 = vmatprep.subr.bf16.mxu0 0
      %4079 = vmatpush2.bf16.msra.mxu0 0
      %4080 = vmatprep.subr.bf16.mxu0 0
      %4081 = vmatpush2.bf16.msra.mxu0 0
      %4082 = vmatprep.subr.bf16.mxu0 0
      %4083 = vmatpush2.bf16.msra.mxu0 0
      %4084 = vmatprep.subr.bf16.mxu0 0
      %4085 = vmatpush2.bf16.msra.mxu0 0
      %4086 = vmatprep.subr.bf16.mxu0 0
      %4087 = vmatpush2.bf16.msra.mxu0 0
      %4088 = vmatprep.mubr.bf16.mxu0 0
      %4089 = vmatmul.mubr.bf16.gmra.mxu0 %v4048
      %v4090 = vpop.f32.mrf.mxu0
      %v4091 = vadd.f32 0.0, %v4090
      %v4092 = vpop.f32.mrf.mxu0
      %v4093 = vadd.f32 0.0, %v4092
      %v4094 = vpop.f32.mrf.mxu0
      %v4095 = vpop.f32.mrf.mxu0
      %4096 = vdwg.mxu0
      %v4097 = vadd.f32 %v4000, %v4091
      %v4098 = vadd.f32 %v4001, %v4093
      %4099 = vmatprep.subr.bf16.mxu0 %v3160
      %4100 = vmatpush1.bf16.msra.mxu0 %v3159
      %4101 = vmatprep.subr.bf16.mxu0 %v3158
      %4102 = vmatpush1.bf16.msra.mxu0 %v3157
      %4103 = vmatprep.subr.bf16.mxu0 %v3156
      %4104 = vmatpush1.bf16.msra.mxu0 %v3155
      %4105 = vmatprep.subr.bf16.mxu0 %v3154
      %4106 = vmatpush1.bf16.msra.mxu0 %v3153
      %4107 = vmatprep.subr.bf16.mxu0 %v3152
      %4108 = vmatpush1.bf16.msra.mxu0 %v3151
      %4109 = vmatprep.subr.bf16.mxu0 %v3150
      %4110 = vmatpush1.bf16.msra.mxu0 %v3149
      %4111 = vmatprep.subr.bf16.mxu0 %v3148
      %4112 = vmatpush1.bf16.msra.mxu0 %v3147
      %4113 = vmatprep.subr.bf16.mxu0 %v3146
      %4114 = vmatpush1.bf16.msra.mxu0 %v3145
      %4115 = vmatprep.subr.bf16.mxu0 %v3176
      %4116 = vmatpush2.bf16.msra.mxu0 %v3175
      %4117 = vmatprep.subr.bf16.mxu0 %v3174
      %4118 = vmatpush2.bf16.msra.mxu0 %v3173
      %4119 = vmatprep.subr.bf16.mxu0 %v3172
      %4120 = vmatpush2.bf16.msra.mxu0 %v3171
      %4121 = vmatprep.subr.bf16.mxu0 %v3170
      %4122 = vmatpush2.bf16.msra.mxu0 %v3169
      %4123 = vmatprep.subr.bf16.mxu0 %v3168
      %4124 = vmatpush2.bf16.msra.mxu0 %v3167
      %4125 = vmatprep.subr.bf16.mxu0 %v3166
      %4126 = vmatpush2.bf16.msra.mxu0 %v3165
      %4127 = vmatprep.subr.bf16.mxu0 %v3164
      %4128 = vmatpush2.bf16.msra.mxu0 %v3163
      %4129 = vmatprep.subr.bf16.mxu0 %v3162
      %4130 = vmatpush2.bf16.msra.mxu0 %v3161
      %4131 = vmatprep.mubr.bf16.mxu0 %v3325
      %4132 = vmatmul.mubr.bf16.gmra.mxu0 %v3324
      %v4133 = vpop.f32.mrf.mxu0
      %v4134 = vadd.f32 0.0, %v4133
      %v4135 = vpop.f32.mrf.mxu0
      %v4136 = vadd.f32 0.0, %v4135
      %v4137 = vpop.f32.mrf.mxu0
      %v4138 = vpop.f32.mrf.mxu0
      %4139 = vdwg.mxu0
      %s4140 = scalar_lea.vmem %s7, 32
      %v4141 = vld [vmem:[%s4140] sm:$0xf]
      %v4142 = vpack.c.bf16 %v4134, %v4134
      %v4143 = vpack.c.bf16 %v4136, %v4136
      %v4145 = vsel %vm3415, %v4141, 0
      %v4148 = vsel %vm3419, %v4142, 0
      %v4151 = vsel %vm3419, %v4143, 0
      %4153 = vmatprep.subr.bf16.mxu0 0
      %4154 = vmatpush1.bf16.msra.mxu0 0
      %4155 = vmatprep.subr.bf16.mxu0 0
      %4156 = vmatpush1.bf16.msra.mxu0 0
      %4157 = vmatprep.subr.bf16.mxu0 0
      %4158 = vmatpush1.bf16.msra.mxu0 0
      %4159 = vmatprep.subr.bf16.mxu0 0
      %4160 = vmatpush1.bf16.msra.mxu0 0
      %4161 = vmatprep.subr.bf16.mxu0 0
      %4162 = vmatpush1.bf16.msra.mxu0 0
      %4163 = vmatprep.subr.bf16.mxu0 0
      %4164 = vmatpush1.bf16.msra.mxu0 0
      %4165 = vmatprep.subr.bf16.mxu0 0
      %4166 = vmatpush1.bf16.msra.mxu0 0
      %4167 = vmatprep.subr.bf16.mxu0 %v4151
      %4168 = vmatpush1.bf16.msra.mxu0 %v4148
      %4169 = vmatprep.subr.bf16.mxu0 0
      %4170 = vmatpush2.bf16.msra.mxu0 0
      %4171 = vmatprep.subr.bf16.mxu0 0
      %4172 = vmatpush2.bf16.msra.mxu0 0
      %4173 = vmatprep.subr.bf16.mxu0 0
      %4174 = vmatpush2.bf16.msra.mxu0 0
      %4175 = vmatprep.subr.bf16.mxu0 0
      %4176 = vmatpush2.bf16.msra.mxu0 0
      %4177 = vmatprep.subr.bf16.mxu0 0
      %4178 = vmatpush2.bf16.msra.mxu0 0
      %4179 = vmatprep.subr.bf16.mxu0 0
      %4180 = vmatpush2.bf16.msra.mxu0 0
      %4181 = vmatprep.subr.bf16.mxu0 0
      %4182 = vmatpush2.bf16.msra.mxu0 0
      %4183 = vmatprep.subr.bf16.mxu0 0
      %4184 = vmatpush2.bf16.msra.mxu0 0
      %4185 = vmatprep.mubr.bf16.mxu0 0
      %4186 = vmatmul.mubr.bf16.gmra.mxu0 %v4145
      %v4187 = vpop.f32.mrf.mxu0
      %v4188 = vadd.f32 0.0, %v4187
      %v4189 = vpop.f32.mrf.mxu0
      %v4190 = vadd.f32 0.0, %v4189
      %v4191 = vpop.f32.mrf.mxu0
      %v4192 = vpop.f32.mrf.mxu0
      %4193 = vdwg.mxu0
      %v4194 = vadd.f32 %v4097, %v4188
      %v4195 = vadd.f32 %v4098, %v4190
      %v4196 = vld [vmem:[%s8] sm:$0xff]
      %4198 = vset.pattern.permute.xlu0 0
      %4199 = vperm.xlu0 %4198, %v4196
      %v4200 = vpop.permute.xlu0 %4199
      %v4202 = vmul.f32 %v4194, %v4200
      %v4203 = vmul.f32 %v4195, %v4200
      %v4204 = vld [vmem:[%s9] sm:$0xff]
      %4206 = vset.pattern.permute.xlu0 0
      %4207 = vperm.xlu0 %4206, %v4204
      %v4208 = vpop.permute.xlu0 %4207
      %v4210 = vadd.f32 %v4202, %v4208
      %v4211 = vadd.f32 %v4203, %v4208
      %v4212 = vmax.f32 %v4210, 0.0
      %v4213 = vmax.f32 %v4211, 0.0
      %v4214 = vpack.c.bf16 %v4212, %v4212
      %v4215 = vpack.c.bf16 %v4213, %v4213
      %4216 = vmatprep.subr.bf16.mxu0 %v840
      %4217 = vmatpush1.bf16.msra.mxu0 %v839
      %4218 = vmatprep.subr.bf16.mxu0 %v838
      %4219 = vmatpush1.bf16.msra.mxu0 %v837
      %4220 = vmatprep.subr.bf16.mxu0 %v836
      %4221 = vmatpush1.bf16.msra.mxu0 %v835
      %4222 = vmatprep.subr.bf16.mxu0 %v834
      %4223 = vmatpush1.bf16.msra.mxu0 %v833
      %4224 = vmatprep.subr.bf16.mxu0 %v832
      %4225 = vmatpush1.bf16.msra.mxu0 %v831
      %4226 = vmatprep.subr.bf16.mxu0 %v830
      %4227 = vmatpush1.bf16.msra.mxu0 %v829
      %4228 = vmatprep.subr.bf16.mxu0 %v828
      %4229 = vmatpush1.bf16.msra.mxu0 %v827
      %4230 = vmatprep.subr.bf16.mxu0 %v826
      %4231 = vmatpush1.bf16.msra.mxu0 %v825
      %4232 = vmatprep.subr.bf16.mxu0 %v856
      %4233 = vmatpush2.bf16.msra.mxu0 %v855
      %4234 = vmatprep.subr.bf16.mxu0 %v854
      %4235 = vmatpush2.bf16.msra.mxu0 %v853
      %4236 = vmatprep.subr.bf16.mxu0 %v852
      %4237 = vmatpush2.bf16.msra.mxu0 %v851
      %4238 = vmatprep.subr.bf16.mxu0 %v850
      %4239 = vmatpush2.bf16.msra.mxu0 %v849
      %4240 = vmatprep.subr.bf16.mxu0 %v848
      %4241 = vmatpush2.bf16.msra.mxu0 %v847
      %4242 = vmatprep.subr.bf16.mxu0 %v846
      %4243 = vmatpush2.bf16.msra.mxu0 %v845
      %4244 = vmatprep.subr.bf16.mxu0 %v844
      %4245 = vmatpush2.bf16.msra.mxu0 %v843
      %4246 = vmatprep.subr.bf16.mxu0 %v842
      %4247 = vmatpush2.bf16.msra.mxu0 %v841
      %4248 = vmatprep.mubr.bf16.mxu0 %v4215
      %4249 = vmatmul.mubr.bf16.gmra.mxu0 %v4214
      %v4250 = vpop.f32.mrf.mxu0
      %v4251 = vadd.f32 0.0, %v4250
      %v4252 = vpop.f32.mrf.mxu0
      %v4253 = vadd.f32 0.0, %v4252
      %v4254 = vpop.f32.mrf.mxu0
      %v4255 = vpop.f32.mrf.mxu0
      %4256 = vdwg.mxu0
      %v4257 = vld [vmem:[%s10] sm:$0xf]
      %v4258 = vpack.c.bf16 %v4251, %v4251
      %v4259 = vpack.c.bf16 %v4253, %v4253
      %4260 = vmatprep.subr.bf16.mxu0 %v1077
      %4261 = vmatpush1.bf16.msra.mxu0 %v1076
      %4262 = vmatprep.subr.bf16.mxu0 %v1075
      %4263 = vmatpush1.bf16.msra.mxu0 %v1074
      %4264 = vmatprep.subr.bf16.mxu0 %v1073
      %4265 = vmatpush1.bf16.msra.mxu0 %v1072
      %4266 = vmatprep.subr.bf16.mxu0 %v1071
      %4267 = vmatpush1.bf16.msra.mxu0 %v1070
      %4268 = vmatprep.subr.bf16.mxu0 %v1069
      %4269 = vmatpush1.bf16.msra.mxu0 %v1068
      %4270 = vmatprep.subr.bf16.mxu0 %v1067
      %4271 = vmatpush1.bf16.msra.mxu0 %v1066
      %4272 = vmatprep.subr.bf16.mxu0 %v1065
      %4273 = vmatpush1.bf16.msra.mxu0 %v1064
      %4274 = vmatprep.subr.bf16.mxu0 %v1063
      %4275 = vmatpush1.bf16.msra.mxu0 %v1062
      %4276 = vmatprep.subr.bf16.mxu0 %v1093
      %4277 = vmatpush2.bf16.msra.mxu0 %v1092
      %4278 = vmatprep.subr.bf16.mxu0 %v1091
      %4279 = vmatpush2.bf16.msra.mxu0 %v1090
      %4280 = vmatprep.subr.bf16.mxu0 %v1089
      %4281 = vmatpush2.bf16.msra.mxu0 %v1088
      %4282 = vmatprep.subr.bf16.mxu0 %v1087
      %4283 = vmatpush2.bf16.msra.mxu0 %v1086
      %4284 = vmatprep.subr.bf16.mxu0 %v1085
      %4285 = vmatpush2.bf16.msra.mxu0 %v1084
      %4286 = vmatprep.subr.bf16.mxu0 %v1083
      %4287 = vmatpush2.bf16.msra.mxu0 %v1082
      %4288 = vmatprep.subr.bf16.mxu0 %v1081
      %4289 = vmatpush2.bf16.msra.mxu0 %v1080
      %4290 = vmatprep.subr.bf16.mxu0 %v1079
      %4291 = vmatpush2.bf16.msra.mxu0 %v1078
      %4292 = vmatprep.mubr.bf16.mxu0 %v4215
      %4293 = vmatmul.mubr.bf16.gmra.mxu0 %v4214
      %v4294 = vpop.f32.mrf.mxu0
      %v4295 = vadd.f32 0.0, %v4294
      %v4296 = vpop.f32.mrf.mxu0
      %v4297 = vadd.f32 0.0, %v4296
      %v4298 = vpop.f32.mrf.mxu0
      %v4299 = vpop.f32.mrf.mxu0
      %4300 = vdwg.mxu0
      %s4301 = scalar_lea.vmem %s10, 4
      %v4302 = vld [vmem:[%s4301] sm:$0xf]
      %v4303 = vpack.c.bf16 %v4295, %v4295
      %v4304 = vpack.c.bf16 %v4297, %v4297
      %v4306 = vsel %vm3415, %v4302, 0
      %v4309 = vsel %vm3419, %v4303, 0
      %v4312 = vsel %vm3419, %v4304, 0
      %4314 = vmatprep.subr.bf16.mxu0 0
      %4315 = vmatpush1.bf16.msra.mxu0 0
      %4316 = vmatprep.subr.bf16.mxu0 0
      %4317 = vmatpush1.bf16.msra.mxu0 0
      %4318 = vmatprep.subr.bf16.mxu0 0
      %4319 = vmatpush1.bf16.msra.mxu0 0
      %4320 = vmatprep.subr.bf16.mxu0 0
      %4321 = vmatpush1.bf16.msra.mxu0 0
      %4322 = vmatprep.subr.bf16.mxu0 0
      %4323 = vmatpush1.bf16.msra.mxu0 0
      %4324 = vmatprep.subr.bf16.mxu0 0
      %4325 = vmatpush1.bf16.msra.mxu0 0
      %4326 = vmatprep.subr.bf16.mxu0 0
      %4327 = vmatpush1.bf16.msra.mxu0 0
      %4328 = vmatprep.subr.bf16.mxu0 %v4312
      %4329 = vmatpush1.bf16.msra.mxu0 %v4309
      %4330 = vmatprep.subr.bf16.mxu0 0
      %4331 = vmatpush2.bf16.msra.mxu0 0
      %4332 = vmatprep.subr.bf16.mxu0 0
      %4333 = vmatpush2.bf16.msra.mxu0 0
      %4334 = vmatprep.subr.bf16.mxu0 0
      %4335 = vmatpush2.bf16.msra.mxu0 0
      %4336 = vmatprep.subr.bf16.mxu0 0
      %4337 = vmatpush2.bf16.msra.mxu0 0
      %4338 = vmatprep.subr.bf16.mxu0 0
      %4339 = vmatpush2.bf16.msra.mxu0 0
      %4340 = vmatprep.subr.bf16.mxu0 0
      %4341 = vmatpush2.bf16.msra.mxu0 0
      %4342 = vmatprep.subr.bf16.mxu0 0
      %4343 = vmatpush2.bf16.msra.mxu0 0
      %4344 = vmatprep.subr.bf16.mxu0 0
      %4345 = vmatpush2.bf16.msra.mxu0 0
      %4346 = vmatprep.mubr.bf16.mxu0 0
      %4347 = vmatmul.mubr.bf16.gmra.mxu0 %v4306
      %v4348 = vpop.f32.mrf.mxu0
      %v4349 = vadd.f32 0.0, %v4348
      %v4350 = vpop.f32.mrf.mxu0
      %v4351 = vadd.f32 0.0, %v4350
      %v4352 = vpop.f32.mrf.mxu0
      %v4353 = vpop.f32.mrf.mxu0
      %4354 = vdwg.mxu0
      %v4356 = vsel %vm3415, %v4257, 0
      %v4359 = vsel %vm3419, %v4258, 0
      %v4362 = vsel %vm3419, %v4259, 0
      %4364 = vmatprep.subr.bf16.mxu0 0
      %4365 = vmatpush1.bf16.msra.mxu0 0
      %4366 = vmatprep.subr.bf16.mxu0 0
      %4367 = vmatpush1.bf16.msra.mxu0 0
      %4368 = vmatprep.subr.bf16.mxu0 0
      %4369 = vmatpush1.bf16.msra.mxu0 0
      %4370 = vmatprep.subr.bf16.mxu0 0
      %4371 = vmatpush1.bf16.msra.mxu0 0
      %4372 = vmatprep.subr.bf16.mxu0 0
      %4373 = vmatpush1.bf16.msra.mxu0 0
      %4374 = vmatprep.subr.bf16.mxu0 0
      %4375 = vmatpush1.bf16.msra.mxu0 0
      %4376 = vmatprep.subr.bf16.mxu0 0
      %4377 = vmatpush1.bf16.msra.mxu0 0
      %4378 = vmatprep.subr.bf16.mxu0 %v4362
      %4379 = vmatpush1.bf16.msra.mxu0 %v4359
      %4380 = vmatprep.subr.bf16.mxu0 0
      %4381 = vmatpush2.bf16.msra.mxu0 0
      %4382 = vmatprep.subr.bf16.mxu0 0
      %4383 = vmatpush2.bf16.msra.mxu0 0
      %4384 = vmatprep.subr.bf16.mxu0 0
      %4385 = vmatpush2.bf16.msra.mxu0 0
      %4386 = vmatprep.subr.bf16.mxu0 0
      %4387 = vmatpush2.bf16.msra.mxu0 0
      %4388 = vmatprep.subr.bf16.mxu0 0
      %4389 = vmatpush2.bf16.msra.mxu0 0
      %4390 = vmatprep.subr.bf16.mxu0 0
      %4391 = vmatpush2.bf16.msra.mxu0 0
      %4392 = vmatprep.subr.bf16.mxu0 0
      %4393 = vmatpush2.bf16.msra.mxu0 0
      %4394 = vmatprep.subr.bf16.mxu0 0
      %4395 = vmatpush2.bf16.msra.mxu0 0
      %4396 = vmatprep.mubr.bf16.mxu0 0
      %4397 = vmatmul.mubr.bf16.gmra.mxu0 %v4356
      %v4398 = vpop.f32.mrf.mxu0
      %v4399 = vadd.f32 %v4349, %v4398
      %v4400 = vpop.f32.mrf.mxu0
      %v4401 = vadd.f32 %v4351, %v4400
      %v4402 = vpop.f32.mrf.mxu0
      %v4403 = vpop.f32.mrf.mxu0
      %4404 = vdwg.mxu0
      %4405 = vmatprep.subr.bf16.mxu0 %v1420
      %4406 = vmatpush1.bf16.msra.mxu0 %v1419
      %4407 = vmatprep.subr.bf16.mxu0 %v1418
      %4408 = vmatpush1.bf16.msra.mxu0 %v1417
      %4409 = vmatprep.subr.bf16.mxu0 %v1416
      %4410 = vmatpush1.bf16.msra.mxu0 %v1415
      %4411 = vmatprep.subr.bf16.mxu0 %v1414
      %4412 = vmatpush1.bf16.msra.mxu0 %v1413
      %4413 = vmatprep.subr.bf16.mxu0 %v1412
      %4414 = vmatpush1.bf16.msra.mxu0 %v1411
      %4415 = vmatprep.subr.bf16.mxu0 %v1410
      %4416 = vmatpush1.bf16.msra.mxu0 %v1409
      %4417 = vmatprep.subr.bf16.mxu0 %v1408
      %4418 = vmatpush1.bf16.msra.mxu0 %v1407
      %4419 = vmatprep.subr.bf16.mxu0 %v1406
      %4420 = vmatpush1.bf16.msra.mxu0 %v1405
      %4421 = vmatprep.subr.bf16.mxu0 %v1436
      %4422 = vmatpush2.bf16.msra.mxu0 %v1435
      %4423 = vmatprep.subr.bf16.mxu0 %v1434
      %4424 = vmatpush2.bf16.msra.mxu0 %v1433
      %4425 = vmatprep.subr.bf16.mxu0 %v1432
      %4426 = vmatpush2.bf16.msra.mxu0 %v1431
      %4427 = vmatprep.subr.bf16.mxu0 %v1430
      %4428 = vmatpush2.bf16.msra.mxu0 %v1429
      %4429 = vmatprep.subr.bf16.mxu0 %v1428
      %4430 = vmatpush2.bf16.msra.mxu0 %v1427
      %4431 = vmatprep.subr.bf16.mxu0 %v1426
      %4432 = vmatpush2.bf16.msra.mxu0 %v1425
      %4433 = vmatprep.subr.bf16.mxu0 %v1424
      %4434 = vmatpush2.bf16.msra.mxu0 %v1423
      %4435 = vmatprep.subr.bf16.mxu0 %v1422
      %4436 = vmatpush2.bf16.msra.mxu0 %v1421
      %4437 = vmatprep.mubr.bf16.mxu0 %v4215
      %4438 = vmatmul.mubr.bf16.gmra.mxu0 %v4214
      %v4439 = vpop.f32.mrf.mxu0
      %v4440 = vadd.f32 0.0, %v4439
      %v4441 = vpop.f32.mrf.mxu0
      %v4442 = vadd.f32 0.0, %v4441
      %v4443 = vpop.f32.mrf.mxu0
      %v4444 = vpop.f32.mrf.mxu0
      %4445 = vdwg.mxu0
      %s4446 = scalar_lea.vmem %s10, 8
      %v4447 = vld [vmem:[%s4446] sm:$0xf]
      %v4448 = vpack.c.bf16 %v4440, %v4440
      %v4449 = vpack.c.bf16 %v4442, %v4442
      %v4451 = vsel %vm3415, %v4447, 0
      %v4454 = vsel %vm3419, %v4448, 0
      %v4457 = vsel %vm3419, %v4449, 0
      %4459 = vmatprep.subr.bf16.mxu0 0
      %4460 = vmatpush1.bf16.msra.mxu0 0
      %4461 = vmatprep.subr.bf16.mxu0 0
      %4462 = vmatpush1.bf16.msra.mxu0 0
      %4463 = vmatprep.subr.bf16.mxu0 0
      %4464 = vmatpush1.bf16.msra.mxu0 0
      %4465 = vmatprep.subr.bf16.mxu0 0
      %4466 = vmatpush1.bf16.msra.mxu0 0
      %4467 = vmatprep.subr.bf16.mxu0 0
      %4468 = vmatpush1.bf16.msra.mxu0 0
      %4469 = vmatprep.subr.bf16.mxu0 0
      %4470 = vmatpush1.bf16.msra.mxu0 0
      %4471 = vmatprep.subr.bf16.mxu0 0
      %4472 = vmatpush1.bf16.msra.mxu0 0
      %4473 = vmatprep.subr.bf16.mxu0 %v4457
      %4474 = vmatpush1.bf16.msra.mxu0 %v4454
      %4475 = vmatprep.subr.bf16.mxu0 0
      %4476 = vmatpush2.bf16.msra.mxu0 0
      %4477 = vmatprep.subr.bf16.mxu0 0
      %4478 = vmatpush2.bf16.msra.mxu0 0
      %4479 = vmatprep.subr.bf16.mxu0 0
      %4480 = vmatpush2.bf16.msra.mxu0 0
      %4481 = vmatprep.subr.bf16.mxu0 0
      %4482 = vmatpush2.bf16.msra.mxu0 0
      %4483 = vmatprep.subr.bf16.mxu0 0
      %4484 = vmatpush2.bf16.msra.mxu0 0
      %4485 = vmatprep.subr.bf16.mxu0 0
      %4486 = vmatpush2.bf16.msra.mxu0 0
      %4487 = vmatprep.subr.bf16.mxu0 0
      %4488 = vmatpush2.bf16.msra.mxu0 0
      %4489 = vmatprep.subr.bf16.mxu0 0
      %4490 = vmatpush2.bf16.msra.mxu0 0
      %4491 = vmatprep.mubr.bf16.mxu0 0
      %4492 = vmatmul.mubr.bf16.gmra.mxu0 %v4451
      %v4493 = vpop.f32.mrf.mxu0
      %v4494 = vadd.f32 0.0, %v4493
      %v4495 = vpop.f32.mrf.mxu0
      %v4496 = vadd.f32 0.0, %v4495
      %v4497 = vpop.f32.mrf.mxu0
      %v4498 = vpop.f32.mrf.mxu0
      %4499 = vdwg.mxu0
      %v4500 = vadd.f32 %v4399, %v4494
      %v4501 = vadd.f32 %v4401, %v4496
      %4502 = vmatprep.subr.bf16.mxu0 %v1710
      %4503 = vmatpush1.bf16.msra.mxu0 %v1709
      %4504 = vmatprep.subr.bf16.mxu0 %v1708
      %4505 = vmatpush1.bf16.msra.mxu0 %v1707
      %4506 = vmatprep.subr.bf16.mxu0 %v1706
      %4507 = vmatpush1.bf16.msra.mxu0 %v1705
      %4508 = vmatprep.subr.bf16.mxu0 %v1704
      %4509 = vmatpush1.bf16.msra.mxu0 %v1703
      %4510 = vmatprep.subr.bf16.mxu0 %v1702
      %4511 = vmatpush1.bf16.msra.mxu0 %v1701
      %4512 = vmatprep.subr.bf16.mxu0 %v1700
      %4513 = vmatpush1.bf16.msra.mxu0 %v1699
      %4514 = vmatprep.subr.bf16.mxu0 %v1698
      %4515 = vmatpush1.bf16.msra.mxu0 %v1697
      %4516 = vmatprep.subr.bf16.mxu0 %v1696
      %4517 = vmatpush1.bf16.msra.mxu0 %v1695
      %4518 = vmatprep.subr.bf16.mxu0 %v1726
      %4519 = vmatpush2.bf16.msra.mxu0 %v1725
      %4520 = vmatprep.subr.bf16.mxu0 %v1724
      %4521 = vmatpush2.bf16.msra.mxu0 %v1723
      %4522 = vmatprep.subr.bf16.mxu0 %v1722
      %4523 = vmatpush2.bf16.msra.mxu0 %v1721
      %4524 = vmatprep.subr.bf16.mxu0 %v1720
      %4525 = vmatpush2.bf16.msra.mxu0 %v1719
      %4526 = vmatprep.subr.bf16.mxu0 %v1718
      %4527 = vmatpush2.bf16.msra.mxu0 %v1717
      %4528 = vmatprep.subr.bf16.mxu0 %v1716
      %4529 = vmatpush2.bf16.msra.mxu0 %v1715
      %4530 = vmatprep.subr.bf16.mxu0 %v1714
      %4531 = vmatpush2.bf16.msra.mxu0 %v1713
      %4532 = vmatprep.subr.bf16.mxu0 %v1712
      %4533 = vmatpush2.bf16.msra.mxu0 %v1711
      %4534 = vmatprep.mubr.bf16.mxu0 %v4215
      %4535 = vmatmul.mubr.bf16.gmra.mxu0 %v4214
      %v4536 = vpop.f32.mrf.mxu0
      %v4537 = vadd.f32 0.0, %v4536
      %v4538 = vpop.f32.mrf.mxu0
      %v4539 = vadd.f32 0.0, %v4538
      %v4540 = vpop.f32.mrf.mxu0
      %v4541 = vpop.f32.mrf.mxu0
      %4542 = vdwg.mxu0
      %s4543 = scalar_lea.vmem %s10, 12
      %v4544 = vld [vmem:[%s4543] sm:$0xf]
      %v4545 = vpack.c.bf16 %v4537, %v4537
      %v4546 = vpack.c.bf16 %v4539, %v4539
      %v4548 = vsel %vm3415, %v4544, 0
      %v4551 = vsel %vm3419, %v4545, 0
      %v4554 = vsel %vm3419, %v4546, 0
      %4556 = vmatprep.subr.bf16.mxu0 0
      %4557 = vmatpush1.bf16.msra.mxu0 0
      %4558 = vmatprep.subr.bf16.mxu0 0
      %4559 = vmatpush1.bf16.msra.mxu0 0
      %4560 = vmatprep.subr.bf16.mxu0 0
      %4561 = vmatpush1.bf16.msra.mxu0 0
      %4562 = vmatprep.subr.bf16.mxu0 0
      %4563 = vmatpush1.bf16.msra.mxu0 0
      %4564 = vmatprep.subr.bf16.mxu0 0
      %4565 = vmatpush1.bf16.msra.mxu0 0
      %4566 = vmatprep.subr.bf16.mxu0 0
      %4567 = vmatpush1.bf16.msra.mxu0 0
      %4568 = vmatprep.subr.bf16.mxu0 0
      %4569 = vmatpush1.bf16.msra.mxu0 0
      %4570 = vmatprep.subr.bf16.mxu0 %v4554
      %4571 = vmatpush1.bf16.msra.mxu0 %v4551
      %4572 = vmatprep.subr.bf16.mxu0 0
      %4573 = vmatpush2.bf16.msra.mxu0 0
      %4574 = vmatprep.subr.bf16.mxu0 0
      %4575 = vmatpush2.bf16.msra.mxu0 0
      %4576 = vmatprep.subr.bf16.mxu0 0
      %4577 = vmatpush2.bf16.msra.mxu0 0
      %4578 = vmatprep.subr.bf16.mxu0 0
      %4579 = vmatpush2.bf16.msra.mxu0 0
      %4580 = vmatprep.subr.bf16.mxu0 0
      %4581 = vmatpush2.bf16.msra.mxu0 0
      %4582 = vmatprep.subr.bf16.mxu0 0
      %4583 = vmatpush2.bf16.msra.mxu0 0
      %4584 = vmatprep.subr.bf16.mxu0 0
      %4585 = vmatpush2.bf16.msra.mxu0 0
      %4586 = vmatprep.subr.bf16.mxu0 0
      %4587 = vmatpush2.bf16.msra.mxu0 0
      %4588 = vmatprep.mubr.bf16.mxu0 0
      %4589 = vmatmul.mubr.bf16.gmra.mxu0 %v4548
      %v4590 = vpop.f32.mrf.mxu0
      %v4591 = vadd.f32 0.0, %v4590
      %v4592 = vpop.f32.mrf.mxu0
      %v4593 = vadd.f32 0.0, %v4592
      %v4594 = vpop.f32.mrf.mxu0
      %v4595 = vpop.f32.mrf.mxu0
      %4596 = vdwg.mxu0
      %v4597 = vadd.f32 %v4500, %v4591
      %v4598 = vadd.f32 %v4501, %v4593
      %4599 = vmatprep.subr.bf16.mxu0 %v2000
      %4600 = vmatpush1.bf16.msra.mxu0 %v1999
      %4601 = vmatprep.subr.bf16.mxu0 %v1998
      %4602 = vmatpush1.bf16.msra.mxu0 %v1997
      %4603 = vmatprep.subr.bf16.mxu0 %v1996
      %4604 = vmatpush1.bf16.msra.mxu0 %v1995
      %4605 = vmatprep.subr.bf16.mxu0 %v1994
      %4606 = vmatpush1.bf16.msra.mxu0 %v1993
      %4607 = vmatprep.subr.bf16.mxu0 %v1992
      %4608 = vmatpush1.bf16.msra.mxu0 %v1991
      %4609 = vmatprep.subr.bf16.mxu0 %v1990
      %4610 = vmatpush1.bf16.msra.mxu0 %v1989
      %4611 = vmatprep.subr.bf16.mxu0 %v1988
      %4612 = vmatpush1.bf16.msra.mxu0 %v1987
      %4613 = vmatprep.subr.bf16.mxu0 %v1986
      %4614 = vmatpush1.bf16.msra.mxu0 %v1985
      %4615 = vmatprep.subr.bf16.mxu0 %v2016
      %4616 = vmatpush2.bf16.msra.mxu0 %v2015
      %4617 = vmatprep.subr.bf16.mxu0 %v2014
      %4618 = vmatpush2.bf16.msra.mxu0 %v2013
      %4619 = vmatprep.subr.bf16.mxu0 %v2012
      %4620 = vmatpush2.bf16.msra.mxu0 %v2011
      %4621 = vmatprep.subr.bf16.mxu0 %v2010
      %4622 = vmatpush2.bf16.msra.mxu0 %v2009
      %4623 = vmatprep.subr.bf16.mxu0 %v2008
      %4624 = vmatpush2.bf16.msra.mxu0 %v2007
      %4625 = vmatprep.subr.bf16.mxu0 %v2006
      %4626 = vmatpush2.bf16.msra.mxu0 %v2005
      %4627 = vmatprep.subr.bf16.mxu0 %v2004
      %4628 = vmatpush2.bf16.msra.mxu0 %v2003
      %4629 = vmatprep.subr.bf16.mxu0 %v2002
      %4630 = vmatpush2.bf16.msra.mxu0 %v2001
      %4631 = vmatprep.mubr.bf16.mxu0 %v4215
      %4632 = vmatmul.mubr.bf16.gmra.mxu0 %v4214
      %v4633 = vpop.f32.mrf.mxu0
      %v4634 = vadd.f32 0.0, %v4633
      %v4635 = vpop.f32.mrf.mxu0
      %v4636 = vadd.f32 0.0, %v4635
      %v4637 = vpop.f32.mrf.mxu0
      %v4638 = vpop.f32.mrf.mxu0
      %4639 = vdwg.mxu0
      %s4640 = scalar_lea.vmem %s10, 16
      %v4641 = vld [vmem:[%s4640] sm:$0xf]
      %v4642 = vpack.c.bf16 %v4634, %v4634
      %v4643 = vpack.c.bf16 %v4636, %v4636
      %v4645 = vsel %vm3415, %v4641, 0
      %v4648 = vsel %vm3419, %v4642, 0
      %v4651 = vsel %vm3419, %v4643, 0
      %4653 = vmatprep.subr.bf16.mxu0 0
      %4654 = vmatpush1.bf16.msra.mxu0 0
      %4655 = vmatprep.subr.bf16.mxu0 0
      %4656 = vmatpush1.bf16.msra.mxu0 0
      %4657 = vmatprep.subr.bf16.mxu0 0
      %4658 = vmatpush1.bf16.msra.mxu0 0
      %4659 = vmatprep.subr.bf16.mxu0 0
      %4660 = vmatpush1.bf16.msra.mxu0 0
      %4661 = vmatprep.subr.bf16.mxu0 0
      %4662 = vmatpush1.bf16.msra.mxu0 0
      %4663 = vmatprep.subr.bf16.mxu0 0
      %4664 = vmatpush1.bf16.msra.mxu0 0
      %4665 = vmatprep.subr.bf16.mxu0 0
      %4666 = vmatpush1.bf16.msra.mxu0 0
      %4667 = vmatprep.subr.bf16.mxu0 %v4651
      %4668 = vmatpush1.bf16.msra.mxu0 %v4648
      %4669 = vmatprep.subr.bf16.mxu0 0
      %4670 = vmatpush2.bf16.msra.mxu0 0
      %4671 = vmatprep.subr.bf16.mxu0 0
      %4672 = vmatpush2.bf16.msra.mxu0 0
      %4673 = vmatprep.subr.bf16.mxu0 0
      %4674 = vmatpush2.bf16.msra.mxu0 0
      %4675 = vmatprep.subr.bf16.mxu0 0
      %4676 = vmatpush2.bf16.msra.mxu0 0
      %4677 = vmatprep.subr.bf16.mxu0 0
      %4678 = vmatpush2.bf16.msra.mxu0 0
      %4679 = vmatprep.subr.bf16.mxu0 0
      %4680 = vmatpush2.bf16.msra.mxu0 0
      %4681 = vmatprep.subr.bf16.mxu0 0
      %4682 = vmatpush2.bf16.msra.mxu0 0
      %4683 = vmatprep.subr.bf16.mxu0 0
      %4684 = vmatpush2.bf16.msra.mxu0 0
      %4685 = vmatprep.mubr.bf16.mxu0 0
      %4686 = vmatmul.mubr.bf16.gmra.mxu0 %v4645
      %v4687 = vpop.f32.mrf.mxu0
      %v4688 = vadd.f32 0.0, %v4687
      %v4689 = vpop.f32.mrf.mxu0
      %v4690 = vadd.f32 0.0, %v4689
      %v4691 = vpop.f32.mrf.mxu0
      %v4692 = vpop.f32.mrf.mxu0
      %4693 = vdwg.mxu0
      %v4694 = vadd.f32 %v4597, %v4688
      %v4695 = vadd.f32 %v4598, %v4690
      %4696 = vmatprep.subr.bf16.mxu0 %v2290
      %4697 = vmatpush1.bf16.msra.mxu0 %v2289
      %4698 = vmatprep.subr.bf16.mxu0 %v2288
      %4699 = vmatpush1.bf16.msra.mxu0 %v2287
      %4700 = vmatprep.subr.bf16.mxu0 %v2286
      %4701 = vmatpush1.bf16.msra.mxu0 %v2285
      %4702 = vmatprep.subr.bf16.mxu0 %v2284
      %4703 = vmatpush1.bf16.msra.mxu0 %v2283
      %4704 = vmatprep.subr.bf16.mxu0 %v2282
      %4705 = vmatpush1.bf16.msra.mxu0 %v2281
      %4706 = vmatprep.subr.bf16.mxu0 %v2280
      %4707 = vmatpush1.bf16.msra.mxu0 %v2279
      %4708 = vmatprep.subr.bf16.mxu0 %v2278
      %4709 = vmatpush1.bf16.msra.mxu0 %v2277
      %4710 = vmatprep.subr.bf16.mxu0 %v2276
      %4711 = vmatpush1.bf16.msra.mxu0 %v2275
      %4712 = vmatprep.subr.bf16.mxu0 %v2306
      %4713 = vmatpush2.bf16.msra.mxu0 %v2305
      %4714 = vmatprep.subr.bf16.mxu0 %v2304
      %4715 = vmatpush2.bf16.msra.mxu0 %v2303
      %4716 = vmatprep.subr.bf16.mxu0 %v2302
      %4717 = vmatpush2.bf16.msra.mxu0 %v2301
      %4718 = vmatprep.subr.bf16.mxu0 %v2300
      %4719 = vmatpush2.bf16.msra.mxu0 %v2299
      %4720 = vmatprep.subr.bf16.mxu0 %v2298
      %4721 = vmatpush2.bf16.msra.mxu0 %v2297
      %4722 = vmatprep.subr.bf16.mxu0 %v2296
      %4723 = vmatpush2.bf16.msra.mxu0 %v2295
      %4724 = vmatprep.subr.bf16.mxu0 %v2294
      %4725 = vmatpush2.bf16.msra.mxu0 %v2293
      %4726 = vmatprep.subr.bf16.mxu0 %v2292
      %4727 = vmatpush2.bf16.msra.mxu0 %v2291
      %4728 = vmatprep.mubr.bf16.mxu0 %v4215
      %4729 = vmatmul.mubr.bf16.gmra.mxu0 %v4214
      %v4730 = vpop.f32.mrf.mxu0
      %v4731 = vadd.f32 0.0, %v4730
      %v4732 = vpop.f32.mrf.mxu0
      %v4733 = vadd.f32 0.0, %v4732
      %v4734 = vpop.f32.mrf.mxu0
      %v4735 = vpop.f32.mrf.mxu0
      %4736 = vdwg.mxu0
      %s4737 = scalar_lea.vmem %s10, 20
      %v4738 = vld [vmem:[%s4737] sm:$0xf]
      %v4739 = vpack.c.bf16 %v4731, %v4731
      %v4740 = vpack.c.bf16 %v4733, %v4733
      %v4742 = vsel %vm3415, %v4738, 0
      %v4745 = vsel %vm3419, %v4739, 0
      %v4748 = vsel %vm3419, %v4740, 0
      %4750 = vmatprep.subr.bf16.mxu0 0
      %4751 = vmatpush1.bf16.msra.mxu0 0
      %4752 = vmatprep.subr.bf16.mxu0 0
      %4753 = vmatpush1.bf16.msra.mxu0 0
      %4754 = vmatprep.subr.bf16.mxu0 0
      %4755 = vmatpush1.bf16.msra.mxu0 0
      %4756 = vmatprep.subr.bf16.mxu0 0
      %4757 = vmatpush1.bf16.msra.mxu0 0
      %4758 = vmatprep.subr.bf16.mxu0 0
      %4759 = vmatpush1.bf16.msra.mxu0 0
      %4760 = vmatprep.subr.bf16.mxu0 0
      %4761 = vmatpush1.bf16.msra.mxu0 0
      %4762 = vmatprep.subr.bf16.mxu0 0
      %4763 = vmatpush1.bf16.msra.mxu0 0
      %4764 = vmatprep.subr.bf16.mxu0 %v4748
      %4765 = vmatpush1.bf16.msra.mxu0 %v4745
      %4766 = vmatprep.subr.bf16.mxu0 0
      %4767 = vmatpush2.bf16.msra.mxu0 0
      %4768 = vmatprep.subr.bf16.mxu0 0
      %4769 = vmatpush2.bf16.msra.mxu0 0
      %4770 = vmatprep.subr.bf16.mxu0 0
      %4771 = vmatpush2.bf16.msra.mxu0 0
      %4772 = vmatprep.subr.bf16.mxu0 0
      %4773 = vmatpush2.bf16.msra.mxu0 0
      %4774 = vmatprep.subr.bf16.mxu0 0
      %4775 = vmatpush2.bf16.msra.mxu0 0
      %4776 = vmatprep.subr.bf16.mxu0 0
      %4777 = vmatpush2.bf16.msra.mxu0 0
      %4778 = vmatprep.subr.bf16.mxu0 0
      %4779 = vmatpush2.bf16.msra.mxu0 0
      %4780 = vmatprep.subr.bf16.mxu0 0
      %4781 = vmatpush2.bf16.msra.mxu0 0
      %4782 = vmatprep.mubr.bf16.mxu0 0
      %4783 = vmatmul.mubr.bf16.gmra.mxu0 %v4742
      %v4784 = vpop.f32.mrf.mxu0
      %v4785 = vadd.f32 0.0, %v4784
      %v4786 = vpop.f32.mrf.mxu0
      %v4787 = vadd.f32 0.0, %v4786
      %v4788 = vpop.f32.mrf.mxu0
      %v4789 = vpop.f32.mrf.mxu0
      %4790 = vdwg.mxu0
      %v4791 = vadd.f32 %v4694, %v4785
      %v4792 = vadd.f32 %v4695, %v4787
      %4793 = vmatprep.subr.bf16.mxu0 %v2580
      %4794 = vmatpush1.bf16.msra.mxu0 %v2579
      %4795 = vmatprep.subr.bf16.mxu0 %v2578
      %4796 = vmatpush1.bf16.msra.mxu0 %v2577
      %4797 = vmatprep.subr.bf16.mxu0 %v2576
      %4798 = vmatpush1.bf16.msra.mxu0 %v2575
      %4799 = vmatprep.subr.bf16.mxu0 %v2574
      %4800 = vmatpush1.bf16.msra.mxu0 %v2573
      %4801 = vmatprep.subr.bf16.mxu0 %v2572
      %4802 = vmatpush1.bf16.msra.mxu0 %v2571
      %4803 = vmatprep.subr.bf16.mxu0 %v2570
      %4804 = vmatpush1.bf16.msra.mxu0 %v2569
      %4805 = vmatprep.subr.bf16.mxu0 %v2568
      %4806 = vmatpush1.bf16.msra.mxu0 %v2567
      %4807 = vmatprep.subr.bf16.mxu0 %v2566
      %4808 = vmatpush1.bf16.msra.mxu0 %v2565
      %4809 = vmatprep.subr.bf16.mxu0 %v2596
      %4810 = vmatpush2.bf16.msra.mxu0 %v2595
      %4811 = vmatprep.subr.bf16.mxu0 %v2594
      %4812 = vmatpush2.bf16.msra.mxu0 %v2593
      %4813 = vmatprep.subr.bf16.mxu0 %v2592
      %4814 = vmatpush2.bf16.msra.mxu0 %v2591
      %4815 = vmatprep.subr.bf16.mxu0 %v2590
      %4816 = vmatpush2.bf16.msra.mxu0 %v2589
      %4817 = vmatprep.subr.bf16.mxu0 %v2588
      %4818 = vmatpush2.bf16.msra.mxu0 %v2587
      %4819 = vmatprep.subr.bf16.mxu0 %v2586
      %4820 = vmatpush2.bf16.msra.mxu0 %v2585
      %4821 = vmatprep.subr.bf16.mxu0 %v2584
      %4822 = vmatpush2.bf16.msra.mxu0 %v2583
      %4823 = vmatprep.subr.bf16.mxu0 %v2582
      %4824 = vmatpush2.bf16.msra.mxu0 %v2581
      %4825 = vmatprep.mubr.bf16.mxu0 %v4215
      %4826 = vmatmul.mubr.bf16.gmra.mxu0 %v4214
      %v4827 = vpop.f32.mrf.mxu0
      %v4828 = vadd.f32 0.0, %v4827
      %v4829 = vpop.f32.mrf.mxu0
      %v4830 = vadd.f32 0.0, %v4829
      %v4831 = vpop.f32.mrf.mxu0
      %v4832 = vpop.f32.mrf.mxu0
      %4833 = vdwg.mxu0
      %s4834 = scalar_lea.vmem %s10, 24
      %v4835 = vld [vmem:[%s4834] sm:$0xf]
      %v4836 = vpack.c.bf16 %v4828, %v4828
      %v4837 = vpack.c.bf16 %v4830, %v4830
      %v4839 = vsel %vm3415, %v4835, 0
      %v4842 = vsel %vm3419, %v4836, 0
      %v4845 = vsel %vm3419, %v4837, 0
      %4847 = vmatprep.subr.bf16.mxu0 0
      %4848 = vmatpush1.bf16.msra.mxu0 0
      %4849 = vmatprep.subr.bf16.mxu0 0
      %4850 = vmatpush1.bf16.msra.mxu0 0
      %4851 = vmatprep.subr.bf16.mxu0 0
      %4852 = vmatpush1.bf16.msra.mxu0 0
      %4853 = vmatprep.subr.bf16.mxu0 0
      %4854 = vmatpush1.bf16.msra.mxu0 0
      %4855 = vmatprep.subr.bf16.mxu0 0
      %4856 = vmatpush1.bf16.msra.mxu0 0
      %4857 = vmatprep.subr.bf16.mxu0 0
      %4858 = vmatpush1.bf16.msra.mxu0 0
      %4859 = vmatprep.subr.bf16.mxu0 0
      %4860 = vmatpush1.bf16.msra.mxu0 0
      %4861 = vmatprep.subr.bf16.mxu0 %v4845
      %4862 = vmatpush1.bf16.msra.mxu0 %v4842
      %4863 = vmatprep.subr.bf16.mxu0 0
      %4864 = vmatpush2.bf16.msra.mxu0 0
      %4865 = vmatprep.subr.bf16.mxu0 0
      %4866 = vmatpush2.bf16.msra.mxu0 0
      %4867 = vmatprep.subr.bf16.mxu0 0
      %4868 = vmatpush2.bf16.msra.mxu0 0
      %4869 = vmatprep.subr.bf16.mxu0 0
      %4870 = vmatpush2.bf16.msra.mxu0 0
      %4871 = vmatprep.subr.bf16.mxu0 0
      %4872 = vmatpush2.bf16.msra.mxu0 0
      %4873 = vmatprep.subr.bf16.mxu0 0
      %4874 = vmatpush2.bf16.msra.mxu0 0
      %4875 = vmatprep.subr.bf16.mxu0 0
      %4876 = vmatpush2.bf16.msra.mxu0 0
      %4877 = vmatprep.subr.bf16.mxu0 0
      %4878 = vmatpush2.bf16.msra.mxu0 0
      %4879 = vmatprep.mubr.bf16.mxu0 0
      %4880 = vmatmul.mubr.bf16.gmra.mxu0 %v4839
      %v4881 = vpop.f32.mrf.mxu0
      %v4882 = vadd.f32 0.0, %v4881
      %v4883 = vpop.f32.mrf.mxu0
      %v4884 = vadd.f32 0.0, %v4883
      %v4885 = vpop.f32.mrf.mxu0
      %v4886 = vpop.f32.mrf.mxu0
      %4887 = vdwg.mxu0
      %v4888 = vadd.f32 %v4791, %v4882
      %v4889 = vadd.f32 %v4792, %v4884
      %4890 = vmatprep.subr.bf16.mxu0 %v2870
      %4891 = vmatpush1.bf16.msra.mxu0 %v2869
      %4892 = vmatprep.subr.bf16.mxu0 %v2868
      %4893 = vmatpush1.bf16.msra.mxu0 %v2867
      %4894 = vmatprep.subr.bf16.mxu0 %v2866
      %4895 = vmatpush1.bf16.msra.mxu0 %v2865
      %4896 = vmatprep.subr.bf16.mxu0 %v2864
      %4897 = vmatpush1.bf16.msra.mxu0 %v2863
      %4898 = vmatprep.subr.bf16.mxu0 %v2862
      %4899 = vmatpush1.bf16.msra.mxu0 %v2861
      %4900 = vmatprep.subr.bf16.mxu0 %v2860
      %4901 = vmatpush1.bf16.msra.mxu0 %v2859
      %4902 = vmatprep.subr.bf16.mxu0 %v2858
      %4903 = vmatpush1.bf16.msra.mxu0 %v2857
      %4904 = vmatprep.subr.bf16.mxu0 %v2856
      %4905 = vmatpush1.bf16.msra.mxu0 %v2855
      %4906 = vmatprep.subr.bf16.mxu0 %v2886
      %4907 = vmatpush2.bf16.msra.mxu0 %v2885
      %4908 = vmatprep.subr.bf16.mxu0 %v2884
      %4909 = vmatpush2.bf16.msra.mxu0 %v2883
      %4910 = vmatprep.subr.bf16.mxu0 %v2882
      %4911 = vmatpush2.bf16.msra.mxu0 %v2881
      %4912 = vmatprep.subr.bf16.mxu0 %v2880
      %4913 = vmatpush2.bf16.msra.mxu0 %v2879
      %4914 = vmatprep.subr.bf16.mxu0 %v2878
      %4915 = vmatpush2.bf16.msra.mxu0 %v2877
      %4916 = vmatprep.subr.bf16.mxu0 %v2876
      %4917 = vmatpush2.bf16.msra.mxu0 %v2875
      %4918 = vmatprep.subr.bf16.mxu0 %v2874
      %4919 = vmatpush2.bf16.msra.mxu0 %v2873
      %4920 = vmatprep.subr.bf16.mxu0 %v2872
      %4921 = vmatpush2.bf16.msra.mxu0 %v2871
      %4922 = vmatprep.mubr.bf16.mxu0 %v4215
      %4923 = vmatmul.mubr.bf16.gmra.mxu0 %v4214
      %v4924 = vpop.f32.mrf.mxu0
      %v4925 = vadd.f32 0.0, %v4924
      %v4926 = vpop.f32.mrf.mxu0
      %v4927 = vadd.f32 0.0, %v4926
      %v4928 = vpop.f32.mrf.mxu0
      %v4929 = vpop.f32.mrf.mxu0
      %4930 = vdwg.mxu0
      %s4931 = scalar_lea.vmem %s10, 28
      %v4932 = vld [vmem:[%s4931] sm:$0xf]
      %v4933 = vpack.c.bf16 %v4925, %v4925
      %v4934 = vpack.c.bf16 %v4927, %v4927
      %v4936 = vsel %vm3415, %v4932, 0
      %v4939 = vsel %vm3419, %v4933, 0
      %v4942 = vsel %vm3419, %v4934, 0
      %4944 = vmatprep.subr.bf16.mxu0 0
      %4945 = vmatpush1.bf16.msra.mxu0 0
      %4946 = vmatprep.subr.bf16.mxu0 0
      %4947 = vmatpush1.bf16.msra.mxu0 0
      %4948 = vmatprep.subr.bf16.mxu0 0
      %4949 = vmatpush1.bf16.msra.mxu0 0
      %4950 = vmatprep.subr.bf16.mxu0 0
      %4951 = vmatpush1.bf16.msra.mxu0 0
      %4952 = vmatprep.subr.bf16.mxu0 0
      %4953 = vmatpush1.bf16.msra.mxu0 0
      %4954 = vmatprep.subr.bf16.mxu0 0
      %4955 = vmatpush1.bf16.msra.mxu0 0
      %4956 = vmatprep.subr.bf16.mxu0 0
      %4957 = vmatpush1.bf16.msra.mxu0 0
      %4958 = vmatprep.subr.bf16.mxu0 %v4942
      %4959 = vmatpush1.bf16.msra.mxu0 %v4939
      %4960 = vmatprep.subr.bf16.mxu0 0
      %4961 = vmatpush2.bf16.msra.mxu0 0
      %4962 = vmatprep.subr.bf16.mxu0 0
      %4963 = vmatpush2.bf16.msra.mxu0 0
      %4964 = vmatprep.subr.bf16.mxu0 0
      %4965 = vmatpush2.bf16.msra.mxu0 0
      %4966 = vmatprep.subr.bf16.mxu0 0
      %4967 = vmatpush2.bf16.msra.mxu0 0
      %4968 = vmatprep.subr.bf16.mxu0 0
      %4969 = vmatpush2.bf16.msra.mxu0 0
      %4970 = vmatprep.subr.bf16.mxu0 0
      %4971 = vmatpush2.bf16.msra.mxu0 0
      %4972 = vmatprep.subr.bf16.mxu0 0
      %4973 = vmatpush2.bf16.msra.mxu0 0
      %4974 = vmatprep.subr.bf16.mxu0 0
      %4975 = vmatpush2.bf16.msra.mxu0 0
      %4976 = vmatprep.mubr.bf16.mxu0 0
      %4977 = vmatmul.mubr.bf16.gmra.mxu0 %v4936
      %v4978 = vpop.f32.mrf.mxu0
      %v4979 = vadd.f32 0.0, %v4978
      %v4980 = vpop.f32.mrf.mxu0
      %v4981 = vadd.f32 0.0, %v4980
      %v4982 = vpop.f32.mrf.mxu0
      %v4983 = vpop.f32.mrf.mxu0
      %4984 = vdwg.mxu0
      %v4985 = vadd.f32 %v4888, %v4979
      %v4986 = vadd.f32 %v4889, %v4981
      %4987 = vmatprep.subr.bf16.mxu0 %v3160
      %4988 = vmatpush1.bf16.msra.mxu0 %v3159
      %4989 = vmatprep.subr.bf16.mxu0 %v3158
      %4990 = vmatpush1.bf16.msra.mxu0 %v3157
      %4991 = vmatprep.subr.bf16.mxu0 %v3156
      %4992 = vmatpush1.bf16.msra.mxu0 %v3155
      %4993 = vmatprep.subr.bf16.mxu0 %v3154
      %4994 = vmatpush1.bf16.msra.mxu0 %v3153
      %4995 = vmatprep.subr.bf16.mxu0 %v3152
      %4996 = vmatpush1.bf16.msra.mxu0 %v3151
      %4997 = vmatprep.subr.bf16.mxu0 %v3150
      %4998 = vmatpush1.bf16.msra.mxu0 %v3149
      %4999 = vmatprep.subr.bf16.mxu0 %v3148
      %5000 = vmatpush1.bf16.msra.mxu0 %v3147
      %5001 = vmatprep.subr.bf16.mxu0 %v3146
      %5002 = vmatpush1.bf16.msra.mxu0 %v3145
      %5003 = vmatprep.subr.bf16.mxu0 %v3176
      %5004 = vmatpush2.bf16.msra.mxu0 %v3175
      %5005 = vmatprep.subr.bf16.mxu0 %v3174
      %5006 = vmatpush2.bf16.msra.mxu0 %v3173
      %5007 = vmatprep.subr.bf16.mxu0 %v3172
      %5008 = vmatpush2.bf16.msra.mxu0 %v3171
      %5009 = vmatprep.subr.bf16.mxu0 %v3170
      %5010 = vmatpush2.bf16.msra.mxu0 %v3169
      %5011 = vmatprep.subr.bf16.mxu0 %v3168
      %5012 = vmatpush2.bf16.msra.mxu0 %v3167
      %5013 = vmatprep.subr.bf16.mxu0 %v3166
      %5014 = vmatpush2.bf16.msra.mxu0 %v3165
      %5015 = vmatprep.subr.bf16.mxu0 %v3164
      %5016 = vmatpush2.bf16.msra.mxu0 %v3163
      %5017 = vmatprep.subr.bf16.mxu0 %v3162
      %5018 = vmatpush2.bf16.msra.mxu0 %v3161
      %5019 = vmatprep.mubr.bf16.mxu0 %v4215
      %5020 = vmatmul.mubr.bf16.gmra.mxu0 %v4214
      %v5021 = vpop.f32.mrf.mxu0
      %v5022 = vadd.f32 0.0, %v5021
      %v5023 = vpop.f32.mrf.mxu0
      %v5024 = vadd.f32 0.0, %v5023
      %v5025 = vpop.f32.mrf.mxu0
      %v5026 = vpop.f32.mrf.mxu0
      %5027 = vdwg.mxu0
      %s5028 = scalar_lea.vmem %s10, 32
      %v5029 = vld [vmem:[%s5028] sm:$0xf]
      %v5030 = vpack.c.bf16 %v5022, %v5022
      %v5031 = vpack.c.bf16 %v5024, %v5024
      %v5033 = vsel %vm3415, %v5029, 0
      %v5036 = vsel %vm3419, %v5030, 0
      %v5039 = vsel %vm3419, %v5031, 0
      %5041 = vmatprep.subr.bf16.mxu0 0
      %5042 = vmatpush1.bf16.msra.mxu0 0
      %5043 = vmatprep.subr.bf16.mxu0 0
      %5044 = vmatpush1.bf16.msra.mxu0 0
      %5045 = vmatprep.subr.bf16.mxu0 0
      %5046 = vmatpush1.bf16.msra.mxu0 0
      %5047 = vmatprep.subr.bf16.mxu0 0
      %5048 = vmatpush1.bf16.msra.mxu0 0
      %5049 = vmatprep.subr.bf16.mxu0 0
      %5050 = vmatpush1.bf16.msra.mxu0 0
      %5051 = vmatprep.subr.bf16.mxu0 0
      %5052 = vmatpush1.bf16.msra.mxu0 0
      %5053 = vmatprep.subr.bf16.mxu0 0
      %5054 = vmatpush1.bf16.msra.mxu0 0
      %5055 = vmatprep.subr.bf16.mxu0 %v5039
      %5056 = vmatpush1.bf16.msra.mxu0 %v5036
      %5057 = vmatprep.subr.bf16.mxu0 0
      %5058 = vmatpush2.bf16.msra.mxu0 0
      %5059 = vmatprep.subr.bf16.mxu0 0
      %5060 = vmatpush2.bf16.msra.mxu0 0
      %5061 = vmatprep.subr.bf16.mxu0 0
      %5062 = vmatpush2.bf16.msra.mxu0 0
      %5063 = vmatprep.subr.bf16.mxu0 0
      %5064 = vmatpush2.bf16.msra.mxu0 0
      %5065 = vmatprep.subr.bf16.mxu0 0
      %5066 = vmatpush2.bf16.msra.mxu0 0
      %5067 = vmatprep.subr.bf16.mxu0 0
      %5068 = vmatpush2.bf16.msra.mxu0 0
      %5069 = vmatprep.subr.bf16.mxu0 0
      %5070 = vmatpush2.bf16.msra.mxu0 0
      %5071 = vmatprep.subr.bf16.mxu0 0
      %5072 = vmatpush2.bf16.msra.mxu0 0
      %5073 = vmatprep.mubr.bf16.mxu0 0
      %5074 = vmatmul.mubr.bf16.gmra.mxu0 %v5033
      %v5075 = vpop.f32.mrf.mxu0
      %v5076 = vadd.f32 0.0, %v5075
      %v5077 = vpop.f32.mrf.mxu0
      %v5078 = vadd.f32 0.0, %v5077
      %v5079 = vpop.f32.mrf.mxu0
      %v5080 = vpop.f32.mrf.mxu0
      %5081 = vdwg.mxu0
      %v5082 = vadd.f32 %v4985, %v5076
      %v5083 = vadd.f32 %v4986, %v5078
      %v5084 = vld [vmem:[%s11] sm:$0xff]
      %5086 = vset.pattern.permute.xlu0 0
      %5087 = vperm.xlu0 %5086, %v5084
      %v5088 = vpop.permute.xlu0 %5087
      %v5090 = vmul.f32 %v5082, %v5088
      %v5091 = vmul.f32 %v5083, %v5088
      %v5092 = vld [vmem:[%s12] sm:$0xff]
      %5094 = vset.pattern.permute.xlu0 0
      %5095 = vperm.xlu0 %5094, %v5092
      %v5096 = vpop.permute.xlu0 %5095
      %v5098 = vadd.f32 %v5090, %v5096
      %v5099 = vadd.f32 %v5091, %v5096
      %v5100 = vadd.f32 %v5098, %v3322
      %v5101 = vadd.f32 %v5099, %v3323
      %v5102 = vmax.f32 %v5100, 0.0
      %v5103 = vmax.f32 %v5101, 0.0
      %v5104 = vpack.c.bf16 %v5102, %v5102
      %v5105 = vpack.c.bf16 %v5103, %v5103
      %v5106 = vld [vmem:[%s2] sm:$0xf]
      %v5107 = vld [vmem:[%s2 + $0x4] sm:$0xf]
      %v5108 = vld [vmem:[%s2 + $0x8] sm:$0xf]
      %v5109 = vld [vmem:[%s2 + $0xc] sm:$0xf]
      %v5110 = vld [vmem:[%s2 + $0x10] sm:$0xf]
      %v5111 = vld [vmem:[%s2 + $0x14] sm:$0xf]
      %v5112 = vld [vmem:[%s2 + $0x18] sm:$0xf]
      %v5113 = vld [vmem:[%s2 + $0x1c] sm:$0xf]
      %v5114 = vld [vmem:[%s2 + $0x20] sm:$0xf]
      %v5115 = vld [vmem:[%s2 + $0x24] sm:$0xf]
      %v5116 = vld [vmem:[%s2 + $0x28] sm:$0xf]
      %v5117 = vld [vmem:[%s2 + $0x2c] sm:$0xf]
      %v5118 = vld [vmem:[%s2 + $0x30] sm:$0xf]
      %v5119 = vld [vmem:[%s2 + $0x34] sm:$0xf]
      %v5120 = vld [vmem:[%s2 + $0x38] sm:$0xf]
      %v5121 = vld [vmem:[%s2 + $0x3c] sm:$0xf]
      %v5122 = vld [vmem:[%s2 + $0x40] sm:$0xf]
      %v5123 = vld [vmem:[%s2 + $0x44] sm:$0xf]
      %v5124 = vld [vmem:[%s2 + $0x48] sm:$0xf]
      %v5125 = vld [vmem:[%s2 + $0x4c] sm:$0xf]
      %v5126 = vld [vmem:[%s2 + $0x50] sm:$0xf]
      %v5127 = vld [vmem:[%s2 + $0x54] sm:$0xf]
      %v5128 = vld [vmem:[%s2 + $0x58] sm:$0xf]
      %v5129 = vld [vmem:[%s2 + $0x5c] sm:$0xf]
      %v5130 = vld [vmem:[%s2 + $0x60] sm:$0xf]
      %v5131 = vld [vmem:[%s2 + $0x64] sm:$0xf]
      %v5132 = vld [vmem:[%s2 + $0x68] sm:$0xf]
      %v5133 = vld [vmem:[%s2 + $0x6c] sm:$0xf]
      %v5134 = vld [vmem:[%s2 + $0x70] sm:$0xf]
      %v5135 = vld [vmem:[%s2 + $0x74] sm:$0xf]
      %v5136 = vld [vmem:[%s2 + $0x78] sm:$0xf]
      %v5137 = vld [vmem:[%s2 + $0x7c] sm:$0xf]
      %v5170 = vunpack.c.l.b16 %v5106
      %v5171 = vunpack.c.l.b16 %v5107
      %v5172 = vunpack.c.l.b16 %v5108
      %v5173 = vunpack.c.l.b16 %v5109
      %v5174 = vunpack.c.l.b16 %v5110
      %v5175 = vunpack.c.l.b16 %v5111
      %v5176 = vunpack.c.l.b16 %v5112
      %v5177 = vunpack.c.l.b16 %v5113
      %v5178 = vunpack.c.l.b16 %v5114
      %v5179 = vunpack.c.l.b16 %v5115
      %v5180 = vunpack.c.l.b16 %v5116
      %v5181 = vunpack.c.l.b16 %v5117
      %v5182 = vunpack.c.l.b16 %v5118
      %v5183 = vunpack.c.l.b16 %v5119
      %v5184 = vunpack.c.l.b16 %v5120
      %v5185 = vunpack.c.l.b16 %v5121
      %v5186 = vunpack.c.l.b16 %v5122
      %v5187 = vunpack.c.l.b16 %v5123
      %v5188 = vunpack.c.l.b16 %v5124
      %v5189 = vunpack.c.l.b16 %v5125
      %v5190 = vunpack.c.l.b16 %v5126
      %v5191 = vunpack.c.l.b16 %v5127
      %v5192 = vunpack.c.l.b16 %v5128
      %v5193 = vunpack.c.l.b16 %v5129
      %v5194 = vunpack.c.l.b16 %v5130
      %v5195 = vunpack.c.l.b16 %v5131
      %v5196 = vunpack.c.l.b16 %v5132
      %v5197 = vunpack.c.l.b16 %v5133
      %v5198 = vunpack.c.l.b16 %v5134
      %v5199 = vunpack.c.l.b16 %v5135
      %v5200 = vunpack.c.l.b16 %v5136
      %v5201 = vunpack.c.l.b16 %v5137
      %v5202 = vpack.c.b16 %v5171, %v5170
      %v5203 = vpack.c.b16 %v5173, %v5172
      %v5204 = vpack.c.b16 %v5175, %v5174
      %v5205 = vpack.c.b16 %v5177, %v5176
      %v5206 = vpack.c.b16 %v5179, %v5178
      %v5207 = vpack.c.b16 %v5181, %v5180
      %v5208 = vpack.c.b16 %v5183, %v5182
      %v5209 = vpack.c.b16 %v5185, %v5184
      %v5210 = vpack.c.b16 %v5187, %v5186
      %v5211 = vpack.c.b16 %v5189, %v5188
      %v5212 = vpack.c.b16 %v5191, %v5190
      %v5213 = vpack.c.b16 %v5193, %v5192
      %v5214 = vpack.c.b16 %v5195, %v5194
      %v5215 = vpack.c.b16 %v5197, %v5196
      %v5216 = vpack.c.b16 %v5199, %v5198
      %v5217 = vpack.c.b16 %v5201, %v5200
      %5234 = vmatprep.subr.bf16.mxu0 0
      %5235 = vmatpush1.bf16.msra.mxu0 %v5209
      %5236 = vmatprep.subr.bf16.mxu0 0
      %5237 = vmatpush1.bf16.msra.mxu0 %v5208
      %5238 = vmatprep.subr.bf16.mxu0 0
      %5239 = vmatpush1.bf16.msra.mxu0 %v5207
      %5240 = vmatprep.subr.bf16.mxu0 0
      %5241 = vmatpush1.bf16.msra.mxu0 %v5206
      %5242 = vmatprep.subr.bf16.mxu0 0
      %5243 = vmatpush1.bf16.msra.mxu0 %v5205
      %5244 = vmatprep.subr.bf16.mxu0 0
      %5245 = vmatpush1.bf16.msra.mxu0 %v5204
      %5246 = vmatprep.subr.bf16.mxu0 0
      %5247 = vmatpush1.bf16.msra.mxu0 %v5203
      %5248 = vmatprep.subr.bf16.mxu0 0
      %5249 = vmatpush1.bf16.msra.mxu0 %v5202
      %5250 = vmatprep.subr.bf16.mxu0 0
      %5251 = vmatpush2.bf16.msra.mxu0 %v5217
      %5252 = vmatprep.subr.bf16.mxu0 0
      %5253 = vmatpush2.bf16.msra.mxu0 %v5216
      %5254 = vmatprep.subr.bf16.mxu0 0
      %5255 = vmatpush2.bf16.msra.mxu0 %v5215
      %5256 = vmatprep.subr.bf16.mxu0 0
      %5257 = vmatpush2.bf16.msra.mxu0 %v5214
      %5258 = vmatprep.subr.bf16.mxu0 0
      %5259 = vmatpush2.bf16.msra.mxu0 %v5213
      %5260 = vmatprep.subr.bf16.mxu0 0
      %5261 = vmatpush2.bf16.msra.mxu0 %v5212
      %5262 = vmatprep.subr.bf16.mxu0 0
      %5263 = vmatpush2.bf16.msra.mxu0 %v5211
      %5264 = vmatprep.subr.bf16.mxu0 0
      %5265 = vmatpush2.bf16.msra.mxu0 %v5210
      %5266 = vmatprep.mubr.bf16.mxu0 %v5105
      %5267 = vmatmul.mubr.bf16.gmra.mxu0 %v5104
      %v5268 = vpop.f32.mrf.mxu0
      %v5269 = vadd.f32 0.0, %v5268
      %v5270 = vpop.f32.mrf.mxu0
      %v5271 = vpop.f32.mrf.mxu0
      %v5272 = vpop.f32.mrf.mxu0
      %5273 = vdwg.mxu0
      %v5274 = vld [vmem:[%s13] sm:$0xf]
      %v5275 = vld [vmem:[%s13 + $0x4] sm:$0xf]
      %v5276 = vpack.c.bf16 %v5269, %v5269
      %s5277 = scalar_lea.vmem %s2, 128
      %v5278 = vld [vmem:[%s5277] sm:$0xf]
      %v5279 = vld [vmem:[%s5277 + $0x4] sm:$0xf]
      %v5280 = vld [vmem:[%s5277 + $0x8] sm:$0xf]
      %v5281 = vld [vmem:[%s5277 + $0xc] sm:$0xf]
      %v5282 = vld [vmem:[%s5277 + $0x10] sm:$0xf]
      %v5283 = vld [vmem:[%s5277 + $0x14] sm:$0xf]
      %v5284 = vld [vmem:[%s5277 + $0x18] sm:$0xf]
      %v5285 = vld [vmem:[%s5277 + $0x1c] sm:$0xf]
      %v5286 = vld [vmem:[%s5277 + $0x20] sm:$0xf]
      %v5287 = vld [vmem:[%s5277 + $0x24] sm:$0xf]
      %v5288 = vld [vmem:[%s5277 + $0x28] sm:$0xf]
      %v5289 = vld [vmem:[%s5277 + $0x2c] sm:$0xf]
      %v5290 = vld [vmem:[%s5277 + $0x30] sm:$0xf]
      %v5291 = vld [vmem:[%s5277 + $0x34] sm:$0xf]
      %v5292 = vld [vmem:[%s5277 + $0x38] sm:$0xf]
      %v5293 = vld [vmem:[%s5277 + $0x3c] sm:$0xf]
      %v5294 = vld [vmem:[%s5277 + $0x40] sm:$0xf]
      %v5295 = vld [vmem:[%s5277 + $0x44] sm:$0xf]
      %v5296 = vld [vmem:[%s5277 + $0x48] sm:$0xf]
      %v5297 = vld [vmem:[%s5277 + $0x4c] sm:$0xf]
      %v5298 = vld [vmem:[%s5277 + $0x50] sm:$0xf]
      %v5299 = vld [vmem:[%s5277 + $0x54] sm:$0xf]
      %v5300 = vld [vmem:[%s5277 + $0x58] sm:$0xf]
      %v5301 = vld [vmem:[%s5277 + $0x5c] sm:$0xf]
      %v5302 = vld [vmem:[%s5277 + $0x60] sm:$0xf]
      %v5303 = vld [vmem:[%s5277 + $0x64] sm:$0xf]
      %v5304 = vld [vmem:[%s5277 + $0x68] sm:$0xf]
      %v5305 = vld [vmem:[%s5277 + $0x6c] sm:$0xf]
      %v5306 = vld [vmem:[%s5277 + $0x70] sm:$0xf]
      %v5307 = vld [vmem:[%s5277 + $0x74] sm:$0xf]
      %v5308 = vld [vmem:[%s5277 + $0x78] sm:$0xf]
      %v5309 = vld [vmem:[%s5277 + $0x7c] sm:$0xf]
      %v5342 = vunpack.c.l.b16 %v5278
      %v5343 = vunpack.c.l.b16 %v5279
      %v5344 = vunpack.c.l.b16 %v5280
      %v5345 = vunpack.c.l.b16 %v5281
      %v5346 = vunpack.c.l.b16 %v5282
      %v5347 = vunpack.c.l.b16 %v5283
      %v5348 = vunpack.c.l.b16 %v5284
      %v5349 = vunpack.c.l.b16 %v5285
      %v5350 = vunpack.c.l.b16 %v5286
      %v5351 = vunpack.c.l.b16 %v5287
      %v5352 = vunpack.c.l.b16 %v5288
      %v5353 = vunpack.c.l.b16 %v5289
      %v5354 = vunpack.c.l.b16 %v5290
      %v5355 = vunpack.c.l.b16 %v5291
      %v5356 = vunpack.c.l.b16 %v5292
      %v5357 = vunpack.c.l.b16 %v5293
      %v5358 = vunpack.c.l.b16 %v5294
      %v5359 = vunpack.c.l.b16 %v5295
      %v5360 = vunpack.c.l.b16 %v5296
      %v5361 = vunpack.c.l.b16 %v5297
      %v5362 = vunpack.c.l.b16 %v5298
      %v5363 = vunpack.c.l.b16 %v5299
      %v5364 = vunpack.c.l.b16 %v5300
      %v5365 = vunpack.c.l.b16 %v5301
      %v5366 = vunpack.c.l.b16 %v5302
      %v5367 = vunpack.c.l.b16 %v5303
      %v5368 = vunpack.c.l.b16 %v5304
      %v5369 = vunpack.c.l.b16 %v5305
      %v5370 = vunpack.c.l.b16 %v5306
      %v5371 = vunpack.c.l.b16 %v5307
      %v5372 = vunpack.c.l.b16 %v5308
      %v5373 = vunpack.c.l.b16 %v5309
      %v5374 = vpack.c.b16 %v5343, %v5342
      %v5375 = vpack.c.b16 %v5345, %v5344
      %v5376 = vpack.c.b16 %v5347, %v5346
      %v5377 = vpack.c.b16 %v5349, %v5348
      %v5378 = vpack.c.b16 %v5351, %v5350
      %v5379 = vpack.c.b16 %v5353, %v5352
      %v5380 = vpack.c.b16 %v5355, %v5354
      %v5381 = vpack.c.b16 %v5357, %v5356
      %v5382 = vpack.c.b16 %v5359, %v5358
      %v5383 = vpack.c.b16 %v5361, %v5360
      %v5384 = vpack.c.b16 %v5363, %v5362
      %v5385 = vpack.c.b16 %v5365, %v5364
      %v5386 = vpack.c.b16 %v5367, %v5366
      %v5387 = vpack.c.b16 %v5369, %v5368
      %v5388 = vpack.c.b16 %v5371, %v5370
      %v5389 = vpack.c.b16 %v5373, %v5372
      %5406 = vmatprep.subr.bf16.mxu0 0
      %5407 = vmatpush1.bf16.msra.mxu0 %v5381
      %5408 = vmatprep.subr.bf16.mxu0 0
      %5409 = vmatpush1.bf16.msra.mxu0 %v5380
      %5410 = vmatprep.subr.bf16.mxu0 0
      %5411 = vmatpush1.bf16.msra.mxu0 %v5379
      %5412 = vmatprep.subr.bf16.mxu0 0
      %5413 = vmatpush1.bf16.msra.mxu0 %v5378
      %5414 = vmatprep.subr.bf16.mxu0 0
      %5415 = vmatpush1.bf16.msra.mxu0 %v5377
      %5416 = vmatprep.subr.bf16.mxu0 0
      %5417 = vmatpush1.bf16.msra.mxu0 %v5376
      %5418 = vmatprep.subr.bf16.mxu0 0
      %5419 = vmatpush1.bf16.msra.mxu0 %v5375
      %5420 = vmatprep.subr.bf16.mxu0 0
      %5421 = vmatpush1.bf16.msra.mxu0 %v5374
      %5422 = vmatprep.subr.bf16.mxu0 0
      %5423 = vmatpush2.bf16.msra.mxu0 %v5389
      %5424 = vmatprep.subr.bf16.mxu0 0
      %5425 = vmatpush2.bf16.msra.mxu0 %v5388
      %5426 = vmatprep.subr.bf16.mxu0 0
      %5427 = vmatpush2.bf16.msra.mxu0 %v5387
      %5428 = vmatprep.subr.bf16.mxu0 0
      %5429 = vmatpush2.bf16.msra.mxu0 %v5386
      %5430 = vmatprep.subr.bf16.mxu0 0
      %5431 = vmatpush2.bf16.msra.mxu0 %v5385
      %5432 = vmatprep.subr.bf16.mxu0 0
      %5433 = vmatpush2.bf16.msra.mxu0 %v5384
      %5434 = vmatprep.subr.bf16.mxu0 0
      %5435 = vmatpush2.bf16.msra.mxu0 %v5383
      %5436 = vmatprep.subr.bf16.mxu0 0
      %5437 = vmatpush2.bf16.msra.mxu0 %v5382
      %5438 = vmatprep.mubr.bf16.mxu0 %v5105
      %5439 = vmatmul.mubr.bf16.gmra.mxu0 %v5104
      %v5440 = vpop.f32.mrf.mxu0
      %v5441 = vadd.f32 0.0, %v5440
      %v5442 = vpop.f32.mrf.mxu0
      %v5443 = vpop.f32.mrf.mxu0
      %v5444 = vpop.f32.mrf.mxu0
      %5445 = vdwg.mxu0
      %s5446 = scalar_lea.vmem %s13, 8
      %v5447 = vld [vmem:[%s5446] sm:$0xf]
      %v5448 = vld [vmem:[%s5446 + $0x4] sm:$0xf]
      %v5449 = vpack.c.bf16 %v5441, %v5441
      %v5452 = vunpack.c.l.b16 %v5447
      %v5453 = vunpack.c.l.b16 %v5448
      %v5454 = vpack.c.b16 %v5453, %v5452
      %v5456 = vsel %vm3415, %v5454, 0
      %v5459 = vsel %vm3419, %v5449, 0
      %5461 = vmatprep.subr.bf16.mxu0 0
      %5462 = vmatpush1.bf16.msra.mxu0 0
      %5463 = vmatprep.subr.bf16.mxu0 0
      %5464 = vmatpush1.bf16.msra.mxu0 0
      %5465 = vmatprep.subr.bf16.mxu0 0
      %5466 = vmatpush1.bf16.msra.mxu0 0
      %5467 = vmatprep.subr.bf16.mxu0 0
      %5468 = vmatpush1.bf16.msra.mxu0 0
      %5469 = vmatprep.subr.bf16.mxu0 0
      %5470 = vmatpush1.bf16.msra.mxu0 0
      %5471 = vmatprep.subr.bf16.mxu0 0
      %5472 = vmatpush1.bf16.msra.mxu0 0
      %5473 = vmatprep.subr.bf16.mxu0 0
      %5474 = vmatpush1.bf16.msra.mxu0 0
      %5475 = vmatprep.subr.bf16.mxu0 0
      %5476 = vmatpush1.bf16.msra.mxu0 %v5459
      %5477 = vmatprep.subr.bf16.mxu0 0
      %5478 = vmatpush2.bf16.msra.mxu0 0
      %5479 = vmatprep.subr.bf16.mxu0 0
      %5480 = vmatpush2.bf16.msra.mxu0 0
      %5481 = vmatprep.subr.bf16.mxu0 0
      %5482 = vmatpush2.bf16.msra.mxu0 0
      %5483 = vmatprep.subr.bf16.mxu0 0
      %5484 = vmatpush2.bf16.msra.mxu0 0
      %5485 = vmatprep.subr.bf16.mxu0 0
      %5486 = vmatpush2.bf16.msra.mxu0 0
      %5487 = vmatprep.subr.bf16.mxu0 0
      %5488 = vmatpush2.bf16.msra.mxu0 0
      %5489 = vmatprep.subr.bf16.mxu0 0
      %5490 = vmatpush2.bf16.msra.mxu0 0
      %5491 = vmatprep.subr.bf16.mxu0 0
      %5492 = vmatpush2.bf16.msra.mxu0 0
      %5493 = vmatprep.mubr.bf16.mxu0 0
      %5494 = vmatmul.mubr.bf16.gmra.mxu0 %v5456
      %v5495 = vpop.f32.mrf.mxu0
      %v5496 = vadd.f32 0.0, %v5495
      %v5497 = vpop.f32.mrf.mxu0
      %v5498 = vpop.f32.mrf.mxu0
      %v5499 = vadd.f32 0.0, %v5498
      %v5500 = vpop.f32.mrf.mxu0
      %5501 = vdwg.mxu0
      %v5504 = vunpack.c.l.b16 %v5274
      %v5505 = vunpack.c.l.b16 %v5275
      %v5506 = vpack.c.b16 %v5505, %v5504
      %v5508 = vsel %vm3415, %v5506, 0
      %v5511 = vsel %vm3419, %v5276, 0
      %5513 = vmatprep.subr.bf16.mxu0 0
      %5514 = vmatpush1.bf16.msra.mxu0 0
      %5515 = vmatprep.subr.bf16.mxu0 0
      %5516 = vmatpush1.bf16.msra.mxu0 0
      %5517 = vmatprep.subr.bf16.mxu0 0
      %5518 = vmatpush1.bf16.msra.mxu0 0
      %5519 = vmatprep.subr.bf16.mxu0 0
      %5520 = vmatpush1.bf16.msra.mxu0 0
      %5521 = vmatprep.subr.bf16.mxu0 0
      %5522 = vmatpush1.bf16.msra.mxu0 0
      %5523 = vmatprep.subr.bf16.mxu0 0
      %5524 = vmatpush1.bf16.msra.mxu0 0
      %5525 = vmatprep.subr.bf16.mxu0 0
      %5526 = vmatpush1.bf16.msra.mxu0 0
      %5527 = vmatprep.subr.bf16.mxu0 0
      %5528 = vmatpush1.bf16.msra.mxu0 %v5511
      %5529 = vmatprep.subr.bf16.mxu0 0
      %5530 = vmatpush2.bf16.msra.mxu0 0
      %5531 = vmatprep.subr.bf16.mxu0 0
      %5532 = vmatpush2.bf16.msra.mxu0 0
      %5533 = vmatprep.subr.bf16.mxu0 0
      %5534 = vmatpush2.bf16.msra.mxu0 0
      %5535 = vmatprep.subr.bf16.mxu0 0
      %5536 = vmatpush2.bf16.msra.mxu0 0
      %5537 = vmatprep.subr.bf16.mxu0 0
      %5538 = vmatpush2.bf16.msra.mxu0 0
      %5539 = vmatprep.subr.bf16.mxu0 0
      %5540 = vmatpush2.bf16.msra.mxu0 0
      %5541 = vmatprep.subr.bf16.mxu0 0
      %5542 = vmatpush2.bf16.msra.mxu0 0
      %5543 = vmatprep.subr.bf16.mxu0 0
      %5544 = vmatpush2.bf16.msra.mxu0 0
      %5545 = vmatprep.mubr.bf16.mxu0 0
      %5546 = vmatmul.mubr.bf16.gmra.mxu0 %v5508
      %v5547 = vpop.f32.mrf.mxu0
      %v5548 = vadd.f32 %v5496, %v5547
      %v5549 = vpop.f32.mrf.mxu0
      %v5550 = vpop.f32.mrf.mxu0
      %v5551 = vadd.f32 %v5499, %v5550
      %v5552 = vpop.f32.mrf.mxu0
      %5553 = vdwg.mxu0
      %s5554 = scalar_lea.vmem %s2, 256
      %v5555 = vld [vmem:[%s5554] sm:$0xf]
      %v5556 = vld [vmem:[%s5554 + $0x4] sm:$0xf]
      %v5557 = vld [vmem:[%s5554 + $0x8] sm:$0xf]
      %v5558 = vld [vmem:[%s5554 + $0xc] sm:$0xf]
      %v5559 = vld [vmem:[%s5554 + $0x10] sm:$0xf]
      %v5560 = vld [vmem:[%s5554 + $0x14] sm:$0xf]
      %v5561 = vld [vmem:[%s5554 + $0x18] sm:$0xf]
      %v5562 = vld [vmem:[%s5554 + $0x1c] sm:$0xf]
      %v5563 = vld [vmem:[%s5554 + $0x20] sm:$0xf]
      %v5564 = vld [vmem:[%s5554 + $0x24] sm:$0xf]
      %v5565 = vld [vmem:[%s5554 + $0x28] sm:$0xf]
      %v5566 = vld [vmem:[%s5554 + $0x2c] sm:$0xf]
      %v5567 = vld [vmem:[%s5554 + $0x30] sm:$0xf]
      %v5568 = vld [vmem:[%s5554 + $0x34] sm:$0xf]
      %v5569 = vld [vmem:[%s5554 + $0x38] sm:$0xf]
      %v5570 = vld [vmem:[%s5554 + $0x3c] sm:$0xf]
      %v5571 = vld [vmem:[%s5554 + $0x40] sm:$0xf]
      %v5572 = vld [vmem:[%s5554 + $0x44] sm:$0xf]
      %v5573 = vld [vmem:[%s5554 + $0x48] sm:$0xf]
      %v5574 = vld [vmem:[%s5554 + $0x4c] sm:$0xf]
      %v5575 = vld [vmem:[%s5554 + $0x50] sm:$0xf]
      %v5576 = vld [vmem:[%s5554 + $0x54] sm:$0xf]
      %v5577 = vld [vmem:[%s5554 + $0x58] sm:$0xf]
      %v5578 = vld [vmem:[%s5554 + $0x5c] sm:$0xf]
      %v5579 = vld [vmem:[%s5554 + $0x60] sm:$0xf]
      %v5580 = vld [vmem:[%s5554 + $0x64] sm:$0xf]
      %v5581 = vld [vmem:[%s5554 + $0x68] sm:$0xf]
      %v5582 = vld [vmem:[%s5554 + $0x6c] sm:$0xf]
      %v5583 = vld [vmem:[%s5554 + $0x70] sm:$0xf]
      %v5584 = vld [vmem:[%s5554 + $0x74] sm:$0xf]
      %v5585 = vld [vmem:[%s5554 + $0x78] sm:$0xf]
      %v5586 = vld [vmem:[%s5554 + $0x7c] sm:$0xf]
      %v5619 = vunpack.c.l.b16 %v5555
      %v5620 = vunpack.c.l.b16 %v5556
      %v5621 = vunpack.c.l.b16 %v5557
      %v5622 = vunpack.c.l.b16 %v5558
      %v5623 = vunpack.c.l.b16 %v5559
      %v5624 = vunpack.c.l.b16 %v5560
      %v5625 = vunpack.c.l.b16 %v5561
      %v5626 = vunpack.c.l.b16 %v5562
      %v5627 = vunpack.c.l.b16 %v5563
      %v5628 = vunpack.c.l.b16 %v5564
      %v5629 = vunpack.c.l.b16 %v5565
      %v5630 = vunpack.c.l.b16 %v5566
      %v5631 = vunpack.c.l.b16 %v5567
      %v5632 = vunpack.c.l.b16 %v5568
      %v5633 = vunpack.c.l.b16 %v5569
      %v5634 = vunpack.c.l.b16 %v5570
      %v5635 = vunpack.c.l.b16 %v5571
      %v5636 = vunpack.c.l.b16 %v5572
      %v5637 = vunpack.c.l.b16 %v5573
      %v5638 = vunpack.c.l.b16 %v5574
      %v5639 = vunpack.c.l.b16 %v5575
      %v5640 = vunpack.c.l.b16 %v5576
      %v5641 = vunpack.c.l.b16 %v5577
      %v5642 = vunpack.c.l.b16 %v5578
      %v5643 = vunpack.c.l.b16 %v5579
      %v5644 = vunpack.c.l.b16 %v5580
      %v5645 = vunpack.c.l.b16 %v5581
      %v5646 = vunpack.c.l.b16 %v5582
      %v5647 = vunpack.c.l.b16 %v5583
      %v5648 = vunpack.c.l.b16 %v5584
      %v5649 = vunpack.c.l.b16 %v5585
      %v5650 = vunpack.c.l.b16 %v5586
      %v5651 = vpack.c.b16 %v5620, %v5619
      %v5652 = vpack.c.b16 %v5622, %v5621
      %v5653 = vpack.c.b16 %v5624, %v5623
      %v5654 = vpack.c.b16 %v5626, %v5625
      %v5655 = vpack.c.b16 %v5628, %v5627
      %v5656 = vpack.c.b16 %v5630, %v5629
      %v5657 = vpack.c.b16 %v5632, %v5631
      %v5658 = vpack.c.b16 %v5634, %v5633
      %v5659 = vpack.c.b16 %v5636, %v5635
      %v5660 = vpack.c.b16 %v5638, %v5637
      %v5661 = vpack.c.b16 %v5640, %v5639
      %v5662 = vpack.c.b16 %v5642, %v5641
      %v5663 = vpack.c.b16 %v5644, %v5643
      %v5664 = vpack.c.b16 %v5646, %v5645
      %v5665 = vpack.c.b16 %v5648, %v5647
      %v5666 = vpack.c.b16 %v5650, %v5649
      %5683 = vmatprep.subr.bf16.mxu0 0
      %5684 = vmatpush1.bf16.msra.mxu0 %v5658
      %5685 = vmatprep.subr.bf16.mxu0 0
      %5686 = vmatpush1.bf16.msra.mxu0 %v5657
      %5687 = vmatprep.subr.bf16.mxu0 0
      %5688 = vmatpush1.bf16.msra.mxu0 %v5656
      %5689 = vmatprep.subr.bf16.mxu0 0
      %5690 = vmatpush1.bf16.msra.mxu0 %v5655
      %5691 = vmatprep.subr.bf16.mxu0 0
      %5692 = vmatpush1.bf16.msra.mxu0 %v5654
      %5693 = vmatprep.subr.bf16.mxu0 0
      %5694 = vmatpush1.bf16.msra.mxu0 %v5653
      %5695 = vmatprep.subr.bf16.mxu0 0
      %5696 = vmatpush1.bf16.msra.mxu0 %v5652
      %5697 = vmatprep.subr.bf16.mxu0 0
      %5698 = vmatpush1.bf16.msra.mxu0 %v5651
      %5699 = vmatprep.subr.bf16.mxu0 0
      %5700 = vmatpush2.bf16.msra.mxu0 %v5666
      %5701 = vmatprep.subr.bf16.mxu0 0
      %5702 = vmatpush2.bf16.msra.mxu0 %v5665
      %5703 = vmatprep.subr.bf16.mxu0 0
      %5704 = vmatpush2.bf16.msra.mxu0 %v5664
      %5705 = vmatprep.subr.bf16.mxu0 0
      %5706 = vmatpush2.bf16.msra.mxu0 %v5663
      %5707 = vmatprep.subr.bf16.mxu0 0
      %5708 = vmatpush2.bf16.msra.mxu0 %v5662
      %5709 = vmatprep.subr.bf16.mxu0 0
      %5710 = vmatpush2.bf16.msra.mxu0 %v5661
      %5711 = vmatprep.subr.bf16.mxu0 0
      %5712 = vmatpush2.bf16.msra.mxu0 %v5660
      %5713 = vmatprep.subr.bf16.mxu0 0
      %5714 = vmatpush2.bf16.msra.mxu0 %v5659
      %5715 = vmatprep.mubr.bf16.mxu0 %v5105
      %5716 = vmatmul.mubr.bf16.gmra.mxu0 %v5104
      %v5717 = vpop.f32.mrf.mxu0
      %v5718 = vadd.f32 0.0, %v5717
      %v5719 = vpop.f32.mrf.mxu0
      %v5720 = vpop.f32.mrf.mxu0
      %v5721 = vpop.f32.mrf.mxu0
      %5722 = vdwg.mxu0
      %s5723 = scalar_lea.vmem %s13, 16
      %v5724 = vld [vmem:[%s5723] sm:$0xf]
      %v5725 = vld [vmem:[%s5723 + $0x4] sm:$0xf]
      %v5726 = vpack.c.bf16 %v5718, %v5718
      %v5729 = vunpack.c.l.b16 %v5724
      %v5730 = vunpack.c.l.b16 %v5725
      %v5731 = vpack.c.b16 %v5730, %v5729
      %v5733 = vsel %vm3415, %v5731, 0
      %v5736 = vsel %vm3419, %v5726, 0
      %5738 = vmatprep.subr.bf16.mxu0 0
      %5739 = vmatpush1.bf16.msra.mxu0 0
      %5740 = vmatprep.subr.bf16.mxu0 0
      %5741 = vmatpush1.bf16.msra.mxu0 0
      %5742 = vmatprep.subr.bf16.mxu0 0
      %5743 = vmatpush1.bf16.msra.mxu0 0
      %5744 = vmatprep.subr.bf16.mxu0 0
      %5745 = vmatpush1.bf16.msra.mxu0 0
      %5746 = vmatprep.subr.bf16.mxu0 0
      %5747 = vmatpush1.bf16.msra.mxu0 0
      %5748 = vmatprep.subr.bf16.mxu0 0
      %5749 = vmatpush1.bf16.msra.mxu0 0
      %5750 = vmatprep.subr.bf16.mxu0 0
      %5751 = vmatpush1.bf16.msra.mxu0 0
      %5752 = vmatprep.subr.bf16.mxu0 0
      %5753 = vmatpush1.bf16.msra.mxu0 %v5736
      %5754 = vmatprep.subr.bf16.mxu0 0
      %5755 = vmatpush2.bf16.msra.mxu0 0
      %5756 = vmatprep.subr.bf16.mxu0 0
      %5757 = vmatpush2.bf16.msra.mxu0 0
      %5758 = vmatprep.subr.bf16.mxu0 0
      %5759 = vmatpush2.bf16.msra.mxu0 0
      %5760 = vmatprep.subr.bf16.mxu0 0
      %5761 = vmatpush2.bf16.msra.mxu0 0
      %5762 = vmatprep.subr.bf16.mxu0 0
      %5763 = vmatpush2.bf16.msra.mxu0 0
      %5764 = vmatprep.subr.bf16.mxu0 0
      %5765 = vmatpush2.bf16.msra.mxu0 0
      %5766 = vmatprep.subr.bf16.mxu0 0
      %5767 = vmatpush2.bf16.msra.mxu0 0
      %5768 = vmatprep.subr.bf16.mxu0 0
      %5769 = vmatpush2.bf16.msra.mxu0 0
      %5770 = vmatprep.mubr.bf16.mxu0 0
      %5771 = vmatmul.mubr.bf16.gmra.mxu0 %v5733
      %v5772 = vpop.f32.mrf.mxu0
      %v5773 = vadd.f32 0.0, %v5772
      %v5774 = vpop.f32.mrf.mxu0
      %v5775 = vpop.f32.mrf.mxu0
      %v5776 = vadd.f32 0.0, %v5775
      %v5777 = vpop.f32.mrf.mxu0
      %5778 = vdwg.mxu0
      %v5779 = vadd.f32 %v5548, %v5773
      %v5780 = vadd.f32 %v5551, %v5776
      %s5781 = scalar_lea.vmem %s2, 384
      %v5782 = vld [vmem:[%s5781] sm:$0xf]
      %v5783 = vld [vmem:[%s5781 + $0x4] sm:$0xf]
      %v5784 = vld [vmem:[%s5781 + $0x8] sm:$0xf]
      %v5785 = vld [vmem:[%s5781 + $0xc] sm:$0xf]
      %v5786 = vld [vmem:[%s5781 + $0x10] sm:$0xf]
      %v5787 = vld [vmem:[%s5781 + $0x14] sm:$0xf]
      %v5788 = vld [vmem:[%s5781 + $0x18] sm:$0xf]
      %v5789 = vld [vmem:[%s5781 + $0x1c] sm:$0xf]
      %v5790 = vld [vmem:[%s5781 + $0x20] sm:$0xf]
      %v5791 = vld [vmem:[%s5781 + $0x24] sm:$0xf]
      %v5792 = vld [vmem:[%s5781 + $0x28] sm:$0xf]
      %v5793 = vld [vmem:[%s5781 + $0x2c] sm:$0xf]
      %v5794 = vld [vmem:[%s5781 + $0x30] sm:$0xf]
      %v5795 = vld [vmem:[%s5781 + $0x34] sm:$0xf]
      %v5796 = vld [vmem:[%s5781 + $0x38] sm:$0xf]
      %v5797 = vld [vmem:[%s5781 + $0x3c] sm:$0xf]
      %v5798 = vld [vmem:[%s5781 + $0x40] sm:$0xf]
      %v5799 = vld [vmem:[%s5781 + $0x44] sm:$0xf]
      %v5800 = vld [vmem:[%s5781 + $0x48] sm:$0xf]
      %v5801 = vld [vmem:[%s5781 + $0x4c] sm:$0xf]
      %v5802 = vld [vmem:[%s5781 + $0x50] sm:$0xf]
      %v5803 = vld [vmem:[%s5781 + $0x54] sm:$0xf]
      %v5804 = vld [vmem:[%s5781 + $0x58] sm:$0xf]
      %v5805 = vld [vmem:[%s5781 + $0x5c] sm:$0xf]
      %v5806 = vld [vmem:[%s5781 + $0x60] sm:$0xf]
      %v5807 = vld [vmem:[%s5781 + $0x64] sm:$0xf]
      %v5808 = vld [vmem:[%s5781 + $0x68] sm:$0xf]
      %v5809 = vld [vmem:[%s5781 + $0x6c] sm:$0xf]
      %v5810 = vld [vmem:[%s5781 + $0x70] sm:$0xf]
      %v5811 = vld [vmem:[%s5781 + $0x74] sm:$0xf]
      %v5812 = vld [vmem:[%s5781 + $0x78] sm:$0xf]
      %v5813 = vld [vmem:[%s5781 + $0x7c] sm:$0xf]
      %v5846 = vunpack.c.l.b16 %v5782
      %v5847 = vunpack.c.l.b16 %v5783
      %v5848 = vunpack.c.l.b16 %v5784
      %v5849 = vunpack.c.l.b16 %v5785
      %v5850 = vunpack.c.l.b16 %v5786
      %v5851 = vunpack.c.l.b16 %v5787
      %v5852 = vunpack.c.l.b16 %v5788
      %v5853 = vunpack.c.l.b16 %v5789
      %v5854 = vunpack.c.l.b16 %v5790
      %v5855 = vunpack.c.l.b16 %v5791
      %v5856 = vunpack.c.l.b16 %v5792
      %v5857 = vunpack.c.l.b16 %v5793
      %v5858 = vunpack.c.l.b16 %v5794
      %v5859 = vunpack.c.l.b16 %v5795
      %v5860 = vunpack.c.l.b16 %v5796
      %v5861 = vunpack.c.l.b16 %v5797
      %v5862 = vunpack.c.l.b16 %v5798
      %v5863 = vunpack.c.l.b16 %v5799
      %v5864 = vunpack.c.l.b16 %v5800
      %v5865 = vunpack.c.l.b16 %v5801
      %v5866 = vunpack.c.l.b16 %v5802
      %v5867 = vunpack.c.l.b16 %v5803
      %v5868 = vunpack.c.l.b16 %v5804
      %v5869 = vunpack.c.l.b16 %v5805
      %v5870 = vunpack.c.l.b16 %v5806
      %v5871 = vunpack.c.l.b16 %v5807
      %v5872 = vunpack.c.l.b16 %v5808
      %v5873 = vunpack.c.l.b16 %v5809
      %v5874 = vunpack.c.l.b16 %v5810
      %v5875 = vunpack.c.l.b16 %v5811
      %v5876 = vunpack.c.l.b16 %v5812
      %v5877 = vunpack.c.l.b16 %v5813
      %v5878 = vpack.c.b16 %v5847, %v5846
      %v5879 = vpack.c.b16 %v5849, %v5848
      %v5880 = vpack.c.b16 %v5851, %v5850
      %v5881 = vpack.c.b16 %v5853, %v5852
      %v5882 = vpack.c.b16 %v5855, %v5854
      %v5883 = vpack.c.b16 %v5857, %v5856
      %v5884 = vpack.c.b16 %v5859, %v5858
      %v5885 = vpack.c.b16 %v5861, %v5860
      %v5886 = vpack.c.b16 %v5863, %v5862
      %v5887 = vpack.c.b16 %v5865, %v5864
      %v5888 = vpack.c.b16 %v5867, %v5866
      %v5889 = vpack.c.b16 %v5869, %v5868
      %v5890 = vpack.c.b16 %v5871, %v5870
      %v5891 = vpack.c.b16 %v5873, %v5872
      %v5892 = vpack.c.b16 %v5875, %v5874
      %v5893 = vpack.c.b16 %v5877, %v5876
      %5910 = vmatprep.subr.bf16.mxu0 0
      %5911 = vmatpush1.bf16.msra.mxu0 %v5885
      %5912 = vmatprep.subr.bf16.mxu0 0
      %5913 = vmatpush1.bf16.msra.mxu0 %v5884
      %5914 = vmatprep.subr.bf16.mxu0 0
      %5915 = vmatpush1.bf16.msra.mxu0 %v5883
      %5916 = vmatprep.subr.bf16.mxu0 0
      %5917 = vmatpush1.bf16.msra.mxu0 %v5882
      %5918 = vmatprep.subr.bf16.mxu0 0
      %5919 = vmatpush1.bf16.msra.mxu0 %v5881
      %5920 = vmatprep.subr.bf16.mxu0 0
      %5921 = vmatpush1.bf16.msra.mxu0 %v5880
      %5922 = vmatprep.subr.bf16.mxu0 0
      %5923 = vmatpush1.bf16.msra.mxu0 %v5879
      %5924 = vmatprep.subr.bf16.mxu0 0
      %5925 = vmatpush1.bf16.msra.mxu0 %v5878
      %5926 = vmatprep.subr.bf16.mxu0 0
      %5927 = vmatpush2.bf16.msra.mxu0 %v5893
      %5928 = vmatprep.subr.bf16.mxu0 0
      %5929 = vmatpush2.bf16.msra.mxu0 %v5892
      %5930 = vmatprep.subr.bf16.mxu0 0
      %5931 = vmatpush2.bf16.msra.mxu0 %v5891
      %5932 = vmatprep.subr.bf16.mxu0 0
      %5933 = vmatpush2.bf16.msra.mxu0 %v5890
      %5934 = vmatprep.subr.bf16.mxu0 0
      %5935 = vmatpush2.bf16.msra.mxu0 %v5889
      %5936 = vmatprep.subr.bf16.mxu0 0
      %5937 = vmatpush2.bf16.msra.mxu0 %v5888
      %5938 = vmatprep.subr.bf16.mxu0 0
      %5939 = vmatpush2.bf16.msra.mxu0 %v5887
      %5940 = vmatprep.subr.bf16.mxu0 0
      %5941 = vmatpush2.bf16.msra.mxu0 %v5886
      %5942 = vmatprep.mubr.bf16.mxu0 %v5105
      %5943 = vmatmul.mubr.bf16.gmra.mxu0 %v5104
      %v5944 = vpop.f32.mrf.mxu0
      %v5945 = vadd.f32 0.0, %v5944
      %v5946 = vpop.f32.mrf.mxu0
      %v5947 = vpop.f32.mrf.mxu0
      %v5948 = vpop.f32.mrf.mxu0
      %5949 = vdwg.mxu0
      %s5950 = scalar_lea.vmem %s13, 24
      %v5951 = vld [vmem:[%s5950] sm:$0xf]
      %v5952 = vld [vmem:[%s5950 + $0x4] sm:$0xf]
      %v5953 = vpack.c.bf16 %v5945, %v5945
      %v5956 = vunpack.c.l.b16 %v5951
      %v5957 = vunpack.c.l.b16 %v5952
      %v5958 = vpack.c.b16 %v5957, %v5956
      %v5960 = vsel %vm3415, %v5958, 0
      %v5963 = vsel %vm3419, %v5953, 0
      %5965 = vmatprep.subr.bf16.mxu0 0
      %5966 = vmatpush1.bf16.msra.mxu0 0
      %5967 = vmatprep.subr.bf16.mxu0 0
      %5968 = vmatpush1.bf16.msra.mxu0 0
      %5969 = vmatprep.subr.bf16.mxu0 0
      %5970 = vmatpush1.bf16.msra.mxu0 0
      %5971 = vmatprep.subr.bf16.mxu0 0
      %5972 = vmatpush1.bf16.msra.mxu0 0
      %5973 = vmatprep.subr.bf16.mxu0 0
      %5974 = vmatpush1.bf16.msra.mxu0 0
      %5975 = vmatprep.subr.bf16.mxu0 0
      %5976 = vmatpush1.bf16.msra.mxu0 0
      %5977 = vmatprep.subr.bf16.mxu0 0
      %5978 = vmatpush1.bf16.msra.mxu0 0
      %5979 = vmatprep.subr.bf16.mxu0 0
      %5980 = vmatpush1.bf16.msra.mxu0 %v5963
      %5981 = vmatprep.subr.bf16.mxu0 0
      %5982 = vmatpush2.bf16.msra.mxu0 0
      %5983 = vmatprep.subr.bf16.mxu0 0
      %5984 = vmatpush2.bf16.msra.mxu0 0
      %5985 = vmatprep.subr.bf16.mxu0 0
      %5986 = vmatpush2.bf16.msra.mxu0 0
      %5987 = vmatprep.subr.bf16.mxu0 0
      %5988 = vmatpush2.bf16.msra.mxu0 0
      %5989 = vmatprep.subr.bf16.mxu0 0
      %5990 = vmatpush2.bf16.msra.mxu0 0
      %5991 = vmatprep.subr.bf16.mxu0 0
      %5992 = vmatpush2.bf16.msra.mxu0 0
      %5993 = vmatprep.subr.bf16.mxu0 0
      %5994 = vmatpush2.bf16.msra.mxu0 0
      %5995 = vmatprep.subr.bf16.mxu0 0
      %5996 = vmatpush2.bf16.msra.mxu0 0
      %5997 = vmatprep.mubr.bf16.mxu0 0
      %5998 = vmatmul.mubr.bf16.gmra.mxu0 %v5960
      %v5999 = vpop.f32.mrf.mxu0
      %v6000 = vadd.f32 0.0, %v5999
      %v6001 = vpop.f32.mrf.mxu0
      %v6002 = vpop.f32.mrf.mxu0
      %v6003 = vadd.f32 0.0, %v6002
      %v6004 = vpop.f32.mrf.mxu0
      %6005 = vdwg.mxu0
      %v6006 = vadd.f32 %v5779, %v6000
      %v6007 = vadd.f32 %v5780, %v6003
      %s6008 = scalar_lea.vmem %s2, 512
      %v6009 = vld [vmem:[%s6008] sm:$0xf]
      %v6010 = vld [vmem:[%s6008 + $0x4] sm:$0xf]
      %v6011 = vld [vmem:[%s6008 + $0x8] sm:$0xf]
      %v6012 = vld [vmem:[%s6008 + $0xc] sm:$0xf]
      %v6013 = vld [vmem:[%s6008 + $0x10] sm:$0xf]
      %v6014 = vld [vmem:[%s6008 + $0x14] sm:$0xf]
      %v6015 = vld [vmem:[%s6008 + $0x18] sm:$0xf]
      %v6016 = vld [vmem:[%s6008 + $0x1c] sm:$0xf]
      %v6017 = vld [vmem:[%s6008 + $0x20] sm:$0xf]
      %v6018 = vld [vmem:[%s6008 + $0x24] sm:$0xf]
      %v6019 = vld [vmem:[%s6008 + $0x28] sm:$0xf]
      %v6020 = vld [vmem:[%s6008 + $0x2c] sm:$0xf]
      %v6021 = vld [vmem:[%s6008 + $0x30] sm:$0xf]
      %v6022 = vld [vmem:[%s6008 + $0x34] sm:$0xf]
      %v6023 = vld [vmem:[%s6008 + $0x38] sm:$0xf]
      %v6024 = vld [vmem:[%s6008 + $0x3c] sm:$0xf]
      %v6025 = vld [vmem:[%s6008 + $0x40] sm:$0xf]
      %v6026 = vld [vmem:[%s6008 + $0x44] sm:$0xf]
      %v6027 = vld [vmem:[%s6008 + $0x48] sm:$0xf]
      %v6028 = vld [vmem:[%s6008 + $0x4c] sm:$0xf]
      %v6029 = vld [vmem:[%s6008 + $0x50] sm:$0xf]
      %v6030 = vld [vmem:[%s6008 + $0x54] sm:$0xf]
      %v6031 = vld [vmem:[%s6008 + $0x58] sm:$0xf]
      %v6032 = vld [vmem:[%s6008 + $0x5c] sm:$0xf]
      %v6033 = vld [vmem:[%s6008 + $0x60] sm:$0xf]
      %v6034 = vld [vmem:[%s6008 + $0x64] sm:$0xf]
      %v6035 = vld [vmem:[%s6008 + $0x68] sm:$0xf]
      %v6036 = vld [vmem:[%s6008 + $0x6c] sm:$0xf]
      %v6037 = vld [vmem:[%s6008 + $0x70] sm:$0xf]
      %v6038 = vld [vmem:[%s6008 + $0x74] sm:$0xf]
      %v6039 = vld [vmem:[%s6008 + $0x78] sm:$0xf]
      %v6040 = vld [vmem:[%s6008 + $0x7c] sm:$0xf]
      %v6073 = vunpack.c.l.b16 %v6009
      %v6074 = vunpack.c.l.b16 %v6010
      %v6075 = vunpack.c.l.b16 %v6011
      %v6076 = vunpack.c.l.b16 %v6012
      %v6077 = vunpack.c.l.b16 %v6013
      %v6078 = vunpack.c.l.b16 %v6014
      %v6079 = vunpack.c.l.b16 %v6015
      %v6080 = vunpack.c.l.b16 %v6016
      %v6081 = vunpack.c.l.b16 %v6017
      %v6082 = vunpack.c.l.b16 %v6018
      %v6083 = vunpack.c.l.b16 %v6019
      %v6084 = vunpack.c.l.b16 %v6020
      %v6085 = vunpack.c.l.b16 %v6021
      %v6086 = vunpack.c.l.b16 %v6022
      %v6087 = vunpack.c.l.b16 %v6023
      %v6088 = vunpack.c.l.b16 %v6024
      %v6089 = vunpack.c.l.b16 %v6025
      %v6090 = vunpack.c.l.b16 %v6026
      %v6091 = vunpack.c.l.b16 %v6027
      %v6092 = vunpack.c.l.b16 %v6028
      %v6093 = vunpack.c.l.b16 %v6029
      %v6094 = vunpack.c.l.b16 %v6030
      %v6095 = vunpack.c.l.b16 %v6031
      %v6096 = vunpack.c.l.b16 %v6032
      %v6097 = vunpack.c.l.b16 %v6033
      %v6098 = vunpack.c.l.b16 %v6034
      %v6099 = vunpack.c.l.b16 %v6035
      %v6100 = vunpack.c.l.b16 %v6036
      %v6101 = vunpack.c.l.b16 %v6037
      %v6102 = vunpack.c.l.b16 %v6038
      %v6103 = vunpack.c.l.b16 %v6039
      %v6104 = vunpack.c.l.b16 %v6040
      %v6105 = vpack.c.b16 %v6074, %v6073
      %v6106 = vpack.c.b16 %v6076, %v6075
      %v6107 = vpack.c.b16 %v6078, %v6077
      %v6108 = vpack.c.b16 %v6080, %v6079
      %v6109 = vpack.c.b16 %v6082, %v6081
      %v6110 = vpack.c.b16 %v6084, %v6083
      %v6111 = vpack.c.b16 %v6086, %v6085
      %v6112 = vpack.c.b16 %v6088, %v6087
      %v6113 = vpack.c.b16 %v6090, %v6089
      %v6114 = vpack.c.b16 %v6092, %v6091
      %v6115 = vpack.c.b16 %v6094, %v6093
      %v6116 = vpack.c.b16 %v6096, %v6095
      %v6117 = vpack.c.b16 %v6098, %v6097
      %v6118 = vpack.c.b16 %v6100, %v6099
      %v6119 = vpack.c.b16 %v6102, %v6101
      %v6120 = vpack.c.b16 %v6104, %v6103
      %6137 = vmatprep.subr.bf16.mxu0 0
      %6138 = vmatpush1.bf16.msra.mxu0 %v6112
      %6139 = vmatprep.subr.bf16.mxu0 0
      %6140 = vmatpush1.bf16.msra.mxu0 %v6111
      %6141 = vmatprep.subr.bf16.mxu0 0
      %6142 = vmatpush1.bf16.msra.mxu0 %v6110
      %6143 = vmatprep.subr.bf16.mxu0 0
      %6144 = vmatpush1.bf16.msra.mxu0 %v6109
      %6145 = vmatprep.subr.bf16.mxu0 0
      %6146 = vmatpush1.bf16.msra.mxu0 %v6108
      %6147 = vmatprep.subr.bf16.mxu0 0
      %6148 = vmatpush1.bf16.msra.mxu0 %v6107
      %6149 = vmatprep.subr.bf16.mxu0 0
      %6150 = vmatpush1.bf16.msra.mxu0 %v6106
      %6151 = vmatprep.subr.bf16.mxu0 0
      %6152 = vmatpush1.bf16.msra.mxu0 %v6105
      %6153 = vmatprep.subr.bf16.mxu0 0
      %6154 = vmatpush2.bf16.msra.mxu0 %v6120
      %6155 = vmatprep.subr.bf16.mxu0 0
      %6156 = vmatpush2.bf16.msra.mxu0 %v6119
      %6157 = vmatprep.subr.bf16.mxu0 0
      %6158 = vmatpush2.bf16.msra.mxu0 %v6118
      %6159 = vmatprep.subr.bf16.mxu0 0
      %6160 = vmatpush2.bf16.msra.mxu0 %v6117
      %6161 = vmatprep.subr.bf16.mxu0 0
      %6162 = vmatpush2.bf16.msra.mxu0 %v6116
      %6163 = vmatprep.subr.bf16.mxu0 0
      %6164 = vmatpush2.bf16.msra.mxu0 %v6115
      %6165 = vmatprep.subr.bf16.mxu0 0
      %6166 = vmatpush2.bf16.msra.mxu0 %v6114
      %6167 = vmatprep.subr.bf16.mxu0 0
      %6168 = vmatpush2.bf16.msra.mxu0 %v6113
      %6169 = vmatprep.mubr.bf16.mxu0 %v5105
      %6170 = vmatmul.mubr.bf16.gmra.mxu0 %v5104
      %v6171 = vpop.f32.mrf.mxu0
      %v6172 = vadd.f32 0.0, %v6171
      %v6173 = vpop.f32.mrf.mxu0
      %v6174 = vpop.f32.mrf.mxu0
      %v6175 = vpop.f32.mrf.mxu0
      %6176 = vdwg.mxu0
      %s6177 = scalar_lea.vmem %s13, 32
      %v6178 = vld [vmem:[%s6177] sm:$0xf]
      %v6179 = vld [vmem:[%s6177 + $0x4] sm:$0xf]
      %v6180 = vpack.c.bf16 %v6172, %v6172
      %v6183 = vunpack.c.l.b16 %v6178
      %v6184 = vunpack.c.l.b16 %v6179
      %v6185 = vpack.c.b16 %v6184, %v6183
      %v6187 = vsel %vm3415, %v6185, 0
      %v6190 = vsel %vm3419, %v6180, 0
      %6192 = vmatprep.subr.bf16.mxu0 0
      %6193 = vmatpush1.bf16.msra.mxu0 0
      %6194 = vmatprep.subr.bf16.mxu0 0
      %6195 = vmatpush1.bf16.msra.mxu0 0
      %6196 = vmatprep.subr.bf16.mxu0 0
      %6197 = vmatpush1.bf16.msra.mxu0 0
      %6198 = vmatprep.subr.bf16.mxu0 0
      %6199 = vmatpush1.bf16.msra.mxu0 0
      %6200 = vmatprep.subr.bf16.mxu0 0
      %6201 = vmatpush1.bf16.msra.mxu0 0
      %6202 = vmatprep.subr.bf16.mxu0 0
      %6203 = vmatpush1.bf16.msra.mxu0 0
      %6204 = vmatprep.subr.bf16.mxu0 0
      %6205 = vmatpush1.bf16.msra.mxu0 0
      %6206 = vmatprep.subr.bf16.mxu0 0
      %6207 = vmatpush1.bf16.msra.mxu0 %v6190
      %6208 = vmatprep.subr.bf16.mxu0 0
      %6209 = vmatpush2.bf16.msra.mxu0 0
      %6210 = vmatprep.subr.bf16.mxu0 0
      %6211 = vmatpush2.bf16.msra.mxu0 0
      %6212 = vmatprep.subr.bf16.mxu0 0
      %6213 = vmatpush2.bf16.msra.mxu0 0
      %6214 = vmatprep.subr.bf16.mxu0 0
      %6215 = vmatpush2.bf16.msra.mxu0 0
      %6216 = vmatprep.subr.bf16.mxu0 0
      %6217 = vmatpush2.bf16.msra.mxu0 0
      %6218 = vmatprep.subr.bf16.mxu0 0
      %6219 = vmatpush2.bf16.msra.mxu0 0
      %6220 = vmatprep.subr.bf16.mxu0 0
      %6221 = vmatpush2.bf16.msra.mxu0 0
      %6222 = vmatprep.subr.bf16.mxu0 0
      %6223 = vmatpush2.bf16.msra.mxu0 0
      %6224 = vmatprep.mubr.bf16.mxu0 0
      %6225 = vmatmul.mubr.bf16.gmra.mxu0 %v6187
      %v6226 = vpop.f32.mrf.mxu0
      %v6227 = vadd.f32 0.0, %v6226
      %v6228 = vpop.f32.mrf.mxu0
      %v6229 = vpop.f32.mrf.mxu0
      %v6230 = vadd.f32 0.0, %v6229
      %v6231 = vpop.f32.mrf.mxu0
      %6232 = vdwg.mxu0
      %v6233 = vadd.f32 %v6006, %v6227
      %v6234 = vadd.f32 %v6007, %v6230
      %s6235 = scalar_lea.vmem %s2, 640
      %v6236 = vld [vmem:[%s6235] sm:$0xf]
      %v6237 = vld [vmem:[%s6235 + $0x4] sm:$0xf]
      %v6238 = vld [vmem:[%s6235 + $0x8] sm:$0xf]
      %v6239 = vld [vmem:[%s6235 + $0xc] sm:$0xf]
      %v6240 = vld [vmem:[%s6235 + $0x10] sm:$0xf]
      %v6241 = vld [vmem:[%s6235 + $0x14] sm:$0xf]
      %v6242 = vld [vmem:[%s6235 + $0x18] sm:$0xf]
      %v6243 = vld [vmem:[%s6235 + $0x1c] sm:$0xf]
      %v6244 = vld [vmem:[%s6235 + $0x20] sm:$0xf]
      %v6245 = vld [vmem:[%s6235 + $0x24] sm:$0xf]
      %v6246 = vld [vmem:[%s6235 + $0x28] sm:$0xf]
      %v6247 = vld [vmem:[%s6235 + $0x2c] sm:$0xf]
      %v6248 = vld [vmem:[%s6235 + $0x30] sm:$0xf]
      %v6249 = vld [vmem:[%s6235 + $0x34] sm:$0xf]
      %v6250 = vld [vmem:[%s6235 + $0x38] sm:$0xf]
      %v6251 = vld [vmem:[%s6235 + $0x3c] sm:$0xf]
      %v6252 = vld [vmem:[%s6235 + $0x40] sm:$0xf]
      %v6253 = vld [vmem:[%s6235 + $0x44] sm:$0xf]
      %v6254 = vld [vmem:[%s6235 + $0x48] sm:$0xf]
      %v6255 = vld [vmem:[%s6235 + $0x4c] sm:$0xf]
      %v6256 = vld [vmem:[%s6235 + $0x50] sm:$0xf]
      %v6257 = vld [vmem:[%s6235 + $0x54] sm:$0xf]
      %v6258 = vld [vmem:[%s6235 + $0x58] sm:$0xf]
      %v6259 = vld [vmem:[%s6235 + $0x5c] sm:$0xf]
      %v6260 = vld [vmem:[%s6235 + $0x60] sm:$0xf]
      %v6261 = vld [vmem:[%s6235 + $0x64] sm:$0xf]
      %v6262 = vld [vmem:[%s6235 + $0x68] sm:$0xf]
      %v6263 = vld [vmem:[%s6235 + $0x6c] sm:$0xf]
      %v6264 = vld [vmem:[%s6235 + $0x70] sm:$0xf]
      %v6265 = vld [vmem:[%s6235 + $0x74] sm:$0xf]
      %v6266 = vld [vmem:[%s6235 + $0x78] sm:$0xf]
      %v6267 = vld [vmem:[%s6235 + $0x7c] sm:$0xf]
      %v6300 = vunpack.c.l.b16 %v6236
      %v6301 = vunpack.c.l.b16 %v6237
      %v6302 = vunpack.c.l.b16 %v6238
      %v6303 = vunpack.c.l.b16 %v6239
      %v6304 = vunpack.c.l.b16 %v6240
      %v6305 = vunpack.c.l.b16 %v6241
      %v6306 = vunpack.c.l.b16 %v6242
      %v6307 = vunpack.c.l.b16 %v6243
      %v6308 = vunpack.c.l.b16 %v6244
      %v6309 = vunpack.c.l.b16 %v6245
      %v6310 = vunpack.c.l.b16 %v6246
      %v6311 = vunpack.c.l.b16 %v6247
      %v6312 = vunpack.c.l.b16 %v6248
      %v6313 = vunpack.c.l.b16 %v6249
      %v6314 = vunpack.c.l.b16 %v6250
      %v6315 = vunpack.c.l.b16 %v6251
      %v6316 = vunpack.c.l.b16 %v6252
      %v6317 = vunpack.c.l.b16 %v6253
      %v6318 = vunpack.c.l.b16 %v6254
      %v6319 = vunpack.c.l.b16 %v6255
      %v6320 = vunpack.c.l.b16 %v6256
      %v6321 = vunpack.c.l.b16 %v6257
      %v6322 = vunpack.c.l.b16 %v6258
      %v6323 = vunpack.c.l.b16 %v6259
      %v6324 = vunpack.c.l.b16 %v6260
      %v6325 = vunpack.c.l.b16 %v6261
      %v6326 = vunpack.c.l.b16 %v6262
      %v6327 = vunpack.c.l.b16 %v6263
      %v6328 = vunpack.c.l.b16 %v6264
      %v6329 = vunpack.c.l.b16 %v6265
      %v6330 = vunpack.c.l.b16 %v6266
      %v6331 = vunpack.c.l.b16 %v6267
      %v6332 = vpack.c.b16 %v6301, %v6300
      %v6333 = vpack.c.b16 %v6303, %v6302
      %v6334 = vpack.c.b16 %v6305, %v6304
      %v6335 = vpack.c.b16 %v6307, %v6306
      %v6336 = vpack.c.b16 %v6309, %v6308
      %v6337 = vpack.c.b16 %v6311, %v6310
      %v6338 = vpack.c.b16 %v6313, %v6312
      %v6339 = vpack.c.b16 %v6315, %v6314
      %v6340 = vpack.c.b16 %v6317, %v6316
      %v6341 = vpack.c.b16 %v6319, %v6318
      %v6342 = vpack.c.b16 %v6321, %v6320
      %v6343 = vpack.c.b16 %v6323, %v6322
      %v6344 = vpack.c.b16 %v6325, %v6324
      %v6345 = vpack.c.b16 %v6327, %v6326
      %v6346 = vpack.c.b16 %v6329, %v6328
      %v6347 = vpack.c.b16 %v6331, %v6330
      %6364 = vmatprep.subr.bf16.mxu0 0
      %6365 = vmatpush1.bf16.msra.mxu0 %v6339
      %6366 = vmatprep.subr.bf16.mxu0 0
      %6367 = vmatpush1.bf16.msra.mxu0 %v6338
      %6368 = vmatprep.subr.bf16.mxu0 0
      %6369 = vmatpush1.bf16.msra.mxu0 %v6337
      %6370 = vmatprep.subr.bf16.mxu0 0
      %6371 = vmatpush1.bf16.msra.mxu0 %v6336
      %6372 = vmatprep.subr.bf16.mxu0 0
      %6373 = vmatpush1.bf16.msra.mxu0 %v6335
      %6374 = vmatprep.subr.bf16.mxu0 0
      %6375 = vmatpush1.bf16.msra.mxu0 %v6334
      %6376 = vmatprep.subr.bf16.mxu0 0
      %6377 = vmatpush1.bf16.msra.mxu0 %v6333
      %6378 = vmatprep.subr.bf16.mxu0 0
      %6379 = vmatpush1.bf16.msra.mxu0 %v6332
      %6380 = vmatprep.subr.bf16.mxu0 0
      %6381 = vmatpush2.bf16.msra.mxu0 %v6347
      %6382 = vmatprep.subr.bf16.mxu0 0
      %6383 = vmatpush2.bf16.msra.mxu0 %v6346
      %6384 = vmatprep.subr.bf16.mxu0 0
      %6385 = vmatpush2.bf16.msra.mxu0 %v6345
      %6386 = vmatprep.subr.bf16.mxu0 0
      %6387 = vmatpush2.bf16.msra.mxu0 %v6344
      %6388 = vmatprep.subr.bf16.mxu0 0
      %6389 = vmatpush2.bf16.msra.mxu0 %v6343
      %6390 = vmatprep.subr.bf16.mxu0 0
      %6391 = vmatpush2.bf16.msra.mxu0 %v6342
      %6392 = vmatprep.subr.bf16.mxu0 0
      %6393 = vmatpush2.bf16.msra.mxu0 %v6341
      %6394 = vmatprep.subr.bf16.mxu0 0
      %6395 = vmatpush2.bf16.msra.mxu0 %v6340
      %6396 = vmatprep.mubr.bf16.mxu0 %v5105
      %6397 = vmatmul.mubr.bf16.gmra.mxu0 %v5104
      %v6398 = vpop.f32.mrf.mxu0
      %v6399 = vadd.f32 0.0, %v6398
      %v6400 = vpop.f32.mrf.mxu0
      %v6401 = vpop.f32.mrf.mxu0
      %v6402 = vpop.f32.mrf.mxu0
      %6403 = vdwg.mxu0
      %s6404 = scalar_lea.vmem %s13, 40
      %v6405 = vld [vmem:[%s6404] sm:$0xf]
      %v6406 = vld [vmem:[%s6404 + $0x4] sm:$0xf]
      %v6407 = vpack.c.bf16 %v6399, %v6399
      %v6410 = vunpack.c.l.b16 %v6405
      %v6411 = vunpack.c.l.b16 %v6406
      %v6412 = vpack.c.b16 %v6411, %v6410
      %v6414 = vsel %vm3415, %v6412, 0
      %v6417 = vsel %vm3419, %v6407, 0
      %6419 = vmatprep.subr.bf16.mxu0 0
      %6420 = vmatpush1.bf16.msra.mxu0 0
      %6421 = vmatprep.subr.bf16.mxu0 0
      %6422 = vmatpush1.bf16.msra.mxu0 0
      %6423 = vmatprep.subr.bf16.mxu0 0
      %6424 = vmatpush1.bf16.msra.mxu0 0
      %6425 = vmatprep.subr.bf16.mxu0 0
      %6426 = vmatpush1.bf16.msra.mxu0 0
      %6427 = vmatprep.subr.bf16.mxu0 0
      %6428 = vmatpush1.bf16.msra.mxu0 0
      %6429 = vmatprep.subr.bf16.mxu0 0
      %6430 = vmatpush1.bf16.msra.mxu0 0
      %6431 = vmatprep.subr.bf16.mxu0 0
      %6432 = vmatpush1.bf16.msra.mxu0 0
      %6433 = vmatprep.subr.bf16.mxu0 0
      %6434 = vmatpush1.bf16.msra.mxu0 %v6417
      %6435 = vmatprep.subr.bf16.mxu0 0
      %6436 = vmatpush2.bf16.msra.mxu0 0
      %6437 = vmatprep.subr.bf16.mxu0 0
      %6438 = vmatpush2.bf16.msra.mxu0 0
      %6439 = vmatprep.subr.bf16.mxu0 0
      %6440 = vmatpush2.bf16.msra.mxu0 0
      %6441 = vmatprep.subr.bf16.mxu0 0
      %6442 = vmatpush2.bf16.msra.mxu0 0
      %6443 = vmatprep.subr.bf16.mxu0 0
      %6444 = vmatpush2.bf16.msra.mxu0 0
      %6445 = vmatprep.subr.bf16.mxu0 0
      %6446 = vmatpush2.bf16.msra.mxu0 0
      %6447 = vmatprep.subr.bf16.mxu0 0
      %6448 = vmatpush2.bf16.msra.mxu0 0
      %6449 = vmatprep.subr.bf16.mxu0 0
      %6450 = vmatpush2.bf16.msra.mxu0 0
      %6451 = vmatprep.mubr.bf16.mxu0 0
      %6452 = vmatmul.mubr.bf16.gmra.mxu0 %v6414
      %v6453 = vpop.f32.mrf.mxu0
      %v6454 = vadd.f32 0.0, %v6453
      %v6455 = vpop.f32.mrf.mxu0
      %v6456 = vpop.f32.mrf.mxu0
      %v6457 = vadd.f32 0.0, %v6456
      %v6458 = vpop.f32.mrf.mxu0
      %6459 = vdwg.mxu0
      %v6460 = vadd.f32 %v6233, %v6454
      %v6461 = vadd.f32 %v6234, %v6457
      %s6462 = scalar_lea.vmem %s2, 768
      %v6463 = vld [vmem:[%s6462] sm:$0xf]
      %v6464 = vld [vmem:[%s6462 + $0x4] sm:$0xf]
      %v6465 = vld [vmem:[%s6462 + $0x8] sm:$0xf]
      %v6466 = vld [vmem:[%s6462 + $0xc] sm:$0xf]
      %v6467 = vld [vmem:[%s6462 + $0x10] sm:$0xf]
      %v6468 = vld [vmem:[%s6462 + $0x14] sm:$0xf]
      %v6469 = vld [vmem:[%s6462 + $0x18] sm:$0xf]
      %v6470 = vld [vmem:[%s6462 + $0x1c] sm:$0xf]
      %v6471 = vld [vmem:[%s6462 + $0x20] sm:$0xf]
      %v6472 = vld [vmem:[%s6462 + $0x24] sm:$0xf]
      %v6473 = vld [vmem:[%s6462 + $0x28] sm:$0xf]
      %v6474 = vld [vmem:[%s6462 + $0x2c] sm:$0xf]
      %v6475 = vld [vmem:[%s6462 + $0x30] sm:$0xf]
      %v6476 = vld [vmem:[%s6462 + $0x34] sm:$0xf]
      %v6477 = vld [vmem:[%s6462 + $0x38] sm:$0xf]
      %v6478 = vld [vmem:[%s6462 + $0x3c] sm:$0xf]
      %v6479 = vld [vmem:[%s6462 + $0x40] sm:$0xf]
      %v6480 = vld [vmem:[%s6462 + $0x44] sm:$0xf]
      %v6481 = vld [vmem:[%s6462 + $0x48] sm:$0xf]
      %v6482 = vld [vmem:[%s6462 + $0x4c] sm:$0xf]
      %v6483 = vld [vmem:[%s6462 + $0x50] sm:$0xf]
      %v6484 = vld [vmem:[%s6462 + $0x54] sm:$0xf]
      %v6485 = vld [vmem:[%s6462 + $0x58] sm:$0xf]
      %v6486 = vld [vmem:[%s6462 + $0x5c] sm:$0xf]
      %v6487 = vld [vmem:[%s6462 + $0x60] sm:$0xf]
      %v6488 = vld [vmem:[%s6462 + $0x64] sm:$0xf]
      %v6489 = vld [vmem:[%s6462 + $0x68] sm:$0xf]
      %v6490 = vld [vmem:[%s6462 + $0x6c] sm:$0xf]
      %v6491 = vld [vmem:[%s6462 + $0x70] sm:$0xf]
      %v6492 = vld [vmem:[%s6462 + $0x74] sm:$0xf]
      %v6493 = vld [vmem:[%s6462 + $0x78] sm:$0xf]
      %v6494 = vld [vmem:[%s6462 + $0x7c] sm:$0xf]
      %v6527 = vunpack.c.l.b16 %v6463
      %v6528 = vunpack.c.l.b16 %v6464
      %v6529 = vunpack.c.l.b16 %v6465
      %v6530 = vunpack.c.l.b16 %v6466
      %v6531 = vunpack.c.l.b16 %v6467
      %v6532 = vunpack.c.l.b16 %v6468
      %v6533 = vunpack.c.l.b16 %v6469
      %v6534 = vunpack.c.l.b16 %v6470
      %v6535 = vunpack.c.l.b16 %v6471
      %v6536 = vunpack.c.l.b16 %v6472
      %v6537 = vunpack.c.l.b16 %v6473
      %v6538 = vunpack.c.l.b16 %v6474
      %v6539 = vunpack.c.l.b16 %v6475
      %v6540 = vunpack.c.l.b16 %v6476
      %v6541 = vunpack.c.l.b16 %v6477
      %v6542 = vunpack.c.l.b16 %v6478
      %v6543 = vunpack.c.l.b16 %v6479
      %v6544 = vunpack.c.l.b16 %v6480
      %v6545 = vunpack.c.l.b16 %v6481
      %v6546 = vunpack.c.l.b16 %v6482
      %v6547 = vunpack.c.l.b16 %v6483
      %v6548 = vunpack.c.l.b16 %v6484
      %v6549 = vunpack.c.l.b16 %v6485
      %v6550 = vunpack.c.l.b16 %v6486
      %v6551 = vunpack.c.l.b16 %v6487
      %v6552 = vunpack.c.l.b16 %v6488
      %v6553 = vunpack.c.l.b16 %v6489
      %v6554 = vunpack.c.l.b16 %v6490
      %v6555 = vunpack.c.l.b16 %v6491
      %v6556 = vunpack.c.l.b16 %v6492
      %v6557 = vunpack.c.l.b16 %v6493
      %v6558 = vunpack.c.l.b16 %v6494
      %v6559 = vpack.c.b16 %v6528, %v6527
      %v6560 = vpack.c.b16 %v6530, %v6529
      %v6561 = vpack.c.b16 %v6532, %v6531
      %v6562 = vpack.c.b16 %v6534, %v6533
      %v6563 = vpack.c.b16 %v6536, %v6535
      %v6564 = vpack.c.b16 %v6538, %v6537
      %v6565 = vpack.c.b16 %v6540, %v6539
      %v6566 = vpack.c.b16 %v6542, %v6541
      %v6567 = vpack.c.b16 %v6544, %v6543
      %v6568 = vpack.c.b16 %v6546, %v6545
      %v6569 = vpack.c.b16 %v6548, %v6547
      %v6570 = vpack.c.b16 %v6550, %v6549
      %v6571 = vpack.c.b16 %v6552, %v6551
      %v6572 = vpack.c.b16 %v6554, %v6553
      %v6573 = vpack.c.b16 %v6556, %v6555
      %v6574 = vpack.c.b16 %v6558, %v6557
      %6591 = vmatprep.subr.bf16.mxu0 0
      %6592 = vmatpush1.bf16.msra.mxu0 %v6566
      %6593 = vmatprep.subr.bf16.mxu0 0
      %6594 = vmatpush1.bf16.msra.mxu0 %v6565
      %6595 = vmatprep.subr.bf16.mxu0 0
      %6596 = vmatpush1.bf16.msra.mxu0 %v6564
      %6597 = vmatprep.subr.bf16.mxu0 0
      %6598 = vmatpush1.bf16.msra.mxu0 %v6563
      %6599 = vmatprep.subr.bf16.mxu0 0
      %6600 = vmatpush1.bf16.msra.mxu0 %v6562
      %6601 = vmatprep.subr.bf16.mxu0 0
      %6602 = vmatpush1.bf16.msra.mxu0 %v6561
      %6603 = vmatprep.subr.bf16.mxu0 0
      %6604 = vmatpush1.bf16.msra.mxu0 %v6560
      %6605 = vmatprep.subr.bf16.mxu0 0
      %6606 = vmatpush1.bf16.msra.mxu0 %v6559
      %6607 = vmatprep.subr.bf16.mxu0 0
      %6608 = vmatpush2.bf16.msra.mxu0 %v6574
      %6609 = vmatprep.subr.bf16.mxu0 0
      %6610 = vmatpush2.bf16.msra.mxu0 %v6573
      %6611 = vmatprep.subr.bf16.mxu0 0
      %6612 = vmatpush2.bf16.msra.mxu0 %v6572
      %6613 = vmatprep.subr.bf16.mxu0 0
      %6614 = vmatpush2.bf16.msra.mxu0 %v6571
      %6615 = vmatprep.subr.bf16.mxu0 0
      %6616 = vmatpush2.bf16.msra.mxu0 %v6570
      %6617 = vmatprep.subr.bf16.mxu0 0
      %6618 = vmatpush2.bf16.msra.mxu0 %v6569
      %6619 = vmatprep.subr.bf16.mxu0 0
      %6620 = vmatpush2.bf16.msra.mxu0 %v6568
      %6621 = vmatprep.subr.bf16.mxu0 0
      %6622 = vmatpush2.bf16.msra.mxu0 %v6567
      %6623 = vmatprep.mubr.bf16.mxu0 %v5105
      %6624 = vmatmul.mubr.bf16.gmra.mxu0 %v5104
      %v6625 = vpop.f32.mrf.mxu0
      %v6626 = vadd.f32 0.0, %v6625
      %v6627 = vpop.f32.mrf.mxu0
      %v6628 = vpop.f32.mrf.mxu0
      %v6629 = vpop.f32.mrf.mxu0
      %6630 = vdwg.mxu0
      %s6631 = scalar_lea.vmem %s13, 48
      %v6632 = vld [vmem:[%s6631] sm:$0xf]
      %v6633 = vld [vmem:[%s6631 + $0x4] sm:$0xf]
      %v6634 = vpack.c.bf16 %v6626, %v6626
      %v6637 = vunpack.c.l.b16 %v6632
      %v6638 = vunpack.c.l.b16 %v6633
      %v6639 = vpack.c.b16 %v6638, %v6637
      %v6641 = vsel %vm3415, %v6639, 0
      %v6644 = vsel %vm3419, %v6634, 0
      %6646 = vmatprep.subr.bf16.mxu0 0
      %6647 = vmatpush1.bf16.msra.mxu0 0
      %6648 = vmatprep.subr.bf16.mxu0 0
      %6649 = vmatpush1.bf16.msra.mxu0 0
      %6650 = vmatprep.subr.bf16.mxu0 0
      %6651 = vmatpush1.bf16.msra.mxu0 0
      %6652 = vmatprep.subr.bf16.mxu0 0
      %6653 = vmatpush1.bf16.msra.mxu0 0
      %6654 = vmatprep.subr.bf16.mxu0 0
      %6655 = vmatpush1.bf16.msra.mxu0 0
      %6656 = vmatprep.subr.bf16.mxu0 0
      %6657 = vmatpush1.bf16.msra.mxu0 0
      %6658 = vmatprep.subr.bf16.mxu0 0
      %6659 = vmatpush1.bf16.msra.mxu0 0
      %6660 = vmatprep.subr.bf16.mxu0 0
      %6661 = vmatpush1.bf16.msra.mxu0 %v6644
      %6662 = vmatprep.subr.bf16.mxu0 0
      %6663 = vmatpush2.bf16.msra.mxu0 0
      %6664 = vmatprep.subr.bf16.mxu0 0
      %6665 = vmatpush2.bf16.msra.mxu0 0
      %6666 = vmatprep.subr.bf16.mxu0 0
      %6667 = vmatpush2.bf16.msra.mxu0 0
      %6668 = vmatprep.subr.bf16.mxu0 0
      %6669 = vmatpush2.bf16.msra.mxu0 0
      %6670 = vmatprep.subr.bf16.mxu0 0
      %6671 = vmatpush2.bf16.msra.mxu0 0
      %6672 = vmatprep.subr.bf16.mxu0 0
      %6673 = vmatpush2.bf16.msra.mxu0 0
      %6674 = vmatprep.subr.bf16.mxu0 0
      %6675 = vmatpush2.bf16.msra.mxu0 0
      %6676 = vmatprep.subr.bf16.mxu0 0
      %6677 = vmatpush2.bf16.msra.mxu0 0
      %6678 = vmatprep.mubr.bf16.mxu0 0
      %6679 = vmatmul.mubr.bf16.gmra.mxu0 %v6641
      %v6680 = vpop.f32.mrf.mxu0
      %v6681 = vadd.f32 0.0, %v6680
      %v6682 = vpop.f32.mrf.mxu0
      %v6683 = vpop.f32.mrf.mxu0
      %v6684 = vadd.f32 0.0, %v6683
      %v6685 = vpop.f32.mrf.mxu0
      %6686 = vdwg.mxu0
      %v6687 = vadd.f32 %v6460, %v6681
      %v6688 = vadd.f32 %v6461, %v6684
      %s6689 = scalar_lea.vmem %s2, 896
      %v6690 = vld [vmem:[%s6689] sm:$0xf]
      %v6691 = vld [vmem:[%s6689 + $0x4] sm:$0xf]
      %v6692 = vld [vmem:[%s6689 + $0x8] sm:$0xf]
      %v6693 = vld [vmem:[%s6689 + $0xc] sm:$0xf]
      %v6694 = vld [vmem:[%s6689 + $0x10] sm:$0xf]
      %v6695 = vld [vmem:[%s6689 + $0x14] sm:$0xf]
      %v6696 = vld [vmem:[%s6689 + $0x18] sm:$0xf]
      %v6697 = vld [vmem:[%s6689 + $0x1c] sm:$0xf]
      %v6698 = vld [vmem:[%s6689 + $0x20] sm:$0xf]
      %v6699 = vld [vmem:[%s6689 + $0x24] sm:$0xf]
      %v6700 = vld [vmem:[%s6689 + $0x28] sm:$0xf]
      %v6701 = vld [vmem:[%s6689 + $0x2c] sm:$0xf]
      %v6702 = vld [vmem:[%s6689 + $0x30] sm:$0xf]
      %v6703 = vld [vmem:[%s6689 + $0x34] sm:$0xf]
      %v6704 = vld [vmem:[%s6689 + $0x38] sm:$0xf]
      %v6705 = vld [vmem:[%s6689 + $0x3c] sm:$0xf]
      %v6706 = vld [vmem:[%s6689 + $0x40] sm:$0xf]
      %v6707 = vld [vmem:[%s6689 + $0x44] sm:$0xf]
      %v6708 = vld [vmem:[%s6689 + $0x48] sm:$0xf]
      %v6709 = vld [vmem:[%s6689 + $0x4c] sm:$0xf]
      %v6710 = vld [vmem:[%s6689 + $0x50] sm:$0xf]
      %v6711 = vld [vmem:[%s6689 + $0x54] sm:$0xf]
      %v6712 = vld [vmem:[%s6689 + $0x58] sm:$0xf]
      %v6713 = vld [vmem:[%s6689 + $0x5c] sm:$0xf]
      %v6714 = vld [vmem:[%s6689 + $0x60] sm:$0xf]
      %v6715 = vld [vmem:[%s6689 + $0x64] sm:$0xf]
      %v6716 = vld [vmem:[%s6689 + $0x68] sm:$0xf]
      %v6717 = vld [vmem:[%s6689 + $0x6c] sm:$0xf]
      %v6718 = vld [vmem:[%s6689 + $0x70] sm:$0xf]
      %v6719 = vld [vmem:[%s6689 + $0x74] sm:$0xf]
      %v6720 = vld [vmem:[%s6689 + $0x78] sm:$0xf]
      %v6721 = vld [vmem:[%s6689 + $0x7c] sm:$0xf]
      %v6754 = vunpack.c.l.b16 %v6690
      %v6755 = vunpack.c.l.b16 %v6691
      %v6756 = vunpack.c.l.b16 %v6692
      %v6757 = vunpack.c.l.b16 %v6693
      %v6758 = vunpack.c.l.b16 %v6694
      %v6759 = vunpack.c.l.b16 %v6695
      %v6760 = vunpack.c.l.b16 %v6696
      %v6761 = vunpack.c.l.b16 %v6697
      %v6762 = vunpack.c.l.b16 %v6698
      %v6763 = vunpack.c.l.b16 %v6699
      %v6764 = vunpack.c.l.b16 %v6700
      %v6765 = vunpack.c.l.b16 %v6701
      %v6766 = vunpack.c.l.b16 %v6702
      %v6767 = vunpack.c.l.b16 %v6703
      %v6768 = vunpack.c.l.b16 %v6704
      %v6769 = vunpack.c.l.b16 %v6705
      %v6770 = vunpack.c.l.b16 %v6706
      %v6771 = vunpack.c.l.b16 %v6707
      %v6772 = vunpack.c.l.b16 %v6708
      %v6773 = vunpack.c.l.b16 %v6709
      %v6774 = vunpack.c.l.b16 %v6710
      %v6775 = vunpack.c.l.b16 %v6711
      %v6776 = vunpack.c.l.b16 %v6712
      %v6777 = vunpack.c.l.b16 %v6713
      %v6778 = vunpack.c.l.b16 %v6714
      %v6779 = vunpack.c.l.b16 %v6715
      %v6780 = vunpack.c.l.b16 %v6716
      %v6781 = vunpack.c.l.b16 %v6717
      %v6782 = vunpack.c.l.b16 %v6718
      %v6783 = vunpack.c.l.b16 %v6719
      %v6784 = vunpack.c.l.b16 %v6720
      %v6785 = vunpack.c.l.b16 %v6721
      %v6786 = vpack.c.b16 %v6755, %v6754
      %v6787 = vpack.c.b16 %v6757, %v6756
      %v6788 = vpack.c.b16 %v6759, %v6758
      %v6789 = vpack.c.b16 %v6761, %v6760
      %v6790 = vpack.c.b16 %v6763, %v6762
      %v6791 = vpack.c.b16 %v6765, %v6764
      %v6792 = vpack.c.b16 %v6767, %v6766
      %v6793 = vpack.c.b16 %v6769, %v6768
      %v6794 = vpack.c.b16 %v6771, %v6770
      %v6795 = vpack.c.b16 %v6773, %v6772
      %v6796 = vpack.c.b16 %v6775, %v6774
      %v6797 = vpack.c.b16 %v6777, %v6776
      %v6798 = vpack.c.b16 %v6779, %v6778
      %v6799 = vpack.c.b16 %v6781, %v6780
      %v6800 = vpack.c.b16 %v6783, %v6782
      %v6801 = vpack.c.b16 %v6785, %v6784
      %6818 = vmatprep.subr.bf16.mxu0 0
      %6819 = vmatpush1.bf16.msra.mxu0 %v6793
      %6820 = vmatprep.subr.bf16.mxu0 0
      %6821 = vmatpush1.bf16.msra.mxu0 %v6792
      %6822 = vmatprep.subr.bf16.mxu0 0
      %6823 = vmatpush1.bf16.msra.mxu0 %v6791
      %6824 = vmatprep.subr.bf16.mxu0 0
      %6825 = vmatpush1.bf16.msra.mxu0 %v6790
      %6826 = vmatprep.subr.bf16.mxu0 0
      %6827 = vmatpush1.bf16.msra.mxu0 %v6789
      %6828 = vmatprep.subr.bf16.mxu0 0
      %6829 = vmatpush1.bf16.msra.mxu0 %v6788
      %6830 = vmatprep.subr.bf16.mxu0 0
      %6831 = vmatpush1.bf16.msra.mxu0 %v6787
      %6832 = vmatprep.subr.bf16.mxu0 0
      %6833 = vmatpush1.bf16.msra.mxu0 %v6786
      %6834 = vmatprep.subr.bf16.mxu0 0
      %6835 = vmatpush2.bf16.msra.mxu0 %v6801
      %6836 = vmatprep.subr.bf16.mxu0 0
      %6837 = vmatpush2.bf16.msra.mxu0 %v6800
      %6838 = vmatprep.subr.bf16.mxu0 0
      %6839 = vmatpush2.bf16.msra.mxu0 %v6799
      %6840 = vmatprep.subr.bf16.mxu0 0
      %6841 = vmatpush2.bf16.msra.mxu0 %v6798
      %6842 = vmatprep.subr.bf16.mxu0 0
      %6843 = vmatpush2.bf16.msra.mxu0 %v6797
      %6844 = vmatprep.subr.bf16.mxu0 0
      %6845 = vmatpush2.bf16.msra.mxu0 %v6796
      %6846 = vmatprep.subr.bf16.mxu0 0
      %6847 = vmatpush2.bf16.msra.mxu0 %v6795
      %6848 = vmatprep.subr.bf16.mxu0 0
      %6849 = vmatpush2.bf16.msra.mxu0 %v6794
      %6850 = vmatprep.mubr.bf16.mxu0 %v5105
      %6851 = vmatmul.mubr.bf16.gmra.mxu0 %v5104
      %v6852 = vpop.f32.mrf.mxu0
      %v6853 = vadd.f32 0.0, %v6852
      %v6854 = vpop.f32.mrf.mxu0
      %v6855 = vpop.f32.mrf.mxu0
      %v6856 = vpop.f32.mrf.mxu0
      %6857 = vdwg.mxu0
      %s6858 = scalar_lea.vmem %s13, 56
      %v6859 = vld [vmem:[%s6858] sm:$0xf]
      %v6860 = vld [vmem:[%s6858 + $0x4] sm:$0xf]
      %v6861 = vpack.c.bf16 %v6853, %v6853
      %v6864 = vunpack.c.l.b16 %v6859
      %v6865 = vunpack.c.l.b16 %v6860
      %v6866 = vpack.c.b16 %v6865, %v6864
      %v6868 = vsel %vm3415, %v6866, 0
      %v6871 = vsel %vm3419, %v6861, 0
      %6873 = vmatprep.subr.bf16.mxu0 0
      %6874 = vmatpush1.bf16.msra.mxu0 0
      %6875 = vmatprep.subr.bf16.mxu0 0
      %6876 = vmatpush1.bf16.msra.mxu0 0
      %6877 = vmatprep.subr.bf16.mxu0 0
      %6878 = vmatpush1.bf16.msra.mxu0 0
      %6879 = vmatprep.subr.bf16.mxu0 0
      %6880 = vmatpush1.bf16.msra.mxu0 0
      %6881 = vmatprep.subr.bf16.mxu0 0
      %6882 = vmatpush1.bf16.msra.mxu0 0
      %6883 = vmatprep.subr.bf16.mxu0 0
      %6884 = vmatpush1.bf16.msra.mxu0 0
      %6885 = vmatprep.subr.bf16.mxu0 0
      %6886 = vmatpush1.bf16.msra.mxu0 0
      %6887 = vmatprep.subr.bf16.mxu0 0
      %6888 = vmatpush1.bf16.msra.mxu0 %v6871
      %6889 = vmatprep.subr.bf16.mxu0 0
      %6890 = vmatpush2.bf16.msra.mxu0 0
      %6891 = vmatprep.subr.bf16.mxu0 0
      %6892 = vmatpush2.bf16.msra.mxu0 0
      %6893 = vmatprep.subr.bf16.mxu0 0
      %6894 = vmatpush2.bf16.msra.mxu0 0
      %6895 = vmatprep.subr.bf16.mxu0 0
      %6896 = vmatpush2.bf16.msra.mxu0 0
      %6897 = vmatprep.subr.bf16.mxu0 0
      %6898 = vmatpush2.bf16.msra.mxu0 0
      %6899 = vmatprep.subr.bf16.mxu0 0
      %6900 = vmatpush2.bf16.msra.mxu0 0
      %6901 = vmatprep.subr.bf16.mxu0 0
      %6902 = vmatpush2.bf16.msra.mxu0 0
      %6903 = vmatprep.subr.bf16.mxu0 0
      %6904 = vmatpush2.bf16.msra.mxu0 0
      %6905 = vmatprep.mubr.bf16.mxu0 0
      %6906 = vmatmul.mubr.bf16.gmra.mxu0 %v6868
      %v6907 = vpop.f32.mrf.mxu0
      %v6908 = vadd.f32 0.0, %v6907
      %v6909 = vpop.f32.mrf.mxu0
      %v6910 = vpop.f32.mrf.mxu0
      %v6911 = vadd.f32 0.0, %v6910
      %v6912 = vpop.f32.mrf.mxu0
      %6913 = vdwg.mxu0
      %v6914 = vadd.f32 %v6687, %v6908
      %v6915 = vadd.f32 %v6688, %v6911
      %s6916 = scalar_lea.vmem %s2, 1024
      %v6917 = vld [vmem:[%s6916] sm:$0xf]
      %v6918 = vld [vmem:[%s6916 + $0x4] sm:$0xf]
      %v6919 = vld [vmem:[%s6916 + $0x8] sm:$0xf]
      %v6920 = vld [vmem:[%s6916 + $0xc] sm:$0xf]
      %v6921 = vld [vmem:[%s6916 + $0x10] sm:$0xf]
      %v6922 = vld [vmem:[%s6916 + $0x14] sm:$0xf]
      %v6923 = vld [vmem:[%s6916 + $0x18] sm:$0xf]
      %v6924 = vld [vmem:[%s6916 + $0x1c] sm:$0xf]
      %v6925 = vld [vmem:[%s6916 + $0x20] sm:$0xf]
      %v6926 = vld [vmem:[%s6916 + $0x24] sm:$0xf]
      %v6927 = vld [vmem:[%s6916 + $0x28] sm:$0xf]
      %v6928 = vld [vmem:[%s6916 + $0x2c] sm:$0xf]
      %v6929 = vld [vmem:[%s6916 + $0x30] sm:$0xf]
      %v6930 = vld [vmem:[%s6916 + $0x34] sm:$0xf]
      %v6931 = vld [vmem:[%s6916 + $0x38] sm:$0xf]
      %v6932 = vld [vmem:[%s6916 + $0x3c] sm:$0xf]
      %v6933 = vld [vmem:[%s6916 + $0x40] sm:$0xf]
      %v6934 = vld [vmem:[%s6916 + $0x44] sm:$0xf]
      %v6935 = vld [vmem:[%s6916 + $0x48] sm:$0xf]
      %v6936 = vld [vmem:[%s6916 + $0x4c] sm:$0xf]
      %v6937 = vld [vmem:[%s6916 + $0x50] sm:$0xf]
      %v6938 = vld [vmem:[%s6916 + $0x54] sm:$0xf]
      %v6939 = vld [vmem:[%s6916 + $0x58] sm:$0xf]
      %v6940 = vld [vmem:[%s6916 + $0x5c] sm:$0xf]
      %v6941 = vld [vmem:[%s6916 + $0x60] sm:$0xf]
      %v6942 = vld [vmem:[%s6916 + $0x64] sm:$0xf]
      %v6943 = vld [vmem:[%s6916 + $0x68] sm:$0xf]
      %v6944 = vld [vmem:[%s6916 + $0x6c] sm:$0xf]
      %v6945 = vld [vmem:[%s6916 + $0x70] sm:$0xf]
      %v6946 = vld [vmem:[%s6916 + $0x74] sm:$0xf]
      %v6947 = vld [vmem:[%s6916 + $0x78] sm:$0xf]
      %v6948 = vld [vmem:[%s6916 + $0x7c] sm:$0xf]
      %v6981 = vunpack.c.l.b16 %v6917
      %v6982 = vunpack.c.l.b16 %v6918
      %v6983 = vunpack.c.l.b16 %v6919
      %v6984 = vunpack.c.l.b16 %v6920
      %v6985 = vunpack.c.l.b16 %v6921
      %v6986 = vunpack.c.l.b16 %v6922
      %v6987 = vunpack.c.l.b16 %v6923
      %v6988 = vunpack.c.l.b16 %v6924
      %v6989 = vunpack.c.l.b16 %v6925
      %v6990 = vunpack.c.l.b16 %v6926
      %v6991 = vunpack.c.l.b16 %v6927
      %v6992 = vunpack.c.l.b16 %v6928
      %v6993 = vunpack.c.l.b16 %v6929
      %v6994 = vunpack.c.l.b16 %v6930
      %v6995 = vunpack.c.l.b16 %v6931
      %v6996 = vunpack.c.l.b16 %v6932
      %v6997 = vunpack.c.l.b16 %v6933
      %v6998 = vunpack.c.l.b16 %v6934
      %v6999 = vunpack.c.l.b16 %v6935
      %v7000 = vunpack.c.l.b16 %v6936
      %v7001 = vunpack.c.l.b16 %v6937
      %v7002 = vunpack.c.l.b16 %v6938
      %v7003 = vunpack.c.l.b16 %v6939
      %v7004 = vunpack.c.l.b16 %v6940
      %v7005 = vunpack.c.l.b16 %v6941
      %v7006 = vunpack.c.l.b16 %v6942
      %v7007 = vunpack.c.l.b16 %v6943
      %v7008 = vunpack.c.l.b16 %v6944
      %v7009 = vunpack.c.l.b16 %v6945
      %v7010 = vunpack.c.l.b16 %v6946
      %v7011 = vunpack.c.l.b16 %v6947
      %v7012 = vunpack.c.l.b16 %v6948
      %v7013 = vpack.c.b16 %v6982, %v6981
      %v7014 = vpack.c.b16 %v6984, %v6983
      %v7015 = vpack.c.b16 %v6986, %v6985
      %v7016 = vpack.c.b16 %v6988, %v6987
      %v7017 = vpack.c.b16 %v6990, %v6989
      %v7018 = vpack.c.b16 %v6992, %v6991
      %v7019 = vpack.c.b16 %v6994, %v6993
      %v7020 = vpack.c.b16 %v6996, %v6995
      %v7021 = vpack.c.b16 %v6998, %v6997
      %v7022 = vpack.c.b16 %v7000, %v6999
      %v7023 = vpack.c.b16 %v7002, %v7001
      %v7024 = vpack.c.b16 %v7004, %v7003
      %v7025 = vpack.c.b16 %v7006, %v7005
      %v7026 = vpack.c.b16 %v7008, %v7007
      %v7027 = vpack.c.b16 %v7010, %v7009
      %v7028 = vpack.c.b16 %v7012, %v7011
      %7045 = vmatprep.subr.bf16.mxu0 0
      %7046 = vmatpush1.bf16.msra.mxu0 %v7020
      %7047 = vmatprep.subr.bf16.mxu0 0
      %7048 = vmatpush1.bf16.msra.mxu0 %v7019
      %7049 = vmatprep.subr.bf16.mxu0 0
      %7050 = vmatpush1.bf16.msra.mxu0 %v7018
      %7051 = vmatprep.subr.bf16.mxu0 0
      %7052 = vmatpush1.bf16.msra.mxu0 %v7017
      %7053 = vmatprep.subr.bf16.mxu0 0
      %7054 = vmatpush1.bf16.msra.mxu0 %v7016
      %7055 = vmatprep.subr.bf16.mxu0 0
      %7056 = vmatpush1.bf16.msra.mxu0 %v7015
      %7057 = vmatprep.subr.bf16.mxu0 0
      %7058 = vmatpush1.bf16.msra.mxu0 %v7014
      %7059 = vmatprep.subr.bf16.mxu0 0
      %7060 = vmatpush1.bf16.msra.mxu0 %v7013
      %7061 = vmatprep.subr.bf16.mxu0 0
      %7062 = vmatpush2.bf16.msra.mxu0 %v7028
      %7063 = vmatprep.subr.bf16.mxu0 0
      %7064 = vmatpush2.bf16.msra.mxu0 %v7027
      %7065 = vmatprep.subr.bf16.mxu0 0
      %7066 = vmatpush2.bf16.msra.mxu0 %v7026
      %7067 = vmatprep.subr.bf16.mxu0 0
      %7068 = vmatpush2.bf16.msra.mxu0 %v7025
      %7069 = vmatprep.subr.bf16.mxu0 0
      %7070 = vmatpush2.bf16.msra.mxu0 %v7024
      %7071 = vmatprep.subr.bf16.mxu0 0
      %7072 = vmatpush2.bf16.msra.mxu0 %v7023
      %7073 = vmatprep.subr.bf16.mxu0 0
      %7074 = vmatpush2.bf16.msra.mxu0 %v7022
      %7075 = vmatprep.subr.bf16.mxu0 0
      %7076 = vmatpush2.bf16.msra.mxu0 %v7021
      %7077 = vmatprep.mubr.bf16.mxu0 %v5105
      %7078 = vmatmul.mubr.bf16.gmra.mxu0 %v5104
      %v7079 = vpop.f32.mrf.mxu0
      %v7080 = vadd.f32 0.0, %v7079
      %v7081 = vpop.f32.mrf.mxu0
      %v7082 = vpop.f32.mrf.mxu0
      %v7083 = vpop.f32.mrf.mxu0
      %7084 = vdwg.mxu0
      %s7085 = scalar_lea.vmem %s13, 64
      %v7086 = vld [vmem:[%s7085] sm:$0xf]
      %v7087 = vld [vmem:[%s7085 + $0x4] sm:$0xf]
      %v7088 = vpack.c.bf16 %v7080, %v7080
      %v7091 = vunpack.c.l.b16 %v7086
      %v7092 = vunpack.c.l.b16 %v7087
      %v7093 = vpack.c.b16 %v7092, %v7091
      %v7095 = vsel %vm3415, %v7093, 0
      %v7098 = vsel %vm3419, %v7088, 0
      %7100 = vmatprep.subr.bf16.mxu0 0
      %7101 = vmatpush1.bf16.msra.mxu0 0
      %7102 = vmatprep.subr.bf16.mxu0 0
      %7103 = vmatpush1.bf16.msra.mxu0 0
      %7104 = vmatprep.subr.bf16.mxu0 0
      %7105 = vmatpush1.bf16.msra.mxu0 0
      %7106 = vmatprep.subr.bf16.mxu0 0
      %7107 = vmatpush1.bf16.msra.mxu0 0
      %7108 = vmatprep.subr.bf16.mxu0 0
      %7109 = vmatpush1.bf16.msra.mxu0 0
      %7110 = vmatprep.subr.bf16.mxu0 0
      %7111 = vmatpush1.bf16.msra.mxu0 0
      %7112 = vmatprep.subr.bf16.mxu0 0
      %7113 = vmatpush1.bf16.msra.mxu0 0
      %7114 = vmatprep.subr.bf16.mxu0 0
      %7115 = vmatpush1.bf16.msra.mxu0 %v7098
      %7116 = vmatprep.subr.bf16.mxu0 0
      %7117 = vmatpush2.bf16.msra.mxu0 0
      %7118 = vmatprep.subr.bf16.mxu0 0
      %7119 = vmatpush2.bf16.msra.mxu0 0
      %7120 = vmatprep.subr.bf16.mxu0 0
      %7121 = vmatpush2.bf16.msra.mxu0 0
      %7122 = vmatprep.subr.bf16.mxu0 0
      %7123 = vmatpush2.bf16.msra.mxu0 0
      %7124 = vmatprep.subr.bf16.mxu0 0
      %7125 = vmatpush2.bf16.msra.mxu0 0
      %7126 = vmatprep.subr.bf16.mxu0 0
      %7127 = vmatpush2.bf16.msra.mxu0 0
      %7128 = vmatprep.subr.bf16.mxu0 0
      %7129 = vmatpush2.bf16.msra.mxu0 0
      %7130 = vmatprep.subr.bf16.mxu0 0
      %7131 = vmatpush2.bf16.msra.mxu0 0
      %7132 = vmatprep.mubr.bf16.mxu0 0
      %7133 = vmatmul.mubr.bf16.gmra.mxu0 %v7095
      %v7134 = vpop.f32.mrf.mxu0
      %v7135 = vadd.f32 0.0, %v7134
      %v7136 = vpop.f32.mrf.mxu0
      %v7137 = vpop.f32.mrf.mxu0
      %v7138 = vadd.f32 0.0, %v7137
      %v7139 = vpop.f32.mrf.mxu0
      %7140 = vdwg.mxu0
      %v7141 = vadd.f32 %v6914, %v7135
      %v7142 = vadd.f32 %v6915, %v7138
      %v7143 = vld [vmem:[%s14] sm:$0xff]
      %v7144 = vld [vmem:[%s14 + $0x8] sm:$0xff]
      %7146 = vset.pattern.permute.xlu0 0
      %7147 = vperm.xlu0 %7146, %v7143
      %v7148 = vpop.permute.xlu0 %7147
      %7151 = vset.pattern.permute.xlu0 0
      %7152 = vperm.xlu0 %7151, %v7144
      %v7153 = vpop.permute.xlu0 %7152
      %v7155 = vmul.f32 %v7141, %v7148
      %v7156 = vmul.f32 %v7142, %v7153
      %v7157 = vld [vmem:[%s15] sm:$0xff]
      %v7158 = vld [vmem:[%s15 + $0x8] sm:$0xff]
      %7160 = vset.pattern.permute.xlu0 0
      %7161 = vperm.xlu0 %7160, %v7157
      %v7162 = vpop.permute.xlu0 %7161
      %7165 = vset.pattern.permute.xlu0 0
      %7166 = vperm.xlu0 %7165, %v7158
      %v7167 = vpop.permute.xlu0 %7166
      %v7169 = vadd.f32 %v7155, %v7162
      %v7170 = vadd.f32 %v7156, %v7167
      %v7171 = vmax.f32 %v7169, 0.0
      %v7172 = vmax.f32 %v7170, 0.0
      %v7173 = vld [vmem:[%s16] sm:$0xf]
      %v7174 = vld [vmem:[%s16 + $0x4] sm:$0xf]
      %v7177 = vunpack.c.l.b16 %v7173
      %v7178 = vunpack.c.l.b16 %v7174
      %v7179 = vpack.c.b16 %v7178, %v7177
      %v7181 = vsel %vm3415, %v7179, 0
      %7183 = vmatprep.subr.bf16.mxu0 0
      %7184 = vmatpush1.bf16.msra.mxu0 0
      %7185 = vmatprep.subr.bf16.mxu0 0
      %7186 = vmatpush1.bf16.msra.mxu0 0
      %7187 = vmatprep.subr.bf16.mxu0 0
      %7188 = vmatpush1.bf16.msra.mxu0 0
      %7189 = vmatprep.subr.bf16.mxu0 0
      %7190 = vmatpush1.bf16.msra.mxu0 0
      %7191 = vmatprep.subr.bf16.mxu0 0
      %7192 = vmatpush1.bf16.msra.mxu0 0
      %7193 = vmatprep.subr.bf16.mxu0 0
      %7194 = vmatpush1.bf16.msra.mxu0 0
      %7195 = vmatprep.subr.bf16.mxu0 0
      %7196 = vmatpush1.bf16.msra.mxu0 0
      %7197 = vmatprep.subr.bf16.mxu0 0
      %7198 = vmatpush1.bf16.msra.mxu0 %v6190
      %7199 = vmatprep.subr.bf16.mxu0 0
      %7200 = vmatpush2.bf16.msra.mxu0 0
      %7201 = vmatprep.subr.bf16.mxu0 0
      %7202 = vmatpush2.bf16.msra.mxu0 0
      %7203 = vmatprep.subr.bf16.mxu0 0
      %7204 = vmatpush2.bf16.msra.mxu0 0
      %7205 = vmatprep.subr.bf16.mxu0 0
      %7206 = vmatpush2.bf16.msra.mxu0 0
      %7207 = vmatprep.subr.bf16.mxu0 0
      %7208 = vmatpush2.bf16.msra.mxu0 0
      %7209 = vmatprep.subr.bf16.mxu0 0
      %7210 = vmatpush2.bf16.msra.mxu0 0
      %7211 = vmatprep.subr.bf16.mxu0 0
      %7212 = vmatpush2.bf16.msra.mxu0 0
      %7213 = vmatprep.subr.bf16.mxu0 0
      %7214 = vmatpush2.bf16.msra.mxu0 0
      %7215 = vmatprep.mubr.bf16.mxu0 0
      %7216 = vmatmul.mubr.bf16.gmra.mxu0 %v7181
      %v7217 = vpop.f32.mrf.mxu0
      %v7218 = vadd.f32 0.0, %v7217
      %v7219 = vpop.f32.mrf.mxu0
      %v7220 = vpop.f32.mrf.mxu0
      %v7221 = vadd.f32 0.0, %v7220
      %v7222 = vpop.f32.mrf.mxu0
      %7223 = vdwg.mxu0
      %v7224 = vld [vmem:[%s17] sm:$0xff]
      %v7225 = vld [vmem:[%s17 + $0x8] sm:$0xff]
      %7227 = vset.pattern.permute.xlu0 0
      %7228 = vperm.xlu0 %7227, %v7224
      %v7229 = vpop.permute.xlu0 %7228
      %7232 = vset.pattern.permute.xlu0 0
      %7233 = vperm.xlu0 %7232, %v7225
      %v7234 = vpop.permute.xlu0 %7233
      %v7236 = vmul.f32 %v7218, %v7229
      %v7237 = vmul.f32 %v7221, %v7234
      %v7238 = vld [vmem:[%s18] sm:$0xff]
      %v7239 = vld [vmem:[%s18 + $0x8] sm:$0xff]
      %7241 = vset.pattern.permute.xlu0 0
      %7242 = vperm.xlu0 %7241, %v7238
      %v7243 = vpop.permute.xlu0 %7242
      %7246 = vset.pattern.permute.xlu0 0
      %7247 = vperm.xlu0 %7246, %v7239
      %v7248 = vpop.permute.xlu0 %7247
      %v7250 = vadd.f32 %v7236, %v7243
      %v7251 = vadd.f32 %v7237, %v7248
      %v7252 = vpack.c.bf16 %v7172, %v7171
      %v7253 = vld [vmem:[%s3] sm:$0xf]
      %v7254 = vld [vmem:[%s3 + $0x4] sm:$0xf]
      %v7255 = vld [vmem:[%s3 + $0x8] sm:$0xf]
      %v7256 = vld [vmem:[%s3 + $0xc] sm:$0xf]
      %v7257 = vld [vmem:[%s3 + $0x10] sm:$0xf]
      %v7258 = vld [vmem:[%s3 + $0x14] sm:$0xf]
      %v7259 = vld [vmem:[%s3 + $0x18] sm:$0xf]
      %v7260 = vld [vmem:[%s3 + $0x1c] sm:$0xf]
      %v7269 = vunpack.c.l.b16 %v7253
      %v7270 = vunpack.c.l.b16 %v7254
      %v7271 = vunpack.c.l.b16 %v7255
      %v7272 = vunpack.c.l.b16 %v7256
      %v7273 = vunpack.c.l.b16 %v7257
      %v7274 = vunpack.c.l.b16 %v7258
      %v7275 = vunpack.c.l.b16 %v7259
      %v7276 = vunpack.c.l.b16 %v7260
      %v7277 = vpack.c.b16 %v7270, %v7269
      %v7278 = vpack.c.b16 %v7272, %v7271
      %v7279 = vpack.c.b16 %v7274, %v7273
      %v7280 = vpack.c.b16 %v7276, %v7275
      %vm7285 = vcmask 523264
      %v7287 = vsel %vm7285, %v7252, 0
      %7289 = vmatprep.subr.bf16.mxu0 0
      %7290 = vmatpush1.bf16.msra.mxu0 0
      %7291 = vmatprep.subr.bf16.mxu0 0
      %7292 = vmatpush1.bf16.msra.mxu0 0
      %7293 = vmatprep.subr.bf16.mxu0 0
      %7294 = vmatpush1.bf16.msra.mxu0 0
      %7295 = vmatprep.subr.bf16.mxu0 0
      %7296 = vmatpush1.bf16.msra.mxu0 0
      %7297 = vmatprep.subr.bf16.mxu0 0
      %7298 = vmatpush1.bf16.msra.mxu0 %v7280
      %7299 = vmatprep.subr.bf16.mxu0 0
      %7300 = vmatpush1.bf16.msra.mxu0 %v7279
      %7301 = vmatprep.subr.bf16.mxu0 0
      %7302 = vmatpush1.bf16.msra.mxu0 %v7278
      %7303 = vmatprep.subr.bf16.mxu0 0
      %7304 = vmatpush1.bf16.msra.mxu0 %v7277
      %7305 = vmatprep.subr.bf16.mxu0 0
      %7306 = vmatpush2.bf16.msra.mxu0 0
      %7307 = vmatprep.subr.bf16.mxu0 0
      %7308 = vmatpush2.bf16.msra.mxu0 0
      %7309 = vmatprep.subr.bf16.mxu0 0
      %7310 = vmatpush2.bf16.msra.mxu0 0
      %7311 = vmatprep.subr.bf16.mxu0 0
      %7312 = vmatpush2.bf16.msra.mxu0 0
      %7313 = vmatprep.subr.bf16.mxu0 0
      %7314 = vmatpush2.bf16.msra.mxu0 0
      %7315 = vmatprep.subr.bf16.mxu0 0
      %7316 = vmatpush2.bf16.msra.mxu0 0
      %7317 = vmatprep.subr.bf16.mxu0 0
      %7318 = vmatpush2.bf16.msra.mxu0 0
      %7319 = vmatprep.subr.bf16.mxu0 0
      %7320 = vmatpush2.bf16.msra.mxu0 0
      %7321 = vmatprep.mubr.bf16.mxu0 0
      %7322 = vmatmul.mubr.bf16.gmra.mxu0 %v7287
      %v7323 = vpop.f32.mrf.mxu0
      %v7324 = vadd.f32 0.0, %v7323
      %v7325 = vpop.f32.mrf.mxu0
      %v7326 = vpop.f32.mrf.mxu0
      %v7327 = vadd.f32 0.0, %v7326
      %v7328 = vpop.f32.mrf.mxu0
      %7329 = vdwg.mxu0
      %v7330 = vld [vmem:[%s19] sm:$0xf]
      %v7331 = vld [vmem:[%s19 + $0x4] sm:$0xf]
      %v7332 = vpack.c.bf16 %v7327, %v7324
      %s7333 = scalar_lea.vmem %s3, 32
      %v7334 = vld [vmem:[%s7333] sm:$0xf]
      %v7335 = vld [vmem:[%s7333 + $0x4] sm:$0xf]
      %v7336 = vld [vmem:[%s7333 + $0x8] sm:$0xf]
      %v7337 = vld [vmem:[%s7333 + $0xc] sm:$0xf]
      %v7338 = vld [vmem:[%s7333 + $0x10] sm:$0xf]
      %v7339 = vld [vmem:[%s7333 + $0x14] sm:$0xf]
      %v7340 = vld [vmem:[%s7333 + $0x18] sm:$0xf]
      %v7341 = vld [vmem:[%s7333 + $0x1c] sm:$0xf]
      %v7350 = vunpack.c.l.b16 %v7334
      %v7351 = vunpack.c.l.b16 %v7335
      %v7352 = vunpack.c.l.b16 %v7336
      %v7353 = vunpack.c.l.b16 %v7337
      %v7354 = vunpack.c.l.b16 %v7338
      %v7355 = vunpack.c.l.b16 %v7339
      %v7356 = vunpack.c.l.b16 %v7340
      %v7357 = vunpack.c.l.b16 %v7341
      %v7358 = vpack.c.b16 %v7351, %v7350
      %v7359 = vpack.c.b16 %v7353, %v7352
      %v7360 = vpack.c.b16 %v7355, %v7354
      %v7361 = vpack.c.b16 %v7357, %v7356
      %7366 = vmatprep.subr.bf16.mxu0 0
      %7367 = vmatpush1.bf16.msra.mxu0 0
      %7368 = vmatprep.subr.bf16.mxu0 0
      %7369 = vmatpush1.bf16.msra.mxu0 0
      %7370 = vmatprep.subr.bf16.mxu0 0
      %7371 = vmatpush1.bf16.msra.mxu0 0
      %7372 = vmatprep.subr.bf16.mxu0 0
      %7373 = vmatpush1.bf16.msra.mxu0 0
      %7374 = vmatprep.subr.bf16.mxu0 0
      %7375 = vmatpush1.bf16.msra.mxu0 %v7361
      %7376 = vmatprep.subr.bf16.mxu0 0
      %7377 = vmatpush1.bf16.msra.mxu0 %v7360
      %7378 = vmatprep.subr.bf16.mxu0 0
      %7379 = vmatpush1.bf16.msra.mxu0 %v7359
      %7380 = vmatprep.subr.bf16.mxu0 0
      %7381 = vmatpush1.bf16.msra.mxu0 %v7358
      %7382 = vmatprep.subr.bf16.mxu0 0
      %7383 = vmatpush2.bf16.msra.mxu0 0
      %7384 = vmatprep.subr.bf16.mxu0 0
      %7385 = vmatpush2.bf16.msra.mxu0 0
      %7386 = vmatprep.subr.bf16.mxu0 0
      %7387 = vmatpush2.bf16.msra.mxu0 0
      %7388 = vmatprep.subr.bf16.mxu0 0
      %7389 = vmatpush2.bf16.msra.mxu0 0
      %7390 = vmatprep.subr.bf16.mxu0 0
      %7391 = vmatpush2.bf16.msra.mxu0 0
      %7392 = vmatprep.subr.bf16.mxu0 0
      %7393 = vmatpush2.bf16.msra.mxu0 0
      %7394 = vmatprep.subr.bf16.mxu0 0
      %7395 = vmatpush2.bf16.msra.mxu0 0
      %7396 = vmatprep.subr.bf16.mxu0 0
      %7397 = vmatpush2.bf16.msra.mxu0 0
      %7398 = vmatprep.mubr.bf16.mxu0 0
      %7399 = vmatmul.mubr.bf16.gmra.mxu0 %v7287
      %v7400 = vpop.f32.mrf.mxu0
      %v7401 = vadd.f32 0.0, %v7400
      %v7402 = vpop.f32.mrf.mxu0
      %v7403 = vpop.f32.mrf.mxu0
      %v7404 = vadd.f32 0.0, %v7403
      %v7405 = vpop.f32.mrf.mxu0
      %7406 = vdwg.mxu0
      %s7407 = scalar_lea.vmem %s19, 8
      %v7408 = vld [vmem:[%s7407] sm:$0xf]
      %v7409 = vld [vmem:[%s7407 + $0x4] sm:$0xf]
      %v7410 = vpack.c.bf16 %v7404, %v7401
      %v7413 = vunpack.c.l.b16 %v7408
      %v7414 = vunpack.c.l.b16 %v7409
      %v7415 = vpack.c.b16 %v7414, %v7413
      %vm7416 = vcmask 130048
      %v7418 = vsel %vm7416, %v7415, 0
      %7420 = vmatprep.subr.bf16.mxu0 0
      %7421 = vmatpush1.bf16.msra.mxu0 0
      %7422 = vmatprep.subr.bf16.mxu0 0
      %7423 = vmatpush1.bf16.msra.mxu0 0
      %7424 = vmatprep.subr.bf16.mxu0 0
      %7425 = vmatpush1.bf16.msra.mxu0 0
      %7426 = vmatprep.subr.bf16.mxu0 0
      %7427 = vmatpush1.bf16.msra.mxu0 0
      %7428 = vmatprep.subr.bf16.mxu0 0
      %7429 = vmatpush1.bf16.msra.mxu0 0
      %7430 = vmatprep.subr.bf16.mxu0 0
      %7431 = vmatpush1.bf16.msra.mxu0 0
      %7432 = vmatprep.subr.bf16.mxu0 0
      %7433 = vmatpush1.bf16.msra.mxu0 0
      %7434 = vmatprep.subr.bf16.mxu0 0
      %7435 = vmatpush1.bf16.msra.mxu0 %v7410
      %7436 = vmatprep.subr.bf16.mxu0 0
      %7437 = vmatpush2.bf16.msra.mxu0 0
      %7438 = vmatprep.subr.bf16.mxu0 0
      %7439 = vmatpush2.bf16.msra.mxu0 0
      %7440 = vmatprep.subr.bf16.mxu0 0
      %7441 = vmatpush2.bf16.msra.mxu0 0
      %7442 = vmatprep.subr.bf16.mxu0 0
      %7443 = vmatpush2.bf16.msra.mxu0 0
      %7444 = vmatprep.subr.bf16.mxu0 0
      %7445 = vmatpush2.bf16.msra.mxu0 0
      %7446 = vmatprep.subr.bf16.mxu0 0
      %7447 = vmatpush2.bf16.msra.mxu0 0
      %7448 = vmatprep.subr.bf16.mxu0 0
      %7449 = vmatpush2.bf16.msra.mxu0 0
      %7450 = vmatprep.subr.bf16.mxu0 0
      %7451 = vmatpush2.bf16.msra.mxu0 0
      %7452 = vmatprep.mubr.bf16.mxu0 0
      %7453 = vmatmul.mubr.bf16.gmra.mxu0 %v7418
      %v7454 = vpop.f32.mrf.mxu0
      %v7455 = vadd.f32 0.0, %v7454
      %v7456 = vpop.f32.mrf.mxu0
      %v7457 = vpop.f32.mrf.mxu0
      %v7458 = vadd.f32 0.0, %v7457
      %v7459 = vpop.f32.mrf.mxu0
      %7460 = vdwg.mxu0
      %v7463 = vunpack.c.l.b16 %v7330
      %v7464 = vunpack.c.l.b16 %v7331
      %v7465 = vpack.c.b16 %v7464, %v7463
      %v7467 = vsel %vm7416, %v7465, 0
      %7469 = vmatprep.subr.bf16.mxu0 0
      %7470 = vmatpush1.bf16.msra.mxu0 0
      %7471 = vmatprep.subr.bf16.mxu0 0
      %7472 = vmatpush1.bf16.msra.mxu0 0
      %7473 = vmatprep.subr.bf16.mxu0 0
      %7474 = vmatpush1.bf16.msra.mxu0 0
      %7475 = vmatprep.subr.bf16.mxu0 0
      %7476 = vmatpush1.bf16.msra.mxu0 0
      %7477 = vmatprep.subr.bf16.mxu0 0
      %7478 = vmatpush1.bf16.msra.mxu0 0
      %7479 = vmatprep.subr.bf16.mxu0 0
      %7480 = vmatpush1.bf16.msra.mxu0 0
      %7481 = vmatprep.subr.bf16.mxu0 0
      %7482 = vmatpush1.bf16.msra.mxu0 0
      %7483 = vmatprep.subr.bf16.mxu0 0
      %7484 = vmatpush1.bf16.msra.mxu0 %v7332
      %7485 = vmatprep.subr.bf16.mxu0 0
      %7486 = vmatpush2.bf16.msra.mxu0 0
      %7487 = vmatprep.subr.bf16.mxu0 0
      %7488 = vmatpush2.bf16.msra.mxu0 0
      %7489 = vmatprep.subr.bf16.mxu0 0
      %7490 = vmatpush2.bf16.msra.mxu0 0
      %7491 = vmatprep.subr.bf16.mxu0 0
      %7492 = vmatpush2.bf16.msra.mxu0 0
      %7493 = vmatprep.subr.bf16.mxu0 0
      %7494 = vmatpush2.bf16.msra.mxu0 0
      %7495 = vmatprep.subr.bf16.mxu0 0
      %7496 = vmatpush2.bf16.msra.mxu0 0
      %7497 = vmatprep.subr.bf16.mxu0 0
      %7498 = vmatpush2.bf16.msra.mxu0 0
      %7499 = vmatprep.subr.bf16.mxu0 0
      %7500 = vmatpush2.bf16.msra.mxu0 0
      %7501 = vmatprep.mubr.bf16.mxu0 0
      %7502 = vmatmul.mubr.bf16.gmra.mxu0 %v7467
      %v7503 = vpop.f32.mrf.mxu0
      %v7504 = vadd.f32 %v7455, %v7503
      %v7505 = vpop.f32.mrf.mxu0
      %v7506 = vpop.f32.mrf.mxu0
      %v7507 = vadd.f32 %v7458, %v7506
      %v7508 = vpop.f32.mrf.mxu0
      %7509 = vdwg.mxu0
      %s7510 = scalar_lea.vmem %s3, 64
      %v7511 = vld [vmem:[%s7510] sm:$0xf]
      %v7512 = vld [vmem:[%s7510 + $0x4] sm:$0xf]
      %v7513 = vld [vmem:[%s7510 + $0x8] sm:$0xf]
      %v7514 = vld [vmem:[%s7510 + $0xc] sm:$0xf]
      %v7515 = vld [vmem:[%s7510 + $0x10] sm:$0xf]
      %v7516 = vld [vmem:[%s7510 + $0x14] sm:$0xf]
      %v7517 = vld [vmem:[%s7510 + $0x18] sm:$0xf]
      %v7518 = vld [vmem:[%s7510 + $0x1c] sm:$0xf]
      %v7527 = vunpack.c.l.b16 %v7511
      %v7528 = vunpack.c.l.b16 %v7512
      %v7529 = vunpack.c.l.b16 %v7513
      %v7530 = vunpack.c.l.b16 %v7514
      %v7531 = vunpack.c.l.b16 %v7515
      %v7532 = vunpack.c.l.b16 %v7516
      %v7533 = vunpack.c.l.b16 %v7517
      %v7534 = vunpack.c.l.b16 %v7518
      %v7535 = vpack.c.b16 %v7528, %v7527
      %v7536 = vpack.c.b16 %v7530, %v7529
      %v7537 = vpack.c.b16 %v7532, %v7531
      %v7538 = vpack.c.b16 %v7534, %v7533
      %7543 = vmatprep.subr.bf16.mxu0 0
      %7544 = vmatpush1.bf16.msra.mxu0 0
      %7545 = vmatprep.subr.bf16.mxu0 0
      %7546 = vmatpush1.bf16.msra.mxu0 0
      %7547 = vmatprep.subr.bf16.mxu0 0
      %7548 = vmatpush1.bf16.msra.mxu0 0
      %7549 = vmatprep.subr.bf16.mxu0 0
      %7550 = vmatpush1.bf16.msra.mxu0 0
      %7551 = vmatprep.subr.bf16.mxu0 0
      %7552 = vmatpush1.bf16.msra.mxu0 %v7538
      %7553 = vmatprep.subr.bf16.mxu0 0
      %7554 = vmatpush1.bf16.msra.mxu0 %v7537
      %7555 = vmatprep.subr.bf16.mxu0 0
      %7556 = vmatpush1.bf16.msra.mxu0 %v7536
      %7557 = vmatprep.subr.bf16.mxu0 0
      %7558 = vmatpush1.bf16.msra.mxu0 %v7535
      %7559 = vmatprep.subr.bf16.mxu0 0
      %7560 = vmatpush2.bf16.msra.mxu0 0
      %7561 = vmatprep.subr.bf16.mxu0 0
      %7562 = vmatpush2.bf16.msra.mxu0 0
      %7563 = vmatprep.subr.bf16.mxu0 0
      %7564 = vmatpush2.bf16.msra.mxu0 0
      %7565 = vmatprep.subr.bf16.mxu0 0
      %7566 = vmatpush2.bf16.msra.mxu0 0
      %7567 = vmatprep.subr.bf16.mxu0 0
      %7568 = vmatpush2.bf16.msra.mxu0 0
      %7569 = vmatprep.subr.bf16.mxu0 0
      %7570 = vmatpush2.bf16.msra.mxu0 0
      %7571 = vmatprep.subr.bf16.mxu0 0
      %7572 = vmatpush2.bf16.msra.mxu0 0
      %7573 = vmatprep.subr.bf16.mxu0 0
      %7574 = vmatpush2.bf16.msra.mxu0 0
      %7575 = vmatprep.mubr.bf16.mxu0 0
      %7576 = vmatmul.mubr.bf16.gmra.mxu0 %v7287
      %v7577 = vpop.f32.mrf.mxu0
      %v7578 = vadd.f32 0.0, %v7577
      %v7579 = vpop.f32.mrf.mxu0
      %v7580 = vpop.f32.mrf.mxu0
      %v7581 = vadd.f32 0.0, %v7580
      %v7582 = vpop.f32.mrf.mxu0
      %7583 = vdwg.mxu0
      %s7584 = scalar_lea.vmem %s19, 16
      %v7585 = vld [vmem:[%s7584] sm:$0xf]
      %v7586 = vld [vmem:[%s7584 + $0x4] sm:$0xf]
      %v7587 = vpack.c.bf16 %v7581, %v7578
      %v7590 = vunpack.c.l.b16 %v7585
      %v7591 = vunpack.c.l.b16 %v7586
      %v7592 = vpack.c.b16 %v7591, %v7590
      %v7594 = vsel %vm7416, %v7592, 0
      %7596 = vmatprep.subr.bf16.mxu0 0
      %7597 = vmatpush1.bf16.msra.mxu0 0
      %7598 = vmatprep.subr.bf16.mxu0 0
      %7599 = vmatpush1.bf16.msra.mxu0 0
      %7600 = vmatprep.subr.bf16.mxu0 0
      %7601 = vmatpush1.bf16.msra.mxu0 0
      %7602 = vmatprep.subr.bf16.mxu0 0
      %7603 = vmatpush1.bf16.msra.mxu0 0
      %7604 = vmatprep.subr.bf16.mxu0 0
      %7605 = vmatpush1.bf16.msra.mxu0 0
      %7606 = vmatprep.subr.bf16.mxu0 0
      %7607 = vmatpush1.bf16.msra.mxu0 0
      %7608 = vmatprep.subr.bf16.mxu0 0
      %7609 = vmatpush1.bf16.msra.mxu0 0
      %7610 = vmatprep.subr.bf16.mxu0 0
      %7611 = vmatpush1.bf16.msra.mxu0 %v7587
      %7612 = vmatprep.subr.bf16.mxu0 0
      %7613 = vmatpush2.bf16.msra.mxu0 0
      %7614 = vmatprep.subr.bf16.mxu0 0
      %7615 = vmatpush2.bf16.msra.mxu0 0
      %7616 = vmatprep.subr.bf16.mxu0 0
      %7617 = vmatpush2.bf16.msra.mxu0 0
      %7618 = vmatprep.subr.bf16.mxu0 0
      %7619 = vmatpush2.bf16.msra.mxu0 0
      %7620 = vmatprep.subr.bf16.mxu0 0
      %7621 = vmatpush2.bf16.msra.mxu0 0
      %7622 = vmatprep.subr.bf16.mxu0 0
      %7623 = vmatpush2.bf16.msra.mxu0 0
      %7624 = vmatprep.subr.bf16.mxu0 0
      %7625 = vmatpush2.bf16.msra.mxu0 0
      %7626 = vmatprep.subr.bf16.mxu0 0
      %7627 = vmatpush2.bf16.msra.mxu0 0
      %7628 = vmatprep.mubr.bf16.mxu0 0
      %7629 = vmatmul.mubr.bf16.gmra.mxu0 %v7594
      %v7630 = vpop.f32.mrf.mxu0
      %v7631 = vadd.f32 0.0, %v7630
      %v7632 = vpop.f32.mrf.mxu0
      %v7633 = vpop.f32.mrf.mxu0
      %v7634 = vadd.f32 0.0, %v7633
      %v7635 = vpop.f32.mrf.mxu0
      %7636 = vdwg.mxu0
      %v7637 = vadd.f32 %v7504, %v7631
      %v7638 = vadd.f32 %v7507, %v7634
      %s7639 = scalar_lea.vmem %s3, 96
      %v7640 = vld [vmem:[%s7639] sm:$0xf]
      %v7641 = vld [vmem:[%s7639 + $0x4] sm:$0xf]
      %v7642 = vld [vmem:[%s7639 + $0x8] sm:$0xf]
      %v7643 = vld [vmem:[%s7639 + $0xc] sm:$0xf]
      %v7644 = vld [vmem:[%s7639 + $0x10] sm:$0xf]
      %v7645 = vld [vmem:[%s7639 + $0x14] sm:$0xf]
      %v7646 = vld [vmem:[%s7639 + $0x18] sm:$0xf]
      %v7647 = vld [vmem:[%s7639 + $0x1c] sm:$0xf]
      %v7656 = vunpack.c.l.b16 %v7640
      %v7657 = vunpack.c.l.b16 %v7641
      %v7658 = vunpack.c.l.b16 %v7642
      %v7659 = vunpack.c.l.b16 %v7643
      %v7660 = vunpack.c.l.b16 %v7644
      %v7661 = vunpack.c.l.b16 %v7645
      %v7662 = vunpack.c.l.b16 %v7646
      %v7663 = vunpack.c.l.b16 %v7647
      %v7664 = vpack.c.b16 %v7657, %v7656
      %v7665 = vpack.c.b16 %v7659, %v7658
      %v7666 = vpack.c.b16 %v7661, %v7660
      %v7667 = vpack.c.b16 %v7663, %v7662
      %7672 = vmatprep.subr.bf16.mxu0 0
      %7673 = vmatpush1.bf16.msra.mxu0 0
      %7674 = vmatprep.subr.bf16.mxu0 0
      %7675 = vmatpush1.bf16.msra.mxu0 0
      %7676 = vmatprep.subr.bf16.mxu0 0
      %7677 = vmatpush1.bf16.msra.mxu0 0
      %7678 = vmatprep.subr.bf16.mxu0 0
      %7679 = vmatpush1.bf16.msra.mxu0 0
      %7680 = vmatprep.subr.bf16.mxu0 0
      %7681 = vmatpush1.bf16.msra.mxu0 %v7667
      %7682 = vmatprep.subr.bf16.mxu0 0
      %7683 = vmatpush1.bf16.msra.mxu0 %v7666
      %7684 = vmatprep.subr.bf16.mxu0 0
      %7685 = vmatpush1.bf16.msra.mxu0 %v7665
      %7686 = vmatprep.subr.bf16.mxu0 0
      %7687 = vmatpush1.bf16.msra.mxu0 %v7664
      %7688 = vmatprep.subr.bf16.mxu0 0
      %7689 = vmatpush2.bf16.msra.mxu0 0
      %7690 = vmatprep.subr.bf16.mxu0 0
      %7691 = vmatpush2.bf16.msra.mxu0 0
      %7692 = vmatprep.subr.bf16.mxu0 0
      %7693 = vmatpush2.bf16.msra.mxu0 0
      %7694 = vmatprep.subr.bf16.mxu0 0
      %7695 = vmatpush2.bf16.msra.mxu0 0
      %7696 = vmatprep.subr.bf16.mxu0 0
      %7697 = vmatpush2.bf16.msra.mxu0 0
      %7698 = vmatprep.subr.bf16.mxu0 0
      %7699 = vmatpush2.bf16.msra.mxu0 0
      %7700 = vmatprep.subr.bf16.mxu0 0
      %7701 = vmatpush2.bf16.msra.mxu0 0
      %7702 = vmatprep.subr.bf16.mxu0 0
      %7703 = vmatpush2.bf16.msra.mxu0 0
      %7704 = vmatprep.mubr.bf16.mxu0 0
      %7705 = vmatmul.mubr.bf16.gmra.mxu0 %v7287
      %v7706 = vpop.f32.mrf.mxu0
      %v7707 = vadd.f32 0.0, %v7706
      %v7708 = vpop.f32.mrf.mxu0
      %v7709 = vpop.f32.mrf.mxu0
      %v7710 = vadd.f32 0.0, %v7709
      %v7711 = vpop.f32.mrf.mxu0
      %7712 = vdwg.mxu0
      %s7713 = scalar_lea.vmem %s19, 24
      %v7714 = vld [vmem:[%s7713] sm:$0xf]
      %v7715 = vld [vmem:[%s7713 + $0x4] sm:$0xf]
      %v7716 = vpack.c.bf16 %v7710, %v7707
      %v7719 = vunpack.c.l.b16 %v7714
      %v7720 = vunpack.c.l.b16 %v7715
      %v7721 = vpack.c.b16 %v7720, %v7719
      %v7723 = vsel %vm7416, %v7721, 0
      %7725 = vmatprep.subr.bf16.mxu0 0
      %7726 = vmatpush1.bf16.msra.mxu0 0
      %7727 = vmatprep.subr.bf16.mxu0 0
      %7728 = vmatpush1.bf16.msra.mxu0 0
      %7729 = vmatprep.subr.bf16.mxu0 0
      %7730 = vmatpush1.bf16.msra.mxu0 0
      %7731 = vmatprep.subr.bf16.mxu0 0
      %7732 = vmatpush1.bf16.msra.mxu0 0
      %7733 = vmatprep.subr.bf16.mxu0 0
      %7734 = vmatpush1.bf16.msra.mxu0 0
      %7735 = vmatprep.subr.bf16.mxu0 0
      %7736 = vmatpush1.bf16.msra.mxu0 0
      %7737 = vmatprep.subr.bf16.mxu0 0
      %7738 = vmatpush1.bf16.msra.mxu0 0
      %7739 = vmatprep.subr.bf16.mxu0 0
      %7740 = vmatpush1.bf16.msra.mxu0 %v7716
      %7741 = vmatprep.subr.bf16.mxu0 0
      %7742 = vmatpush2.bf16.msra.mxu0 0
      %7743 = vmatprep.subr.bf16.mxu0 0
      %7744 = vmatpush2.bf16.msra.mxu0 0
      %7745 = vmatprep.subr.bf16.mxu0 0
      %7746 = vmatpush2.bf16.msra.mxu0 0
      %7747 = vmatprep.subr.bf16.mxu0 0
      %7748 = vmatpush2.bf16.msra.mxu0 0
      %7749 = vmatprep.subr.bf16.mxu0 0
      %7750 = vmatpush2.bf16.msra.mxu0 0
      %7751 = vmatprep.subr.bf16.mxu0 0
      %7752 = vmatpush2.bf16.msra.mxu0 0
      %7753 = vmatprep.subr.bf16.mxu0 0
      %7754 = vmatpush2.bf16.msra.mxu0 0
      %7755 = vmatprep.subr.bf16.mxu0 0
      %7756 = vmatpush2.bf16.msra.mxu0 0
      %7757 = vmatprep.mubr.bf16.mxu0 0
      %7758 = vmatmul.mubr.bf16.gmra.mxu0 %v7723
      %v7759 = vpop.f32.mrf.mxu0
      %v7760 = vadd.f32 0.0, %v7759
      %v7761 = vpop.f32.mrf.mxu0
      %v7762 = vpop.f32.mrf.mxu0
      %v7763 = vadd.f32 0.0, %v7762
      %v7764 = vpop.f32.mrf.mxu0
      %7765 = vdwg.mxu0
      %v7766 = vadd.f32 %v7637, %v7760
      %v7767 = vadd.f32 %v7638, %v7763
      %s7768 = scalar_lea.vmem %s3, 128
      %v7769 = vld [vmem:[%s7768] sm:$0xf]
      %v7770 = vld [vmem:[%s7768 + $0x4] sm:$0xf]
      %v7771 = vld [vmem:[%s7768 + $0x8] sm:$0xf]
      %v7772 = vld [vmem:[%s7768 + $0xc] sm:$0xf]
      %v7773 = vld [vmem:[%s7768 + $0x10] sm:$0xf]
      %v7774 = vld [vmem:[%s7768 + $0x14] sm:$0xf]
      %v7775 = vld [vmem:[%s7768 + $0x18] sm:$0xf]
      %v7776 = vld [vmem:[%s7768 + $0x1c] sm:$0xf]
      %v7785 = vunpack.c.l.b16 %v7769
      %v7786 = vunpack.c.l.b16 %v7770
      %v7787 = vunpack.c.l.b16 %v7771
      %v7788 = vunpack.c.l.b16 %v7772
      %v7789 = vunpack.c.l.b16 %v7773
      %v7790 = vunpack.c.l.b16 %v7774
      %v7791 = vunpack.c.l.b16 %v7775
      %v7792 = vunpack.c.l.b16 %v7776
      %v7793 = vpack.c.b16 %v7786, %v7785
      %v7794 = vpack.c.b16 %v7788, %v7787
      %v7795 = vpack.c.b16 %v7790, %v7789
      %v7796 = vpack.c.b16 %v7792, %v7791
      %7801 = vmatprep.subr.bf16.mxu0 0
      %7802 = vmatpush1.bf16.msra.mxu0 0
      %7803 = vmatprep.subr.bf16.mxu0 0
      %7804 = vmatpush1.bf16.msra.mxu0 0
      %7805 = vmatprep.subr.bf16.mxu0 0
      %7806 = vmatpush1.bf16.msra.mxu0 0
      %7807 = vmatprep.subr.bf16.mxu0 0
      %7808 = vmatpush1.bf16.msra.mxu0 0
      %7809 = vmatprep.subr.bf16.mxu0 0
      %7810 = vmatpush1.bf16.msra.mxu0 %v7796
      %7811 = vmatprep.subr.bf16.mxu0 0
      %7812 = vmatpush1.bf16.msra.mxu0 %v7795
      %7813 = vmatprep.subr.bf16.mxu0 0
      %7814 = vmatpush1.bf16.msra.mxu0 %v7794
      %7815 = vmatprep.subr.bf16.mxu0 0
      %7816 = vmatpush1.bf16.msra.mxu0 %v7793
      %7817 = vmatprep.subr.bf16.mxu0 0
      %7818 = vmatpush2.bf16.msra.mxu0 0
      %7819 = vmatprep.subr.bf16.mxu0 0
      %7820 = vmatpush2.bf16.msra.mxu0 0
      %7821 = vmatprep.subr.bf16.mxu0 0
      %7822 = vmatpush2.bf16.msra.mxu0 0
      %7823 = vmatprep.subr.bf16.mxu0 0
      %7824 = vmatpush2.bf16.msra.mxu0 0
      %7825 = vmatprep.subr.bf16.mxu0 0
      %7826 = vmatpush2.bf16.msra.mxu0 0
      %7827 = vmatprep.subr.bf16.mxu0 0
      %7828 = vmatpush2.bf16.msra.mxu0 0
      %7829 = vmatprep.subr.bf16.mxu0 0
      %7830 = vmatpush2.bf16.msra.mxu0 0
      %7831 = vmatprep.subr.bf16.mxu0 0
      %7832 = vmatpush2.bf16.msra.mxu0 0
      %7833 = vmatprep.mubr.bf16.mxu0 0
      %7834 = vmatmul.mubr.bf16.gmra.mxu0 %v7287
      %v7835 = vpop.f32.mrf.mxu0
      %v7836 = vadd.f32 0.0, %v7835
      %v7837 = vpop.f32.mrf.mxu0
      %v7838 = vpop.f32.mrf.mxu0
      %v7839 = vadd.f32 0.0, %v7838
      %v7840 = vpop.f32.mrf.mxu0
      %7841 = vdwg.mxu0
      %s7842 = scalar_lea.vmem %s19, 32
      %v7843 = vld [vmem:[%s7842] sm:$0xf]
      %v7844 = vld [vmem:[%s7842 + $0x4] sm:$0xf]
      %v7845 = vpack.c.bf16 %v7839, %v7836
      %v7848 = vunpack.c.l.b16 %v7843
      %v7849 = vunpack.c.l.b16 %v7844
      %v7850 = vpack.c.b16 %v7849, %v7848
      %v7852 = vsel %vm7416, %v7850, 0
      %7854 = vmatprep.subr.bf16.mxu0 0
      %7855 = vmatpush1.bf16.msra.mxu0 0
      %7856 = vmatprep.subr.bf16.mxu0 0
      %7857 = vmatpush1.bf16.msra.mxu0 0
      %7858 = vmatprep.subr.bf16.mxu0 0
      %7859 = vmatpush1.bf16.msra.mxu0 0
      %7860 = vmatprep.subr.bf16.mxu0 0
      %7861 = vmatpush1.bf16.msra.mxu0 0
      %7862 = vmatprep.subr.bf16.mxu0 0
      %7863 = vmatpush1.bf16.msra.mxu0 0
      %7864 = vmatprep.subr.bf16.mxu0 0
      %7865 = vmatpush1.bf16.msra.mxu0 0
      %7866 = vmatprep.subr.bf16.mxu0 0
      %7867 = vmatpush1.bf16.msra.mxu0 0
      %7868 = vmatprep.subr.bf16.mxu0 0
      %7869 = vmatpush1.bf16.msra.mxu0 %v7845
      %7870 = vmatprep.subr.bf16.mxu0 0
      %7871 = vmatpush2.bf16.msra.mxu0 0
      %7872 = vmatprep.subr.bf16.mxu0 0
      %7873 = vmatpush2.bf16.msra.mxu0 0
      %7874 = vmatprep.subr.bf16.mxu0 0
      %7875 = vmatpush2.bf16.msra.mxu0 0
      %7876 = vmatprep.subr.bf16.mxu0 0
      %7877 = vmatpush2.bf16.msra.mxu0 0
      %7878 = vmatprep.subr.bf16.mxu0 0
      %7879 = vmatpush2.bf16.msra.mxu0 0
      %7880 = vmatprep.subr.bf16.mxu0 0
      %7881 = vmatpush2.bf16.msra.mxu0 0
      %7882 = vmatprep.subr.bf16.mxu0 0
      %7883 = vmatpush2.bf16.msra.mxu0 0
      %7884 = vmatprep.subr.bf16.mxu0 0
      %7885 = vmatpush2.bf16.msra.mxu0 0
      %7886 = vmatprep.mubr.bf16.mxu0 0
      %7887 = vmatmul.mubr.bf16.gmra.mxu0 %v7852
      %v7888 = vpop.f32.mrf.mxu0
      %v7889 = vadd.f32 0.0, %v7888
      %v7890 = vpop.f32.mrf.mxu0
      %v7891 = vpop.f32.mrf.mxu0
      %v7892 = vadd.f32 0.0, %v7891
      %v7893 = vpop.f32.mrf.mxu0
      %7894 = vdwg.mxu0
      %v7895 = vadd.f32 %v7766, %v7889
      %v7896 = vadd.f32 %v7767, %v7892
      %s7897 = scalar_lea.vmem %s3, 160
      %v7898 = vld [vmem:[%s7897] sm:$0xf]
      %v7899 = vld [vmem:[%s7897 + $0x4] sm:$0xf]
      %v7900 = vld [vmem:[%s7897 + $0x8] sm:$0xf]
      %v7901 = vld [vmem:[%s7897 + $0xc] sm:$0xf]
      %v7902 = vld [vmem:[%s7897 + $0x10] sm:$0xf]
      %v7903 = vld [vmem:[%s7897 + $0x14] sm:$0xf]
      %v7904 = vld [vmem:[%s7897 + $0x18] sm:$0xf]
      %v7905 = vld [vmem:[%s7897 + $0x1c] sm:$0xf]
      %v7914 = vunpack.c.l.b16 %v7898
      %v7915 = vunpack.c.l.b16 %v7899
      %v7916 = vunpack.c.l.b16 %v7900
      %v7917 = vunpack.c.l.b16 %v7901
      %v7918 = vunpack.c.l.b16 %v7902
      %v7919 = vunpack.c.l.b16 %v7903
      %v7920 = vunpack.c.l.b16 %v7904
      %v7921 = vunpack.c.l.b16 %v7905
      %v7922 = vpack.c.b16 %v7915, %v7914
      %v7923 = vpack.c.b16 %v7917, %v7916
      %v7924 = vpack.c.b16 %v7919, %v7918
      %v7925 = vpack.c.b16 %v7921, %v7920
      %7930 = vmatprep.subr.bf16.mxu0 0
      %7931 = vmatpush1.bf16.msra.mxu0 0
      %7932 = vmatprep.subr.bf16.mxu0 0
      %7933 = vmatpush1.bf16.msra.mxu0 0
      %7934 = vmatprep.subr.bf16.mxu0 0
      %7935 = vmatpush1.bf16.msra.mxu0 0
      %7936 = vmatprep.subr.bf16.mxu0 0
      %7937 = vmatpush1.bf16.msra.mxu0 0
      %7938 = vmatprep.subr.bf16.mxu0 0
      %7939 = vmatpush1.bf16.msra.mxu0 %v7925
      %7940 = vmatprep.subr.bf16.mxu0 0
      %7941 = vmatpush1.bf16.msra.mxu0 %v7924
      %7942 = vmatprep.subr.bf16.mxu0 0
      %7943 = vmatpush1.bf16.msra.mxu0 %v7923
      %7944 = vmatprep.subr.bf16.mxu0 0
      %7945 = vmatpush1.bf16.msra.mxu0 %v7922
      %7946 = vmatprep.subr.bf16.mxu0 0
      %7947 = vmatpush2.bf16.msra.mxu0 0
      %7948 = vmatprep.subr.bf16.mxu0 0
      %7949 = vmatpush2.bf16.msra.mxu0 0
      %7950 = vmatprep.subr.bf16.mxu0 0
      %7951 = vmatpush2.bf16.msra.mxu0 0
      %7952 = vmatprep.subr.bf16.mxu0 0
      %7953 = vmatpush2.bf16.msra.mxu0 0
      %7954 = vmatprep.subr.bf16.mxu0 0
      %7955 = vmatpush2.bf16.msra.mxu0 0
      %7956 = vmatprep.subr.bf16.mxu0 0
      %7957 = vmatpush2.bf16.msra.mxu0 0
      %7958 = vmatprep.subr.bf16.mxu0 0
      %7959 = vmatpush2.bf16.msra.mxu0 0
      %7960 = vmatprep.subr.bf16.mxu0 0
      %7961 = vmatpush2.bf16.msra.mxu0 0
      %7962 = vmatprep.mubr.bf16.mxu0 0
      %7963 = vmatmul.mubr.bf16.gmra.mxu0 %v7287
      %v7964 = vpop.f32.mrf.mxu0
      %v7965 = vadd.f32 0.0, %v7964
      %v7966 = vpop.f32.mrf.mxu0
      %v7967 = vpop.f32.mrf.mxu0
      %v7968 = vadd.f32 0.0, %v7967
      %v7969 = vpop.f32.mrf.mxu0
      %7970 = vdwg.mxu0
      %s7971 = scalar_lea.vmem %s19, 40
      %v7972 = vld [vmem:[%s7971] sm:$0xf]
      %v7973 = vld [vmem:[%s7971 + $0x4] sm:$0xf]
      %v7974 = vpack.c.bf16 %v7968, %v7965
      %v7977 = vunpack.c.l.b16 %v7972
      %v7978 = vunpack.c.l.b16 %v7973
      %v7979 = vpack.c.b16 %v7978, %v7977
      %v7981 = vsel %vm7416, %v7979, 0
      %7983 = vmatprep.subr.bf16.mxu0 0
      %7984 = vmatpush1.bf16.msra.mxu0 0
      %7985 = vmatprep.subr.bf16.mxu0 0
      %7986 = vmatpush1.bf16.msra.mxu0 0
      %7987 = vmatprep.subr.bf16.mxu0 0
      %7988 = vmatpush1.bf16.msra.mxu0 0
      %7989 = vmatprep.subr.bf16.mxu0 0
      %7990 = vmatpush1.bf16.msra.mxu0 0
      %7991 = vmatprep.subr.bf16.mxu0 0
      %7992 = vmatpush1.bf16.msra.mxu0 0
      %7993 = vmatprep.subr.bf16.mxu0 0
      %7994 = vmatpush1.bf16.msra.mxu0 0
      %7995 = vmatprep.subr.bf16.mxu0 0
      %7996 = vmatpush1.bf16.msra.mxu0 0
      %7997 = vmatprep.subr.bf16.mxu0 0
      %7998 = vmatpush1.bf16.msra.mxu0 %v7974
      %7999 = vmatprep.subr.bf16.mxu0 0
      %8000 = vmatpush2.bf16.msra.mxu0 0
      %8001 = vmatprep.subr.bf16.mxu0 0
      %8002 = vmatpush2.bf16.msra.mxu0 0
      %8003 = vmatprep.subr.bf16.mxu0 0
      %8004 = vmatpush2.bf16.msra.mxu0 0
      %8005 = vmatprep.subr.bf16.mxu0 0
      %8006 = vmatpush2.bf16.msra.mxu0 0
      %8007 = vmatprep.subr.bf16.mxu0 0
      %8008 = vmatpush2.bf16.msra.mxu0 0
      %8009 = vmatprep.subr.bf16.mxu0 0
      %8010 = vmatpush2.bf16.msra.mxu0 0
      %8011 = vmatprep.subr.bf16.mxu0 0
      %8012 = vmatpush2.bf16.msra.mxu0 0
      %8013 = vmatprep.subr.bf16.mxu0 0
      %8014 = vmatpush2.bf16.msra.mxu0 0
      %8015 = vmatprep.mubr.bf16.mxu0 0
      %8016 = vmatmul.mubr.bf16.gmra.mxu0 %v7981
      %v8017 = vpop.f32.mrf.mxu0
      %v8018 = vadd.f32 0.0, %v8017
      %v8019 = vpop.f32.mrf.mxu0
      %v8020 = vpop.f32.mrf.mxu0
      %v8021 = vadd.f32 0.0, %v8020
      %v8022 = vpop.f32.mrf.mxu0
      %8023 = vdwg.mxu0
      %v8024 = vadd.f32 %v7895, %v8018
      %v8025 = vadd.f32 %v7896, %v8021
      %s8026 = scalar_lea.vmem %s3, 192
      %v8027 = vld [vmem:[%s8026] sm:$0xf]
      %v8028 = vld [vmem:[%s8026 + $0x4] sm:$0xf]
      %v8029 = vld [vmem:[%s8026 + $0x8] sm:$0xf]
      %v8030 = vld [vmem:[%s8026 + $0xc] sm:$0xf]
      %v8031 = vld [vmem:[%s8026 + $0x10] sm:$0xf]
      %v8032 = vld [vmem:[%s8026 + $0x14] sm:$0xf]
      %v8033 = vld [vmem:[%s8026 + $0x18] sm:$0xf]
      %v8034 = vld [vmem:[%s8026 + $0x1c] sm:$0xf]
      %v8043 = vunpack.c.l.b16 %v8027
      %v8044 = vunpack.c.l.b16 %v8028
      %v8045 = vunpack.c.l.b16 %v8029
      %v8046 = vunpack.c.l.b16 %v8030
      %v8047 = vunpack.c.l.b16 %v8031
      %v8048 = vunpack.c.l.b16 %v8032
      %v8049 = vunpack.c.l.b16 %v8033
      %v8050 = vunpack.c.l.b16 %v8034
      %v8051 = vpack.c.b16 %v8044, %v8043
      %v8052 = vpack.c.b16 %v8046, %v8045
      %v8053 = vpack.c.b16 %v8048, %v8047
      %v8054 = vpack.c.b16 %v8050, %v8049
      %8059 = vmatprep.subr.bf16.mxu0 0
      %8060 = vmatpush1.bf16.msra.mxu0 0
      %8061 = vmatprep.subr.bf16.mxu0 0
      %8062 = vmatpush1.bf16.msra.mxu0 0
      %8063 = vmatprep.subr.bf16.mxu0 0
      %8064 = vmatpush1.bf16.msra.mxu0 0
      %8065 = vmatprep.subr.bf16.mxu0 0
      %8066 = vmatpush1.bf16.msra.mxu0 0
      %8067 = vmatprep.subr.bf16.mxu0 0
      %8068 = vmatpush1.bf16.msra.mxu0 %v8054
      %8069 = vmatprep.subr.bf16.mxu0 0
      %8070 = vmatpush1.bf16.msra.mxu0 %v8053
      %8071 = vmatprep.subr.bf16.mxu0 0
      %8072 = vmatpush1.bf16.msra.mxu0 %v8052
      %8073 = vmatprep.subr.bf16.mxu0 0
      %8074 = vmatpush1.bf16.msra.mxu0 %v8051
      %8075 = vmatprep.subr.bf16.mxu0 0
      %8076 = vmatpush2.bf16.msra.mxu0 0
      %8077 = vmatprep.subr.bf16.mxu0 0
      %8078 = vmatpush2.bf16.msra.mxu0 0
      %8079 = vmatprep.subr.bf16.mxu0 0
      %8080 = vmatpush2.bf16.msra.mxu0 0
      %8081 = vmatprep.subr.bf16.mxu0 0
      %8082 = vmatpush2.bf16.msra.mxu0 0
      %8083 = vmatprep.subr.bf16.mxu0 0
      %8084 = vmatpush2.bf16.msra.mxu0 0
      %8085 = vmatprep.subr.bf16.mxu0 0
      %8086 = vmatpush2.bf16.msra.mxu0 0
      %8087 = vmatprep.subr.bf16.mxu0 0
      %8088 = vmatpush2.bf16.msra.mxu0 0
      %8089 = vmatprep.subr.bf16.mxu0 0
      %8090 = vmatpush2.bf16.msra.mxu0 0
      %8091 = vmatprep.mubr.bf16.mxu0 0
      %8092 = vmatmul.mubr.bf16.gmra.mxu0 %v7287
      %v8093 = vpop.f32.mrf.mxu0
      %v8094 = vadd.f32 0.0, %v8093
      %v8095 = vpop.f32.mrf.mxu0
      %v8096 = vpop.f32.mrf.mxu0
      %v8097 = vadd.f32 0.0, %v8096
      %v8098 = vpop.f32.mrf.mxu0
      %8099 = vdwg.mxu0
      %s8100 = scalar_lea.vmem %s19, 48
      %v8101 = vld [vmem:[%s8100] sm:$0xf]
      %v8102 = vld [vmem:[%s8100 + $0x4] sm:$0xf]
      %v8103 = vpack.c.bf16 %v8097, %v8094
      %v8106 = vunpack.c.l.b16 %v8101
      %v8107 = vunpack.c.l.b16 %v8102
      %v8108 = vpack.c.b16 %v8107, %v8106
      %v8110 = vsel %vm7416, %v8108, 0
      %8112 = vmatprep.subr.bf16.mxu0 0
      %8113 = vmatpush1.bf16.msra.mxu0 0
      %8114 = vmatprep.subr.bf16.mxu0 0
      %8115 = vmatpush1.bf16.msra.mxu0 0
      %8116 = vmatprep.subr.bf16.mxu0 0
      %8117 = vmatpush1.bf16.msra.mxu0 0
      %8118 = vmatprep.subr.bf16.mxu0 0
      %8119 = vmatpush1.bf16.msra.mxu0 0
      %8120 = vmatprep.subr.bf16.mxu0 0
      %8121 = vmatpush1.bf16.msra.mxu0 0
      %8122 = vmatprep.subr.bf16.mxu0 0
      %8123 = vmatpush1.bf16.msra.mxu0 0
      %8124 = vmatprep.subr.bf16.mxu0 0
      %8125 = vmatpush1.bf16.msra.mxu0 0
      %8126 = vmatprep.subr.bf16.mxu0 0
      %8127 = vmatpush1.bf16.msra.mxu0 %v8103
      %8128 = vmatprep.subr.bf16.mxu0 0
      %8129 = vmatpush2.bf16.msra.mxu0 0
      %8130 = vmatprep.subr.bf16.mxu0 0
      %8131 = vmatpush2.bf16.msra.mxu0 0
      %8132 = vmatprep.subr.bf16.mxu0 0
      %8133 = vmatpush2.bf16.msra.mxu0 0
      %8134 = vmatprep.subr.bf16.mxu0 0
      %8135 = vmatpush2.bf16.msra.mxu0 0
      %8136 = vmatprep.subr.bf16.mxu0 0
      %8137 = vmatpush2.bf16.msra.mxu0 0
      %8138 = vmatprep.subr.bf16.mxu0 0
      %8139 = vmatpush2.bf16.msra.mxu0 0
      %8140 = vmatprep.subr.bf16.mxu0 0
      %8141 = vmatpush2.bf16.msra.mxu0 0
      %8142 = vmatprep.subr.bf16.mxu0 0
      %8143 = vmatpush2.bf16.msra.mxu0 0
      %8144 = vmatprep.mubr.bf16.mxu0 0
      %8145 = vmatmul.mubr.bf16.gmra.mxu0 %v8110
      %v8146 = vpop.f32.mrf.mxu0
      %v8147 = vadd.f32 0.0, %v8146
      %v8148 = vpop.f32.mrf.mxu0
      %v8149 = vpop.f32.mrf.mxu0
      %v8150 = vadd.f32 0.0, %v8149
      %v8151 = vpop.f32.mrf.mxu0
      %8152 = vdwg.mxu0
      %v8153 = vadd.f32 %v8024, %v8147
      %v8154 = vadd.f32 %v8025, %v8150
      %s8155 = scalar_lea.vmem %s3, 224
      %v8156 = vld [vmem:[%s8155] sm:$0xf]
      %v8157 = vld [vmem:[%s8155 + $0x4] sm:$0xf]
      %v8158 = vld [vmem:[%s8155 + $0x8] sm:$0xf]
      %v8159 = vld [vmem:[%s8155 + $0xc] sm:$0xf]
      %v8160 = vld [vmem:[%s8155 + $0x10] sm:$0xf]
      %v8161 = vld [vmem:[%s8155 + $0x14] sm:$0xf]
      %v8162 = vld [vmem:[%s8155 + $0x18] sm:$0xf]
      %v8163 = vld [vmem:[%s8155 + $0x1c] sm:$0xf]
      %v8172 = vunpack.c.l.b16 %v8156
      %v8173 = vunpack.c.l.b16 %v8157
      %v8174 = vunpack.c.l.b16 %v8158
      %v8175 = vunpack.c.l.b16 %v8159
      %v8176 = vunpack.c.l.b16 %v8160
      %v8177 = vunpack.c.l.b16 %v8161
      %v8178 = vunpack.c.l.b16 %v8162
      %v8179 = vunpack.c.l.b16 %v8163
      %v8180 = vpack.c.b16 %v8173, %v8172
      %v8181 = vpack.c.b16 %v8175, %v8174
      %v8182 = vpack.c.b16 %v8177, %v8176
      %v8183 = vpack.c.b16 %v8179, %v8178
      %8188 = vmatprep.subr.bf16.mxu0 0
      %8189 = vmatpush1.bf16.msra.mxu0 0
      %8190 = vmatprep.subr.bf16.mxu0 0
      %8191 = vmatpush1.bf16.msra.mxu0 0
      %8192 = vmatprep.subr.bf16.mxu0 0
      %8193 = vmatpush1.bf16.msra.mxu0 0
      %8194 = vmatprep.subr.bf16.mxu0 0
      %8195 = vmatpush1.bf16.msra.mxu0 0
      %8196 = vmatprep.subr.bf16.mxu0 0
      %8197 = vmatpush1.bf16.msra.mxu0 %v8183
      %8198 = vmatprep.subr.bf16.mxu0 0
      %8199 = vmatpush1.bf16.msra.mxu0 %v8182
      %8200 = vmatprep.subr.bf16.mxu0 0
      %8201 = vmatpush1.bf16.msra.mxu0 %v8181
      %8202 = vmatprep.subr.bf16.mxu0 0
      %8203 = vmatpush1.bf16.msra.mxu0 %v8180
      %8204 = vmatprep.subr.bf16.mxu0 0
      %8205 = vmatpush2.bf16.msra.mxu0 0
      %8206 = vmatprep.subr.bf16.mxu0 0
      %8207 = vmatpush2.bf16.msra.mxu0 0
      %8208 = vmatprep.subr.bf16.mxu0 0
      %8209 = vmatpush2.bf16.msra.mxu0 0
      %8210 = vmatprep.subr.bf16.mxu0 0
      %8211 = vmatpush2.bf16.msra.mxu0 0
      %8212 = vmatprep.subr.bf16.mxu0 0
      %8213 = vmatpush2.bf16.msra.mxu0 0
      %8214 = vmatprep.subr.bf16.mxu0 0
      %8215 = vmatpush2.bf16.msra.mxu0 0
      %8216 = vmatprep.subr.bf16.mxu0 0
      %8217 = vmatpush2.bf16.msra.mxu0 0
      %8218 = vmatprep.subr.bf16.mxu0 0
      %8219 = vmatpush2.bf16.msra.mxu0 0
      %8220 = vmatprep.mubr.bf16.mxu0 0
      %8221 = vmatmul.mubr.bf16.gmra.mxu0 %v7287
      %v8222 = vpop.f32.mrf.mxu0
      %v8223 = vadd.f32 0.0, %v8222
      %v8224 = vpop.f32.mrf.mxu0
      %v8225 = vpop.f32.mrf.mxu0
      %v8226 = vadd.f32 0.0, %v8225
      %v8227 = vpop.f32.mrf.mxu0
      %8228 = vdwg.mxu0
      %s8229 = scalar_lea.vmem %s19, 56
      %v8230 = vld [vmem:[%s8229] sm:$0xf]
      %v8231 = vld [vmem:[%s8229 + $0x4] sm:$0xf]
      %v8232 = vpack.c.bf16 %v8226, %v8223
      %v8235 = vunpack.c.l.b16 %v8230
      %v8236 = vunpack.c.l.b16 %v8231
      %v8237 = vpack.c.b16 %v8236, %v8235
      %v8239 = vsel %vm7416, %v8237, 0
      %8241 = vmatprep.subr.bf16.mxu0 0
      %8242 = vmatpush1.bf16.msra.mxu0 0
      %8243 = vmatprep.subr.bf16.mxu0 0
      %8244 = vmatpush1.bf16.msra.mxu0 0
      %8245 = vmatprep.subr.bf16.mxu0 0
      %8246 = vmatpush1.bf16.msra.mxu0 0
      %8247 = vmatprep.subr.bf16.mxu0 0
      %8248 = vmatpush1.bf16.msra.mxu0 0
      %8249 = vmatprep.subr.bf16.mxu0 0
      %8250 = vmatpush1.bf16.msra.mxu0 0
      %8251 = vmatprep.subr.bf16.mxu0 0
      %8252 = vmatpush1.bf16.msra.mxu0 0
      %8253 = vmatprep.subr.bf16.mxu0 0
      %8254 = vmatpush1.bf16.msra.mxu0 0
      %8255 = vmatprep.subr.bf16.mxu0 0
      %8256 = vmatpush1.bf16.msra.mxu0 %v8232
      %8257 = vmatprep.subr.bf16.mxu0 0
      %8258 = vmatpush2.bf16.msra.mxu0 0
      %8259 = vmatprep.subr.bf16.mxu0 0
      %8260 = vmatpush2.bf16.msra.mxu0 0
      %8261 = vmatprep.subr.bf16.mxu0 0
      %8262 = vmatpush2.bf16.msra.mxu0 0
      %8263 = vmatprep.subr.bf16.mxu0 0
      %8264 = vmatpush2.bf16.msra.mxu0 0
      %8265 = vmatprep.subr.bf16.mxu0 0
      %8266 = vmatpush2.bf16.msra.mxu0 0
      %8267 = vmatprep.subr.bf16.mxu0 0
      %8268 = vmatpush2.bf16.msra.mxu0 0
      %8269 = vmatprep.subr.bf16.mxu0 0
      %8270 = vmatpush2.bf16.msra.mxu0 0
      %8271 = vmatprep.subr.bf16.mxu0 0
      %8272 = vmatpush2.bf16.msra.mxu0 0
      %8273 = vmatprep.mubr.bf16.mxu0 0
      %8274 = vmatmul.mubr.bf16.gmra.mxu0 %v8239
      %v8275 = vpop.f32.mrf.mxu0
      %v8276 = vadd.f32 0.0, %v8275
      %v8277 = vpop.f32.mrf.mxu0
      %v8278 = vpop.f32.mrf.mxu0
      %v8279 = vadd.f32 0.0, %v8278
      %v8280 = vpop.f32.mrf.mxu0
      %8281 = vdwg.mxu0
      %v8282 = vadd.f32 %v8153, %v8276
      %v8283 = vadd.f32 %v8154, %v8279
      %s8284 = scalar_lea.vmem %s3, 256
      %v8285 = vld [vmem:[%s8284] sm:$0xf]
      %v8286 = vld [vmem:[%s8284 + $0x4] sm:$0xf]
      %v8287 = vld [vmem:[%s8284 + $0x8] sm:$0xf]
      %v8288 = vld [vmem:[%s8284 + $0xc] sm:$0xf]
      %v8289 = vld [vmem:[%s8284 + $0x10] sm:$0xf]
      %v8290 = vld [vmem:[%s8284 + $0x14] sm:$0xf]
      %v8291 = vld [vmem:[%s8284 + $0x18] sm:$0xf]
      %v8292 = vld [vmem:[%s8284 + $0x1c] sm:$0xf]
      %v8301 = vunpack.c.l.b16 %v8285
      %v8302 = vunpack.c.l.b16 %v8286
      %v8303 = vunpack.c.l.b16 %v8287
      %v8304 = vunpack.c.l.b16 %v8288
      %v8305 = vunpack.c.l.b16 %v8289
      %v8306 = vunpack.c.l.b16 %v8290
      %v8307 = vunpack.c.l.b16 %v8291
      %v8308 = vunpack.c.l.b16 %v8292
      %v8309 = vpack.c.b16 %v8302, %v8301
      %v8310 = vpack.c.b16 %v8304, %v8303
      %v8311 = vpack.c.b16 %v8306, %v8305
      %v8312 = vpack.c.b16 %v8308, %v8307
      %8317 = vmatprep.subr.bf16.mxu0 0
      %8318 = vmatpush1.bf16.msra.mxu0 0
      %8319 = vmatprep.subr.bf16.mxu0 0
      %8320 = vmatpush1.bf16.msra.mxu0 0
      %8321 = vmatprep.subr.bf16.mxu0 0
      %8322 = vmatpush1.bf16.msra.mxu0 0
      %8323 = vmatprep.subr.bf16.mxu0 0
      %8324 = vmatpush1.bf16.msra.mxu0 0
      %8325 = vmatprep.subr.bf16.mxu0 0
      %8326 = vmatpush1.bf16.msra.mxu0 %v8312
      %8327 = vmatprep.subr.bf16.mxu0 0
      %8328 = vmatpush1.bf16.msra.mxu0 %v8311
      %8329 = vmatprep.subr.bf16.mxu0 0
      %8330 = vmatpush1.bf16.msra.mxu0 %v8310
      %8331 = vmatprep.subr.bf16.mxu0 0
      %8332 = vmatpush1.bf16.msra.mxu0 %v8309
      %8333 = vmatprep.subr.bf16.mxu0 0
      %8334 = vmatpush2.bf16.msra.mxu0 0
      %8335 = vmatprep.subr.bf16.mxu0 0
      %8336 = vmatpush2.bf16.msra.mxu0 0
      %8337 = vmatprep.subr.bf16.mxu0 0
      %8338 = vmatpush2.bf16.msra.mxu0 0
      %8339 = vmatprep.subr.bf16.mxu0 0
      %8340 = vmatpush2.bf16.msra.mxu0 0
      %8341 = vmatprep.subr.bf16.mxu0 0
      %8342 = vmatpush2.bf16.msra.mxu0 0
      %8343 = vmatprep.subr.bf16.mxu0 0
      %8344 = vmatpush2.bf16.msra.mxu0 0
      %8345 = vmatprep.subr.bf16.mxu0 0
      %8346 = vmatpush2.bf16.msra.mxu0 0
      %8347 = vmatprep.subr.bf16.mxu0 0
      %8348 = vmatpush2.bf16.msra.mxu0 0
      %8349 = vmatprep.mubr.bf16.mxu0 0
      %8350 = vmatmul.mubr.bf16.gmra.mxu0 %v7287
      %v8351 = vpop.f32.mrf.mxu0
      %v8352 = vadd.f32 0.0, %v8351
      %v8353 = vpop.f32.mrf.mxu0
      %v8354 = vpop.f32.mrf.mxu0
      %v8355 = vadd.f32 0.0, %v8354
      %v8356 = vpop.f32.mrf.mxu0
      %8357 = vdwg.mxu0
      %s8358 = scalar_lea.vmem %s19, 64
      %v8359 = vld [vmem:[%s8358] sm:$0xf]
      %v8360 = vld [vmem:[%s8358 + $0x4] sm:$0xf]
      %v8361 = vpack.c.bf16 %v8355, %v8352
      %v8364 = vunpack.c.l.b16 %v8359
      %v8365 = vunpack.c.l.b16 %v8360
      %v8366 = vpack.c.b16 %v8365, %v8364
      %v8368 = vsel %vm7416, %v8366, 0
      %8370 = vmatprep.subr.bf16.mxu0 0
      %8371 = vmatpush1.bf16.msra.mxu0 0
      %8372 = vmatprep.subr.bf16.mxu0 0
      %8373 = vmatpush1.bf16.msra.mxu0 0
      %8374 = vmatprep.subr.bf16.mxu0 0
      %8375 = vmatpush1.bf16.msra.mxu0 0
      %8376 = vmatprep.subr.bf16.mxu0 0
      %8377 = vmatpush1.bf16.msra.mxu0 0
      %8378 = vmatprep.subr.bf16.mxu0 0
      %8379 = vmatpush1.bf16.msra.mxu0 0
      %8380 = vmatprep.subr.bf16.mxu0 0
      %8381 = vmatpush1.bf16.msra.mxu0 0
      %8382 = vmatprep.subr.bf16.mxu0 0
      %8383 = vmatpush1.bf16.msra.mxu0 0
      %8384 = vmatprep.subr.bf16.mxu0 0
      %8385 = vmatpush1.bf16.msra.mxu0 %v8361
      %8386 = vmatprep.subr.bf16.mxu0 0
      %8387 = vmatpush2.bf16.msra.mxu0 0
      %8388 = vmatprep.subr.bf16.mxu0 0
      %8389 = vmatpush2.bf16.msra.mxu0 0
      %8390 = vmatprep.subr.bf16.mxu0 0
      %8391 = vmatpush2.bf16.msra.mxu0 0
      %8392 = vmatprep.subr.bf16.mxu0 0
      %8393 = vmatpush2.bf16.msra.mxu0 0
      %8394 = vmatprep.subr.bf16.mxu0 0
      %8395 = vmatpush2.bf16.msra.mxu0 0
      %8396 = vmatprep.subr.bf16.mxu0 0
      %8397 = vmatpush2.bf16.msra.mxu0 0
      %8398 = vmatprep.subr.bf16.mxu0 0
      %8399 = vmatpush2.bf16.msra.mxu0 0
      %8400 = vmatprep.subr.bf16.mxu0 0
      %8401 = vmatpush2.bf16.msra.mxu0 0
      %8402 = vmatprep.mubr.bf16.mxu0 0
      %8403 = vmatmul.mubr.bf16.gmra.mxu0 %v8368
      %v8404 = vpop.f32.mrf.mxu0
      %v8405 = vadd.f32 0.0, %v8404
      %v8406 = vpop.f32.mrf.mxu0
      %v8407 = vpop.f32.mrf.mxu0
      %v8408 = vadd.f32 0.0, %v8407
      %v8409 = vpop.f32.mrf.mxu0
      %8410 = vdwg.mxu0
      %v8411 = vadd.f32 %v8282, %v8405
      %v8412 = vadd.f32 %v8283, %v8408
      %v8413 = vld [vmem:[%s20] sm:$0xff]
      %v8414 = vld [vmem:[%s20 + $0x8] sm:$0xff]
      %8416 = vset.pattern.permute.xlu0 0
      %8417 = vperm.xlu0 %8416, %v8413
      %v8418 = vpop.permute.xlu0 %8417
      %8421 = vset.pattern.permute.xlu0 0
      %8422 = vperm.xlu0 %8421, %v8414
      %v8423 = vpop.permute.xlu0 %8422
      %v8425 = vmul.f32 %v8411, %v8418
      %v8426 = vmul.f32 %v8412, %v8423
      %v8427 = vld [vmem:[%s21] sm:$0xff]
      %v8428 = vld [vmem:[%s21 + $0x8] sm:$0xff]
      %8430 = vset.pattern.permute.xlu0 0
      %8431 = vperm.xlu0 %8430, %v8427
      %v8432 = vpop.permute.xlu0 %8431
      %8435 = vset.pattern.permute.xlu0 0
      %8436 = vperm.xlu0 %8435, %v8428
      %v8437 = vpop.permute.xlu0 %8436
      %v8439 = vadd.f32 %v8425, %v8432
      %v8440 = vadd.f32 %v8426, %v8437
      %v8441 = vadd.f32 %v8439, %v7250
      %v8442 = vadd.f32 %v8440, %v7251
      %v8443 = vmax.f32 %v8441, 0.0
      %v8444 = vmax.f32 %v8442, 0.0
      %v8445 = vsel %vm7285, %v8443, 0.0
      %8446 = vadd.xlane.f32.xlu0 %v8445
      %v8447 = vpop.xlane.xlu0 %8446
      %v8448 = vsel %vm7285, %v8444, 0.0
      %8449 = vadd.xlane.f32.xlu0 %v8448
      %v8450 = vpop.xlane.xlu0 %8449
      %v8451 = vrcp.pop 64.0
      %v8452 = vmul.f32 %v8447, %v8451
      %v8453 = vmul.f32 %v8450, %v8451
      %vm8454 = vcmask 7168
      %8455 = vst.msk [vmem:[%s683] sm:$0xff] %vm8454, %v8452
      %8456 = vst.msk [vmem:[%s683 + $0x8] sm:$0xff] %vm8454, %v8453
      %p8457 = scmp.lt.s32.totalorder %s33, 1
      %s8458 = scalar_select %p8457, %s33, 1
      %s8459 = smul.addr %s8458, 2
      %s8460 = smul.addr %s8459, 8
      %s8461 = scalar_lea.vmem %s22, %s8460
      // Predicated region
      $region109: #{resnet_features_forward.1} parent=107 // pred_check
        %p8462 = pneg %p518
      $region110: #{resnet_features_forward.1} parent=107 // pred_check_branch
        %8464 = sbr.rel (%p8462) target = $region112
      $region111: #{resnet_features_forward.1} parent=107 // pred_region
        _
      $region112: #{resnet_features_forward.1} parent=107 // pred_fallthru
        _
    $region108: #{resnet_features_forward.1} parent=5 // pred_fallthru
      _
    %p8465 = scmp.le.s32.totalorder 2, %s28
    // Predicated region
    $region113: #{resnet_features_forward.1} parent=5 // pred_check
      %p8466 = pneg %p8465
    $region114: #{resnet_features_forward.1} parent=5 // pred_check_branch
      %8468 = sbr.rel (%p8466) target = $region116
    $region115: #{resnet_features_forward.1} parent=5 // pred_region
      %s8469 = ssub.s32 %s28, 2
      // Predicated region
      $region117: #{resnet_features_forward.1} parent=115 // pred_check
        %p8470 = pneg %p524
      $region118: #{resnet_features_forward.1} parent=115 // pred_check_branch
        %8472 = sbr.rel (%p8470) target = $region120
      $region119: #{resnet_features_forward.1} parent=115 // pred_region
        %p8473 = scmp.lt.s32.totalorder %s34, 1
        %s8474 = scalar_select %p8473, %s34, 1
        %s8475 = smul.addr %s8474, 2
        %s8476 = smul.addr %s8475, 8
        %s8477 = scalar_lea.vmem %s22, %s8476
      $region120: #{resnet_features_forward.1} parent=115 // pred_fallthru
        _
    $region116: #{resnet_features_forward.1} parent=5 // pred_fallthru
      _
  $region6: #{resnet_features_forward.1} parent=0 // loop_footer
    %s32 = sadd.s32 1, %s28
  $region7: #{resnet_features_forward.1} parent=0 // loop_footer_branch
    %27 = sbr.rel target = $region3
  $region8: #{resnet_features_forward.1} parent=0 // loop_exit
    _

</llo_original>
